<compile_context>
chip_gen: v7x
topology: tpu7x:2x2x1
jax: 0.10.0
libtpu: 0.0.40
codegen_flags: <defaults>
</compile_context>

<pallas_src>
import math
import functools

import jax
import jax.numpy as jnp
from jax import lax
from jax.experimental import pallas as pl
from jax.experimental.pallas import tpu as pltpu


_VMEM_LIMIT_BYTES = 64 * 1024 * 1024   # <= physical VMEM on v5e/v6e (128 MiB) and v7x (64 MiB)
_NEG_INF = -1000000000.0               # matches reference masked_fill value


def _cparams(*sem):
    return pltpu.CompilerParams(dimension_semantics=tuple(sem),
                                vmem_limit_bytes=_VMEM_LIMIT_BYTES)


def _pick_seq_tile(S, target=256):
    """Largest multiple-of-8 tile <= target that divides S (else full S)."""
    if S <= target or S % 8 != 0:
        return S
    for t in range(target, 7, -8):
        if S % t == 0:
            return t
    return S


def _pick_ff_tile(F, target=512):
    """Largest multiple-of-128 tile <= target that divides F (else full F)."""
    if F <= target or F % 128 != 0:
        return F
    for t in range(target, 127, -128):
        if F % t == 0:
            return t
    return F


# ----------------------------------------------------------------------------
# Pallas kernels
# ----------------------------------------------------------------------------
def _linear3d_kernel(x_ref, w_ref, b_ref, o_ref):
    # y = x @ w + b      (bf16 operands, f32 accumulation)
    y = jnp.dot(x_ref[0].astype(jnp.bfloat16), w_ref[...],
                preferred_element_type=jnp.float32)
    o_ref[0] = (y + b_ref[...]).astype(o_ref.dtype)


def _proj_pe_kernel(x_ref, w_ref, b_ref, pe_ref, o_ref):
    # input projection fused with positional-encoding add
    y = jnp.dot(x_ref[0].astype(jnp.bfloat16), w_ref[...],
                preferred_element_type=jnp.float32)
    o_ref[0] = (y + b_ref[...] + pe_ref[...]).astype(o_ref.dtype)


def _linear_add_ln_kernel(x_ref, w_ref, b_ref, res_ref, g_ref, bt_ref, o_ref, *, eps):
    # out = LayerNorm(residual + (x @ w + b)) * g + beta
    y = jnp.dot(x_ref[0].astype(jnp.bfloat16), w_ref[...],
                preferred_element_type=jnp.float32) + b_ref[...]
    z = res_ref[0].astype(jnp.float32) + y
    mean = jnp.mean(z, axis=-1, keepdims=True)
    zc = z - mean
    var = jnp.mean(zc * zc, axis=-1, keepdims=True)
    inv = lax.rsqrt(var + eps)
    o_ref[0] = (zc * inv * g_ref[...] + bt_ref[...]).astype(o_ref.dtype)


def _ffn_ln_kernel(x_ref, w1_ref, b1_ref, w2_ref, b2_ref, g_ref, bt_ref, o_ref,
                   acc_ref, *, eps):
    # d_ff tiled along the last (arbitrary) grid axis; fc2 partials accumulated in
    # a f32 VMEM scratch.  The d_ff activation never leaves VMEM.
    f = pl.program_id(2)

    @pl.when(f == 0)
    def _():
        acc_ref[...] = jnp.zeros_like(acc_ref)

    xb = x_ref[0].astype(jnp.bfloat16)
    h = jnp.tanh(jnp.dot(xb, w1_ref[...], preferred_element_type=jnp.float32)
                 + b1_ref[...])
    acc_ref[...] += jnp.dot(h.astype(jnp.bfloat16), w2_ref[...],
                            preferred_element_type=jnp.float32)

    @pl.when(f == pl.num_programs(2) - 1)
    def _():
        z = x_ref[0].astype(jnp.float32) + acc_ref[...] + b2_ref[...]
        mean = jnp.mean(z, axis=-1, keepdims=True)
        zc = z - mean
        var = jnp.mean(zc * zc, axis=-1, keepdims=True)
        inv = lax.rsqrt(var + eps)
        o_ref[0] = (zc * inv * g_ref[...] + bt_ref[...]).astype(o_ref.dtype)


def _self_attn_kernel(x_ref, w_ref, b_ref, qk_ref, kk_ref, o_ref, *, scale, causal):
    # Fused QKV projection + multi-head attention for one batch element.
    # Output is head-major [1, H, Sq, dk]; the reference combine_heads quirk is a
    # free bitcast reshape outside the kernel.
    x = x_ref[0]                                                   # [S, D] f32
    qkv = jnp.dot(x.astype(jnp.bfloat16), w_ref[...],
                  preferred_element_type=jnp.float32) + b_ref[...]  # [S, 3D] f32
    S = x.shape[0]
    H = o_ref.shape[1]
    dk = o_ref.shape[3]
    D = H * dk

    # keep mask built in-kernel from tiny keep vectors (no [B,Sq,Sk] mask in HBM)
    keep = (qk_ref[0] * kk_ref[0]) != 0.0                          # [S,1]*[1,S]->[S,S]
    if causal:
        row = lax.broadcasted_iota(jnp.int32, (S, S), 0)
        col = lax.broadcasted_iota(jnp.int32, (S, S), 1)
        keep = jnp.logical_and(keep, col <= row)

    for h in range(H):                                             # static, small H
        qh = qkv[:, h * dk:(h + 1) * dk].astype(jnp.bfloat16)
        kh = qkv[:, D + h * dk:D + (h + 1) * dk].astype(jnp.bfloat16)
        vh = qkv[:, 2 * D + h * dk:2 * D + (h + 1) * dk].astype(jnp.bfloat16)

        s = lax.dot_general(qh, kh, (((1,), (1,)), ((), ())),
                            preferred_element_type=jnp.float32) * scale   # [S, S]
        s = jnp.where(keep, s, _NEG_INF)
        s = s - jnp.max(s, axis=-1, keepdims=True)
        p = jnp.exp(s)
        p = p * pl.reciprocal(jnp.sum(p, axis=-1, keepdims=True), approx=True)

        oh = jnp.dot(p.astype(jnp.bfloat16), vh,
                     preferred_element_type=jnp.float32)           # [S, dk]
        o_ref[0, h] = oh.astype(o_ref.dtype)


def _cross_attn_kernel(x_ref, enc_ref, wq_ref, bq_ref, wkv_ref, bkv_ref, kk_ref,
                       o_ref, *, scale):
    # Fused Q projection + KV projection + cross-attention for one batch element.
    q = jnp.dot(x_ref[0].astype(jnp.bfloat16), wq_ref[...],
                preferred_element_type=jnp.float32) + bq_ref[...]      # [Sq, D]
    kv = jnp.dot(enc_ref[0].astype(jnp.bfloat16), wkv_ref[...],
                 preferred_element_type=jnp.float32) + bkv_ref[...]    # [Sk, 2D]
    H = o_ref.shape[1]
    dk = o_ref.shape[3]
    D = H * dk

    keep = kk_ref[0] != 0.0                                           # [1, Sk]

    for h in range(H):
        qh = q[:, h * dk:(h + 1) * dk].astype(jnp.bfloat16)
        kh = kv[:, h * dk:(h + 1) * dk].astype(jnp.bfloat16)
        vh = kv[:, D + h * dk:D + (h + 1) * dk].astype(jnp.bfloat16)

        s = lax.dot_general(qh, kh, (((1,), (1,)), ((), ())),
                            preferred_element_type=jnp.float32) * scale  # [Sq, Sk]
        s = jnp.where(keep, s, _NEG_INF)
        s = s - jnp.max(s, axis=-1, keepdims=True)
        p = jnp.exp(s)
        p = p * pl.reciprocal(jnp.sum(p, axis=-1, keepdims=True), approx=True)

        oh = jnp.dot(p.astype(jnp.bfloat16), vh,
                     preferred_element_type=jnp.float32)
        o_ref[0, h] = oh.astype(o_ref.dtype)


# ----------------------------------------------------------------------------
# pallas_call wrappers
# ----------------------------------------------------------------------------
def linear3d(x, w, b):
    """x: [B, S, Din] f32, w: [Din, Dout] bf16 -> [B, S, Dout] f32."""
    B, S, Din = x.shape
    Dout = w.shape[1]
    tm = _pick_seq_tile(S)
    return pl.pallas_call(
        _linear3d_kernel,
        out_shape=jax.ShapeDtypeStruct((B, S, Dout), jnp.float32),
        grid=(B, S // tm),
        in_specs=[
            pl.BlockSpec((1, tm, Din), lambda b, i: (b, i, 0)),
            pl.BlockSpec((Din, Dout), lambda b, i: (0, 0)),
            pl.BlockSpec((1, Dout), lambda b, i: (0, 0)),
        ],
        out_specs=pl.BlockSpec((1, tm, Dout), lambda b, i: (b, i, 0)),
        compiler_params=_cparams("parallel", "parallel"),
    )(x, w, b.reshape(1, Dout))


def proj_pe(x, w, b, pe):
    """Input projection + positional-encoding add.  x: [B,S,Din], pe: [S,D]."""
    B, S, Din = x.shape
    D = w.shape[1]
    tm = _pick_seq_tile(S)
    return pl.pallas_call(
        _proj_pe_kernel,
        out_shape=jax.ShapeDtypeStruct((B, S, D), jnp.float32),
        grid=(B, S // tm),
        in_specs=[
            pl.BlockSpec((1, tm, Din), lambda b, i: (b, i, 0)),
            pl.BlockSpec((Din, D), lambda b, i: (0, 0)),
            pl.BlockSpec((1, D), lambda b, i: (0, 0)),
            pl.BlockSpec((tm, D), lambda b, i: (i, 0)),
        ],
        out_specs=pl.BlockSpec((1, tm, D), lambda b, i: (b, i, 0)),
        compiler_params=_cparams("parallel", "parallel"),
    )(x, w, b.reshape(1, D), pe)


def linear_add_ln(x, w, b, residual, gamma, beta, eps=1e-5):
    """LayerNorm(residual + x @ w + b).  x may be bf16; residual f32."""
    B, S, Din = x.shape
    D = w.shape[1]
    tm = _pick_seq_tile(S)
    return pl.pallas_call(
        functools.partial(_linear_add_ln_kernel, eps=eps),
        out_shape=jax.ShapeDtypeStruct((B, S, D), jnp.float32),
        grid=(B, S // tm),
        in_specs=[
            pl.BlockSpec((1, tm, Din), lambda b, i: (b, i, 0)),
            pl.BlockSpec((Din, D), lambda b, i: (0, 0)),
            pl.BlockSpec((1, D), lambda b, i: (0, 0)),
            pl.BlockSpec((1, tm, D), lambda b, i: (b, i, 0)),
            pl.BlockSpec((1, D), lambda b, i: (0, 0)),
            pl.BlockSpec((1, D), lambda b, i: (0, 0)),
        ],
        out_specs=pl.BlockSpec((1, tm, D), lambda b, i: (b, i, 0)),
        compiler_params=_cparams("parallel", "parallel"),
    )(x, w, b.reshape(1, D), residual, gamma.reshape(1, D), beta.reshape(1, D))


def ffn_ln(x, w1, b1, w2, b2, gamma, beta, eps=1e-5):
    """LayerNorm(x + fc2(tanh(fc1(x)))) with the d_ff axis tiled (reduction grid)."""
    B, S, D = x.shape
    F = w1.shape[1]
    tm = _pick_seq_tile(S)
    tf = _pick_ff_tile(F)
    return pl.pallas_call(
        functools.partial(_ffn_ln_kernel, eps=eps),
        out_shape=jax.ShapeDtypeStruct((B, S, D), jnp.float32),
        grid=(B, S // tm, F // tf),
        in_specs=[
            pl.BlockSpec((1, tm, D), lambda b, i, f: (b, i, 0)),
            pl.BlockSpec((D, tf), lambda b, i, f: (0, f)),
            pl.BlockSpec((1, tf), lambda b, i, f: (0, f)),
            pl.BlockSpec((tf, D), lambda b, i, f: (f, 0)),
            pl.BlockSpec((1, D), lambda b, i, f: (0, 0)),
            pl.BlockSpec((1, D), lambda b, i, f: (0, 0)),
            pl.BlockSpec((1, D), lambda b, i, f: (0, 0)),
        ],
        out_specs=pl.BlockSpec((1, tm, D), lambda b, i, f: (b, i, 0)),
        scratch_shapes=[pltpu.VMEM((tm, D), jnp.float32)],
        compiler_params=_cparams("parallel", "parallel", "arbitrary"),
    )(x, w1, b1.reshape(1, F), w2, b2.reshape(1, D),
      gamma.reshape(1, D), beta.reshape(1, D))


def self_attn_fused(x, wqkv, bqkv, qkeep, kkeep, num_heads, causal):
    """Fused QKV projection + MHA.  x: [B,S,D] f32 -> attn [B,H,S,dk] bf16."""
    B, S, D = x.shape
    dk = D // num_heads
    scale = 1.0 / math.sqrt(dk)
    return pl.pallas_call(
        functools.partial(_self_attn_kernel, scale=scale, causal=causal),
        out_shape=jax.ShapeDtypeStruct((B, num_heads, S, dk), jnp.bfloat16),
        grid=(B,),
        in_specs=[
            pl.BlockSpec((1, S, D), lambda b: (b, 0, 0)),
            pl.BlockSpec((D, 3 * D), lambda b: (0, 0)),
            pl.BlockSpec((1, 3 * D), lambda b: (0, 0)),
            pl.BlockSpec((1, S, 1), lambda b: (b, 0, 0)),
            pl.BlockSpec((1, 1, S), lambda b: (b, 0, 0)),
        ],
        out_specs=pl.BlockSpec((1, num_heads, S, dk), lambda b: (b, 0, 0, 0)),
        compiler_params=_cparams("parallel"),
    )(x, wqkv, bqkv.reshape(1, 3 * D), qkeep, kkeep)


def cross_attn_fused(x, enc, wq, bq, wkv, bkv, kkeep, num_heads):
    """Fused Q / KV projections + cross-MHA.  -> attn [B,H,Sq,dk] bf16."""
    B, Sq, D = x.shape
    Sk = enc.shape[1]
    dk = D // num_heads
    scale = 1.0 / math.sqrt(dk)
    return pl.pallas_call(
        functools.partial(_cross_attn_kernel, scale=scale),
        out_shape=jax.ShapeDtypeStruct((B, num_heads, Sq, dk), jnp.bfloat16),
        grid=(B,),
        in_specs=[
            pl.BlockSpec((1, Sq, D), lambda b: (b, 0, 0)),
            pl.BlockSpec((1, Sk, D), lambda b: (b, 0, 0)),
            pl.BlockSpec((D, D), lambda b: (0, 0)),
            pl.BlockSpec((1, D), lambda b: (0, 0)),
            pl.BlockSpec((D, 2 * D), lambda b: (0, 0)),
            pl.BlockSpec((1, 2 * D), lambda b: (0, 0)),
            pl.BlockSpec((1, 1, Sk), lambda b: (b, 0, 0)),
        ],
        out_specs=pl.BlockSpec((1, num_heads, Sq, dk), lambda b: (b, 0, 0, 0)),
        compiler_params=_cparams("parallel"),
    )(x, enc, wq, bq.reshape(1, D), wkv, bkv.reshape(1, 2 * D), kkeep)


# ----------------------------------------------------------------------------
# Model glue (plain JAX)
# ----------------------------------------------------------------------------
def self_attn_block(p, x, qkeep, kkeep, causal, num_heads, gamma, beta):
    B, S, D = x.shape
    attn = self_attn_fused(x, p["wqkv_w"], p["wqkv_b"], qkeep, kkeep,
                           num_heads, causal)                     # [B,H,S,dk] bf16
    combined = attn.reshape(B, S, D)   # raw-view combine_heads quirk (free bitcast)
    return linear_add_ln(combined, p["wo_w"], p["wo_b"], x, gamma, beta)


def cross_attn_block(p, x, enc, kkeep, num_heads, gamma, beta):
    B, Sq, D = x.shape
    attn = cross_attn_fused(x, enc, p["wq_w"], p["wq_b"], p["wkv_w"], p["wkv_b"],
                            kkeep, num_heads)                     # [B,H,Sq,dk] bf16
    combined = attn.reshape(B, Sq, D)
    return linear_add_ln(combined, p["wo_w"], p["wo_b"], x, gamma, beta)


def make_positional_encoding(d_model, max_len):
    pos = jnp.arange(max_len, dtype=jnp.float32)[:, None]
    div = jnp.exp(jnp.arange(0, d_model, 2, dtype=jnp.float32)
                  * (-math.log(10000.0) / d_model))
    pe = jnp.zeros((max_len, d_model), jnp.float32)
    pe = pe.at[:, 0::2].set(jnp.sin(pos * div))
    pe = pe.at[:, 1::2].set(jnp.cos(pos * div))
    return pe


def transformer_forward(params, src, tgt, num_heads):
    B, Ss, _ = src.shape
    St = tgt.shape[1]

    # generate_mask(src.sum(-1), tgt.sum(-1)): only the tiny keep vectors are
    # materialized; the [Sq, Sk] keep matrices are built inside the attn kernels.
    src_keep = (src.sum(-1) != 0).astype(jnp.float32)              # [B, Ss]
    tgt_keep = (tgt.sum(-1) != 0).astype(jnp.float32)              # [B, St]
    src_kkeep = src_keep[:, None, :]                               # [B, 1, Ss]
    tgt_qkeep = tgt_keep[:, :, None]                               # [B, St, 1]
    ones_q_enc = jnp.ones((B, Ss, 1), jnp.float32)
    ones_k_dec = jnp.ones((B, 1, St), jnp.float32)

    pe = params["pe"]

    # input projections fused with positional encoding (dropout == identity)
    enc = proj_pe(src, params["enc_proj_w"], params["enc_proj_b"], pe[:Ss])
    dec = proj_pe(tgt, params["dec_proj_w"], params["dec_proj_b"], pe[:St])

    for lp in params["enc_layers"]:
        x = self_attn_block(lp["attn"], enc, ones_q_enc, src_kkeep, False,
                            num_heads, lp["norm1_g"], lp["norm1_b"])
        enc = ffn_ln(x, lp["fc1_w"], lp["fc1_b"], lp["fc2_w"], lp["fc2_b"],
                     lp["norm2_g"], lp["norm2_b"])

    for lp in params["dec_layers"]:
        x = self_attn_block(lp["self_attn"], dec, tgt_qkeep, ones_k_dec, True,
                            num_heads, lp["norm1_g"], lp["norm1_b"])
        x = cross_attn_block(lp["cross_attn"], x, enc, src_kkeep,
                             num_heads, lp["norm2_g"], lp["norm2_b"])
        dec = ffn_ln(x, lp["fc1_w"], lp["fc1_b"], lp["fc2_w"], lp["fc2_b"],
                     lp["norm3_g"], lp["norm3_b"])

    return linear3d(dec, params["fc_w"], params["fc_b"])


transformer_forward_jit = jax.jit(transformer_forward, static_argnums=(3,))


# ----------------------------------------------------------------------------
# Deterministic parameter init (matches nn.init.normal_(p, 0, 0.2) semantics).
# Matmul weights are stored pre-cast to bf16 (MXU-native); biases / LN in f32.
# ----------------------------------------------------------------------------
def init_params(key, src_size, tgt_size, d_model, num_layers, d_ff, max_seq_len):
    keys = iter(jax.random.split(key, 4096))
    bf16 = jnp.bfloat16

    def nrm(shape):
        return jax.random.normal(next(keys), shape, jnp.float32) * 0.2

    def lin(din, dout):
        return nrm((din, dout)), nrm((dout,))

    def self_mha():
        wq, bq = lin(d_model, d_model); wk, bk = lin(d_model, d_model)
        wv, bv = lin(d_model, d_model); wo, bo = lin(d_model, d_model)
        return {"wqkv_w": jnp.concatenate([wq, wk, wv], axis=1).astype(bf16),
                "wqkv_b": jnp.concatenate([bq, bk, bv]),
                "wo_w": wo.astype(bf16), "wo_b": bo}

    def cross_mha():
        wq, bq = lin(d_model, d_model); wk, bk = lin(d_model, d_model)
        wv, bv = lin(d_model, d_model); wo, bo = lin(d_model, d_model)
        return {"wq_w": wq.astype(bf16), "wq_b": bq,
                "wkv_w": jnp.concatenate([wk, wv], axis=1).astype(bf16),
                "wkv_b": jnp.concatenate([bk, bv]),
                "wo_w": wo.astype(bf16), "wo_b": bo}

    def ln():
        return nrm((d_model,)), nrm((d_model,))

    enc_layers = []
    for _ in range(num_layers):
        w1, b1 = lin(d_model, d_ff); w2, b2 = lin(d_ff, d_model)
        g1, bb1 = ln(); g2, bb2 = ln()
        enc_layers.append({"attn": self_mha(),
                           "fc1_w": w1.astype(bf16), "fc1_b": b1,
                           "fc2_w": w2.astype(bf16), "fc2_b": b2,
                           "norm1_g": g1, "norm1_b": bb1,
                           "norm2_g": g2, "norm2_b": bb2})

    dec_layers = []
    for _ in range(num_layers):
        w1, b1 = lin(d_model, d_ff); w2, b2 = lin(d_ff, d_model)
        g1, bb1 = ln(); g2, bb2 = ln(); g3, bb3 = ln()
        dec_layers.append({"self_attn": self_mha(), "cross_attn": cross_mha(),
                           "fc1_w": w1.astype(bf16), "fc1_b": b1,
                           "fc2_w": w2.astype(bf16), "fc2_b": b2,
                           "norm1_g": g1, "norm1_b": bb1,
                           "norm2_g": g2, "norm2_b": bb2,
                           "norm3_g": g3, "norm3_b": bb3})

    ew, eb = lin(src_size, d_model)
    dw, db = lin(tgt_size, d_model)
    fw, fb = lin(d_model, tgt_size)
    return {
        "enc_proj_w": ew.astype(bf16), "enc_proj_b": eb,
        "dec_proj_w": dw.astype(bf16), "dec_proj_b": db,
        "enc_layers": enc_layers,
        "dec_layers": dec_layers,
        "fc_w": fw.astype(bf16), "fc_b": fb,
        "pe": make_positional_encoding(d_model, max_seq_len),  # buffer, not a param
    }


# ----------------------------------------------------------------------------
if __name__ == "__main__":
    # small config consistent with the module's forward
    src_size, tgt_size = 8, 8
    d_model, num_heads, num_layers, d_ff = 32, 4, 2, 64
    enc_seq_length = dec_seq_length = 16
    B = 2

    key = jax.random.PRNGKey(0)
    kp, ks, kt = jax.random.split(key, 3)

    params = init_params(kp, src_size, tgt_size, d_model, num_layers, d_ff,
                         max(enc_seq_length, dec_seq_length))

    src = jax.random.normal(ks, (B, enc_seq_length, src_size), jnp.float32)
    tgt = jax.random.normal(kt, (B, dec_seq_length, tgt_size), jnp.float32)

    out = transformer_forward_jit(params, src, tgt, num_heads)
    out = jax.block_until_ready(out)
    assert out.shape == (B, dec_seq_length, tgt_size)
    assert bool(jnp.all(jnp.isfinite(out)))
    print("KERNEL_OK")
</pallas_src>

<mosaic_0001>
module attributes {stable_mosaic.version = 11 : i64} {
  func.func @_proj_pe_kernel(%arg0: i32, %arg1: i32, %arg2: memref<1x16x8xf32, #tpu.memory_space<vmem>>, %arg3: memref<8x32xbf16, #tpu.memory_space<vmem>>, %arg4: memref<1x32xf32, #tpu.memory_space<vmem>>, %arg5: memref<16x32xf32, #tpu.memory_space<vmem>>, %arg6: memref<1x16x32xf32, #tpu.memory_space<vmem>>) attributes {dimension_semantics = [#tpu.dimension_semantics<parallel>, #tpu.dimension_semantics<parallel>], iteration_bounds = array<i64: 2, 1>, scalar_prefetch = 0 : i64, scratch_operands = 0 : i64, tpu.core_type = #tpu.core_type<tc>, window_params = [{transform_indices = @transform_0, window_bounds = array<i64: 1, 16, 8>}, {pipeline_mode = #tpu.pipeline_mode<synchronous>, transform_indices = @transform_1, window_bounds = array<i64: 8, 32>}, {pipeline_mode = #tpu.pipeline_mode<synchronous>, transform_indices = @transform_2, window_bounds = array<i64: 1, 32>}, {transform_indices = @transform_3, window_bounds = array<i64: 16, 32>}, {transform_indices = @transform_4, window_bounds = array<i64: 1, 16, 32>}]} {
    %c0 = arith.constant 0 : index
    %c0_0 = arith.constant 0 : index
    %c0_1 = arith.constant 0 : index
    %0 = vector.load %arg2[%c0, %c0_0, %c0_1] : memref<1x16x8xf32, #tpu.memory_space<vmem>>, vector<1x16x8xf32>
    %1 = vector.shape_cast %0 : vector<1x16x8xf32> to vector<16x8xf32>
    %2 = arith.truncf %1 : vector<16x8xf32> to vector<16x8xbf16>
    %c0_2 = arith.constant 0 : index
    %c0_3 = arith.constant 0 : index
    %3 = vector.load %arg3[%c0_2, %c0_3] : memref<8x32xbf16, #tpu.memory_space<vmem>>, vector<8x32xbf16>
    %cst = arith.constant dense<0.000000e+00> : vector<16x32xf32>
    %4 = tpu.matmul %2, %3, %cst {dimension_numbers = #tpu.dot_dimension_numbers<[1], [0], [0], [1], [0, 0, 1, 1], [], []>} : vector<16x8xbf16>, vector<8x32xbf16>, vector<16x32xf32> -> vector<16x32xf32>
    %c0_4 = arith.constant 0 : index
    %c0_5 = arith.constant 0 : index
    %5 = vector.load %arg4[%c0_4, %c0_5] : memref<1x32xf32, #tpu.memory_space<vmem>>, vector<1x32xf32>
    %6 = vector.broadcast %5 : vector<1x32xf32> to vector<16x32xf32>
    %7 = arith.addf %4, %6 : vector<16x32xf32>
    %c0_6 = arith.constant 0 : index
    %c0_7 = arith.constant 0 : index
    %8 = vector.load %arg5[%c0_6, %c0_7] : memref<16x32xf32, #tpu.memory_space<vmem>>, vector<16x32xf32>
    %9 = arith.addf %7, %8 : vector<16x32xf32>
    %c0_8 = arith.constant 0 : index
    %c0_9 = arith.constant 0 : index
    %c0_10 = arith.constant 0 : index
    %10 = vector.load %arg6[%c0_8, %c0_9, %c0_10] : memref<1x16x32xf32, #tpu.memory_space<vmem>>, vector<1x16x32xf32>
    %11 = vector.shape_cast %10 : vector<1x16x32xf32> to vector<16x32xf32>
    %12 = vector.shape_cast %9 : vector<16x32xf32> to vector<1x16x32xf32>
    tpu.vector_store %arg6[%c0_8, %c0_9, %c0_10], %12 {strides = array<i32>} : memref<1x16x32xf32, #tpu.memory_space<vmem>>, vector<1x16x32xf32>,
    return
  }
  func.func @transform_0(%arg0: i32, %arg1: i32) -> (i32, i32, i32) {
    %c0_i32 = arith.constant 0 : i32
    %c0_i32_0 = arith.constant 0 : i32
    return %arg0, %arg1, %c0_i32 : i32, i32, i32
  }
  func.func @transform_1(%arg0: i32, %arg1: i32) -> (i32, i32) {
    %c0_i32 = arith.constant 0 : i32
    %c0_i32_0 = arith.constant 0 : i32
    %c0_i32_1 = arith.constant 0 : i32
    return %c0_i32, %c0_i32_0 : i32, i32
  }
  func.func @transform_2(%arg0: i32, %arg1: i32) -> (i32, i32) {
    %c0_i32 = arith.constant 0 : i32
    %c0_i32_0 = arith.constant 0 : i32
    %c0_i32_1 = arith.constant 0 : i32
    return %c0_i32, %c0_i32_0 : i32, i32
  }
  func.func @transform_3(%arg0: i32, %arg1: i32) -> (i32, i32) {
    %c0_i32 = arith.constant 0 : i32
    %c0_i32_0 = arith.constant 0 : i32
    return %arg1, %c0_i32 : i32, i32
  }
  func.func @transform_4(%arg0: i32, %arg1: i32) -> (i32, i32, i32) {
    %c0_i32 = arith.constant 0 : i32
    %c0_i32_0 = arith.constant 0 : i32
    return %arg0, %arg1, %c0_i32 : i32, i32, i32
  }
}

module attributes {stable_mosaic.version = 11 : i64} {
  func.func @_self_attn_kernel(%arg0: i32, %arg1: memref<1x16x32xf32, #tpu.memory_space<vmem>>, %arg2: memref<32x96xbf16, #tpu.memory_space<vmem>>, %arg3: memref<1x96xf32, #tpu.memory_space<vmem>>, %arg4: memref<1x16x1xf32, #tpu.memory_space<vmem>>, %arg5: memref<1x1x16xf32, #tpu.memory_space<vmem>>, %arg6: memref<1x4x16x8xbf16, #tpu.memory_space<vmem>>) attributes {dimension_semantics = [#tpu.dimension_semantics<parallel>], iteration_bounds = array<i64: 2>, scalar_prefetch = 0 : i64, scratch_operands = 0 : i64, tpu.core_type = #tpu.core_type<tc>, window_params = [{transform_indices = @transform_0, window_bounds = array<i64: 1, 16, 32>}, {pipeline_mode = #tpu.pipeline_mode<synchronous>, transform_indices = @transform_1, window_bounds = array<i64: 32, 96>}, {pipeline_mode = #tpu.pipeline_mode<synchronous>, transform_indices = @transform_2, window_bounds = array<i64: 1, 96>}, {transform_indices = @transform_3, window_bounds = array<i64: 1, 16, 1>}, {transform_indices = @transform_4, window_bounds = array<i64: 1, 1, 16>}, {transform_indices = @transform_5, window_bounds = array<i64: 1, 4, 16, 8>}]} {
    %c0 = arith.constant 0 : index
    %c0_0 = arith.constant 0 : index
    %c0_1 = arith.constant 0 : index
    %0 = vector.load %arg1[%c0, %c0_0, %c0_1] : memref<1x16x32xf32, #tpu.memory_space<vmem>>, vector<1x16x32xf32>
    %1 = vector.shape_cast %0 : vector<1x16x32xf32> to vector<16x32xf32>
    %2 = arith.truncf %1 : vector<16x32xf32> to vector<16x32xbf16>
    %c0_2 = arith.constant 0 : index
    %c0_3 = arith.constant 0 : index
    %3 = vector.load %arg2[%c0_2, %c0_3] : memref<32x96xbf16, #tpu.memory_space<vmem>>, vector<32x96xbf16>
    %cst = arith.constant dense<0.000000e+00> : vector<16x96xf32>
    %4 = tpu.matmul %2, %3, %cst {dimension_numbers = #tpu.dot_dimension_numbers<[1], [0], [0], [1], [0, 0, 1, 1], [], []>} : vector<16x32xbf16>, vector<32x96xbf16>, vector<16x96xf32> -> vector<16x96xf32>
    %c0_4 = arith.constant 0 : index
    %c0_5 = arith.constant 0 : index
    %5 = vector.load %arg3[%c0_4, %c0_5] : memref<1x96xf32, #tpu.memory_space<vmem>>, vector<1x96xf32>
    %6 = vector.broadcast %5 : vector<1x96xf32> to vector<16x96xf32>
    %7 = arith.addf %4, %6 : vector<16x96xf32>
    %c0_6 = arith.constant 0 : index
    %c0_7 = arith.constant 0 : index
    %c0_8 = arith.constant 0 : index
    %8 = vector.load %arg4[%c0_6, %c0_7, %c0_8] : memref<1x16x1xf32, #tpu.memory_space<vmem>>, vector<1x16x1xf32>
    %9 = vector.shape_cast %8 : vector<1x16x1xf32> to vector<16x1xf32>
    %c0_9 = arith.constant 0 : index
    %c0_10 = arith.constant 0 : index
    %c0_11 = arith.constant 0 : index
    %10 = vector.load %arg5[%c0_9, %c0_10, %c0_11] : memref<1x1x16xf32, #tpu.memory_space<vmem>>, vector<1x1x16xf32>
    %11 = vector.shape_cast %10 : vector<1x1x16xf32> to vector<1x16xf32>
    %12 = vector.broadcast %9 : vector<16x1xf32> to vector<16x16xf32>
    %13 = vector.broadcast %11 : vector<1x16xf32> to vector<16x16xf32>
    %14 = arith.mulf %12, %13 : vector<16x16xf32>
    %cst_12 = arith.constant 0.000000e+00 : f32
    %15 = vector.broadcast %cst_12 : f32 to vector<16x16xf32>
    %16 = arith.cmpf one, %14, %15 : vector<16x16xf32>
    %17 = vector.extract_strided_slice %7 {offsets = [0, 0], sizes = [16, 8], strides = [1, 1]} : vector<16x96xf32> to vector<16x8xf32>
    %18 = arith.truncf %17 : vector<16x8xf32> to vector<16x8xbf16>
    %19 = vector.extract_strided_slice %7 {offsets = [0, 32], sizes = [16, 8], strides = [1, 1]} : vector<16x96xf32> to vector<16x8xf32>
    %20 = arith.truncf %19 : vector<16x8xf32> to vector<16x8xbf16>
    %21 = vector.extract_strided_slice %7 {offsets = [0, 64], sizes = [16, 8], strides = [1, 1]} : vector<16x96xf32> to vector<16x8xf32>
    %22 = arith.truncf %21 : vector<16x8xf32> to vector<16x8xbf16>
    %cst_13 = arith.constant dense<0.000000e+00> : vector<16x16xf32>
    %23 = tpu.matmul %18, %20, %cst_13 {dimension_numbers = #tpu.dot_dimension_numbers<[1], [1], [0], [0], [0, 0, 1, 0], [], []>} : vector<16x8xbf16>, vector<16x8xbf16>, vector<16x16xf32> -> vector<16x16xf32>
    %cst_14 = arith.constant 0.353553385 : f32
    %24 = vector.broadcast %cst_14 : f32 to vector<16x16xf32>
    %25 = arith.mulf %23, %24 : vector<16x16xf32>
    %cst_15 = arith.constant -1.000000e+09 : f32
    %26 = vector.broadcast %cst_15 : f32 to vector<16x16xf32>
    %27 = arith.select %16, %25, %26 : vector<16x16xi1>, vector<16x16xf32>
    %cst_16 = arith.constant dense<0xFF800000> : vector<16xf32>
    %28 = vector.multi_reduction <maximumf>, %27, %cst_16 [1] : vector<16x16xf32> to vector<16xf32>
    %29 = vector.shape_cast %28 : vector<16xf32> to vector<16x1xf32>
    %30 = vector.broadcast %29 : vector<16x1xf32> to vector<16x16xf32>
    %31 = arith.subf %27, %30 : vector<16x16xf32>
    %32 = math.exp %31 : vector<16x16xf32>
    %cst_17 = arith.constant dense<0.000000e+00> : vector<16xf32>
    %33 = vector.multi_reduction <add>, %32, %cst_17 [1] : vector<16x16xf32> to vector<16xf32>
    %34 = vector.shape_cast %33 : vector<16xf32> to vector<16x1xf32>
    %35 = tpu.reciprocal %34 {approx = true} : vector<16x1xf32> -> vector<16x1xf32>
    %36 = vector.broadcast %35 : vector<16x1xf32> to vector<16x16xf32>
    %37 = arith.mulf %32, %36 : vector<16x16xf32>
    %38 = arith.truncf %37 : vector<16x16xf32> to vector<16x16xbf16>
    %cst_18 = arith.constant dense<0.000000e+00> : vector<16x8xf32>
    %39 = tpu.matmul %38, %22, %cst_18 {dimension_numbers = #tpu.dot_dimension_numbers<[1], [0], [0], [1], [0, 0, 1, 1], [], []>} : vector<16x16xbf16>, vector<16x8xbf16>, vector<16x8xf32> -> vector<16x8xf32>
    %40 = arith.truncf %39 : vector<16x8xf32> to vector<16x8xbf16>
    %c0_19 = arith.constant 0 : index
    %c0_20 = arith.constant 0 : index
    %c0_21 = arith.constant 0 : index
    %c0_22 = arith.constant 0 : index
    %41 = vector.load %arg6[%c0_19, %c0_20, %c0_21, %c0_22] : memref<1x4x16x8xbf16, #tpu.memory_space<vmem>>, vector<1x1x16x8xbf16>
    %42 = vector.shape_cast %41 : vector<1x1x16x8xbf16> to vector<16x8xbf16>
    %43 = vector.shape_cast %40 : vector<16x8xbf16> to vector<1x1x16x8xbf16>
    tpu.vector_store %arg6[%c0_19, %c0_20, %c0_21, %c0_22], %43 {strides = array<i32>} : memref<1x4x16x8xbf16, #tpu.memory_space<vmem>>, vector<1x1x16x8xbf16>,
    %44 = vector.extract_strided_slice %7 {offsets = [0, 8], sizes = [16, 8], strides = [1, 1]} : vector<16x96xf32> to vector<16x8xf32>
    %45 = arith.truncf %44 : vector<16x8xf32> to vector<16x8xbf16>
    %46 = vector.extract_strided_slice %7 {offsets = [0, 40], sizes = [16, 8], strides = [1, 1]} : vector<16x96xf32> to vector<16x8xf32>
    %47 = arith.truncf %46 : vector<16x8xf32> to vector<16x8xbf16>
    %48 = vector.extract_strided_slice %7 {offsets = [0, 72], sizes = [16, 8], strides = [1, 1]} : vector<16x96xf32> to vector<16x8xf32>
    %49 = arith.truncf %48 : vector<16x8xf32> to vector<16x8xbf16>
    %cst_23 = arith.constant dense<0.000000e+00> : vector<16x16xf32>
    %50 = tpu.matmul %45, %47, %cst_23 {dimension_numbers = #tpu.dot_dimension_numbers<[1], [1], [0], [0], [0, 0, 1, 0], [], []>} : vector<16x8xbf16>, vector<16x8xbf16>, vector<16x16xf32> -> vector<16x16xf32>
    %cst_24 = arith.constant 0.353553385 : f32
    %51 = vector.broadcast %cst_24 : f32 to vector<16x16xf32>
    %52 = arith.mulf %50, %51 : vector<16x16xf32>
    %cst_25 = arith.constant -1.000000e+09 : f32
    %53 = vector.broadcast %cst_25 : f32 to vector<16x16xf32>
    %54 = arith.select %16, %52, %53 : vector<16x16xi1>, vector<16x16xf32>
    %cst_26 = arith.constant dense<0xFF800000> : vector<16xf32>
    %55 = vector.multi_reduction <maximumf>, %54, %cst_26 [1] : vector<16x16xf32> to vector<16xf32>
    %56 = vector.shape_cast %55 : vector<16xf32> to vector<16x1xf32>
    %57 = vector.broadcast %56 : vector<16x1xf32> to vector<16x16xf32>
    %58 = arith.subf %54, %57 : vector<16x16xf32>
    %59 = math.exp %58 : vector<16x16xf32>
    %cst_27 = arith.constant dense<0.000000e+00> : vector<16xf32>
    %60 = vector.multi_reduction <add>, %59, %cst_27 [1] : vector<16x16xf32> to vector<16xf32>
    %61 = vector.shape_cast %60 : vector<16xf32> to vector<16x1xf32>
    %62 = tpu.reciprocal %61 {approx = true} : vector<16x1xf32> -> vector<16x1xf32>
    %63 = vector.broadcast %62 : vector<16x1xf32> to vector<16x16xf32>
    %64 = arith.mulf %59, %63 : vector<16x16xf32>
    %65 = arith.truncf %64 : vector<16x16xf32> to vector<16x16xbf16>
    %cst_28 = arith.constant dense<0.000000e+00> : vector<16x8xf32>
    %66 = tpu.matmul %65, %49, %cst_28 {dimension_numbers = #tpu.dot_dimension_numbers<[1], [0], [0], [1], [0, 0, 1, 1], [], []>} : vector<16x16xbf16>, vector<16x8xbf16>, vector<16x8xf32> -> vector<16x8xf32>
    %67 = arith.truncf %66 : vector<16x8xf32> to vector<16x8xbf16>
    %c0_29 = arith.constant 0 : index
    %c1 = arith.constant 1 : index
    %c0_30 = arith.constant 0 : index
    %c0_31 = arith.constant 0 : index
    %68 = vector.load %arg6[%c0_29, %c1, %c0_30, %c0_31] : memref<1x4x16x8xbf16, #tpu.memory_space<vmem>>, vector<1x1x16x8xbf16>
    %69 = vector.shape_cast %68 : vector<1x1x16x8xbf16> to vector<16x8xbf16>
    %70 = vector.shape_cast %67 : vector<16x8xbf16> to vector<1x1x16x8xbf16>
    tpu.vector_store %arg6[%c0_29, %c1, %c0_30, %c0_31], %70 {strides = array<i32>} : memref<1x4x16x8xbf16, #tpu.memory_space<vmem>>, vector<1x1x16x8xbf16>,
    %71 = vector.extract_strided_slice %7 {offsets = [0, 16], sizes = [16, 8], strides = [1, 1]} : vector<16x96xf32> to vector<16x8xf32>
    %72 = arith.truncf %71 : vector<16x8xf32> to vector<16x8xbf16>
    %73 = vector.extract_strided_slice %7 {offsets = [0, 48], sizes = [16, 8], strides = [1, 1]} : vector<16x96xf32> to vector<16x8xf32>
    %74 = arith.truncf %73 : vector<16x8xf32> to vector<16x8xbf16>
    %75 = vector.extract_strided_slice %7 {offsets = [0, 80], sizes = [16, 8], strides = [1, 1]} : vector<16x96xf32> to vector<16x8xf32>
    %76 = arith.truncf %75 : vector<16x8xf32> to vector<16x8xbf16>
    %cst_32 = arith.constant dense<0.000000e+00> : vector<16x16xf32>
    %77 = tpu.matmul %72, %74, %cst_32 {dimension_numbers = #tpu.dot_dimension_numbers<[1], [1], [0], [0], [0, 0, 1, 0], [], []>} : vector<16x8xbf16>, vector<16x8xbf16>, vector<16x16xf32> -> vector<16x16xf32>
    %cst_33 = arith.constant 0.353553385 : f32
    %78 = vector.broadcast %cst_33 : f32 to vector<16x16xf32>
    %79 = arith.mulf %77, %78 : vector<16x16xf32>
    %cst_34 = arith.constant -1.000000e+09 : f32
    %80 = vector.broadcast %cst_34 : f32 to vector<16x16xf32>
    %81 = arith.select %16, %79, %80 : vector<16x16xi1>, vector<16x16xf32>
    %cst_35 = arith.constant dense<0xFF800000> : vector<16xf32>
    %82 = vector.multi_reduction <maximumf>, %81, %cst_35 [1] : vector<16x16xf32> to vector<16xf32>
    %83 = vector.shape_cast %82 : vector<16xf32> to vector<16x1xf32>
    %84 = vector.broadcast %83 : vector<16x1xf32> to vector<16x16xf32>
    %85 = arith.subf %81, %84 : vector<16x16xf32>
    %86 = math.exp %85 : vector<16x16xf32>
    %cst_36 = arith.constant dense<0.000000e+00> : vector<16xf32>
    %87 = vector.multi_reduction <add>, %86, %cst_36 [1] : vector<16x16xf32> to vector<16xf32>
    %88 = vector.shape_cast %87 : vector<16xf32> to vector<16x1xf32>
    %89 = tpu.reciprocal %88 {approx = true} : vector<16x1xf32> -> vector<16x1xf32>
    %90 = vector.broadcast %89 : vector<16x1xf32> to vector<16x16xf32>
    %91 = arith.mulf %86, %90 : vector<16x16xf32>
    %92 = arith.truncf %91 : vector<16x16xf32> to vector<16x16xbf16>
    %cst_37 = arith.constant dense<0.000000e+00> : vector<16x8xf32>
    %93 = tpu.matmul %92, %76, %cst_37 {dimension_numbers = #tpu.dot_dimension_numbers<[1], [0], [0], [1], [0, 0, 1, 1], [], []>} : vector<16x16xbf16>, vector<16x8xbf16>, vector<16x8xf32> -> vector<16x8xf32>
    %94 = arith.truncf %93 : vector<16x8xf32> to vector<16x8xbf16>
    %c0_38 = arith.constant 0 : index
    %c2 = arith.constant 2 : index
    %c0_39 = arith.constant 0 : index
    %c0_40 = arith.constant 0 : index
    %95 = vector.load %arg6[%c0_38, %c2, %c0_39, %c0_40] : memref<1x4x16x8xbf16, #tpu.memory_space<vmem>>, vector<1x1x16x8xbf16>
    %96 = vector.shape_cast %95 : vector<1x1x16x8xbf16> to vector<16x8xbf16>
    %97 = vector.shape_cast %94 : vector<16x8xbf16> to vector<1x1x16x8xbf16>
    tpu.vector_store %arg6[%c0_38, %c2, %c0_39, %c0_40], %97 {strides = array<i32>} : memref<1x4x16x8xbf16, #tpu.memory_space<vmem>>, vector<1x1x16x8xbf16>,
    %98 = vector.extract_strided_slice %7 {offsets = [0, 24], sizes = [16, 8], strides = [1, 1]} : vector<16x96xf32> to vector<16x8xf32>
    %99 = arith.truncf %98 : vector<16x8xf32> to vector<16x8xbf16>
    %100 = vector.extract_strided_slice %7 {offsets = [0, 56], sizes = [16, 8], strides = [1, 1]} : vector<16x96xf32> to vector<16x8xf32>
    %101 = arith.truncf %100 : vector<16x8xf32> to vector<16x8xbf16>
    %102 = vector.extract_strided_slice %7 {offsets = [0, 88], sizes = [16, 8], strides = [1, 1]} : vector<16x96xf32> to vector<16x8xf32>
    %103 = arith.truncf %102 : vector<16x8xf32> to vector<16x8xbf16>
    %cst_41 = arith.constant dense<0.000000e+00> : vector<16x16xf32>
    %104 = tpu.matmul %99, %101, %cst_41 {dimension_numbers = #tpu.dot_dimension_numbers<[1], [1], [0], [0], [0, 0, 1, 0], [], []>} : vector<16x8xbf16>, vector<16x8xbf16>, vector<16x16xf32> -> vector<16x16xf32>
    %cst_42 = arith.constant 0.353553385 : f32
    %105 = vector.broadcast %cst_42 : f32 to vector<16x16xf32>
    %106 = arith.mulf %104, %105 : vector<16x16xf32>
    %cst_43 = arith.constant -1.000000e+09 : f32
    %107 = vector.broadcast %cst_43 : f32 to vector<16x16xf32>
    %108 = arith.select %16, %106, %107 : vector<16x16xi1>, vector<16x16xf32>
    %cst_44 = arith.constant dense<0xFF800000> : vector<16xf32>
    %109 = vector.multi_reduction <maximumf>, %108, %cst_44 [1] : vector<16x16xf32> to vector<16xf32>
    %110 = vector.shape_cast %109 : vector<16xf32> to vector<16x1xf32>
    %111 = vector.broadcast %110 : vector<16x1xf32> to vector<16x16xf32>
    %112 = arith.subf %108, %111 : vector<16x16xf32>
    %113 = math.exp %112 : vector<16x16xf32>
    %cst_45 = arith.constant dense<0.000000e+00> : vector<16xf32>
    %114 = vector.multi_reduction <add>, %113, %cst_45 [1] : vector<16x16xf32> to vector<16xf32>
    %115 = vector.shape_cast %114 : vector<16xf32> to vector<16x1xf32>
    %116 = tpu.reciprocal %115 {approx = true} : vector<16x1xf32> -> vector<16x1xf32>
    %117 = vector.broadcast %116 : vector<16x1xf32> to vector<16x16xf32>
    %118 = arith.mulf %113, %117 : vector<16x16xf32>
    %119 = arith.truncf %118 : vector<16x16xf32> to vector<16x16xbf16>
    %cst_46 = arith.constant dense<0.000000e+00> : vector<16x8xf32>
    %120 = tpu.matmul %119, %103, %cst_46 {dimension_numbers = #tpu.dot_dimension_numbers<[1], [0], [0], [1], [0, 0, 1, 1], [], []>} : vector<16x16xbf16>, vector<16x8xbf16>, vector<16x8xf32> -> vector<16x8xf32>
    %121 = arith.truncf %120 : vector<16x8xf32> to vector<16x8xbf16>
    %c0_47 = arith.constant 0 : index
    %c3 = arith.constant 3 : index
    %c0_48 = arith.constant 0 : index
    %c0_49 = arith.constant 0 : index
    %122 = vector.load %arg6[%c0_47, %c3, %c0_48, %c0_49] : memref<1x4x16x8xbf16, #tpu.memory_space<vmem>>, vector<1x1x16x8xbf16>
    %123 = vector.shape_cast %122 : vector<1x1x16x8xbf16> to vector<16x8xbf16>
    %124 = vector.shape_cast %121 : vector<16x8xbf16> to vector<1x1x16x8xbf16>
    tpu.vector_store %arg6[%c0_47, %c3, %c0_48, %c0_49], %124 {strides = array<i32>} : memref<1x4x16x8xbf16, #tpu.memory_space<vmem>>, vector<1x1x16x8xbf16>,
    return
  }
  func.func @transform_0(%arg0: i32) -> (i32, i32, i32) {
    %c0_i32 = arith.constant 0 : i32
    %c0_i32_0 = arith.constant 0 : i32
    %c0_i32_1 = arith.constant 0 : i32
    return %arg0, %c0_i32, %c0_i32_0 : i32, i32, i32
  }
  func.func @transform_1(%arg0: i32) -> (i32, i32) {
    %c0_i32 = arith.constant 0 : i32
    %c0_i32_0 = arith.constant 0 : i32
    %c0_i32_1 = arith.constant 0 : i32
    return %c0_i32, %c0_i32_0 : i32, i32
  }
  func.func @transform_2(%arg0: i32) -> (i32, i32) {
    %c0_i32 = arith.constant 0 : i32
    %c0_i32_0 = arith.constant 0 : i32
    %c0_i32_1 = arith.constant 0 : i32
    return %c0_i32, %c0_i32_0 : i32, i32
  }
  func.func @transform_3(%arg0: i32) -> (i32, i32, i32) {
    %c0_i32 = arith.constant 0 : i32
    %c0_i32_0 = arith.constant 0 : i32
    %c0_i32_1 = arith.constant 0 : i32
    return %arg0, %c0_i32, %c0_i32_0 : i32, i32, i32
  }
  func.func @transform_4(%arg0: i32) -> (i32, i32, i32) {
    %c0_i32 = arith.constant 0 : i32
    %c0_i32_0 = arith.constant 0 : i32
    %c0_i32_1 = arith.constant 0 : i32
    return %arg0, %c0_i32, %c0_i32_0 : i32, i32, i32
  }
  func.func @transform_5(%arg0: i32) -> (i32, i32, i32, i32) {
    %c0_i32 = arith.constant 0 : i32
    %c0_i32_0 = arith.constant 0 : i32
    %c0_i32_1 = arith.constant 0 : i32
    %c0_i32_2 = arith.constant 0 : i32
    return %arg0, %c0_i32, %c0_i32_0, %c0_i32_1 : i32, i32, i32, i32
  }
}

module attributes {stable_mosaic.version = 11 : i64} {
  func.func @_linear_add_ln_kernel(%arg0: i32, %arg1: i32, %arg2: memref<1x16x32xbf16, #tpu.memory_space<vmem>>, %arg3: memref<32x32xbf16, #tpu.memory_space<vmem>>, %arg4: memref<1x32xf32, #tpu.memory_space<vmem>>, %arg5: memref<1x16x32xf32, #tpu.memory_space<vmem>>, %arg6: memref<1x32xf32, #tpu.memory_space<vmem>>, %arg7: memref<1x32xf32, #tpu.memory_space<vmem>>, %arg8: memref<1x16x32xf32, #tpu.memory_space<vmem>>) attributes {dimension_semantics = [#tpu.dimension_semantics<parallel>, #tpu.dimension_semantics<parallel>], iteration_bounds = array<i64: 2, 1>, scalar_prefetch = 0 : i64, scratch_operands = 0 : i64, tpu.core_type = #tpu.core_type<tc>, window_params = [{transform_indices = @transform_0, window_bounds = array<i64: 1, 16, 32>}, {pipeline_mode = #tpu.pipeline_mode<synchronous>, transform_indices = @transform_1, window_bounds = array<i64: 32, 32>}, {pipeline_mode = #tpu.pipeline_mode<synchronous>, transform_indices = @transform_2, window_bounds = array<i64: 1, 32>}, {transform_indices = @transform_3, window_bounds = array<i64: 1, 16, 32>}, {pipeline_mode = #tpu.pipeline_mode<synchronous>, transform_indices = @transform_4, window_bounds = array<i64: 1, 32>}, {pipeline_mode = #tpu.pipeline_mode<synchronous>, transform_indices = @transform_5, window_bounds = array<i64: 1, 32>}, {transform_indices = @transform_6, window_bounds = array<i64: 1, 16, 32>}]} {
    %c0 = arith.constant 0 : index
    %c0_0 = arith.constant 0 : index
    %c0_1 = arith.constant 0 : index
    %0 = vector.load %arg2[%c0, %c0_0, %c0_1] : memref<1x16x32xbf16, #tpu.memory_space<vmem>>, vector<1x16x32xbf16>
    %1 = vector.shape_cast %0 : vector<1x16x32xbf16> to vector<16x32xbf16>
    %c0_2 = arith.constant 0 : index
    %c0_3 = arith.constant 0 : index
    %2 = vector.load %arg3[%c0_2, %c0_3] : memref<32x32xbf16, #tpu.memory_space<vmem>>, vector<32x32xbf16>
    %cst = arith.constant dense<0.000000e+00> : vector<16x32xf32>
    %3 = tpu.matmul %1, %2, %cst {dimension_numbers = #tpu.dot_dimension_numbers<[1], [0], [0], [1], [0, 0, 1, 1], [], []>} : vector<16x32xbf16>, vector<32x32xbf16>, vector<16x32xf32> -> vector<16x32xf32>
    %c0_4 = arith.constant 0 : index
    %c0_5 = arith.constant 0 : index
    %4 = vector.load %arg4[%c0_4, %c0_5] : memref<1x32xf32, #tpu.memory_space<vmem>>, vector<1x32xf32>
    %5 = vector.broadcast %4 : vector<1x32xf32> to vector<16x32xf32>
    %6 = arith.addf %3, %5 : vector<16x32xf32>
    %c0_6 = arith.constant 0 : index
    %c0_7 = arith.constant 0 : index
    %c0_8 = arith.constant 0 : index
    %7 = vector.load %arg5[%c0_6, %c0_7, %c0_8] : memref<1x16x32xf32, #tpu.memory_space<vmem>>, vector<1x16x32xf32>
    %8 = vector.shape_cast %7 : vector<1x16x32xf32> to vector<16x32xf32>
    %9 = arith.addf %8, %6 : vector<16x32xf32>
    %cst_9 = arith.constant dense<0.000000e+00> : vector<16xf32>
    %10 = vector.multi_reduction <add>, %9, %cst_9 [1] : vector<16x32xf32> to vector<16xf32>
    %11 = vector.shape_cast %10 : vector<16xf32> to vector<16x1xf32>
    %cst_10 = arith.constant 3.200000e+01 : f32
    %12 = vector.broadcast %cst_10 : f32 to vector<16x1xf32>
    %13 = arith.divf %11, %12 : vector<16x1xf32>
    %14 = vector.broadcast %13 : vector<16x1xf32> to vector<16x32xf32>
    %15 = arith.subf %9, %14 : vector<16x32xf32>
    %16 = arith.mulf %15, %15 : vector<16x32xf32>
    %cst_11 = arith.constant dense<0.000000e+00> : vector<16xf32>
    %17 = vector.multi_reduction <add>, %16, %cst_11 [1] : vector<16x32xf32> to vector<16xf32>
    %18 = vector.shape_cast %17 : vector<16xf32> to vector<16x1xf32>
    %cst_12 = arith.constant 3.200000e+01 : f32
    %19 = vector.broadcast %cst_12 : f32 to vector<16x1xf32>
    %20 = arith.divf %18, %19 : vector<16x1xf32>
    %cst_13 = arith.constant 9.99999974E-6 : f32
    %21 = vector.broadcast %cst_13 : f32 to vector<16x1xf32>
    %22 = arith.addf %20, %21 : vector<16x1xf32>
    %23 = math.rsqrt %22 : vector<16x1xf32>
    %24 = vector.broadcast %23 : vector<16x1xf32> to vector<16x32xf32>
    %25 = arith.mulf %15, %24 : vector<16x32xf32>
    %c0_14 = arith.constant 0 : index
    %c0_15 = arith.constant 0 : index
    %26 = vector.load %arg6[%c0_14, %c0_15] : memref<1x32xf32, #tpu.memory_space<vmem>>, vector<1x32xf32>
    %27 = vector.broadcast %26 : vector<1x32xf32> to vector<16x32xf32>
    %28 = arith.mulf %25, %27 : vector<16x32xf32>
    %c0_16 = arith.constant 0 : index
    %c0_17 = arith.constant 0 : index
    %29 = vector.load %arg7[%c0_16, %c0_17] : memref<1x32xf32, #tpu.memory_space<vmem>>, vector<1x32xf32>
    %30 = vector.broadcast %29 : vector<1x32xf32> to vector<16x32xf32>
    %31 = arith.addf %28, %30 : vector<16x32xf32>
    %c0_18 = arith.constant 0 : index
    %c0_19 = arith.constant 0 : index
    %c0_20 = arith.constant 0 : index
    %32 = vector.load %arg8[%c0_18, %c0_19, %c0_20] : memref<1x16x32xf32, #tpu.memory_space<vmem>>, vector<1x16x32xf32>
    %33 = vector.shape_cast %32 : vector<1x16x32xf32> to vector<16x32xf32>
    %34 = vector.shape_cast %31 : vector<16x32xf32> to vector<1x16x32xf32>
    tpu.vector_store %arg8[%c0_18, %c0_19, %c0_20], %34 {strides = array<i32>} : memref<1x16x32xf32, #tpu.memory_space<vmem>>, vector<1x16x32xf32>,
    return
  }
  func.func @transform_0(%arg0: i32, %arg1: i32) -> (i32, i32, i32) {
    %c0_i32 = arith.constant 0 : i32
    %c0_i32_0 = arith.constant 0 : i32
    return %arg0, %arg1, %c0_i32 : i32, i32, i32
  }
  func.func @transform_1(%arg0: i32, %arg1: i32) -> (i32, i32) {
    %c0_i32 = arith.constant 0 : i32
    %c0_i32_0 = arith.constant 0 : i32
    %c0_i32_1 = arith.constant 0 : i32
    return %c0_i32, %c0_i32_0 : i32, i32
  }
  func.func @transform_2(%arg0: i32, %arg1: i32) -> (i32, i32) {
    %c0_i32 = arith.constant 0 : i32
    %c0_i32_0 = arith.constant 0 : i32
    %c0_i32_1 = arith.constant 0 : i32
    return %c0_i32, %c0_i32_0 : i32, i32
  }
  func.func @transform_3(%arg0: i32, %arg1: i32) -> (i32, i32, i32) {
    %c0_i32 = arith.constant 0 : i32
    %c0_i32_0 = arith.constant 0 : i32
    return %arg0, %arg1, %c0_i32 : i32, i32, i32
  }
  func.func @transform_4(%arg0: i32, %arg1: i32) -> (i32, i32) {
    %c0_i32 = arith.constant 0 : i32
    %c0_i32_0 = arith.constant 0 : i32
    %c0_i32_1 = arith.constant 0 : i32
    return %c0_i32, %c0_i32_0 : i32, i32
  }
  func.func @transform_5(%arg0: i32, %arg1: i32) -> (i32, i32) {
    %c0_i32 = arith.constant 0 : i32
    %c0_i32_0 = arith.constant 0 : i32
    %c0_i32_1 = arith.constant 0 : i32
    return %c0_i32, %c0_i32_0 : i32, i32
  }
  func.func @transform_6(%arg0: i32, %arg1: i32) -> (i32, i32, i32) {
    %c0_i32 = arith.constant 0 : i32
    %c0_i32_0 = arith.constant 0 : i32
    return %arg0, %arg1, %c0_i32 : i32, i32, i32
  }
}

module attributes {stable_mosaic.version = 11 : i64} {
  func.func @_ffn_ln_kernel(%arg0: i32, %arg1: i32, %arg2: i32, %arg3: memref<1x16x32xf32, #tpu.memory_space<vmem>>, %arg4: memref<32x64xbf16, #tpu.memory_space<vmem>>, %arg5: memref<1x64xf32, #tpu.memory_space<vmem>>, %arg6: memref<64x32xbf16, #tpu.memory_space<vmem>>, %arg7: memref<1x32xf32, #tpu.memory_space<vmem>>, %arg8: memref<1x32xf32, #tpu.memory_space<vmem>>, %arg9: memref<1x32xf32, #tpu.memory_space<vmem>>, %arg10: memref<1x16x32xf32, #tpu.memory_space<vmem>>, %arg11: memref<16x32xf32, #tpu.memory_space<vmem>>) attributes {dimension_semantics = [#tpu.dimension_semantics<parallel>, #tpu.dimension_semantics<parallel>, #tpu.dimension_semantics<arbitrary>], iteration_bounds = array<i64: 2, 1, 1>, scalar_prefetch = 0 : i64, scratch_operands = 1 : i64, tpu.core_type = #tpu.core_type<tc>, window_params = [{transform_indices = @transform_0, window_bounds = array<i64: 1, 16, 32>}, {transform_indices = @transform_1, window_bounds = array<i64: 32, 64>}, {transform_indices = @transform_2, window_bounds = array<i64: 1, 64>}, {transform_indices = @transform_3, window_bounds = array<i64: 64, 32>}, {pipeline_mode = #tpu.pipeline_mode<synchronous>, transform_indices = @transform_4, window_bounds = array<i64: 1, 32>}, {pipeline_mode = #tpu.pipeline_mode<synchronous>, transform_indices = @transform_5, window_bounds = array<i64: 1, 32>}, {pipeline_mode = #tpu.pipeline_mode<synchronous>, transform_indices = @transform_6, window_bounds = array<i64: 1, 32>}, {transform_indices = @transform_7, window_bounds = array<i64: 1, 16, 32>}]} {
    %c0_i32 = arith.constant 0 : i32
    %0 = arith.cmpi eq, %arg2, %c0_i32 : i32
    %1 = arith.extui %0 : i1 to i32
    %c0_i32_0 = arith.constant 0 : i32
    %2 = arith.cmpi ne, %1, %c0_i32_0 : i32
    scf.if %2 {
      %cst_16 = arith.constant 0.000000e+00 : f32
      %21 = vector.broadcast %cst_16 : f32 to vector<16x32xf32>
      %c0_17 = arith.constant 0 : index
      %c0_18 = arith.constant 0 : index
      %22 = vector.load %arg11[%c0_17, %c0_18] : memref<16x32xf32, #tpu.memory_space<vmem>>, vector<16x32xf32>
      tpu.vector_store %arg11[%c0_17, %c0_18], %21 {strides = array<i32>} : memref<16x32xf32, #tpu.memory_space<vmem>>, vector<16x32xf32>,
    } else {
    }
    %c0 = arith.constant 0 : index
    %c0_1 = arith.constant 0 : index
    %c0_2 = arith.constant 0 : index
    %3 = vector.load %arg3[%c0, %c0_1, %c0_2] : memref<1x16x32xf32, #tpu.memory_space<vmem>>, vector<1x16x32xf32>
    %4 = vector.shape_cast %3 : vector<1x16x32xf32> to vector<16x32xf32>
    %5 = arith.truncf %4 : vector<16x32xf32> to vector<16x32xbf16>
    %c0_3 = arith.constant 0 : index
    %c0_4 = arith.constant 0 : index
    %6 = vector.load %arg4[%c0_3, %c0_4] : memref<32x64xbf16, #tpu.memory_space<vmem>>, vector<32x64xbf16>
    %cst = arith.constant dense<0.000000e+00> : vector<16x64xf32>
    %7 = tpu.matmul %5, %6, %cst {dimension_numbers = #tpu.dot_dimension_numbers<[1], [0], [0], [1], [0, 0, 1, 1], [], []>} : vector<16x32xbf16>, vector<32x64xbf16>, vector<16x64xf32> -> vector<16x64xf32>
    %c0_5 = arith.constant 0 : index
    %c0_6 = arith.constant 0 : index
    %8 = vector.load %arg5[%c0_5, %c0_6] : memref<1x64xf32, #tpu.memory_space<vmem>>, vector<1x64xf32>
    %9 = vector.broadcast %8 : vector<1x64xf32> to vector<16x64xf32>
    %10 = arith.addf %7, %9 : vector<16x64xf32>
    %11 = math.tanh %10 : vector<16x64xf32>
    %c0_7 = arith.constant 0 : index
    %c0_8 = arith.constant 0 : index
    %12 = vector.load %arg11[%c0_7, %c0_8] : memref<16x32xf32, #tpu.memory_space<vmem>>, vector<16x32xf32>
    %13 = arith.truncf %11 : vector<16x64xf32> to vector<16x64xbf16>
    %c0_9 = arith.constant 0 : index
    %c0_10 = arith.constant 0 : index
    %14 = vector.load %arg6[%c0_9, %c0_10] : memref<64x32xbf16, #tpu.memory_space<vmem>>, vector<64x32xbf16>
    %cst_11 = arith.constant dense<0.000000e+00> : vector<16x32xf32>
    %15 = tpu.matmul %13, %14, %cst_11 {dimension_numbers = #tpu.dot_dimension_numbers<[1], [0], [0], [1], [0, 0, 1, 1], [], []>} : vector<16x64xbf16>, vector<64x32xbf16>, vector<16x32xf32> -> vector<16x32xf32>
    %16 = arith.addf %12, %15 : vector<16x32xf32>
    %c0_12 = arith.constant 0 : index
    %c0_13 = arith.constant 0 : index
    %17 = vector.load %arg11[%c0_12, %c0_13] : memref<16x32xf32, #tpu.memory_space<vmem>>, vector<16x32xf32>
    tpu.vector_store %arg11[%c0_12, %c0_13], %16 {strides = array<i32>} : memref<16x32xf32, #tpu.memory_space<vmem>>, vector<16x32xf32>,
    %c0_i32_14 = arith.constant 0 : i32
    %18 = arith.cmpi eq, %arg2, %c0_i32_14 : i32
    %19 = arith.extui %18 : i1 to i32
    %c0_i32_15 = arith.constant 0 : i32
    %20 = arith.cmpi ne, %19, %c0_i32_15 : i32
    scf.if %20 {
      %c0_16 = arith.constant 0 : index
      %c0_17 = arith.constant 0 : index
      %c0_18 = arith.constant 0 : index
      %21 = vector.load %arg3[%c0_16, %c0_17, %c0_18] : memref<1x16x32xf32, #tpu.memory_space<vmem>>, vector<1x16x32xf32>
      %22 = vector.shape_cast %21 : vector<1x16x32xf32> to vector<16x32xf32>
      %c0_19 = arith.constant 0 : index
      %c0_20 = arith.constant 0 : index
      %23 = vector.load %arg11[%c0_19, %c0_20] : memref<16x32xf32, #tpu.memory_space<vmem>>, vector<16x32xf32>
      %24 = arith.addf %22, %23 : vector<16x32xf32>
      %c0_21 = arith.constant 0 : index
      %c0_22 = arith.constant 0 : index
      %25 = vector.load %arg7[%c0_21, %c0_22] : memref<1x32xf32, #tpu.memory_space<vmem>>, vector<1x32xf32>
      %26 = vector.broadcast %25 : vector<1x32xf32> to vector<16x32xf32>
      %27 = arith.addf %24, %26 : vector<16x32xf32>
      %cst_23 = arith.constant dense<0.000000e+00> : vector<16xf32>
      %28 = vector.multi_reduction <add>, %27, %cst_23 [1] : vector<16x32xf32> to vector<16xf32>
      %29 = vector.shape_cast %28 : vector<16xf32> to vector<16x1xf32>
      %cst_24 = arith.constant 3.200000e+01 : f32
      %30 = vector.broadcast %cst_24 : f32 to vector<16x1xf32>
      %31 = arith.divf %29, %30 : vector<16x1xf32>
      %32 = vector.broadcast %31 : vector<16x1xf32> to vector<16x32xf32>
      %33 = arith.subf %27, %32 : vector<16x32xf32>
      %34 = arith.mulf %33, %33 : vector<16x32xf32>
      %cst_25 = arith.constant dense<0.000000e+00> : vector<16xf32>
      %35 = vector.multi_reduction <add>, %34, %cst_25 [1] : vector<16x32xf32> to vector<16xf32>
      %36 = vector.shape_cast %35 : vector<16xf32> to vector<16x1xf32>
      %cst_26 = arith.constant 3.200000e+01 : f32
      %37 = vector.broadcast %cst_26 : f32 to vector<16x1xf32>
      %38 = arith.divf %36, %37 : vector<16x1xf32>
      %cst_27 = arith.constant 9.99999974E-6 : f32
      %39 = vector.broadcast %cst_27 : f32 to vector<16x1xf32>
      %40 = arith.addf %38, %39 : vector<16x1xf32>
      %41 = math.rsqrt %40 : vector<16x1xf32>
      %42 = vector.broadcast %41 : vector<16x1xf32> to vector<16x32xf32>
      %43 = arith.mulf %33, %42 : vector<16x32xf32>
      %c0_28 = arith.constant 0 : index
      %c0_29 = arith.constant 0 : index
      %44 = vector.load %arg8[%c0_28, %c0_29] : memref<1x32xf32, #tpu.memory_space<vmem>>, vector<1x32xf32>
      %45 = vector.broadcast %44 : vector<1x32xf32> to vector<16x32xf32>
      %46 = arith.mulf %43, %45 : vector<16x32xf32>
      %c0_30 = arith.constant 0 : index
      %c0_31 = arith.constant 0 : index
      %47 = vector.load %arg9[%c0_30, %c0_31] : memref<1x32xf32, #tpu.memory_space<vmem>>, vector<1x32xf32>
      %48 = vector.broadcast %47 : vector<1x32xf32> to vector<16x32xf32>
      %49 = arith.addf %46, %48 : vector<16x32xf32>
      %c0_32 = arith.constant 0 : index
      %c0_33 = arith.constant 0 : index
      %c0_34 = arith.constant 0 : index
      %50 = vector.load %arg10[%c0_32, %c0_33, %c0_34] : memref<1x16x32xf32, #tpu.memory_space<vmem>>, vector<1x16x32xf32>
      %51 = vector.shape_cast %50 : vector<1x16x32xf32> to vector<16x32xf32>
      %52 = vector.shape_cast %49 : vector<16x32xf32> to vector<1x16x32xf32>
      tpu.vector_store %arg10[%c0_32, %c0_33, %c0_34], %52 {strides = array<i32>} : memref<1x16x32xf32, #tpu.memory_space<vmem>>, vector<1x16x32xf32>,
    } else {
    }
    return
  }
  func.func @transform_0(%arg0: i32, %arg1: i32, %arg2: i32) -> (i32, i32, i32) {
    %c0_i32 = arith.constant 0 : i32
    %c0_i32_0 = arith.constant 0 : i32
    return %arg0, %arg1, %c0_i32 : i32, i32, i32
  }
  func.func @transform_1(%arg0: i32, %arg1: i32, %arg2: i32) -> (i32, i32) {
    %c0_i32 = arith.constant 0 : i32
    %c0_i32_0 = arith.constant 0 : i32
    return %c0_i32, %arg2 : i32, i32
  }
  func.func @transform_2(%arg0: i32, %arg1: i32, %arg2: i32) -> (i32, i32) {
    %c0_i32 = arith.constant 0 : i32
    %c0_i32_0 = arith.constant 0 : i32
    return %c0_i32, %arg2 : i32, i32
  }
  func.func @transform_3(%arg0: i32, %arg1: i32, %arg2: i32) -> (i32, i32) {
    %c0_i32 = arith.constant 0 : i32
    %c0_i32_0 = arith.constant 0 : i32
    return %arg2, %c0_i32 : i32, i32
  }
  func.func @transform_4(%arg0: i32, %arg1: i32, %arg2: i32) -> (i32, i32) {
    %c0_i32 = arith.constant 0 : i32
    %c0_i32_0 = arith.constant 0 : i32
    %c0_i32_1 = arith.constant 0 : i32
    return %c0_i32, %c0_i32_0 : i32, i32
  }
  func.func @transform_5(%arg0: i32, %arg1: i32, %arg2: i32) -> (i32, i32) {
    %c0_i32 = arith.constant 0 : i32
    %c0_i32_0 = arith.constant 0 : i32
    %c0_i32_1 = arith.constant 0 : i32
    return %c0_i32, %c0_i32_0 : i32, i32
  }
  func.func @transform_6(%arg0: i32, %arg1: i32, %arg2: i32) -> (i32, i32) {
    %c0_i32 = arith.constant 0 : i32
    %c0_i32_0 = arith.constant 0 : i32
    %c0_i32_1 = arith.constant 0 : i32
    return %c0_i32, %c0_i32_0 : i32, i32
  }
  func.func @transform_7(%arg0: i32, %arg1: i32, %arg2: i32) -> (i32, i32, i32) {
    %c0_i32 = arith.constant 0 : i32
    %c0_i32_0 = arith.constant 0 : i32
    return %arg0, %arg1, %c0_i32 : i32, i32, i32
  }
}

module attributes {stable_mosaic.version = 11 : i64} {
  func.func @_self_attn_kernel(%arg0: i32, %arg1: memref<1x16x32xf32, #tpu.memory_space<vmem>>, %arg2: memref<32x96xbf16, #tpu.memory_space<vmem>>, %arg3: memref<1x96xf32, #tpu.memory_space<vmem>>, %arg4: memref<1x16x1xf32, #tpu.memory_space<vmem>>, %arg5: memref<1x1x16xf32, #tpu.memory_space<vmem>>, %arg6: memref<1x4x16x8xbf16, #tpu.memory_space<vmem>>) attributes {dimension_semantics = [#tpu.dimension_semantics<parallel>], iteration_bounds = array<i64: 2>, scalar_prefetch = 0 : i64, scratch_operands = 0 : i64, tpu.core_type = #tpu.core_type<tc>, window_params = [{transform_indices = @transform_0, window_bounds = array<i64: 1, 16, 32>}, {pipeline_mode = #tpu.pipeline_mode<synchronous>, transform_indices = @transform_1, window_bounds = array<i64: 32, 96>}, {pipeline_mode = #tpu.pipeline_mode<synchronous>, transform_indices = @transform_2, window_bounds = array<i64: 1, 96>}, {transform_indices = @transform_3, window_bounds = array<i64: 1, 16, 1>}, {transform_indices = @transform_4, window_bounds = array<i64: 1, 1, 16>}, {transform_indices = @transform_5, window_bounds = array<i64: 1, 4, 16, 8>}]} {
    %c0 = arith.constant 0 : index
    %c0_0 = arith.constant 0 : index
    %c0_1 = arith.constant 0 : index
    %0 = vector.load %arg1[%c0, %c0_0, %c0_1] : memref<1x16x32xf32, #tpu.memory_space<vmem>>, vector<1x16x32xf32>
    %1 = vector.shape_cast %0 : vector<1x16x32xf32> to vector<16x32xf32>
    %2 = arith.truncf %1 : vector<16x32xf32> to vector<16x32xbf16>
    %c0_2 = arith.constant 0 : index
    %c0_3 = arith.constant 0 : index
    %3 = vector.load %arg2[%c0_2, %c0_3] : memref<32x96xbf16, #tpu.memory_space<vmem>>, vector<32x96xbf16>
    %cst = arith.constant dense<0.000000e+00> : vector<16x96xf32>
    %4 = tpu.matmul %2, %3, %cst {dimension_numbers = #tpu.dot_dimension_numbers<[1], [0], [0], [1], [0, 0, 1, 1], [], []>} : vector<16x32xbf16>, vector<32x96xbf16>, vector<16x96xf32> -> vector<16x96xf32>
    %c0_4 = arith.constant 0 : index
    %c0_5 = arith.constant 0 : index
    %5 = vector.load %arg3[%c0_4, %c0_5] : memref<1x96xf32, #tpu.memory_space<vmem>>, vector<1x96xf32>
    %6 = vector.broadcast %5 : vector<1x96xf32> to vector<16x96xf32>
    %7 = arith.addf %4, %6 : vector<16x96xf32>
    %c0_6 = arith.constant 0 : index
    %c0_7 = arith.constant 0 : index
    %c0_8 = arith.constant 0 : index
    %8 = vector.load %arg4[%c0_6, %c0_7, %c0_8] : memref<1x16x1xf32, #tpu.memory_space<vmem>>, vector<1x16x1xf32>
    %9 = vector.shape_cast %8 : vector<1x16x1xf32> to vector<16x1xf32>
    %c0_9 = arith.constant 0 : index
    %c0_10 = arith.constant 0 : index
    %c0_11 = arith.constant 0 : index
    %10 = vector.load %arg5[%c0_9, %c0_10, %c0_11] : memref<1x1x16xf32, #tpu.memory_space<vmem>>, vector<1x1x16xf32>
    %11 = vector.shape_cast %10 : vector<1x1x16xf32> to vector<1x16xf32>
    %12 = vector.broadcast %9 : vector<16x1xf32> to vector<16x16xf32>
    %13 = vector.broadcast %11 : vector<1x16xf32> to vector<16x16xf32>
    %14 = arith.mulf %12, %13 : vector<16x16xf32>
    %cst_12 = arith.constant 0.000000e+00 : f32
    %15 = vector.broadcast %cst_12 : f32 to vector<16x16xf32>
    %16 = arith.cmpf one, %14, %15 : vector<16x16xf32>
    %17 = tpu.iota {dimensions = array<i32: 0>} : vector<16x16xi32>
    %18 = tpu.iota {dimensions = array<i32: 1>} : vector<16x16xi32>
    %19 = arith.cmpi sle, %18, %17 : vector<16x16xi32>
    %20 = arith.andi %16, %19 : vector<16x16xi1>
    %21 = vector.extract_strided_slice %7 {offsets = [0, 0], sizes = [16, 8], strides = [1, 1]} : vector<16x96xf32> to vector<16x8xf32>
    %22 = arith.truncf %21 : vector<16x8xf32> to vector<16x8xbf16>
    %23 = vector.extract_strided_slice %7 {offsets = [0, 32], sizes = [16, 8], strides = [1, 1]} : vector<16x96xf32> to vector<16x8xf32>
    %24 = arith.truncf %23 : vector<16x8xf32> to vector<16x8xbf16>
    %25 = vector.extract_strided_slice %7 {offsets = [0, 64], sizes = [16, 8], strides = [1, 1]} : vector<16x96xf32> to vector<16x8xf32>
    %26 = arith.truncf %25 : vector<16x8xf32> to vector<16x8xbf16>
    %cst_13 = arith.constant dense<0.000000e+00> : vector<16x16xf32>
    %27 = tpu.matmul %22, %24, %cst_13 {dimension_numbers = #tpu.dot_dimension_numbers<[1], [1], [0], [0], [0, 0, 1, 0], [], []>} : vector<16x8xbf16>, vector<16x8xbf16>, vector<16x16xf32> -> vector<16x16xf32>
    %cst_14 = arith.constant 0.353553385 : f32
    %28 = vector.broadcast %cst_14 : f32 to vector<16x16xf32>
    %29 = arith.mulf %27, %28 : vector<16x16xf32>
    %cst_15 = arith.constant -1.000000e+09 : f32
    %30 = vector.broadcast %cst_15 : f32 to vector<16x16xf32>
    %31 = arith.select %20, %29, %30 : vector<16x16xi1>, vector<16x16xf32>
    %cst_16 = arith.constant dense<0xFF800000> : vector<16xf32>
    %32 = vector.multi_reduction <maximumf>, %31, %cst_16 [1] : vector<16x16xf32> to vector<16xf32>
    %33 = vector.shape_cast %32 : vector<16xf32> to vector<16x1xf32>
    %34 = vector.broadcast %33 : vector<16x1xf32> to vector<16x16xf32>
    %35 = arith.subf %31, %34 : vector<16x16xf32>
    %36 = math.exp %35 : vector<16x16xf32>
    %cst_17 = arith.constant dense<0.000000e+00> : vector<16xf32>
    %37 = vector.multi_reduction <add>, %36, %cst_17 [1] : vector<16x16xf32> to vector<16xf32>
    %38 = vector.shape_cast %37 : vector<16xf32> to vector<16x1xf32>
    %39 = tpu.reciprocal %38 {approx = true} : vector<16x1xf32> -> vector<16x1xf32>
    %40 = vector.broadcast %39 : vector<16x1xf32> to vector<16x16xf32>
    %41 = arith.mulf %36, %40 : vector<16x16xf32>
    %42 = arith.truncf %41 : vector<16x16xf32> to vector<16x16xbf16>
    %cst_18 = arith.constant dense<0.000000e+00> : vector<16x8xf32>
    %43 = tpu.matmul %42, %26, %cst_18 {dimension_numbers = #tpu.dot_dimension_numbers<[1], [0], [0], [1], [0, 0, 1, 1], [], []>} : vector<16x16xbf16>, vector<16x8xbf16>, vector<16x8xf32> -> vector<16x8xf32>
    %44 = arith.truncf %43 : vector<16x8xf32> to vector<16x8xbf16>
    %c0_19 = arith.constant 0 : index
    %c0_20 = arith.constant 0 : index
    %c0_21 = arith.constant 0 : index
    %c0_22 = arith.constant 0 : index
    %45 = vector.load %arg6[%c0_19, %c0_20, %c0_21, %c0_22] : memref<1x4x16x8xbf16, #tpu.memory_space<vmem>>, vector<1x1x16x8xbf16>
    %46 = vector.shape_cast %45 : vector<1x1x16x8xbf16> to vector<16x8xbf16>
    %47 = vector.shape_cast %44 : vector<16x8xbf16> to vector<1x1x16x8xbf16>
    tpu.vector_store %arg6[%c0_19, %c0_20, %c0_21, %c0_22], %47 {strides = array<i32>} : memref<1x4x16x8xbf16, #tpu.memory_space<vmem>>, vector<1x1x16x8xbf16>,
    %48 = vector.extract_strided_slice %7 {offsets = [0, 8], sizes = [16, 8], strides = [1, 1]} : vector<16x96xf32> to vector<16x8xf32>
    %49 = arith.truncf %48 : vector<16x8xf32> to vector<16x8xbf16>
    %50 = vector.extract_strided_slice %7 {offsets = [0, 40], sizes = [16, 8], strides = [1, 1]} : vector<16x96xf32> to vector<16x8xf32>
    %51 = arith.truncf %50 : vector<16x8xf32> to vector<16x8xbf16>
    %52 = vector.extract_strided_slice %7 {offsets = [0, 72], sizes = [16, 8], strides = [1, 1]} : vector<16x96xf32> to vector<16x8xf32>
    %53 = arith.truncf %52 : vector<16x8xf32> to vector<16x8xbf16>
    %cst_23 = arith.constant dense<0.000000e+00> : vector<16x16xf32>
    %54 = tpu.matmul %49, %51, %cst_23 {dimension_numbers = #tpu.dot_dimension_numbers<[1], [1], [0], [0], [0, 0, 1, 0], [], []>} : vector<16x8xbf16>, vector<16x8xbf16>, vector<16x16xf32> -> vector<16x16xf32>
    %cst_24 = arith.constant 0.353553385 : f32
    %55 = vector.broadcast %cst_24 : f32 to vector<16x16xf32>
    %56 = arith.mulf %54, %55 : vector<16x16xf32>
    %cst_25 = arith.constant -1.000000e+09 : f32
    %57 = vector.broadcast %cst_25 : f32 to vector<16x16xf32>
    %58 = arith.select %20, %56, %57 : vector<16x16xi1>, vector<16x16xf32>
    %cst_26 = arith.constant dense<0xFF800000> : vector<16xf32>
    %59 = vector.multi_reduction <maximumf>, %58, %cst_26 [1] : vector<16x16xf32> to vector<16xf32>
    %60 = vector.shape_cast %59 : vector<16xf32> to vector<16x1xf32>
    %61 = vector.broadcast %60 : vector<16x1xf32> to vector<16x16xf32>
    %62 = arith.subf %58, %61 : vector<16x16xf32>
    %63 = math.exp %62 : vector<16x16xf32>
    %cst_27 = arith.constant dense<0.000000e+00> : vector<16xf32>
    %64 = vector.multi_reduction <add>, %63, %cst_27 [1] : vector<16x16xf32> to vector<16xf32>
    %65 = vector.shape_cast %64 : vector<16xf32> to vector<16x1xf32>
    %66 = tpu.reciprocal %65 {approx = true} : vector<16x1xf32> -> vector<16x1xf32>
    %67 = vector.broadcast %66 : vector<16x1xf32> to vector<16x16xf32>
    %68 = arith.mulf %63, %67 : vector<16x16xf32>
    %69 = arith.truncf %68 : vector<16x16xf32> to vector<16x16xbf16>
    %cst_28 = arith.constant dense<0.000000e+00> : vector<16x8xf32>
    %70 = tpu.matmul %69, %53, %cst_28 {dimension_numbers = #tpu.dot_dimension_numbers<[1], [0], [0], [1], [0, 0, 1, 1], [], []>} : vector<16x16xbf16>, vector<16x8xbf16>, vector<16x8xf32> -> vector<16x8xf32>
    %71 = arith.truncf %70 : vector<16x8xf32> to vector<16x8xbf16>
    %c0_29 = arith.constant 0 : index
    %c1 = arith.constant 1 : index
    %c0_30 = arith.constant 0 : index
    %c0_31 = arith.constant 0 : index
    %72 = vector.load %arg6[%c0_29, %c1, %c0_30, %c0_31] : memref<1x4x16x8xbf16, #tpu.memory_space<vmem>>, vector<1x1x16x8xbf16>
    %73 = vector.shape_cast %72 : vector<1x1x16x8xbf16> to vector<16x8xbf16>
    %74 = vector.shape_cast %71 : vector<16x8xbf16> to vector<1x1x16x8xbf16>
    tpu.vector_store %arg6[%c0_29, %c1, %c0_30, %c0_31], %74 {strides = array<i32>} : memref<1x4x16x8xbf16, #tpu.memory_space<vmem>>, vector<1x1x16x8xbf16>,
    %75 = vector.extract_strided_slice %7 {offsets = [0, 16], sizes = [16, 8], strides = [1, 1]} : vector<16x96xf32> to vector<16x8xf32>
    %76 = arith.truncf %75 : vector<16x8xf32> to vector<16x8xbf16>
    %77 = vector.extract_strided_slice %7 {offsets = [0, 48], sizes = [16, 8], strides = [1, 1]} : vector<16x96xf32> to vector<16x8xf32>
    %78 = arith.truncf %77 : vector<16x8xf32> to vector<16x8xbf16>
    %79 = vector.extract_strided_slice %7 {offsets = [0, 80], sizes = [16, 8], strides = [1, 1]} : vector<16x96xf32> to vector<16x8xf32>
    %80 = arith.truncf %79 : vector<16x8xf32> to vector<16x8xbf16>
    %cst_32 = arith.constant dense<0.000000e+00> : vector<16x16xf32>
    %81 = tpu.matmul %76, %78, %cst_32 {dimension_numbers = #tpu.dot_dimension_numbers<[1], [1], [0], [0], [0, 0, 1, 0], [], []>} : vector<16x8xbf16>, vector<16x8xbf16>, vector<16x16xf32> -> vector<16x16xf32>
    %cst_33 = arith.constant 0.353553385 : f32
    %82 = vector.broadcast %cst_33 : f32 to vector<16x16xf32>
    %83 = arith.mulf %81, %82 : vector<16x16xf32>
    %cst_34 = arith.constant -1.000000e+09 : f32
    %84 = vector.broadcast %cst_34 : f32 to vector<16x16xf32>
    %85 = arith.select %20, %83, %84 : vector<16x16xi1>, vector<16x16xf32>
    %cst_35 = arith.constant dense<0xFF800000> : vector<16xf32>
    %86 = vector.multi_reduction <maximumf>, %85, %cst_35 [1] : vector<16x16xf32> to vector<16xf32>
    %87 = vector.shape_cast %86 : vector<16xf32> to vector<16x1xf32>
    %88 = vector.broadcast %87 : vector<16x1xf32> to vector<16x16xf32>
    %89 = arith.subf %85, %88 : vector<16x16xf32>
    %90 = math.exp %89 : vector<16x16xf32>
    %cst_36 = arith.constant dense<0.000000e+00> : vector<16xf32>
    %91 = vector.multi_reduction <add>, %90, %cst_36 [1] : vector<16x16xf32> to vector<16xf32>
    %92 = vector.shape_cast %91 : vector<16xf32> to vector<16x1xf32>
    %93 = tpu.reciprocal %92 {approx = true} : vector<16x1xf32> -> vector<16x1xf32>
    %94 = vector.broadcast %93 : vector<16x1xf32> to vector<16x16xf32>
    %95 = arith.mulf %90, %94 : vector<16x16xf32>
    %96 = arith.truncf %95 : vector<16x16xf32> to vector<16x16xbf16>
    %cst_37 = arith.constant dense<0.000000e+00> : vector<16x8xf32>
    %97 = tpu.matmul %96, %80, %cst_37 {dimension_numbers = #tpu.dot_dimension_numbers<[1], [0], [0], [1], [0, 0, 1, 1], [], []>} : vector<16x16xbf16>, vector<16x8xbf16>, vector<16x8xf32> -> vector<16x8xf32>
    %98 = arith.truncf %97 : vector<16x8xf32> to vector<16x8xbf16>
    %c0_38 = arith.constant 0 : index
    %c2 = arith.constant 2 : index
    %c0_39 = arith.constant 0 : index
    %c0_40 = arith.constant 0 : index
    %99 = vector.load %arg6[%c0_38, %c2, %c0_39, %c0_40] : memref<1x4x16x8xbf16, #tpu.memory_space<vmem>>, vector<1x1x16x8xbf16>
    %100 = vector.shape_cast %99 : vector<1x1x16x8xbf16> to vector<16x8xbf16>
    %101 = vector.shape_cast %98 : vector<16x8xbf16> to vector<1x1x16x8xbf16>
    tpu.vector_store %arg6[%c0_38, %c2, %c0_39, %c0_40], %101 {strides = array<i32>} : memref<1x4x16x8xbf16, #tpu.memory_space<vmem>>, vector<1x1x16x8xbf16>,
    %102 = vector.extract_strided_slice %7 {offsets = [0, 24], sizes = [16, 8], strides = [1, 1]} : vector<16x96xf32> to vector<16x8xf32>
    %103 = arith.truncf %102 : vector<16x8xf32> to vector<16x8xbf16>
    %104 = vector.extract_strided_slice %7 {offsets = [0, 56], sizes = [16, 8], strides = [1, 1]} : vector<16x96xf32> to vector<16x8xf32>
    %105 = arith.truncf %104 : vector<16x8xf32> to vector<16x8xbf16>
    %106 = vector.extract_strided_slice %7 {offsets = [0, 88], sizes = [16, 8], strides = [1, 1]} : vector<16x96xf32> to vector<16x8xf32>
    %107 = arith.truncf %106 : vector<16x8xf32> to vector<16x8xbf16>
    %cst_41 = arith.constant dense<0.000000e+00> : vector<16x16xf32>
    %108 = tpu.matmul %103, %105, %cst_41 {dimension_numbers = #tpu.dot_dimension_numbers<[1], [1], [0], [0], [0, 0, 1, 0], [], []>} : vector<16x8xbf16>, vector<16x8xbf16>, vector<16x16xf32> -> vector<16x16xf32>
    %cst_42 = arith.constant 0.353553385 : f32
    %109 = vector.broadcast %cst_42 : f32 to vector<16x16xf32>
    %110 = arith.mulf %108, %109 : vector<16x16xf32>
    %cst_43 = arith.constant -1.000000e+09 : f32
    %111 = vector.broadcast %cst_43 : f32 to vector<16x16xf32>
    %112 = arith.select %20, %110, %111 : vector<16x16xi1>, vector<16x16xf32>
    %cst_44 = arith.constant dense<0xFF800000> : vector<16xf32>
    %113 = vector.multi_reduction <maximumf>, %112, %cst_44 [1] : vector<16x16xf32> to vector<16xf32>
    %114 = vector.shape_cast %113 : vector<16xf32> to vector<16x1xf32>
    %115 = vector.broadcast %114 : vector<16x1xf32> to vector<16x16xf32>
    %116 = arith.subf %112, %115 : vector<16x16xf32>
    %117 = math.exp %116 : vector<16x16xf32>
    %cst_45 = arith.constant dense<0.000000e+00> : vector<16xf32>
    %118 = vector.multi_reduction <add>, %117, %cst_45 [1] : vector<16x16xf32> to vector<16xf32>
    %119 = vector.shape_cast %118 : vector<16xf32> to vector<16x1xf32>
    %120 = tpu.reciprocal %119 {approx = true} : vector<16x1xf32> -> vector<16x1xf32>
    %121 = vector.broadcast %120 : vector<16x1xf32> to vector<16x16xf32>
    %122 = arith.mulf %117, %121 : vector<16x16xf32>
    %123 = arith.truncf %122 : vector<16x16xf32> to vector<16x16xbf16>
    %cst_46 = arith.constant dense<0.000000e+00> : vector<16x8xf32>
    %124 = tpu.matmul %123, %107, %cst_46 {dimension_numbers = #tpu.dot_dimension_numbers<[1], [0], [0], [1], [0, 0, 1, 1], [], []>} : vector<16x16xbf16>, vector<16x8xbf16>, vector<16x8xf32> -> vector<16x8xf32>
    %125 = arith.truncf %124 : vector<16x8xf32> to vector<16x8xbf16>
    %c0_47 = arith.constant 0 : index
    %c3 = arith.constant 3 : index
    %c0_48 = arith.constant 0 : index
    %c0_49 = arith.constant 0 : index
    %126 = vector.load %arg6[%c0_47, %c3, %c0_48, %c0_49] : memref<1x4x16x8xbf16, #tpu.memory_space<vmem>>, vector<1x1x16x8xbf16>
    %127 = vector.shape_cast %126 : vector<1x1x16x8xbf16> to vector<16x8xbf16>
    %128 = vector.shape_cast %125 : vector<16x8xbf16> to vector<1x1x16x8xbf16>
    tpu.vector_store %arg6[%c0_47, %c3, %c0_48, %c0_49], %128 {strides = array<i32>} : memref<1x4x16x8xbf16, #tpu.memory_space<vmem>>, vector<1x1x16x8xbf16>,
    return
  }
  func.func @transform_0(%arg0: i32) -> (i32, i32, i32) {
    %c0_i32 = arith.constant 0 : i32
    %c0_i32_0 = arith.constant 0 : i32
    %c0_i32_1 = arith.constant 0 : i32
    return %arg0, %c0_i32, %c0_i32_0 : i32, i32, i32
  }
  func.func @transform_1(%arg0: i32) -> (i32, i32) {
    %c0_i32 = arith.constant 0 : i32
    %c0_i32_0 = arith.constant 0 : i32
    %c0_i32_1 = arith.constant 0 : i32
    return %c0_i32, %c0_i32_0 : i32, i32
  }
  func.func @transform_2(%arg0: i32) -> (i32, i32) {
    %c0_i32 = arith.constant 0 : i32
    %c0_i32_0 = arith.constant 0 : i32
    %c0_i32_1 = arith.constant 0 : i32
    return %c0_i32, %c0_i32_0 : i32, i32
  }
  func.func @transform_3(%arg0: i32) -> (i32, i32, i32) {
    %c0_i32 = arith.constant 0 : i32
    %c0_i32_0 = arith.constant 0 : i32
    %c0_i32_1 = arith.constant 0 : i32
    return %arg0, %c0_i32, %c0_i32_0 : i32, i32, i32
  }
  func.func @transform_4(%arg0: i32) -> (i32, i32, i32) {
    %c0_i32 = arith.constant 0 : i32
    %c0_i32_0 = arith.constant 0 : i32
    %c0_i32_1 = arith.constant 0 : i32
    return %arg0, %c0_i32, %c0_i32_0 : i32, i32, i32
  }
  func.func @transform_5(%arg0: i32) -> (i32, i32, i32, i32) {
    %c0_i32 = arith.constant 0 : i32
    %c0_i32_0 = arith.constant 0 : i32
    %c0_i32_1 = arith.constant 0 : i32
    %c0_i32_2 = arith.constant 0 : i32
    return %arg0, %c0_i32, %c0_i32_0, %c0_i32_1 : i32, i32, i32, i32
  }
}

module attributes {stable_mosaic.version = 11 : i64} {
  func.func @_cross_attn_kernel(%arg0: i32, %arg1: memref<1x16x32xf32, #tpu.memory_space<vmem>>, %arg2: memref<1x16x32xf32, #tpu.memory_space<vmem>>, %arg3: memref<32x32xbf16, #tpu.memory_space<vmem>>, %arg4: memref<1x32xf32, #tpu.memory_space<vmem>>, %arg5: memref<32x64xbf16, #tpu.memory_space<vmem>>, %arg6: memref<1x64xf32, #tpu.memory_space<vmem>>, %arg7: memref<1x1x16xf32, #tpu.memory_space<vmem>>, %arg8: memref<1x4x16x8xbf16, #tpu.memory_space<vmem>>) attributes {dimension_semantics = [#tpu.dimension_semantics<parallel>], iteration_bounds = array<i64: 2>, scalar_prefetch = 0 : i64, scratch_operands = 0 : i64, tpu.core_type = #tpu.core_type<tc>, window_params = [{transform_indices = @transform_0, window_bounds = array<i64: 1, 16, 32>}, {transform_indices = @transform_1, window_bounds = array<i64: 1, 16, 32>}, {pipeline_mode = #tpu.pipeline_mode<synchronous>, transform_indices = @transform_2, window_bounds = array<i64: 32, 32>}, {pipeline_mode = #tpu.pipeline_mode<synchronous>, transform_indices = @transform_3, window_bounds = array<i64: 1, 32>}, {pipeline_mode = #tpu.pipeline_mode<synchronous>, transform_indices = @transform_4, window_bounds = array<i64: 32, 64>}, {pipeline_mode = #tpu.pipeline_mode<synchronous>, transform_indices = @transform_5, window_bounds = array<i64: 1, 64>}, {transform_indices = @transform_6, window_bounds = array<i64: 1, 1, 16>}, {transform_indices = @transform_7, window_bounds = array<i64: 1, 4, 16, 8>}]} {
    %c0 = arith.constant 0 : index
    %c0_0 = arith.constant 0 : index
    %c0_1 = arith.constant 0 : index
    %0 = vector.load %arg1[%c0, %c0_0, %c0_1] : memref<1x16x32xf32, #tpu.memory_space<vmem>>, vector<1x16x32xf32>
    %1 = vector.shape_cast %0 : vector<1x16x32xf32> to vector<16x32xf32>
    %2 = arith.truncf %1 : vector<16x32xf32> to vector<16x32xbf16>
    %c0_2 = arith.constant 0 : index
    %c0_3 = arith.constant 0 : index
    %3 = vector.load %arg3[%c0_2, %c0_3] : memref<32x32xbf16, #tpu.memory_space<vmem>>, vector<32x32xbf16>
    %cst = arith.constant dense<0.000000e+00> : vector<16x32xf32>
    %4 = tpu.matmul %2, %3, %cst {dimension_numbers = #tpu.dot_dimension_numbers<[1], [0], [0], [1], [0, 0, 1, 1], [], []>} : vector<16x32xbf16>, vector<32x32xbf16>, vector<16x32xf32> -> vector<16x32xf32>
    %c0_4 = arith.constant 0 : index
    %c0_5 = arith.constant 0 : index
    %5 = vector.load %arg4[%c0_4, %c0_5] : memref<1x32xf32, #tpu.memory_space<vmem>>, vector<1x32xf32>
    %6 = vector.broadcast %5 : vector<1x32xf32> to vector<16x32xf32>
    %7 = arith.addf %4, %6 : vector<16x32xf32>
    %c0_6 = arith.constant 0 : index
    %c0_7 = arith.constant 0 : index
    %c0_8 = arith.constant 0 : index
    %8 = vector.load %arg2[%c0_6, %c0_7, %c0_8] : memref<1x16x32xf32, #tpu.memory_space<vmem>>, vector<1x16x32xf32>
    %9 = vector.shape_cast %8 : vector<1x16x32xf32> to vector<16x32xf32>
    %10 = arith.truncf %9 : vector<16x32xf32> to vector<16x32xbf16>
    %c0_9 = arith.constant 0 : index
    %c0_10 = arith.constant 0 : index
    %11 = vector.load %arg5[%c0_9, %c0_10] : memref<32x64xbf16, #tpu.memory_space<vmem>>, vector<32x64xbf16>
    %cst_11 = arith.constant dense<0.000000e+00> : vector<16x64xf32>
    %12 = tpu.matmul %10, %11, %cst_11 {dimension_numbers = #tpu.dot_dimension_numbers<[1], [0], [0], [1], [0, 0, 1, 1], [], []>} : vector<16x32xbf16>, vector<32x64xbf16>, vector<16x64xf32> -> vector<16x64xf32>
    %c0_12 = arith.constant 0 : index
    %c0_13 = arith.constant 0 : index
    %13 = vector.load %arg6[%c0_12, %c0_13] : memref<1x64xf32, #tpu.memory_space<vmem>>, vector<1x64xf32>
    %14 = vector.broadcast %13 : vector<1x64xf32> to vector<16x64xf32>
    %15 = arith.addf %12, %14 : vector<16x64xf32>
    %c0_14 = arith.constant 0 : index
    %c0_15 = arith.constant 0 : index
    %c0_16 = arith.constant 0 : index
    %16 = vector.load %arg7[%c0_14, %c0_15, %c0_16] : memref<1x1x16xf32, #tpu.memory_space<vmem>>, vector<1x1x16xf32>
    %17 = vector.shape_cast %16 : vector<1x1x16xf32> to vector<1x16xf32>
    %cst_17 = arith.constant 0.000000e+00 : f32
    %18 = vector.broadcast %cst_17 : f32 to vector<1x16xf32>
    %19 = arith.cmpf one, %17, %18 : vector<1x16xf32>
    %20 = vector.extract_strided_slice %7 {offsets = [0, 0], sizes = [16, 8], strides = [1, 1]} : vector<16x32xf32> to vector<16x8xf32>
    %21 = arith.truncf %20 : vector<16x8xf32> to vector<16x8xbf16>
    %22 = vector.extract_strided_slice %15 {offsets = [0, 0], sizes = [16, 8], strides = [1, 1]} : vector<16x64xf32> to vector<16x8xf32>
    %23 = arith.truncf %22 : vector<16x8xf32> to vector<16x8xbf16>
    %24 = vector.extract_strided_slice %15 {offsets = [0, 32], sizes = [16, 8], strides = [1, 1]} : vector<16x64xf32> to vector<16x8xf32>
    %25 = arith.truncf %24 : vector<16x8xf32> to vector<16x8xbf16>
    %cst_18 = arith.constant dense<0.000000e+00> : vector<16x16xf32>
    %26 = tpu.matmul %21, %23, %cst_18 {dimension_numbers = #tpu.dot_dimension_numbers<[1], [1], [0], [0], [0, 0, 1, 0], [], []>} : vector<16x8xbf16>, vector<16x8xbf16>, vector<16x16xf32> -> vector<16x16xf32>
    %cst_19 = arith.constant 0.353553385 : f32
    %27 = vector.broadcast %cst_19 : f32 to vector<16x16xf32>
    %28 = arith.mulf %26, %27 : vector<16x16xf32>
    %cst_20 = arith.constant -1.000000e+09 : f32
    %29 = vector.shape_cast %19 : vector<1x16xi1> to vector<1x16xi1>
    %30 = vector.broadcast %29 : vector<1x16xi1> to vector<16x16xi1>
    %31 = vector.broadcast %cst_20 : f32 to vector<16x16xf32>
    %32 = arith.select %30, %28, %31 : vector<16x16xi1>, vector<16x16xf32>
    %cst_21 = arith.constant dense<0xFF800000> : vector<16xf32>
    %33 = vector.multi_reduction <maximumf>, %32, %cst_21 [1] : vector<16x16xf32> to vector<16xf32>
    %34 = vector.shape_cast %33 : vector<16xf32> to vector<16x1xf32>
    %35 = vector.broadcast %34 : vector<16x1xf32> to vector<16x16xf32>
    %36 = arith.subf %32, %35 : vector<16x16xf32>
    %37 = math.exp %36 : vector<16x16xf32>
    %cst_22 = arith.constant dense<0.000000e+00> : vector<16xf32>
    %38 = vector.multi_reduction <add>, %37, %cst_22 [1] : vector<16x16xf32> to vector<16xf32>
    %39 = vector.shape_cast %38 : vector<16xf32> to vector<16x1xf32>
    %40 = tpu.reciprocal %39 {approx = true} : vector<16x1xf32> -> vector<16x1xf32>
    %41 = vector.broadcast %40 : vector<16x1xf32> to vector<16x16xf32>
    %42 = arith.mulf %37, %41 : vector<16x16xf32>
    %43 = arith.truncf %42 : vector<16x16xf32> to vector<16x16xbf16>
    %cst_23 = arith.constant dense<0.000000e+00> : vector<16x8xf32>
    %44 = tpu.matmul %43, %25, %cst_23 {dimension_numbers = #tpu.dot_dimension_numbers<[1], [0], [0], [1], [0, 0, 1, 1], [], []>} : vector<16x16xbf16>, vector<16x8xbf16>, vector<16x8xf32> -> vector<16x8xf32>
    %45 = arith.truncf %44 : vector<16x8xf32> to vector<16x8xbf16>
    %c0_24 = arith.constant 0 : index
    %c0_25 = arith.constant 0 : index
    %c0_26 = arith.constant 0 : index
    %c0_27 = arith.constant 0 : index
    %46 = vector.load %arg8[%c0_24, %c0_25, %c0_26, %c0_27] : memref<1x4x16x8xbf16, #tpu.memory_space<vmem>>, vector<1x1x16x8xbf16>
    %47 = vector.shape_cast %46 : vector<1x1x16x8xbf16> to vector<16x8xbf16>
    %48 = vector.shape_cast %45 : vector<16x8xbf16> to vector<1x1x16x8xbf16>
    tpu.vector_store %arg8[%c0_24, %c0_25, %c0_26, %c0_27], %48 {strides = array<i32>} : memref<1x4x16x8xbf16, #tpu.memory_space<vmem>>, vector<1x1x16x8xbf16>,
    %49 = vector.extract_strided_slice %7 {offsets = [0, 8], sizes = [16, 8], strides = [1, 1]} : vector<16x32xf32> to vector<16x8xf32>
    %50 = arith.truncf %49 : vector<16x8xf32> to vector<16x8xbf16>
    %51 = vector.extract_strided_slice %15 {offsets = [0, 8], sizes = [16, 8], strides = [1, 1]} : vector<16x64xf32> to vector<16x8xf32>
    %52 = arith.truncf %51 : vector<16x8xf32> to vector<16x8xbf16>
    %53 = vector.extract_strided_slice %15 {offsets = [0, 40], sizes = [16, 8], strides = [1, 1]} : vector<16x64xf32> to vector<16x8xf32>
    %54 = arith.truncf %53 : vector<16x8xf32> to vector<16x8xbf16>
    %cst_28 = arith.constant dense<0.000000e+00> : vector<16x16xf32>
    %55 = tpu.matmul %50, %52, %cst_28 {dimension_numbers = #tpu.dot_dimension_numbers<[1], [1], [0], [0], [0, 0, 1, 0], [], []>} : vector<16x8xbf16>, vector<16x8xbf16>, vector<16x16xf32> -> vector<16x16xf32>
    %cst_29 = arith.constant 0.353553385 : f32
    %56 = vector.broadcast %cst_29 : f32 to vector<16x16xf32>
    %57 = arith.mulf %55, %56 : vector<16x16xf32>
    %cst_30 = arith.constant -1.000000e+09 : f32
    %58 = vector.shape_cast %19 : vector<1x16xi1> to vector<1x16xi1>
    %59 = vector.broadcast %58 : vector<1x16xi1> to vector<16x16xi1>
    %60 = vector.broadcast %cst_30 : f32 to vector<16x16xf32>
    %61 = arith.select %59, %57, %60 : vector<16x16xi1>, vector<16x16xf32>
    %cst_31 = arith.constant dense<0xFF800000> : vector<16xf32>
    %62 = vector.multi_reduction <maximumf>, %61, %cst_31 [1] : vector<16x16xf32> to vector<16xf32>
    %63 = vector.shape_cast %62 : vector<16xf32> to vector<16x1xf32>
    %64 = vector.broadcast %63 : vector<16x1xf32> to vector<16x16xf32>
    %65 = arith.subf %61, %64 : vector<16x16xf32>
    %66 = math.exp %65 : vector<16x16xf32>
    %cst_32 = arith.constant dense<0.000000e+00> : vector<16xf32>
    %67 = vector.multi_reduction <add>, %66, %cst_32 [1] : vector<16x16xf32> to vector<16xf32>
    %68 = vector.shape_cast %67 : vector<16xf32> to vector<16x1xf32>
    %69 = tpu.reciprocal %68 {approx = true} : vector<16x1xf32> -> vector<16x1xf32>
    %70 = vector.broadcast %69 : vector<16x1xf32> to vector<16x16xf32>
    %71 = arith.mulf %66, %70 : vector<16x16xf32>
    %72 = arith.truncf %71 : vector<16x16xf32> to vector<16x16xbf16>
    %cst_33 = arith.constant dense<0.000000e+00> : vector<16x8xf32>
    %73 = tpu.matmul %72, %54, %cst_33 {dimension_numbers = #tpu.dot_dimension_numbers<[1], [0], [0], [1], [0, 0, 1, 1], [], []>} : vector<16x16xbf16>, vector<16x8xbf16>, vector<16x8xf32> -> vector<16x8xf32>
    %74 = arith.truncf %73 : vector<16x8xf32> to vector<16x8xbf16>
    %c0_34 = arith.constant 0 : index
    %c1 = arith.constant 1 : index
    %c0_35 = arith.constant 0 : index
    %c0_36 = arith.constant 0 : index
    %75 = vector.load %arg8[%c0_34, %c1, %c0_35, %c0_36] : memref<1x4x16x8xbf16, #tpu.memory_space<vmem>>, vector<1x1x16x8xbf16>
    %76 = vector.shape_cast %75 : vector<1x1x16x8xbf16> to vector<16x8xbf16>
    %77 = vector.shape_cast %74 : vector<16x8xbf16> to vector<1x1x16x8xbf16>
    tpu.vector_store %arg8[%c0_34, %c1, %c0_35, %c0_36], %77 {strides = array<i32>} : memref<1x4x16x8xbf16, #tpu.memory_space<vmem>>, vector<1x1x16x8xbf16>,
    %78 = vector.extract_strided_slice %7 {offsets = [0, 16], sizes = [16, 8], strides = [1, 1]} : vector<16x32xf32> to vector<16x8xf32>
    %79 = arith.truncf %78 : vector<16x8xf32> to vector<16x8xbf16>
    %80 = vector.extract_strided_slice %15 {offsets = [0, 16], sizes = [16, 8], strides = [1, 1]} : vector<16x64xf32> to vector<16x8xf32>
    %81 = arith.truncf %80 : vector<16x8xf32> to vector<16x8xbf16>
    %82 = vector.extract_strided_slice %15 {offsets = [0, 48], sizes = [16, 8], strides = [1, 1]} : vector<16x64xf32> to vector<16x8xf32>
    %83 = arith.truncf %82 : vector<16x8xf32> to vector<16x8xbf16>
    %cst_37 = arith.constant dense<0.000000e+00> : vector<16x16xf32>
    %84 = tpu.matmul %79, %81, %cst_37 {dimension_numbers = #tpu.dot_dimension_numbers<[1], [1], [0], [0], [0, 0, 1, 0], [], []>} : vector<16x8xbf16>, vector<16x8xbf16>, vector<16x16xf32> -> vector<16x16xf32>
    %cst_38 = arith.constant 0.353553385 : f32
    %85 = vector.broadcast %cst_38 : f32 to vector<16x16xf32>
    %86 = arith.mulf %84, %85 : vector<16x16xf32>
    %cst_39 = arith.constant -1.000000e+09 : f32
    %87 = vector.shape_cast %19 : vector<1x16xi1> to vector<1x16xi1>
    %88 = vector.broadcast %87 : vector<1x16xi1> to vector<16x16xi1>
    %89 = vector.broadcast %cst_39 : f32 to vector<16x16xf32>
    %90 = arith.select %88, %86, %89 : vector<16x16xi1>, vector<16x16xf32>
    %cst_40 = arith.constant dense<0xFF800000> : vector<16xf32>
    %91 = vector.multi_reduction <maximumf>, %90, %cst_40 [1] : vector<16x16xf32> to vector<16xf32>
    %92 = vector.shape_cast %91 : vector<16xf32> to vector<16x1xf32>
    %93 = vector.broadcast %92 : vector<16x1xf32> to vector<16x16xf32>
    %94 = arith.subf %90, %93 : vector<16x16xf32>
    %95 = math.exp %94 : vector<16x16xf32>
    %cst_41 = arith.constant dense<0.000000e+00> : vector<16xf32>
    %96 = vector.multi_reduction <add>, %95, %cst_41 [1] : vector<16x16xf32> to vector<16xf32>
    %97 = vector.shape_cast %96 : vector<16xf32> to vector<16x1xf32>
    %98 = tpu.reciprocal %97 {approx = true} : vector<16x1xf32> -> vector<16x1xf32>
    %99 = vector.broadcast %98 : vector<16x1xf32> to vector<16x16xf32>
    %100 = arith.mulf %95, %99 : vector<16x16xf32>
    %101 = arith.truncf %100 : vector<16x16xf32> to vector<16x16xbf16>
    %cst_42 = arith.constant dense<0.000000e+00> : vector<16x8xf32>
    %102 = tpu.matmul %101, %83, %cst_42 {dimension_numbers = #tpu.dot_dimension_numbers<[1], [0], [0], [1], [0, 0, 1, 1], [], []>} : vector<16x16xbf16>, vector<16x8xbf16>, vector<16x8xf32> -> vector<16x8xf32>
    %103 = arith.truncf %102 : vector<16x8xf32> to vector<16x8xbf16>
    %c0_43 = arith.constant 0 : index
    %c2 = arith.constant 2 : index
    %c0_44 = arith.constant 0 : index
    %c0_45 = arith.constant 0 : index
    %104 = vector.load %arg8[%c0_43, %c2, %c0_44, %c0_45] : memref<1x4x16x8xbf16, #tpu.memory_space<vmem>>, vector<1x1x16x8xbf16>
    %105 = vector.shape_cast %104 : vector<1x1x16x8xbf16> to vector<16x8xbf16>
    %106 = vector.shape_cast %103 : vector<16x8xbf16> to vector<1x1x16x8xbf16>
    tpu.vector_store %arg8[%c0_43, %c2, %c0_44, %c0_45], %106 {strides = array<i32>} : memref<1x4x16x8xbf16, #tpu.memory_space<vmem>>, vector<1x1x16x8xbf16>,
    %107 = vector.extract_strided_slice %7 {offsets = [0, 24], sizes = [16, 8], strides = [1, 1]} : vector<16x32xf32> to vector<16x8xf32>
    %108 = arith.truncf %107 : vector<16x8xf32> to vector<16x8xbf16>
    %109 = vector.extract_strided_slice %15 {offsets = [0, 24], sizes = [16, 8], strides = [1, 1]} : vector<16x64xf32> to vector<16x8xf32>
    %110 = arith.truncf %109 : vector<16x8xf32> to vector<16x8xbf16>
    %111 = vector.extract_strided_slice %15 {offsets = [0, 56], sizes = [16, 8], strides = [1, 1]} : vector<16x64xf32> to vector<16x8xf32>
    %112 = arith.truncf %111 : vector<16x8xf32> to vector<16x8xbf16>
    %cst_46 = arith.constant dense<0.000000e+00> : vector<16x16xf32>
    %113 = tpu.matmul %108, %110, %cst_46 {dimension_numbers = #tpu.dot_dimension_numbers<[1], [1], [0], [0], [0, 0, 1, 0], [], []>} : vector<16x8xbf16>, vector<16x8xbf16>, vector<16x16xf32> -> vector<16x16xf32>
    %cst_47 = arith.constant 0.353553385 : f32
    %114 = vector.broadcast %cst_47 : f32 to vector<16x16xf32>
    %115 = arith.mulf %113, %114 : vector<16x16xf32>
    %cst_48 = arith.constant -1.000000e+09 : f32
    %116 = vector.shape_cast %19 : vector<1x16xi1> to vector<1x16xi1>
    %117 = vector.broadcast %116 : vector<1x16xi1> to vector<16x16xi1>
    %118 = vector.broadcast %cst_48 : f32 to vector<16x16xf32>
    %119 = arith.select %117, %115, %118 : vector<16x16xi1>, vector<16x16xf32>
    %cst_49 = arith.constant dense<0xFF800000> : vector<16xf32>
    %120 = vector.multi_reduction <maximumf>, %119, %cst_49 [1] : vector<16x16xf32> to vector<16xf32>
    %121 = vector.shape_cast %120 : vector<16xf32> to vector<16x1xf32>
    %122 = vector.broadcast %121 : vector<16x1xf32> to vector<16x16xf32>
    %123 = arith.subf %119, %122 : vector<16x16xf32>
    %124 = math.exp %123 : vector<16x16xf32>
    %cst_50 = arith.constant dense<0.000000e+00> : vector<16xf32>
    %125 = vector.multi_reduction <add>, %124, %cst_50 [1] : vector<16x16xf32> to vector<16xf32>
    %126 = vector.shape_cast %125 : vector<16xf32> to vector<16x1xf32>
    %127 = tpu.reciprocal %126 {approx = true} : vector<16x1xf32> -> vector<16x1xf32>
    %128 = vector.broadcast %127 : vector<16x1xf32> to vector<16x16xf32>
    %129 = arith.mulf %124, %128 : vector<16x16xf32>
    %130 = arith.truncf %129 : vector<16x16xf32> to vector<16x16xbf16>
    %cst_51 = arith.constant dense<0.000000e+00> : vector<16x8xf32>
    %131 = tpu.matmul %130, %112, %cst_51 {dimension_numbers = #tpu.dot_dimension_numbers<[1], [0], [0], [1], [0, 0, 1, 1], [], []>} : vector<16x16xbf16>, vector<16x8xbf16>, vector<16x8xf32> -> vector<16x8xf32>
    %132 = arith.truncf %131 : vector<16x8xf32> to vector<16x8xbf16>
    %c0_52 = arith.constant 0 : index
    %c3 = arith.constant 3 : index
    %c0_53 = arith.constant 0 : index
    %c0_54 = arith.constant 0 : index
    %133 = vector.load %arg8[%c0_52, %c3, %c0_53, %c0_54] : memref<1x4x16x8xbf16, #tpu.memory_space<vmem>>, vector<1x1x16x8xbf16>
    %134 = vector.shape_cast %133 : vector<1x1x16x8xbf16> to vector<16x8xbf16>
    %135 = vector.shape_cast %132 : vector<16x8xbf16> to vector<1x1x16x8xbf16>
    tpu.vector_store %arg8[%c0_52, %c3, %c0_53, %c0_54], %135 {strides = array<i32>} : memref<1x4x16x8xbf16, #tpu.memory_space<vmem>>, vector<1x1x16x8xbf16>,
    return
  }
  func.func @transform_0(%arg0: i32) -> (i32, i32, i32) {
    %c0_i32 = arith.constant 0 : i32
    %c0_i32_0 = arith.constant 0 : i32
    %c0_i32_1 = arith.constant 0 : i32
    return %arg0, %c0_i32, %c0_i32_0 : i32, i32, i32
  }
  func.func @transform_1(%arg0: i32) -> (i32, i32, i32) {
    %c0_i32 = arith.constant 0 : i32
    %c0_i32_0 = arith.constant 0 : i32
    %c0_i32_1 = arith.constant 0 : i32
    return %arg0, %c0_i32, %c0_i32_0 : i32, i32, i32
  }
  func.func @transform_2(%arg0: i32) -> (i32, i32) {
    %c0_i32 = arith.constant 0 : i32
    %c0_i32_0 = arith.constant 0 : i32
    %c0_i32_1 = arith.constant 0 : i32
    return %c0_i32, %c0_i32_0 : i32, i32
  }
  func.func @transform_3(%arg0: i32) -> (i32, i32) {
    %c0_i32 = arith.constant 0 : i32
    %c0_i32_0 = arith.constant 0 : i32
    %c0_i32_1 = arith.constant 0 : i32
    return %c0_i32, %c0_i32_0 : i32, i32
  }
  func.func @transform_4(%arg0: i32) -> (i32, i32) {
    %c0_i32 = arith.constant 0 : i32
    %c0_i32_0 = arith.constant 0 : i32
    %c0_i32_1 = arith.constant 0 : i32
    return %c0_i32, %c0_i32_0 : i32, i32
  }
  func.func @transform_5(%arg0: i32) -> (i32, i32) {
    %c0_i32 = arith.constant 0 : i32
    %c0_i32_0 = arith.constant 0 : i32
    %c0_i32_1 = arith.constant 0 : i32
    return %c0_i32, %c0_i32_0 : i32, i32
  }
  func.func @transform_6(%arg0: i32) -> (i32, i32, i32) {
    %c0_i32 = arith.constant 0 : i32
    %c0_i32_0 = arith.constant 0 : i32
    %c0_i32_1 = arith.constant 0 : i32
    return %arg0, %c0_i32, %c0_i32_0 : i32, i32, i32
  }
  func.func @transform_7(%arg0: i32) -> (i32, i32, i32, i32) {
    %c0_i32 = arith.constant 0 : i32
    %c0_i32_0 = arith.constant 0 : i32
    %c0_i32_1 = arith.constant 0 : i32
    %c0_i32_2 = arith.constant 0 : i32
    return %arg0, %c0_i32, %c0_i32_0, %c0_i32_1 : i32, i32, i32, i32
  }
}

module attributes {stable_mosaic.version = 11 : i64} {
  func.func @_linear3d_kernel(%arg0: i32, %arg1: i32, %arg2: memref<1x16x32xf32, #tpu.memory_space<vmem>>, %arg3: memref<32x8xbf16, #tpu.memory_space<vmem>>, %arg4: memref<1x8xf32, #tpu.memory_space<vmem>>, %arg5: memref<1x16x8xf32, #tpu.memory_space<vmem>>) attributes {dimension_semantics = [#tpu.dimension_semantics<parallel>, #tpu.dimension_semantics<parallel>], iteration_bounds = array<i64: 2, 1>, scalar_prefetch = 0 : i64, scratch_operands = 0 : i64, tpu.core_type = #tpu.core_type<tc>, window_params = [{transform_indices = @transform_0, window_bounds = array<i64: 1, 16, 32>}, {pipeline_mode = #tpu.pipeline_mode<synchronous>, transform_indices = @transform_1, window_bounds = array<i64: 32, 8>}, {pipeline_mode = #tpu.pipeline_mode<synchronous>, transform_indices = @transform_2, window_bounds = array<i64: 1, 8>}, {transform_indices = @transform_3, window_bounds = array<i64: 1, 16, 8>}]} {
    %c0 = arith.constant 0 : index
    %c0_0 = arith.constant 0 : index
    %c0_1 = arith.constant 0 : index
    %0 = vector.load %arg2[%c0, %c0_0, %c0_1] : memref<1x16x32xf32, #tpu.memory_space<vmem>>, vector<1x16x32xf32>
    %1 = vector.shape_cast %0 : vector<1x16x32xf32> to vector<16x32xf32>
    %2 = arith.truncf %1 : vector<16x32xf32> to vector<16x32xbf16>
    %c0_2 = arith.constant 0 : index
    %c0_3 = arith.constant 0 : index
    %3 = vector.load %arg3[%c0_2, %c0_3] : memref<32x8xbf16, #tpu.memory_space<vmem>>, vector<32x8xbf16>
    %cst = arith.constant dense<0.000000e+00> : vector<16x8xf32>
    %4 = tpu.matmul %2, %3, %cst {dimension_numbers = #tpu.dot_dimension_numbers<[1], [0], [0], [1], [0, 0, 1, 1], [], []>} : vector<16x32xbf16>, vector<32x8xbf16>, vector<16x8xf32> -> vector<16x8xf32>
    %c0_4 = arith.constant 0 : index
    %c0_5 = arith.constant 0 : index
    %5 = vector.load %arg4[%c0_4, %c0_5] : memref<1x8xf32, #tpu.memory_space<vmem>>, vector<1x8xf32>
    %6 = vector.broadcast %5 : vector<1x8xf32> to vector<16x8xf32>
    %7 = arith.addf %4, %6 : vector<16x8xf32>
    %c0_6 = arith.constant 0 : index
    %c0_7 = arith.constant 0 : index
    %c0_8 = arith.constant 0 : index
    %8 = vector.load %arg5[%c0_6, %c0_7, %c0_8] : memref<1x16x8xf32, #tpu.memory_space<vmem>>, vector<1x16x8xf32>
    %9 = vector.shape_cast %8 : vector<1x16x8xf32> to vector<16x8xf32>
    %10 = vector.shape_cast %7 : vector<16x8xf32> to vector<1x16x8xf32>
    tpu.vector_store %arg5[%c0_6, %c0_7, %c0_8], %10 {strides = array<i32>} : memref<1x16x8xf32, #tpu.memory_space<vmem>>, vector<1x16x8xf32>,
    return
  }
  func.func @transform_0(%arg0: i32, %arg1: i32) -> (i32, i32, i32) {
    %c0_i32 = arith.constant 0 : i32
    %c0_i32_0 = arith.constant 0 : i32
    return %arg0, %arg1, %c0_i32 : i32, i32, i32
  }
  func.func @transform_1(%arg0: i32, %arg1: i32) -> (i32, i32) {
    %c0_i32 = arith.constant 0 : i32
    %c0_i32_0 = arith.constant 0 : i32
    %c0_i32_1 = arith.constant 0 : i32
    return %c0_i32, %c0_i32_0 : i32, i32
  }
  func.func @transform_2(%arg0: i32, %arg1: i32) -> (i32, i32) {
    %c0_i32 = arith.constant 0 : i32
    %c0_i32_0 = arith.constant 0 : i32
    %c0_i32_1 = arith.constant 0 : i32
    return %c0_i32, %c0_i32_0 : i32, i32
  }
  func.func @transform_3(%arg0: i32, %arg1: i32) -> (i32, i32, i32) {
    %c0_i32 = arith.constant 0 : i32
    %c0_i32_0 = arith.constant 0 : i32
    return %arg0, %arg1, %c0_i32 : i32, i32, i32
  }
}

</mosaic_0001>

<llo_original>
// kernel: transformer_forward.19
$region0: #{transformer_forward.19}
  #allocation0 [shape = 'u32[]', space=smem, size = 0x4, offset = 0x4, fixed_abs, tag = 'smem constant byte address 0x4 - core index']
  #allocation1 [shape = 'u32[144,128]{1,0:T(1,128)}', space=vmem, size = 0x12000, scoped, tag = 'internal scratch']
  %s0 = inlined_call_operand.hbm [shape: f32[2,16,8], index: 0, kind: input, shape index: {}]
  %s1 = inlined_call_operand.hbm [shape: bf16[8,32], index: 1, kind: input, shape index: {}]
  %s2 = inlined_call_operand.hbm [shape: f32[1,32], index: 2, kind: input, shape index: {}]
  %s3 = inlined_call_operand.hbm [shape: f32[16,32], index: 3, kind: input, shape index: {}]
  %s4 = inlined_call_operand.hbm [shape: f32[2,16,32], index: 4, kind: output, shape index: {}]
  %s5 = sld [smem:[#allocation0]]
  $region65: #{transformer_forward.19} parent=0
    _
  %s7 = ssub.s32 1, %s5
  %s8 = scalar_select 0, %s7, %s5
  $region1: #{transformer_forward.19} parent=0
    #allocation2 [shape = 'u8[16384]{0}', space=vmem, size = 0x4000, scoped, tag = 'input window, operand 0']
    #allocation3 [shape = 's32[2]{0}', space=sflag, size = 0x8, scoped, tag = 'scoped memory for transformer_forward.19']
    #allocation4 [shape = 's32[2]{0}', space=sflag, size = 0x8, scoped, tag = 'scoped memory for transformer_forward.19']
    #allocation5 [shape = 'u8[2048]{0}', space=vmem, size = 0x800, scoped, tag = 'input window, operand 1, single buffered']
    #allocation6 [shape = 's32[1]{0}', space=sflag, size = 0x4, scoped, tag = 'scoped memory for transformer_forward.19']
    #allocation7 [shape = 'u8[512]{0}', space=vmem, size = 0x400, scoped, tag = 'input window, operand 2, single buffered']
    #allocation8 [shape = 'u8[8192]{0}', space=vmem, size = 0x2000, scoped, tag = 'input window, operand 3, single buffered']
    #allocation9 [shape = 's32[1]{0}', space=sflag, size = 0x4, scoped, tag = 'scoped memory for transformer_forward.19']
    #allocation10 [shape = 'u8[16384]{0}', space=vmem, size = 0x4000, scoped, tag = 'output window, operand 0']
    %9 = vsyncpa [#allocation3], 0
    %s10 = scalar_lea.sflag [#allocation3], 1
    %11 = vsyncpa %s10, 0
    %12 = vsyncpa [#allocation6], 0
    %13 = vsyncpa [#allocation9], 0
    %14 = vsyncpa [#allocation4], 0
    %s15 = scalar_lea.sflag [#allocation4], 1
    %16 = vsyncpa %s15, 0
    loop: start=0, step=1, limit=4
    $region2: #{transformer_forward.19} parent=1 // loop_pre_header
      _
    $region3: #{transformer_forward.19} parent=1 // loop_header
      %s18 = sphi 0, %s22
      %p19 = scmp.ge.s32.totalorder %s18, 4
      %s25 = sphi 0, %s37
      %s26 = sphi 0, %s33
      %s27 = sphi 0, %s25
      %s28 = sphi 0, %s26
      %s29 = sphi 0, %s27
      %s30 = sphi 0, %s28
      %s42 = sphi 0, %s44
      %s45 = sphi 0, %s42
      %s46 = sphi 0, %s45
      %s62 = sphi 0, %s46
      %s66 = sphi 0, %s66
      %s68 = sphi 0, %s66
      %s69 = sphi 0, %s68
      %s83 = sphi 0, %s69
      %s87 = sphi 0, %s87
      %s89 = sphi 0, %s87
      %s90 = sphi 0, %s89
      %s104 = sphi 0, %s90
      %s110 = sphi 0, %s112
      %s113 = sphi 0, %s110
      %s114 = sphi 0, %s113
      %s130 = sphi 0, %s114
      %s138 = sphi 0, %s140
      %s141 = sphi 0, %s138
      %s142 = sphi 0, %s141
      %s158 = sphi 0, %s142
    $region4: #{transformer_forward.19} parent=1 // loop_header_branch
      %21 = sbr.rel (%p19) target = $region8
    $region5: #{transformer_forward.19} parent=1 // loop_body
      %s23 = ssub.s32 %s18, 1
      %s24 = ssub.s32 %s18, 2
      %s31 = sadd.s32 1, %s26
      %p32 = scmp.ge.s32.totalorder %s31, 1
      %s33 = scalar_select %p32, 0, %s31
      %s34 = sadd.s32 1, %s25
      %s35 = scalar_select %p32, %s34, %s25
      %p36 = scmp.ge.s32.totalorder %s35, 2
      %s37 = scalar_select %p36, 0, %s35
      %s38 = ssub.s32 %s25, %s37
      %s39 = ssub.s32 %s26, %s33
      %s40 = sor.u32 %s38, %s39
      %p41 = scmp.eq.s32.totalorder %s40, 0
      %s43 = sadd.s32 %s42, 1
      %s44 = scalar_select %p41, %s42, %s43
      %p47 = pneg %p41
      %p48 = scmp.eq.s32.totalorder %s18, 1
      %p49 = por %p47, %p48
      %p50 = scmp.ne.s32.totalorder %s42, %s45
      %p51 = scmp.eq.s32.totalorder %s18, 0
      %p52 = por %p50, %p51
      %p53 = scmp.ne.s32.totalorder %s42, %s45
      %p54 = scmp.eq.s32.totalorder %s23, 1
      %p55 = por %p53, %p54
      %p56 = scmp.ne.s32.totalorder %s45, %s46
      %p57 = scmp.eq.s32.totalorder %s23, 0
      %p58 = por %p56, %p57
      %p59 = scmp.ne.s32.totalorder %s45, %s46
      %p60 = scmp.eq.s32.totalorder %s24, 1
      %p61 = por %p59, %p60
      %p63 = scmp.ne.s32.totalorder %s46, %s62
      %p64 = scmp.eq.s32.totalorder %s24, 0
      %p65 = por %p63, %p64
      %s67 = sadd.s32 %s66, 1
      %p70 = scmp.eq.s32.totalorder %s18, 1
      %p71 = scmp.ne.s32.totalorder %s66, %s68
      %p72 = scmp.eq.s32.totalorder %s18, 0
      %p73 = por %p71, %p72
      %p74 = scmp.ne.s32.totalorder %s66, %s68
      %p75 = scmp.eq.s32.totalorder %s23, 1
      %p76 = por %p74, %p75
      %p77 = scmp.ne.s32.totalorder %s68, %s69
      %p78 = scmp.eq.s32.totalorder %s23, 0
      %p79 = por %p77, %p78
      %p80 = scmp.ne.s32.totalorder %s68, %s69
      %p81 = scmp.eq.s32.totalorder %s24, 1
      %p82 = por %p80, %p81
      %p84 = scmp.ne.s32.totalorder %s69, %s83
      %p85 = scmp.eq.s32.totalorder %s24, 0
      %p86 = por %p84, %p85
      %s88 = sadd.s32 %s87, 1
      %p91 = scmp.eq.s32.totalorder %s18, 1
      %p92 = scmp.ne.s32.totalorder %s87, %s89
      %p93 = scmp.eq.s32.totalorder %s18, 0
      %p94 = por %p92, %p93
      %p95 = scmp.ne.s32.totalorder %s87, %s89
      %p96 = scmp.eq.s32.totalorder %s23, 1
      %p97 = por %p95, %p96
      %p98 = scmp.ne.s32.totalorder %s89, %s90
      %p99 = scmp.eq.s32.totalorder %s23, 0
      %p100 = por %p98, %p99
      %p101 = scmp.ne.s32.totalorder %s89, %s90
      %p102 = scmp.eq.s32.totalorder %s24, 1
      %p103 = por %p101, %p102
      %p105 = scmp.ne.s32.totalorder %s90, %s104
      %p106 = scmp.eq.s32.totalorder %s24, 0
      %p107 = por %p105, %p106
      %s108 = ssub.s32 %s26, %s33
      %p109 = scmp.eq.s32.totalorder %s108, 0
      %s111 = sadd.s32 %s110, 1
      %s112 = scalar_select %p109, %s110, %s111
      %p115 = pneg %p109
      %p116 = scmp.eq.s32.totalorder %s18, 1
      %p117 = por %p115, %p116
      %p118 = scmp.ne.s32.totalorder %s110, %s113
      %p119 = scmp.eq.s32.totalorder %s18, 0
      %p120 = por %p118, %p119
      %p121 = scmp.ne.s32.totalorder %s110, %s113
      %p122 = scmp.eq.s32.totalorder %s23, 1
      %p123 = por %p121, %p122
      %p124 = scmp.ne.s32.totalorder %s113, %s114
      %p125 = scmp.eq.s32.totalorder %s23, 0
      %p126 = por %p124, %p125
      %p127 = scmp.ne.s32.totalorder %s113, %s114
      %p128 = scmp.eq.s32.totalorder %s24, 1
      %p129 = por %p127, %p128
      %p131 = scmp.ne.s32.totalorder %s114, %s130
      %p132 = scmp.eq.s32.totalorder %s24, 0
      %p133 = por %p131, %p132
      %s134 = ssub.s32 %s25, %s37
      %s135 = ssub.s32 %s26, %s33
      %s136 = sor.u32 %s134, %s135
      %p137 = scmp.eq.s32.totalorder %s136, 0
      %s139 = sadd.s32 %s138, 1
      %s140 = scalar_select %p137, %s138, %s139
      %p143 = pneg %p137
      %p144 = scmp.eq.s32.totalorder %s18, 1
      %p145 = por %p143, %p144
      %p146 = scmp.ne.s32.totalorder %s138, %s141
      %p147 = scmp.eq.s32.totalorder %s18, 0
      %p148 = por %p146, %p147
      %p149 = scmp.ne.s32.totalorder %s138, %s141
      %p150 = scmp.eq.s32.totalorder %s23, 1
      %p151 = por %p149, %p150
      %p152 = scmp.ne.s32.totalorder %s141, %s142
      %p153 = scmp.eq.s32.totalorder %s23, 0
      %p154 = por %p152, %p153
      %p155 = scmp.ne.s32.totalorder %s141, %s142
      %p156 = scmp.eq.s32.totalorder %s24, 1
      %p157 = por %p155, %p156
      %p159 = scmp.ne.s32.totalorder %s142, %s158
      %p160 = scmp.eq.s32.totalorder %s24, 0
      %p161 = por %p159, %p160
      %p162 = scmp.le.s32.totalorder 1, %s18
      %p163 = scmp.lt.s32.totalorder %s18, 3
      %p164 = pnand %p162, %p163
      %p165 = pneg %p164
      // Predicated region
      $region9: #{transformer_forward.19} parent=5 // pred_check
        _
      $region10: #{transformer_forward.19} parent=5 // pred_check_branch
        %167 = sbr.rel (%p164) target = $region12
      $region11: #{transformer_forward.19} parent=5 // pred_region
        %s168 = ssub.s32 %s18, 1
        // Predicated region
        $region13: #{transformer_forward.19} parent=11 // pred_check
          %p169 = pneg %p79
        $region14: #{transformer_forward.19} parent=11 // pred_check_branch
          %171 = sbr.rel (%p169) target = $region16
        $region15: #{transformer_forward.19} parent=11 // pred_region
          %s173 = ssub.s32 64, 64
          %174 = vsyncadd [#allocation6], %s173
          %s176 = sshll.u32 [#allocation5], 4
          %s177 = int_to_ptr.vmem [resolvable:$true] %s176
          %179 = dma.hbm_to_vmem [thread:$0]  %s1, 64, %s177, [#allocation6]
        $region16: #{transformer_forward.19} parent=11 // pred_fallthru
          _
        // Predicated region
        $region17: #{transformer_forward.19} parent=11 // pred_check
          %p180 = pneg %p100
        $region18: #{transformer_forward.19} parent=11 // pred_check_branch
          %182 = sbr.rel (%p180) target = $region20
        $region19: #{transformer_forward.19} parent=11 // pred_region
          %s184 = ssub.s32 16, 16
          %185 = vsyncadd [#allocation6], %s184
          %s187 = sshll.u32 [#allocation7], 4
          %s188 = int_to_ptr.vmem [resolvable:$true] %s187
          %190 = dma.hbm_to_vmem [thread:$0]  %s2, 16, %s188, [#allocation6]
        $region20: #{transformer_forward.19} parent=11 // pred_fallthru
          _
        // Predicated region
        $region21: #{transformer_forward.19} parent=11 // pred_check
          %p191 = pneg %p126
        $region22: #{transformer_forward.19} parent=11 // pred_check_branch
          %193 = sbr.rel (%p191) target = $region24
        $region23: #{transformer_forward.19} parent=11 // pred_region
          %s194 = smul.u32 2, %s28
          %s196 = ssub.s32 256, 256
          %197 = vsyncadd [#allocation9], %s196
          %s198 = smul.addr %s194, 128
          %s199 = scalar_lea.hbm %s3, %s198
          %s200 = sshll.u32 [#allocation8], 4
          %s201 = int_to_ptr.vmem [resolvable:$true] %s200
          %206 = dma.hbm_to_vmem [thread:$0]  %s199, 256, %s201, [#allocation9], 128, 128, 8
        $region24: #{transformer_forward.19} parent=11 // pred_fallthru
          _
      $region12: #{transformer_forward.19} parent=5 // pred_fallthru
        _
      %p207 = scmp.lt.s32.totalorder %s18, 2
      // Predicated region
      $region25: #{transformer_forward.19} parent=5 // pred_check
        %p208 = pneg %p207
      $region26: #{transformer_forward.19} parent=5 // pred_check_branch
        %210 = sbr.rel (%p208) target = $region28
      $region27: #{transformer_forward.19} parent=5 // pred_region
        // Predicated region
        $region29: #{transformer_forward.19} parent=27 // pred_check
          %p211 = pneg %p52
        $region30: #{transformer_forward.19} parent=27 // pred_check_branch
          %213 = sbr.rel (%p211) target = $region32
        $region31: #{transformer_forward.19} parent=27 // pred_region
          %s214 = sand.u32 %s42, 1
          %s215 = scalar_lea.sflag [#allocation3], %s214
          %s216 = sand.u32 %s42, 1
          %s217 = smul.addr %s216, 16
          %s218 = scalar_lea.vmem [#allocation2], %s217
          %s219 = smul.u32 2, %s26
          %s221 = ssub.s32 256, 256
          %222 = vsyncadd %s215, %s221
          %s223 = smul.addr %s25, 2
          %s224 = sadd.s32 %s219, %s223
          %s225 = smul.addr %s224, 128
          %s226 = scalar_lea.hbm %s0, %s225
          %s227 = sshll.u32 %s218, 4
          %s228 = int_to_ptr.vmem [resolvable:$true] %s227
          %233 = dma.hbm_to_vmem [thread:$0]  %s226, 256, %s228, %s215, 128, 128, 8
        $region32: #{transformer_forward.19} parent=27 // pred_fallthru
          _
      $region28: #{transformer_forward.19} parent=5 // pred_fallthru
        _
      %p234 = scmp.le.s32.totalorder 1, %s18
      %p235 = scmp.lt.s32.totalorder %s18, 3
      %p236 = pnand %p234, %p235
      %p237 = pneg %p236
      // Predicated region
      $region33: #{transformer_forward.19} parent=5 // pred_check
        _
      $region34: #{transformer_forward.19} parent=5 // pred_check_branch
        %239 = sbr.rel (%p236) target = $region36
      $region35: #{transformer_forward.19} parent=5 // pred_region
        %s240 = ssub.s32 %s18, 1
        %s241 = sand.u32 %s45, 1
        %s242 = scalar_lea.sflag [#allocation3], %s241
        %s243 = sand.u32 %s45, 1
        %s244 = smul.addr %s243, 16
        %s245 = scalar_lea.vmem [#allocation2], %s244
        // Predicated region
        $region37: #{transformer_forward.19} parent=35 // pred_check
          %p246 = pneg %p58
        $region38: #{transformer_forward.19} parent=35 // pred_check_branch
          %248 = sbr.rel (%p246) target = $region40
        $region39: #{transformer_forward.19} parent=35 // pred_region
          %249 = dma.done %s242, 256
        $region40: #{transformer_forward.19} parent=35 // pred_fallthru
          _
        // Predicated region
        $region41: #{transformer_forward.19} parent=35 // pred_check
          %p250 = pneg %p79
        $region42: #{transformer_forward.19} parent=35 // pred_check_branch
          %252 = sbr.rel (%p250) target = $region44
        $region43: #{transformer_forward.19} parent=35 // pred_region
          %253 = dma.done [#allocation6], 64
        $region44: #{transformer_forward.19} parent=35 // pred_fallthru
          _
        // Predicated region
        $region45: #{transformer_forward.19} parent=35 // pred_check
          %p254 = pneg %p100
        $region46: #{transformer_forward.19} parent=35 // pred_check_branch
          %256 = sbr.rel (%p254) target = $region48
        $region47: #{transformer_forward.19} parent=35 // pred_region
          %257 = dma.done [#allocation6], 16
        $region48: #{transformer_forward.19} parent=35 // pred_fallthru
          _
        // Predicated region
        $region49: #{transformer_forward.19} parent=35 // pred_check
          %p258 = pneg %p126
        $region50: #{transformer_forward.19} parent=35 // pred_check_branch
          %260 = sbr.rel (%p258) target = $region52
        $region51: #{transformer_forward.19} parent=35 // pred_region
          %261 = dma.done [#allocation9], 256
        $region52: #{transformer_forward.19} parent=35 // pred_fallthru
          _
        %s262 = sand.u32 %s45, 1
        %s263 = scalar_lea.sflag [#allocation3], %s262
        %s264 = sand.u32 %s45, 1
        %s265 = smul.addr %s264, 16
        %s266 = scalar_lea.vmem [#allocation2], %s265
        %p267 = pneg %p58
        %p268 = pneg %p55
        %p269 = pneg %p79
        %p270 = pneg %p76
        %p271 = pneg %p100
        %p272 = pneg %p97
        %p273 = pneg %p126
        %p274 = pneg %p123
        %p275 = pneg %p154
        %p276 = pneg %p151
        %s277 = sand.u32 %s141, 1
        %s278 = scalar_lea.sflag [#allocation4], %s277
        %s279 = sand.u32 %s141, 1
        %s280 = smul.addr %s279, 16
        %s281 = scalar_lea.vmem [#allocation10], %s280
        %s282 = smul.u32 2, %s28
        %s283 = smul.u32 2, %s28
        %s284 = smul.u32 2, %s28
        %v286 = vld [vmem:[%s245] sm:$0xff]
        %v287 = vld [vmem:[%s245 + $0x8] sm:$0xff]
        %v288 = vpack.c.bf16 %v287, %v286
        %v289 = vld [vmem:[#allocation5] sm:$0xf]
        %v290 = vld [vmem:[#allocation7] sm:$0x1]
        %v292 = vlaneseq
        %v293 = vshrl.u32 %v292, 7
        %v294 = vsub.s32 0, %v293
        %v295 = vrot.slane %v290, %v294
        %vm297 = vcmask 64512
        %v299 = vsel %vm297, %v288, 0
        %vm301 = vcmask 1043456
        %v303 = vsel %vm301, %v289, 0
        %305 = vmatprep.subr.bf16.mxu0 0
        %306 = vmatpush1.bf16.msra.mxu0 %v303
        %307 = vmatprep.subr.bf16.mxu0 0
        %308 = vmatpush1.bf16.msra.mxu0 0
        %309 = vmatprep.subr.bf16.mxu0 0
        %310 = vmatpush1.bf16.msra.mxu0 0
        %311 = vmatprep.subr.bf16.mxu0 0
        %312 = vmatpush1.bf16.msra.mxu0 0
        %313 = vmatprep.subr.bf16.mxu0 0
        %314 = vmatpush1.bf16.msra.mxu0 0
        %315 = vmatprep.subr.bf16.mxu0 0
        %316 = vmatpush1.bf16.msra.mxu0 0
        %317 = vmatprep.subr.bf16.mxu0 0
        %318 = vmatpush1.bf16.msra.mxu0 0
        %319 = vmatprep.subr.bf16.mxu0 0
        %320 = vmatpush1.bf16.msra.mxu0 0
        %321 = vmatprep.subr.bf16.mxu0 0
        %322 = vmatpush1.bf16.msra.mxu0 0
        %323 = vmatprep.subr.bf16.mxu0 0
        %324 = vmatpush1.bf16.msra.mxu0 0
        %325 = vmatprep.subr.bf16.mxu0 0
        %326 = vmatpush1.bf16.msra.mxu0 0
        %327 = vmatprep.subr.bf16.mxu0 0
        %328 = vmatpush1.bf16.msra.mxu0 0
        %329 = vmatprep.subr.bf16.mxu0 0
        %330 = vmatpush1.bf16.msra.mxu0 0
        %331 = vmatprep.subr.bf16.mxu0 0
        %332 = vmatpush1.bf16.msra.mxu0 0
        %333 = vmatprep.subr.bf16.mxu0 0
        %334 = vmatpush1.bf16.msra.mxu0 0
        %335 = vmatprep.subr.bf16.mxu0 0
        %336 = vmatpush1.bf16.msra.mxu0 0
        %337 = vmatprep.mubr.bf16.mxu0 0
        %338 = vmatmul.mubr.bf16.gmra.mrb[0].mxu0 %v299
        %v339 = vpop.f32.mrb[0].mxu0
        %v340 = vadd.f32 %v295, %v339
        %v341 = vpop.f32.mrb[0].mxu0
        %v342 = vpop.f32.mrb[0].mxu0
        %v343 = vadd.f32 %v295, %v342
        %v344 = vpop.f32.mrb[0].mxu0
        %345 = vdwg.mxu0
        %v346 = vld [vmem:[#allocation8] sm:$0xff]
        %v347 = vld [vmem:[#allocation8 + $0x8] sm:$0xff]
        %v348 = vadd.f32 %v340, %v346
        %v349 = vadd.f32 %v343, %v347
        %vm350 = vcmask 261120
        %351 = vst.msk [vmem:[%s281] sm:$0xff] %vm350, %v348
        %352 = vst.msk [vmem:[%s281 + $0x8] sm:$0xff] %vm350, %v349
        %s353 = sand.u32 %s141, 1
        %s354 = scalar_lea.sflag [#allocation4], %s353
        %s355 = sand.u32 %s141, 1
        %s356 = smul.addr %s355, 16
        %s357 = scalar_lea.vmem [#allocation10], %s356
        // Predicated region
        $region53: #{transformer_forward.19} parent=35 // pred_check
          %p358 = pneg %p151
        $region54: #{transformer_forward.19} parent=35 // pred_check_branch
          %360 = sbr.rel (%p358) target = $region56
        $region55: #{transformer_forward.19} parent=35 // pred_region
          %s361 = smul.u32 2, %s28
          %s363 = ssub.s32 256, 256
          %364 = vsyncadd %s354, %s363
          %s365 = smul.addr %s27, 2
          %s366 = sadd.s32 %s361, %s365
          %s367 = smul.addr %s366, 128
          %s368 = scalar_lea.hbm %s4, %s367
          %s369 = sshll.u32 %s357, 4
          %s370 = int_to_ptr.vmem [resolvable:$true] %s369
          %375 = dma.vmem_to_hbm [thread:$0]  %s370, 256, %s368, %s354, 128, 128, 8
        $region56: #{transformer_forward.19} parent=35 // pred_fallthru
          _
      $region36: #{transformer_forward.19} parent=5 // pred_fallthru
        _
      %p376 = scmp.le.s32.totalorder 2, %s18
      // Predicated region
      $region57: #{transformer_forward.19} parent=5 // pred_check
        %p377 = pneg %p376
      $region58: #{transformer_forward.19} parent=5 // pred_check_branch
        %379 = sbr.rel (%p377) target = $region60
      $region59: #{transformer_forward.19} parent=5 // pred_region
        %s380 = ssub.s32 %s18, 2
        // Predicated region
        $region61: #{transformer_forward.19} parent=59 // pred_check
          %p381 = pneg %p157
        $region62: #{transformer_forward.19} parent=59 // pred_check_branch
          %383 = sbr.rel (%p381) target = $region64
        $region63: #{transformer_forward.19} parent=59 // pred_region
          %s384 = sand.u32 %s142, 1
          %s385 = scalar_lea.sflag [#allocation4], %s384
          %s386 = sand.u32 %s142, 1
          %s387 = smul.addr %s386, 16
          %s388 = scalar_lea.vmem [#allocation10], %s387
          %389 = dma.done %s385, 256
        $region64: #{transformer_forward.19} parent=59 // pred_fallthru
          _
      $region60: #{transformer_forward.19} parent=5 // pred_fallthru
        _
    $region6: #{transformer_forward.19} parent=1 // loop_footer
      %s22 = sadd.s32 1, %s18
    $region7: #{transformer_forward.19} parent=1 // loop_footer_branch
      %17 = sbr.rel target = $region3
    $region8: #{transformer_forward.19} parent=1 // loop_exit
      _
    %390 = vsyncpa [#allocation3], 1
    %s391 = scalar_lea.sflag [#allocation3], 1
    %392 = vsyncpa %s391, 1
    %393 = vsyncpa [#allocation6], 1
    %394 = vsyncpa [#allocation9], 1
    %395 = vsyncpa [#allocation4], 1
    %s396 = scalar_lea.sflag [#allocation4], 1
    %397 = vsyncpa %s396, 1

// kernel: transformer_forward.22
$region0: #{transformer_forward.22}
  #allocation0 [shape = 'u32[]', space=smem, size = 0x4, offset = 0x4, fixed_abs, tag = 'smem constant byte address 0x4 - core index']
  #allocation1 [shape = 'u32[144,128]{1,0:T(1,128)}', space=vmem, size = 0x12000, scoped, tag = 'internal scratch']
  %s0 = inlined_call_operand.hbm [shape: bf16[2,16,32], index: 0, kind: input, shape index: {}]
  %s1 = inlined_call_operand.hbm [shape: bf16[32,32], index: 1, kind: input, shape index: {}]
  %s2 = inlined_call_operand.hbm [shape: f32[1,32], index: 2, kind: input, shape index: {}]
  %s3 = inlined_call_operand.hbm [shape: f32[2,16,32], index: 3, kind: input, shape index: {}]
  %s4 = inlined_call_operand.hbm [shape: f32[1,32], index: 4, kind: input, shape index: {}]
  %s5 = inlined_call_operand.hbm [shape: f32[1,32], index: 5, kind: input, shape index: {}]
  %s6 = inlined_call_operand.hbm [shape: f32[2,16,32], index: 6, kind: output, shape index: {}]
  %s7 = sld [smem:[#allocation0]]
  $region81: #{transformer_forward.22} parent=0
    _
  %s9 = ssub.s32 1, %s7
  %s10 = scalar_select 0, %s9, %s7
  $region1: #{transformer_forward.22} parent=0
    #allocation2 [shape = 'u8[8192]{0}', space=vmem, size = 0x2000, scoped, tag = 'input window, operand 0']
    #allocation3 [shape = 's32[2]{0}', space=sflag, size = 0x8, scoped, tag = 'scoped memory for transformer_forward.22']
    #allocation4 [shape = 's32[2]{0}', space=sflag, size = 0x8, scoped, tag = 'scoped memory for transformer_forward.22']
    #allocation5 [shape = 'u8[8192]{0}', space=vmem, size = 0x2000, scoped, tag = 'input window, operand 1, single buffered']
    #allocation6 [shape = 's32[1]{0}', space=sflag, size = 0x4, scoped, tag = 'scoped memory for transformer_forward.22']
    #allocation7 [shape = 'u8[512]{0}', space=vmem, size = 0x400, scoped, tag = 'input window, operand 2, single buffered']
    #allocation8 [shape = 'u8[16384]{0}', space=vmem, size = 0x4000, scoped, tag = 'input window, operand 3']
    #allocation9 [shape = 's32[2]{0}', space=sflag, size = 0x8, scoped, tag = 'scoped memory for transformer_forward.22']
    #allocation10 [shape = 'u8[512]{0}', space=vmem, size = 0x400, scoped, tag = 'input window, operand 4, single buffered']
    #allocation11 [shape = 'u8[512]{0}', space=vmem, size = 0x400, scoped, tag = 'input window, operand 5, single buffered']
    #allocation12 [shape = 's32[1]{0}', space=sflag, size = 0x4, scoped, tag = 'scoped memory for transformer_forward.22']
    #allocation13 [shape = 'u8[16384]{0}', space=vmem, size = 0x4000, scoped, tag = 'output window, operand 0']
    %11 = vsyncpa [#allocation3], 0
    %s12 = scalar_lea.sflag [#allocation3], 1
    %13 = vsyncpa %s12, 0
    %14 = vsyncpa [#allocation6], 0
    %15 = vsyncpa [#allocation9], 0
    %s16 = scalar_lea.sflag [#allocation9], 1
    %17 = vsyncpa %s16, 0
    %18 = vsyncpa [#allocation12], 0
    %19 = vsyncpa [#allocation4], 0
    %s20 = scalar_lea.sflag [#allocation4], 1
    %21 = vsyncpa %s20, 0
    loop: start=0, step=1, limit=4
    $region2: #{transformer_forward.22} parent=1 // loop_pre_header
      _
    $region3: #{transformer_forward.22} parent=1 // loop_header
      %s23 = sphi 0, %s27
      %p24 = scmp.ge.s32.totalorder %s23, 4
      %s30 = sphi 0, %s42
      %s31 = sphi 0, %s38
      %s32 = sphi 0, %s30
      %s33 = sphi 0, %s31
      %s34 = sphi 0, %s32
      %s35 = sphi 0, %s33
      %s47 = sphi 0, %s49
      %s50 = sphi 0, %s47
      %s51 = sphi 0, %s50
      %s67 = sphi 0, %s51
      %s71 = sphi 0, %s71
      %s73 = sphi 0, %s71
      %s74 = sphi 0, %s73
      %s88 = sphi 0, %s74
      %s92 = sphi 0, %s92
      %s94 = sphi 0, %s92
      %s95 = sphi 0, %s94
      %s109 = sphi 0, %s95
      %s117 = sphi 0, %s119
      %s120 = sphi 0, %s117
      %s121 = sphi 0, %s120
      %s137 = sphi 0, %s121
      %s141 = sphi 0, %s141
      %s143 = sphi 0, %s141
      %s144 = sphi 0, %s143
      %s158 = sphi 0, %s144
      %s162 = sphi 0, %s162
      %s164 = sphi 0, %s162
      %s165 = sphi 0, %s164
      %s179 = sphi 0, %s165
      %s187 = sphi 0, %s189
      %s190 = sphi 0, %s187
      %s191 = sphi 0, %s190
      %s207 = sphi 0, %s191
    $region4: #{transformer_forward.22} parent=1 // loop_header_branch
      %26 = sbr.rel (%p24) target = $region8
    $region5: #{transformer_forward.22} parent=1 // loop_body
      %s28 = ssub.s32 %s23, 1
      %s29 = ssub.s32 %s23, 2
      %s36 = sadd.s32 1, %s31
      %p37 = scmp.ge.s32.totalorder %s36, 1
      %s38 = scalar_select %p37, 0, %s36
      %s39 = sadd.s32 1, %s30
      %s40 = scalar_select %p37, %s39, %s30
      %p41 = scmp.ge.s32.totalorder %s40, 2
      %s42 = scalar_select %p41, 0, %s40
      %s43 = ssub.s32 %s30, %s42
      %s44 = ssub.s32 %s31, %s38
      %s45 = sor.u32 %s43, %s44
      %p46 = scmp.eq.s32.totalorder %s45, 0
      %s48 = sadd.s32 %s47, 1
      %s49 = scalar_select %p46, %s47, %s48
      %p52 = pneg %p46
      %p53 = scmp.eq.s32.totalorder %s23, 1
      %p54 = por %p52, %p53
      %p55 = scmp.ne.s32.totalorder %s47, %s50
      %p56 = scmp.eq.s32.totalorder %s23, 0
      %p57 = por %p55, %p56
      %p58 = scmp.ne.s32.totalorder %s47, %s50
      %p59 = scmp.eq.s32.totalorder %s28, 1
      %p60 = por %p58, %p59
      %p61 = scmp.ne.s32.totalorder %s50, %s51
      %p62 = scmp.eq.s32.totalorder %s28, 0
      %p63 = por %p61, %p62
      %p64 = scmp.ne.s32.totalorder %s50, %s51
      %p65 = scmp.eq.s32.totalorder %s29, 1
      %p66 = por %p64, %p65
      %p68 = scmp.ne.s32.totalorder %s51, %s67
      %p69 = scmp.eq.s32.totalorder %s29, 0
      %p70 = por %p68, %p69
      %s72 = sadd.s32 %s71, 1
      %p75 = scmp.eq.s32.totalorder %s23, 1
      %p76 = scmp.ne.s32.totalorder %s71, %s73
      %p77 = scmp.eq.s32.totalorder %s23, 0
      %p78 = por %p76, %p77
      %p79 = scmp.ne.s32.totalorder %s71, %s73
      %p80 = scmp.eq.s32.totalorder %s28, 1
      %p81 = por %p79, %p80
      %p82 = scmp.ne.s32.totalorder %s73, %s74
      %p83 = scmp.eq.s32.totalorder %s28, 0
      %p84 = por %p82, %p83
      %p85 = scmp.ne.s32.totalorder %s73, %s74
      %p86 = scmp.eq.s32.totalorder %s29, 1
      %p87 = por %p85, %p86
      %p89 = scmp.ne.s32.totalorder %s74, %s88
      %p90 = scmp.eq.s32.totalorder %s29, 0
      %p91 = por %p89, %p90
      %s93 = sadd.s32 %s92, 1
      %p96 = scmp.eq.s32.totalorder %s23, 1
      %p97 = scmp.ne.s32.totalorder %s92, %s94
      %p98 = scmp.eq.s32.totalorder %s23, 0
      %p99 = por %p97, %p98
      %p100 = scmp.ne.s32.totalorder %s92, %s94
      %p101 = scmp.eq.s32.totalorder %s28, 1
      %p102 = por %p100, %p101
      %p103 = scmp.ne.s32.totalorder %s94, %s95
      %p104 = scmp.eq.s32.totalorder %s28, 0
      %p105 = por %p103, %p104
      %p106 = scmp.ne.s32.totalorder %s94, %s95
      %p107 = scmp.eq.s32.totalorder %s29, 1
      %p108 = por %p106, %p107
      %p110 = scmp.ne.s32.totalorder %s95, %s109
      %p111 = scmp.eq.s32.totalorder %s29, 0
      %p112 = por %p110, %p111
      %s113 = ssub.s32 %s30, %s42
      %s114 = ssub.s32 %s31, %s38
      %s115 = sor.u32 %s113, %s114
      %p116 = scmp.eq.s32.totalorder %s115, 0
      %s118 = sadd.s32 %s117, 1
      %s119 = scalar_select %p116, %s117, %s118
      %p122 = pneg %p116
      %p123 = scmp.eq.s32.totalorder %s23, 1
      %p124 = por %p122, %p123
      %p125 = scmp.ne.s32.totalorder %s117, %s120
      %p126 = scmp.eq.s32.totalorder %s23, 0
      %p127 = por %p125, %p126
      %p128 = scmp.ne.s32.totalorder %s117, %s120
      %p129 = scmp.eq.s32.totalorder %s28, 1
      %p130 = por %p128, %p129
      %p131 = scmp.ne.s32.totalorder %s120, %s121
      %p132 = scmp.eq.s32.totalorder %s28, 0
      %p133 = por %p131, %p132
      %p134 = scmp.ne.s32.totalorder %s120, %s121
      %p135 = scmp.eq.s32.totalorder %s29, 1
      %p136 = por %p134, %p135
      %p138 = scmp.ne.s32.totalorder %s121, %s137
      %p139 = scmp.eq.s32.totalorder %s29, 0
      %p140 = por %p138, %p139
      %s142 = sadd.s32 %s141, 1
      %p145 = scmp.eq.s32.totalorder %s23, 1
      %p146 = scmp.ne.s32.totalorder %s141, %s143
      %p147 = scmp.eq.s32.totalorder %s23, 0
      %p148 = por %p146, %p147
      %p149 = scmp.ne.s32.totalorder %s141, %s143
      %p150 = scmp.eq.s32.totalorder %s28, 1
      %p151 = por %p149, %p150
      %p152 = scmp.ne.s32.totalorder %s143, %s144
      %p153 = scmp.eq.s32.totalorder %s28, 0
      %p154 = por %p152, %p153
      %p155 = scmp.ne.s32.totalorder %s143, %s144
      %p156 = scmp.eq.s32.totalorder %s29, 1
      %p157 = por %p155, %p156
      %p159 = scmp.ne.s32.totalorder %s144, %s158
      %p160 = scmp.eq.s32.totalorder %s29, 0
      %p161 = por %p159, %p160
      %s163 = sadd.s32 %s162, 1
      %p166 = scmp.eq.s32.totalorder %s23, 1
      %p167 = scmp.ne.s32.totalorder %s162, %s164
      %p168 = scmp.eq.s32.totalorder %s23, 0
      %p169 = por %p167, %p168
      %p170 = scmp.ne.s32.totalorder %s162, %s164
      %p171 = scmp.eq.s32.totalorder %s28, 1
      %p172 = por %p170, %p171
      %p173 = scmp.ne.s32.totalorder %s164, %s165
      %p174 = scmp.eq.s32.totalorder %s28, 0
      %p175 = por %p173, %p174
      %p176 = scmp.ne.s32.totalorder %s164, %s165
      %p177 = scmp.eq.s32.totalorder %s29, 1
      %p178 = por %p176, %p177
      %p180 = scmp.ne.s32.totalorder %s165, %s179
      %p181 = scmp.eq.s32.totalorder %s29, 0
      %p182 = por %p180, %p181
      %s183 = ssub.s32 %s30, %s42
      %s184 = ssub.s32 %s31, %s38
      %s185 = sor.u32 %s183, %s184
      %p186 = scmp.eq.s32.totalorder %s185, 0
      %s188 = sadd.s32 %s187, 1
      %s189 = scalar_select %p186, %s187, %s188
      %p192 = pneg %p186
      %p193 = scmp.eq.s32.totalorder %s23, 1
      %p194 = por %p192, %p193
      %p195 = scmp.ne.s32.totalorder %s187, %s190
      %p196 = scmp.eq.s32.totalorder %s23, 0
      %p197 = por %p195, %p196
      %p198 = scmp.ne.s32.totalorder %s187, %s190
      %p199 = scmp.eq.s32.totalorder %s28, 1
      %p200 = por %p198, %p199
      %p201 = scmp.ne.s32.totalorder %s190, %s191
      %p202 = scmp.eq.s32.totalorder %s28, 0
      %p203 = por %p201, %p202
      %p204 = scmp.ne.s32.totalorder %s190, %s191
      %p205 = scmp.eq.s32.totalorder %s29, 1
      %p206 = por %p204, %p205
      %p208 = scmp.ne.s32.totalorder %s191, %s207
      %p209 = scmp.eq.s32.totalorder %s29, 0
      %p210 = por %p208, %p209
      %p211 = scmp.le.s32.totalorder 1, %s23
      %p212 = scmp.lt.s32.totalorder %s23, 3
      %p213 = pnand %p211, %p212
      %p214 = pneg %p213
      // Predicated region
      $region9: #{transformer_forward.22} parent=5 // pred_check
        _
      $region10: #{transformer_forward.22} parent=5 // pred_check_branch
        %216 = sbr.rel (%p213) target = $region12
      $region11: #{transformer_forward.22} parent=5 // pred_region
        %s217 = ssub.s32 %s23, 1
        // Predicated region
        $region13: #{transformer_forward.22} parent=11 // pred_check
          %p218 = pneg %p84
        $region14: #{transformer_forward.22} parent=11 // pred_check_branch
          %220 = sbr.rel (%p218) target = $region16
        $region15: #{transformer_forward.22} parent=11 // pred_region
          %s222 = ssub.s32 256, 256
          %223 = vsyncadd [#allocation6], %s222
          %s224 = sshll.u32 [#allocation5], 4
          %s225 = int_to_ptr.vmem [resolvable:$true] %s224
          %230 = dma.hbm_to_vmem [thread:$0]  %s1, 256, %s225, [#allocation6], 64, 64, 4
        $region16: #{transformer_forward.22} parent=11 // pred_fallthru
          _
        // Predicated region
        $region17: #{transformer_forward.22} parent=11 // pred_check
          %p231 = pneg %p105
        $region18: #{transformer_forward.22} parent=11 // pred_check_branch
          %233 = sbr.rel (%p231) target = $region20
        $region19: #{transformer_forward.22} parent=11 // pred_region
          %s235 = ssub.s32 16, 16
          %236 = vsyncadd [#allocation6], %s235
          %s238 = sshll.u32 [#allocation7], 4
          %s239 = int_to_ptr.vmem [resolvable:$true] %s238
          %241 = dma.hbm_to_vmem [thread:$0]  %s2, 16, %s239, [#allocation6]
        $region20: #{transformer_forward.22} parent=11 // pred_fallthru
          _
        // Predicated region
        $region21: #{transformer_forward.22} parent=11 // pred_check
          %p242 = pneg %p154
        $region22: #{transformer_forward.22} parent=11 // pred_check_branch
          %244 = sbr.rel (%p242) target = $region24
        $region23: #{transformer_forward.22} parent=11 // pred_region
          %s246 = ssub.s32 16, 16
          %247 = vsyncadd [#allocation9], %s246
          %s249 = sshll.u32 [#allocation10], 4
          %s250 = int_to_ptr.vmem [resolvable:$true] %s249
          %252 = dma.hbm_to_vmem [thread:$0]  %s4, 16, %s250, [#allocation9]
        $region24: #{transformer_forward.22} parent=11 // pred_fallthru
          _
        // Predicated region
        $region25: #{transformer_forward.22} parent=11 // pred_check
          %p253 = pneg %p175
        $region26: #{transformer_forward.22} parent=11 // pred_check_branch
          %255 = sbr.rel (%p253) target = $region28
        $region27: #{transformer_forward.22} parent=11 // pred_region
          %s257 = ssub.s32 16, 16
          %258 = vsyncadd [#allocation12], %s257
          %s260 = sshll.u32 [#allocation11], 4
          %s261 = int_to_ptr.vmem [resolvable:$true] %s260
          %263 = dma.hbm_to_vmem [thread:$0]  %s5, 16, %s261, [#allocation12]
        $region28: #{transformer_forward.22} parent=11 // pred_fallthru
          _
      $region12: #{transformer_forward.22} parent=5 // pred_fallthru
        _
      %p264 = scmp.lt.s32.totalorder %s23, 2
      // Predicated region
      $region29: #{transformer_forward.22} parent=5 // pred_check
        %p265 = pneg %p264
      $region30: #{transformer_forward.22} parent=5 // pred_check_branch
        %267 = sbr.rel (%p265) target = $region32
      $region31: #{transformer_forward.22} parent=5 // pred_region
        // Predicated region
        $region33: #{transformer_forward.22} parent=31 // pred_check
          %p268 = pneg %p57
        $region34: #{transformer_forward.22} parent=31 // pred_check_branch
          %270 = sbr.rel (%p268) target = $region36
        $region35: #{transformer_forward.22} parent=31 // pred_region
          %s271 = sand.u32 %s47, 1
          %s272 = scalar_lea.sflag [#allocation3], %s271
          %s273 = sand.u32 %s47, 1
          %s274 = smul.addr %s273, 8
          %s275 = scalar_lea.vmem [#allocation2], %s274
          %s276 = smul.u32 2, %s31
          %s278 = ssub.s32 128, 128
          %279 = vsyncadd %s272, %s278
          %s280 = smul.addr %s30, 2
          %s281 = sadd.s32 %s276, %s280
          %s282 = smul.addr %s281, 64
          %s283 = scalar_lea.hbm %s0, %s282
          %s284 = sshll.u32 %s275, 4
          %s285 = int_to_ptr.vmem [resolvable:$true] %s284
          %290 = dma.hbm_to_vmem [thread:$0]  %s283, 128, %s285, %s272, 64, 64, 4
        $region36: #{transformer_forward.22} parent=31 // pred_fallthru
          _
        // Predicated region
        $region37: #{transformer_forward.22} parent=31 // pred_check
          %p291 = pneg %p127
        $region38: #{transformer_forward.22} parent=31 // pred_check_branch
          %293 = sbr.rel (%p291) target = $region40
        $region39: #{transformer_forward.22} parent=31 // pred_region
          %s294 = sand.u32 %s23, 1
          %s295 = scalar_lea.sflag [#allocation9], %s294
          %s296 = sand.u32 %s117, 1
          %s297 = smul.addr %s296, 16
          %s298 = scalar_lea.vmem [#allocation8], %s297
          %s299 = smul.u32 2, %s31
          %s301 = ssub.s32 256, 256
          %302 = vsyncadd %s295, %s301
          %s303 = smul.addr %s30, 2
          %s304 = sadd.s32 %s299, %s303
          %s305 = smul.addr %s304, 128
          %s306 = scalar_lea.hbm %s3, %s305
          %s307 = sshll.u32 %s298, 4
          %s308 = int_to_ptr.vmem [resolvable:$true] %s307
          %313 = dma.hbm_to_vmem [thread:$0]  %s306, 256, %s308, %s295, 128, 128, 8
        $region40: #{transformer_forward.22} parent=31 // pred_fallthru
          _
      $region32: #{transformer_forward.22} parent=5 // pred_fallthru
        _
      %p314 = scmp.le.s32.totalorder 1, %s23
      %p315 = scmp.lt.s32.totalorder %s23, 3
      %p316 = pnand %p314, %p315
      %p317 = pneg %p316
      // Predicated region
      $region41: #{transformer_forward.22} parent=5 // pred_check
        _
      $region42: #{transformer_forward.22} parent=5 // pred_check_branch
        %319 = sbr.rel (%p316) target = $region44
      $region43: #{transformer_forward.22} parent=5 // pred_region
        %s320 = ssub.s32 %s23, 1
        %s321 = sand.u32 %s50, 1
        %s322 = scalar_lea.sflag [#allocation3], %s321
        %s323 = sand.u32 %s50, 1
        %s324 = smul.addr %s323, 8
        %s325 = scalar_lea.vmem [#allocation2], %s324
        // Predicated region
        $region45: #{transformer_forward.22} parent=43 // pred_check
          %p326 = pneg %p63
        $region46: #{transformer_forward.22} parent=43 // pred_check_branch
          %328 = sbr.rel (%p326) target = $region48
        $region47: #{transformer_forward.22} parent=43 // pred_region
          %329 = dma.done %s322, 128
        $region48: #{transformer_forward.22} parent=43 // pred_fallthru
          _
        // Predicated region
        $region49: #{transformer_forward.22} parent=43 // pred_check
          %p330 = pneg %p84
        $region50: #{transformer_forward.22} parent=43 // pred_check_branch
          %332 = sbr.rel (%p330) target = $region52
        $region51: #{transformer_forward.22} parent=43 // pred_region
          %333 = dma.done [#allocation6], 256
        $region52: #{transformer_forward.22} parent=43 // pred_fallthru
          _
        // Predicated region
        $region53: #{transformer_forward.22} parent=43 // pred_check
          %p334 = pneg %p105
        $region54: #{transformer_forward.22} parent=43 // pred_check_branch
          %336 = sbr.rel (%p334) target = $region56
        $region55: #{transformer_forward.22} parent=43 // pred_region
          %337 = dma.done [#allocation6], 16
        $region56: #{transformer_forward.22} parent=43 // pred_fallthru
          _
        %s338 = sand.u32 %s28, 1
        %s339 = scalar_lea.sflag [#allocation9], %s338
        %s340 = sand.u32 %s120, 1
        %s341 = smul.addr %s340, 16
        %s342 = scalar_lea.vmem [#allocation8], %s341
        // Predicated region
        $region57: #{transformer_forward.22} parent=43 // pred_check
          %p343 = pneg %p133
        $region58: #{transformer_forward.22} parent=43 // pred_check_branch
          %345 = sbr.rel (%p343) target = $region60
        $region59: #{transformer_forward.22} parent=43 // pred_region
          %346 = dma.done %s339, 256
        $region60: #{transformer_forward.22} parent=43 // pred_fallthru
          _
        // Predicated region
        $region61: #{transformer_forward.22} parent=43 // pred_check
          %p347 = pneg %p154
        $region62: #{transformer_forward.22} parent=43 // pred_check_branch
          %349 = sbr.rel (%p347) target = $region64
        $region63: #{transformer_forward.22} parent=43 // pred_region
          %350 = dma.done [#allocation9], 16
        $region64: #{transformer_forward.22} parent=43 // pred_fallthru
          _
        // Predicated region
        $region65: #{transformer_forward.22} parent=43 // pred_check
          %p351 = pneg %p175
        $region66: #{transformer_forward.22} parent=43 // pred_check_branch
          %353 = sbr.rel (%p351) target = $region68
        $region67: #{transformer_forward.22} parent=43 // pred_region
          %354 = dma.done [#allocation12], 16
        $region68: #{transformer_forward.22} parent=43 // pred_fallthru
          _
        %s355 = sand.u32 %s50, 1
        %s356 = scalar_lea.sflag [#allocation3], %s355
        %s357 = sand.u32 %s50, 1
        %s358 = smul.addr %s357, 8
        %s359 = scalar_lea.vmem [#allocation2], %s358
        %p360 = pneg %p63
        %p361 = pneg %p60
        %p362 = pneg %p84
        %p363 = pneg %p81
        %p364 = pneg %p105
        %p365 = pneg %p102
        %s366 = sand.u32 %s28, 1
        %s367 = scalar_lea.sflag [#allocation9], %s366
        %s368 = sand.u32 %s120, 1
        %s369 = smul.addr %s368, 16
        %s370 = scalar_lea.vmem [#allocation8], %s369
        %p371 = pneg %p133
        %p372 = pneg %p130
        %p373 = pneg %p154
        %p374 = pneg %p151
        %p375 = pneg %p175
        %p376 = pneg %p172
        %p377 = pneg %p203
        %p378 = pneg %p200
        %s379 = sand.u32 %s190, 1
        %s380 = scalar_lea.sflag [#allocation4], %s379
        %s381 = sand.u32 %s190, 1
        %s382 = smul.addr %s381, 16
        %s383 = scalar_lea.vmem [#allocation13], %s382
        %s384 = smul.u32 2, %s33
        %s385 = smul.u32 2, %s33
        %s386 = smul.u32 2, %s33
        %v388 = vld [vmem:[%s325] sm:$0xf]
        %v389 = vld [vmem:[%s325 + $0x4] sm:$0xf]
        %v390 = vld [vmem:[#allocation5] sm:$0xf]
        %v391 = vld [vmem:[#allocation5 + $0x4] sm:$0xf]
        %v392 = vld [vmem:[#allocation5 + $0x8] sm:$0xf]
        %v393 = vld [vmem:[#allocation5 + $0xc] sm:$0xf]
        %v394 = vld [vmem:[#allocation7] sm:$0x1]
        %v396 = vlaneseq
        %v397 = vshrl.u32 %v396, 7
        %v398 = vsub.s32 0, %v397
        %v399 = vrot.slane %v394, %v398
        %v403 = vunpack.c.l.b16 %v388
        %v404 = vunpack.c.l.b16 %v389
        %v405 = vpack.c.b16 %v404, %v403
        %v410 = vunpack.c.l.b16 %v390
        %v411 = vunpack.c.l.b16 %v391
        %v412 = vunpack.c.l.b16 %v392
        %v413 = vunpack.c.l.b16 %v393
        %v414 = vpack.c.b16 %v411, %v410
        %v415 = vpack.c.b16 %v413, %v412
        %vm418 = vcmask 261120
        %v420 = vsel %vm418, %v405, 0
        %422 = vmatprep.subr.bf16.mxu0 0
        %423 = vmatpush1.bf16.msra.mxu0 %v414
        %424 = vmatprep.subr.bf16.mxu0 0
        %425 = vmatpush1.bf16.msra.mxu0 %v415
        %426 = vmatprep.subr.bf16.mxu0 0
        %427 = vmatpush1.bf16.msra.mxu0 0
        %428 = vmatprep.subr.bf16.mxu0 0
        %429 = vmatpush1.bf16.msra.mxu0 0
        %430 = vmatprep.subr.bf16.mxu0 0
        %431 = vmatpush1.bf16.msra.mxu0 0
        %432 = vmatprep.subr.bf16.mxu0 0
        %433 = vmatpush1.bf16.msra.mxu0 0
        %434 = vmatprep.subr.bf16.mxu0 0
        %435 = vmatpush1.bf16.msra.mxu0 0
        %436 = vmatprep.subr.bf16.mxu0 0
        %437 = vmatpush1.bf16.msra.mxu0 0
        %438 = vmatprep.subr.bf16.mxu0 0
        %439 = vmatpush1.bf16.msra.mxu0 0
        %440 = vmatprep.subr.bf16.mxu0 0
        %441 = vmatpush1.bf16.msra.mxu0 0
        %442 = vmatprep.subr.bf16.mxu0 0
        %443 = vmatpush1.bf16.msra.mxu0 0
        %444 = vmatprep.subr.bf16.mxu0 0
        %445 = vmatpush1.bf16.msra.mxu0 0
        %446 = vmatprep.subr.bf16.mxu0 0
        %447 = vmatpush1.bf16.msra.mxu0 0
        %448 = vmatprep.subr.bf16.mxu0 0
        %449 = vmatpush1.bf16.msra.mxu0 0
        %450 = vmatprep.subr.bf16.mxu0 0
        %451 = vmatpush1.bf16.msra.mxu0 0
        %452 = vmatprep.subr.bf16.mxu0 0
        %453 = vmatpush1.bf16.msra.mxu0 0
        %454 = vmatprep.mubr.bf16.mxu0 0
        %455 = vmatmul.mubr.bf16.gmra.mrb[0].mxu0 %v420
        %v456 = vpop.f32.mrb[0].mxu0
        %v457 = vadd.f32 %v399, %v456
        %v458 = vpop.f32.mrb[0].mxu0
        %v459 = vpop.f32.mrb[0].mxu0
        %v460 = vadd.f32 %v399, %v459
        %v461 = vpop.f32.mrb[0].mxu0
        %462 = vdwg.mxu0
        %v463 = vld [vmem:[%s342] sm:$0xff]
        %v464 = vld [vmem:[%s342 + $0x8] sm:$0xff]
        %v465 = vadd.f32 %v463, %v457
        %v466 = vadd.f32 %v464, %v460
        %v467 = vsel %vm418, %v465, 0.0
        %468 = vadd.xlane.f32.xlu0 %v467
        %v469 = vpop.xlane.xlu0 %468
        %v470 = vsel %vm418, %v466, 0.0
        %471 = vadd.xlane.f32.xlu0 %v470
        %v472 = vpop.xlane.xlu0 %471
        %v473 = vrcp.pop 32.0
        %v474 = vmul.f32 %v469, %v473
        %v475 = vmul.f32 %v472, %v473
        %v476 = vsub.f32 %v465, %v474
        %v477 = vsub.f32 %v466, %v475
        %v478 = vmul.f32 %v476, %v476
        %v479 = vmul.f32 %v477, %v477
        %v480 = vsel %vm418, %v478, 0.0
        %481 = vadd.xlane.f32.xlu0 %v480
        %v482 = vpop.xlane.xlu0 %481
        %v483 = vsel %vm418, %v479, 0.0
        %484 = vadd.xlane.f32.xlu0 %v483
        %v485 = vpop.xlane.xlu0 %484
        %v486 = vmul.f32 %v482, %v473
        %v487 = vmul.f32 %v485, %v473
        %v488 = vadd.f32 %v486, 1e-05
        %v489 = vadd.f32 %v487, 1e-05
        %v490 = vrsqrt.pop %v488
        %v491 = vrsqrt.pop %v489
        %v492 = vmul.f32 %v476, %v490
        %v493 = vmul.f32 %v477, %v491
        %v494 = vld [vmem:[#allocation10] sm:$0x1]
        %v496 = vlaneseq
        %v497 = vshrl.u32 %v496, 7
        %v498 = vsub.s32 0, %v497
        %v499 = vrot.slane %v494, %v498
        %v501 = vmul.f32 %v492, %v499
        %v502 = vmul.f32 %v493, %v499
        %v503 = vld [vmem:[#allocation11] sm:$0x1]
        %v505 = vlaneseq
        %v506 = vshrl.u32 %v505, 7
        %v507 = vsub.s32 0, %v506
        %v508 = vrot.slane %v503, %v507
        %v510 = vadd.f32 %v501, %v508
        %v511 = vadd.f32 %v502, %v508
        %512 = vst.msk [vmem:[%s383] sm:$0xff] %vm418, %v510
        %513 = vst.msk [vmem:[%s383 + $0x8] sm:$0xff] %vm418, %v511
        %s514 = sand.u32 %s190, 1
        %s515 = scalar_lea.sflag [#allocation4], %s514
        %s516 = sand.u32 %s190, 1
        %s517 = smul.addr %s516, 16
        %s518 = scalar_lea.vmem [#allocation13], %s517
        // Predicated region
        $region69: #{transformer_forward.22} parent=43 // pred_check
          %p519 = pneg %p200
        $region70: #{transformer_forward.22} parent=43 // pred_check_branch
          %521 = sbr.rel (%p519) target = $region72
        $region71: #{transformer_forward.22} parent=43 // pred_region
          %s522 = smul.u32 2, %s33
          %s524 = ssub.s32 256, 256
          %525 = vsyncadd %s515, %s524
          %s526 = smul.addr %s32, 2
          %s527 = sadd.s32 %s522, %s526
          %s528 = smul.addr %s527, 128
          %s529 = scalar_lea.hbm %s6, %s528
          %s530 = sshll.u32 %s518, 4
          %s531 = int_to_ptr.vmem [resolvable:$true] %s530
          %536 = dma.vmem_to_hbm [thread:$0]  %s531, 256, %s529, %s515, 128, 128, 8
        $region72: #{transformer_forward.22} parent=43 // pred_fallthru
          _
      $region44: #{transformer_forward.22} parent=5 // pred_fallthru
        _
      %p537 = scmp.le.s32.totalorder 2, %s23
      // Predicated region
      $region73: #{transformer_forward.22} parent=5 // pred_check
        %p538 = pneg %p537
      $region74: #{transformer_forward.22} parent=5 // pred_check_branch
        %540 = sbr.rel (%p538) target = $region76
      $region75: #{transformer_forward.22} parent=5 // pred_region
        %s541 = ssub.s32 %s23, 2
        // Predicated region
        $region77: #{transformer_forward.22} parent=75 // pred_check
          %p542 = pneg %p206
        $region78: #{transformer_forward.22} parent=75 // pred_check_branch
          %544 = sbr.rel (%p542) target = $region80
        $region79: #{transformer_forward.22} parent=75 // pred_region
          %s545 = sand.u32 %s191, 1
          %s546 = scalar_lea.sflag [#allocation4], %s545
          %s547 = sand.u32 %s191, 1
          %s548 = smul.addr %s547, 16
          %s549 = scalar_lea.vmem [#allocation13], %s548
          %550 = dma.done %s546, 256
        $region80: #{transformer_forward.22} parent=75 // pred_fallthru
          _
      $region76: #{transformer_forward.22} parent=5 // pred_fallthru
        _
    $region6: #{transformer_forward.22} parent=1 // loop_footer
      %s27 = sadd.s32 1, %s23
    $region7: #{transformer_forward.22} parent=1 // loop_footer_branch
      %22 = sbr.rel target = $region3
    $region8: #{transformer_forward.22} parent=1 // loop_exit
      _
    %551 = vsyncpa [#allocation3], 1
    %s552 = scalar_lea.sflag [#allocation3], 1
    %553 = vsyncpa %s552, 1
    %554 = vsyncpa [#allocation6], 1
    %555 = vsyncpa [#allocation9], 1
    %s556 = scalar_lea.sflag [#allocation9], 1
    %557 = vsyncpa %s556, 1
    %558 = vsyncpa [#allocation12], 1
    %559 = vsyncpa [#allocation4], 1
    %s560 = scalar_lea.sflag [#allocation4], 1
    %561 = vsyncpa %s560, 1

// kernel: transformer_forward.23
$region0: #{transformer_forward.23}
  #allocation0 [shape = 'u32[]', space=smem, size = 0x4, offset = 0x4, fixed_abs, tag = 'smem constant byte address 0x4 - core index']
  #allocation1 [shape = 'u32[144,128]{1,0:T(1,128)}', space=vmem, size = 0x12000, scoped, tag = 'internal scratch']
  #allocation2 [shape = 'f32[16,32]{1,0:T(8,128)}', space=vmem, size = 0x2000, scoped, tag = 'scratch operand']
  %s0 = inlined_call_operand.hbm [shape: f32[2,16,32], index: 0, kind: input, shape index: {}]
  %s1 = inlined_call_operand.hbm [shape: bf16[32,64], index: 1, kind: input, shape index: {}]
  %s2 = inlined_call_operand.hbm [shape: f32[1,64], index: 2, kind: input, shape index: {}]
  %s3 = inlined_call_operand.hbm [shape: bf16[64,32], index: 3, kind: input, shape index: {}]
  %s4 = inlined_call_operand.hbm [shape: f32[1,32], index: 4, kind: input, shape index: {}]
  %s5 = inlined_call_operand.hbm [shape: f32[1,32], index: 5, kind: input, shape index: {}]
  %s6 = inlined_call_operand.hbm [shape: f32[1,32], index: 6, kind: input, shape index: {}]
  %s7 = inlined_call_operand.hbm [shape: f32[2,16,32], index: 7, kind: output, shape index: {}]
  %s8 = sld [smem:[#allocation0]]
  $region97: #{transformer_forward.23} parent=0
    _
  %s10 = ssub.s32 1, %s8
  %s11 = scalar_select 0, %s10, %s8
  $region1: #{transformer_forward.23} parent=0
    #allocation3 [shape = 'u8[16384]{0}', space=vmem, size = 0x4000, scoped, tag = 'input window, operand 0']
    #allocation4 [shape = 's32[2]{0}', space=sflag, size = 0x8, scoped, tag = 'scoped memory for transformer_forward.23']
    #allocation5 [shape = 's32[2]{0}', space=sflag, size = 0x8, scoped, tag = 'scoped memory for transformer_forward.23']
    #allocation6 [shape = 'u8[8192]{0}', space=vmem, size = 0x2000, scoped, tag = 'input window, operand 1, single buffered']
    #allocation7 [shape = 's32[1]{0}', space=sflag, size = 0x4, scoped, tag = 'scoped memory for transformer_forward.23']
    #allocation8 [shape = 'u8[512]{0}', space=vmem, size = 0x400, scoped, tag = 'input window, operand 2, single buffered']
    #allocation9 [shape = 'u8[16384]{0}', space=vmem, size = 0x4000, scoped, tag = 'input window, operand 3, single buffered']
    #allocation10 [shape = 's32[1]{0}', space=sflag, size = 0x4, scoped, tag = 'scoped memory for transformer_forward.23']
    #allocation11 [shape = 'u8[512]{0}', space=vmem, size = 0x400, scoped, tag = 'input window, operand 4, single buffered']
    #allocation12 [shape = 'u8[512]{0}', space=vmem, size = 0x400, scoped, tag = 'input window, operand 5, single buffered']
    #allocation13 [shape = 's32[1]{0}', space=sflag, size = 0x4, scoped, tag = 'scoped memory for transformer_forward.23']
    #allocation14 [shape = 'u8[512]{0}', space=vmem, size = 0x400, scoped, tag = 'input window, operand 6, single buffered']
    #allocation15 [shape = 'u8[16384]{0}', space=vmem, size = 0x4000, scoped, tag = 'output window, operand 0']
    %12 = vsyncpa [#allocation4], 0
    %s13 = scalar_lea.sflag [#allocation4], 1
    %14 = vsyncpa %s13, 0
    %15 = vsyncpa [#allocation7], 0
    %16 = vsyncpa [#allocation10], 0
    %17 = vsyncpa [#allocation13], 0
    %18 = vsyncpa [#allocation5], 0
    %s19 = scalar_lea.sflag [#allocation5], 1
    %20 = vsyncpa %s19, 0
    loop: start=0, step=1, limit=4
    $region2: #{transformer_forward.23} parent=1 // loop_pre_header
      _
    $region3: #{transformer_forward.23} parent=1 // loop_header
      %s22 = sphi 0, %s26
      %p23 = scmp.ge.s32.totalorder %s22, 4
      %s29 = sphi 0, %s48
      %s30 = sphi 0, %s44
      %s31 = sphi 0, %s40
      %s32 = sphi 0, %s29
      %s33 = sphi 0, %s30
      %s34 = sphi 0, %s31
      %s35 = sphi 0, %s32
      %s36 = sphi 0, %s33
      %s37 = sphi 0, %s34
      %s53 = sphi 0, %s55
      %s56 = sphi 0, %s53
      %s57 = sphi 0, %s56
      %s73 = sphi 0, %s57
      %s79 = sphi 0, %s81
      %s82 = sphi 0, %s79
      %s83 = sphi 0, %s82
      %s99 = sphi 0, %s83
      %s105 = sphi 0, %s107
      %s108 = sphi 0, %s105
      %s109 = sphi 0, %s108
      %s125 = sphi 0, %s109
      %s131 = sphi 0, %s133
      %s134 = sphi 0, %s131
      %s135 = sphi 0, %s134
      %s151 = sphi 0, %s135
      %s155 = sphi 0, %s155
      %s157 = sphi 0, %s155
      %s158 = sphi 0, %s157
      %s172 = sphi 0, %s158
      %s176 = sphi 0, %s176
      %s178 = sphi 0, %s176
      %s179 = sphi 0, %s178
      %s193 = sphi 0, %s179
      %s197 = sphi 0, %s197
      %s199 = sphi 0, %s197
      %s200 = sphi 0, %s199
      %s214 = sphi 0, %s200
      %s222 = sphi 0, %s224
      %s225 = sphi 0, %s222
      %s226 = sphi 0, %s225
      %s242 = sphi 0, %s226
    $region4: #{transformer_forward.23} parent=1 // loop_header_branch
      %25 = sbr.rel (%p23) target = $region8
    $region5: #{transformer_forward.23} parent=1 // loop_body
      %s27 = ssub.s32 %s22, 1
      %s28 = ssub.s32 %s22, 2
      %s38 = sadd.s32 1, %s31
      %p39 = scmp.ge.s32.totalorder %s38, 1
      %s40 = scalar_select %p39, 0, %s38
      %s41 = sadd.s32 1, %s30
      %s42 = scalar_select %p39, %s41, %s30
      %p43 = scmp.ge.s32.totalorder %s42, 1
      %s44 = scalar_select %p43, 0, %s42
      %s45 = sadd.s32 1, %s29
      %s46 = scalar_select %p43, %s45, %s29
      %p47 = scmp.ge.s32.totalorder %s46, 2
      %s48 = scalar_select %p47, 0, %s46
      %s49 = ssub.s32 %s29, %s48
      %s50 = ssub.s32 %s30, %s44
      %s51 = sor.u32 %s49, %s50
      %p52 = scmp.eq.s32.totalorder %s51, 0
      %s54 = sadd.s32 %s53, 1
      %s55 = scalar_select %p52, %s53, %s54
      %p58 = pneg %p52
      %p59 = scmp.eq.s32.totalorder %s22, 1
      %p60 = por %p58, %p59
      %p61 = scmp.ne.s32.totalorder %s53, %s56
      %p62 = scmp.eq.s32.totalorder %s22, 0
      %p63 = por %p61, %p62
      %p64 = scmp.ne.s32.totalorder %s53, %s56
      %p65 = scmp.eq.s32.totalorder %s27, 1
      %p66 = por %p64, %p65
      %p67 = scmp.ne.s32.totalorder %s56, %s57
      %p68 = scmp.eq.s32.totalorder %s27, 0
      %p69 = por %p67, %p68
      %p70 = scmp.ne.s32.totalorder %s56, %s57
      %p71 = scmp.eq.s32.totalorder %s28, 1
      %p72 = por %p70, %p71
      %p74 = scmp.ne.s32.totalorder %s57, %s73
      %p75 = scmp.eq.s32.totalorder %s28, 0
      %p76 = por %p74, %p75
      %s77 = ssub.s32 %s31, %s40
      %p78 = scmp.eq.s32.totalorder %s77, 0
      %s80 = sadd.s32 %s79, 1
      %s81 = scalar_select %p78, %s79, %s80
      %p84 = pneg %p78
      %p85 = scmp.eq.s32.totalorder %s22, 1
      %p86 = por %p84, %p85
      %p87 = scmp.ne.s32.totalorder %s79, %s82
      %p88 = scmp.eq.s32.totalorder %s22, 0
      %p89 = por %p87, %p88
      %p90 = scmp.ne.s32.totalorder %s79, %s82
      %p91 = scmp.eq.s32.totalorder %s27, 1
      %p92 = por %p90, %p91
      %p93 = scmp.ne.s32.totalorder %s82, %s83
      %p94 = scmp.eq.s32.totalorder %s27, 0
      %p95 = por %p93, %p94
      %p96 = scmp.ne.s32.totalorder %s82, %s83
      %p97 = scmp.eq.s32.totalorder %s28, 1
      %p98 = por %p96, %p97
      %p100 = scmp.ne.s32.totalorder %s83, %s99
      %p101 = scmp.eq.s32.totalorder %s28, 0
      %p102 = por %p100, %p101
      %s103 = ssub.s32 %s31, %s40
      %p104 = scmp.eq.s32.totalorder %s103, 0
      %s106 = sadd.s32 %s105, 1
      %s107 = scalar_select %p104, %s105, %s106
      %p110 = pneg %p104
      %p111 = scmp.eq.s32.totalorder %s22, 1
      %p112 = por %p110, %p111
      %p113 = scmp.ne.s32.totalorder %s105, %s108
      %p114 = scmp.eq.s32.totalorder %s22, 0
      %p115 = por %p113, %p114
      %p116 = scmp.ne.s32.totalorder %s105, %s108
      %p117 = scmp.eq.s32.totalorder %s27, 1
      %p118 = por %p116, %p117
      %p119 = scmp.ne.s32.totalorder %s108, %s109
      %p120 = scmp.eq.s32.totalorder %s27, 0
      %p121 = por %p119, %p120
      %p122 = scmp.ne.s32.totalorder %s108, %s109
      %p123 = scmp.eq.s32.totalorder %s28, 1
      %p124 = por %p122, %p123
      %p126 = scmp.ne.s32.totalorder %s109, %s125
      %p127 = scmp.eq.s32.totalorder %s28, 0
      %p128 = por %p126, %p127
      %s129 = ssub.s32 %s31, %s40
      %p130 = scmp.eq.s32.totalorder %s129, 0
      %s132 = sadd.s32 %s131, 1
      %s133 = scalar_select %p130, %s131, %s132
      %p136 = pneg %p130
      %p137 = scmp.eq.s32.totalorder %s22, 1
      %p138 = por %p136, %p137
      %p139 = scmp.ne.s32.totalorder %s131, %s134
      %p140 = scmp.eq.s32.totalorder %s22, 0
      %p141 = por %p139, %p140
      %p142 = scmp.ne.s32.totalorder %s131, %s134
      %p143 = scmp.eq.s32.totalorder %s27, 1
      %p144 = por %p142, %p143
      %p145 = scmp.ne.s32.totalorder %s134, %s135
      %p146 = scmp.eq.s32.totalorder %s27, 0
      %p147 = por %p145, %p146
      %p148 = scmp.ne.s32.totalorder %s134, %s135
      %p149 = scmp.eq.s32.totalorder %s28, 1
      %p150 = por %p148, %p149
      %p152 = scmp.ne.s32.totalorder %s135, %s151
      %p153 = scmp.eq.s32.totalorder %s28, 0
      %p154 = por %p152, %p153
      %s156 = sadd.s32 %s155, 1
      %p159 = scmp.eq.s32.totalorder %s22, 1
      %p160 = scmp.ne.s32.totalorder %s155, %s157
      %p161 = scmp.eq.s32.totalorder %s22, 0
      %p162 = por %p160, %p161
      %p163 = scmp.ne.s32.totalorder %s155, %s157
      %p164 = scmp.eq.s32.totalorder %s27, 1
      %p165 = por %p163, %p164
      %p166 = scmp.ne.s32.totalorder %s157, %s158
      %p167 = scmp.eq.s32.totalorder %s27, 0
      %p168 = por %p166, %p167
      %p169 = scmp.ne.s32.totalorder %s157, %s158
      %p170 = scmp.eq.s32.totalorder %s28, 1
      %p171 = por %p169, %p170
      %p173 = scmp.ne.s32.totalorder %s158, %s172
      %p174 = scmp.eq.s32.totalorder %s28, 0
      %p175 = por %p173, %p174
      %s177 = sadd.s32 %s176, 1
      %p180 = scmp.eq.s32.totalorder %s22, 1
      %p181 = scmp.ne.s32.totalorder %s176, %s178
      %p182 = scmp.eq.s32.totalorder %s22, 0
      %p183 = por %p181, %p182
      %p184 = scmp.ne.s32.totalorder %s176, %s178
      %p185 = scmp.eq.s32.totalorder %s27, 1
      %p186 = por %p184, %p185
      %p187 = scmp.ne.s32.totalorder %s178, %s179
      %p188 = scmp.eq.s32.totalorder %s27, 0
      %p189 = por %p187, %p188
      %p190 = scmp.ne.s32.totalorder %s178, %s179
      %p191 = scmp.eq.s32.totalorder %s28, 1
      %p192 = por %p190, %p191
      %p194 = scmp.ne.s32.totalorder %s179, %s193
      %p195 = scmp.eq.s32.totalorder %s28, 0
      %p196 = por %p194, %p195
      %s198 = sadd.s32 %s197, 1
      %p201 = scmp.eq.s32.totalorder %s22, 1
      %p202 = scmp.ne.s32.totalorder %s197, %s199
      %p203 = scmp.eq.s32.totalorder %s22, 0
      %p204 = por %p202, %p203
      %p205 = scmp.ne.s32.totalorder %s197, %s199
      %p206 = scmp.eq.s32.totalorder %s27, 1
      %p207 = por %p205, %p206
      %p208 = scmp.ne.s32.totalorder %s199, %s200
      %p209 = scmp.eq.s32.totalorder %s27, 0
      %p210 = por %p208, %p209
      %p211 = scmp.ne.s32.totalorder %s199, %s200
      %p212 = scmp.eq.s32.totalorder %s28, 1
      %p213 = por %p211, %p212
      %p215 = scmp.ne.s32.totalorder %s200, %s214
      %p216 = scmp.eq.s32.totalorder %s28, 0
      %p217 = por %p215, %p216
      %s218 = ssub.s32 %s29, %s48
      %s219 = ssub.s32 %s30, %s44
      %s220 = sor.u32 %s218, %s219
      %p221 = scmp.eq.s32.totalorder %s220, 0
      %s223 = sadd.s32 %s222, 1
      %s224 = scalar_select %p221, %s222, %s223
      %p227 = pneg %p221
      %p228 = scmp.eq.s32.totalorder %s22, 1
      %p229 = por %p227, %p228
      %p230 = scmp.ne.s32.totalorder %s222, %s225
      %p231 = scmp.eq.s32.totalorder %s22, 0
      %p232 = por %p230, %p231
      %p233 = scmp.ne.s32.totalorder %s222, %s225
      %p234 = scmp.eq.s32.totalorder %s27, 1
      %p235 = por %p233, %p234
      %p236 = scmp.ne.s32.totalorder %s225, %s226
      %p237 = scmp.eq.s32.totalorder %s27, 0
      %p238 = por %p236, %p237
      %p239 = scmp.ne.s32.totalorder %s225, %s226
      %p240 = scmp.eq.s32.totalorder %s28, 1
      %p241 = por %p239, %p240
      %p243 = scmp.ne.s32.totalorder %s226, %s242
      %p244 = scmp.eq.s32.totalorder %s28, 0
      %p245 = por %p243, %p244
      %p246 = scmp.le.s32.totalorder 1, %s22
      %p247 = scmp.lt.s32.totalorder %s22, 3
      %p248 = pnand %p246, %p247
      %p249 = pneg %p248
      // Predicated region
      $region9: #{transformer_forward.23} parent=5 // pred_check
        _
      $region10: #{transformer_forward.23} parent=5 // pred_check_branch
        %251 = sbr.rel (%p248) target = $region12
      $region11: #{transformer_forward.23} parent=5 // pred_region
        %s252 = ssub.s32 %s22, 1
        // Predicated region
        $region13: #{transformer_forward.23} parent=11 // pred_check
          %p253 = pneg %p95
        $region14: #{transformer_forward.23} parent=11 // pred_check_branch
          %255 = sbr.rel (%p253) target = $region16
        $region15: #{transformer_forward.23} parent=11 // pred_region
          %s257 = ssub.s32 256, 256
          %258 = vsyncadd [#allocation7], %s257
          %s259 = smul.addr %s34, 64
          %s260 = scalar_lea.hbm %s1, %s259
          %s261 = sshll.u32 [#allocation6], 4
          %s262 = int_to_ptr.vmem [resolvable:$true] %s261
          %267 = dma.hbm_to_vmem [thread:$0]  %s260, 256, %s262, [#allocation7], 64, 64, 4
        $region16: #{transformer_forward.23} parent=11 // pred_fallthru
          _
        // Predicated region
        $region17: #{transformer_forward.23} parent=11 // pred_check
          %p268 = pneg %p121
        $region18: #{transformer_forward.23} parent=11 // pred_check_branch
          %270 = sbr.rel (%p268) target = $region20
        $region19: #{transformer_forward.23} parent=11 // pred_region
          %s272 = ssub.s32 16, 16
          %273 = vsyncadd [#allocation7], %s272
          %s274 = smul.addr %s34, 16
          %s275 = scalar_lea.hbm %s2, %s274
          %s277 = sshll.u32 [#allocation8], 4
          %s278 = int_to_ptr.vmem [resolvable:$true] %s277
          %280 = dma.hbm_to_vmem [thread:$0]  %s275, 16, %s278, [#allocation7]
        $region20: #{transformer_forward.23} parent=11 // pred_fallthru
          _
        // Predicated region
        $region21: #{transformer_forward.23} parent=11 // pred_check
          %p281 = pneg %p147
        $region22: #{transformer_forward.23} parent=11 // pred_check_branch
          %283 = sbr.rel (%p281) target = $region24
        $region23: #{transformer_forward.23} parent=11 // pred_region
          %s284 = smul.u32 8, %s34
          %s286 = ssub.s32 512, 512
          %287 = vsyncadd [#allocation10], %s286
          %s288 = smul.addr %s284, 64
          %s289 = scalar_lea.hbm %s3, %s288
          %s290 = sshll.u32 [#allocation9], 4
          %s291 = int_to_ptr.vmem [resolvable:$true] %s290
          %296 = dma.hbm_to_vmem [thread:$0]  %s289, 512, %s291, [#allocation10], 64, 64, 4
        $region24: #{transformer_forward.23} parent=11 // pred_fallthru
          _
        // Predicated region
        $region25: #{transformer_forward.23} parent=11 // pred_check
          %p297 = pneg %p168
        $region26: #{transformer_forward.23} parent=11 // pred_check_branch
          %299 = sbr.rel (%p297) target = $region28
        $region27: #{transformer_forward.23} parent=11 // pred_region
          %s301 = ssub.s32 16, 16
          %302 = vsyncadd [#allocation10], %s301
          %s304 = sshll.u32 [#allocation11], 4
          %s305 = int_to_ptr.vmem [resolvable:$true] %s304
          %307 = dma.hbm_to_vmem [thread:$0]  %s4, 16, %s305, [#allocation10]
        $region28: #{transformer_forward.23} parent=11 // pred_fallthru
          _
        // Predicated region
        $region29: #{transformer_forward.23} parent=11 // pred_check
          %p308 = pneg %p189
        $region30: #{transformer_forward.23} parent=11 // pred_check_branch
          %310 = sbr.rel (%p308) target = $region32
        $region31: #{transformer_forward.23} parent=11 // pred_region
          %s312 = ssub.s32 16, 16
          %313 = vsyncadd [#allocation13], %s312
          %s315 = sshll.u32 [#allocation12], 4
          %s316 = int_to_ptr.vmem [resolvable:$true] %s315
          %318 = dma.hbm_to_vmem [thread:$0]  %s5, 16, %s316, [#allocation13]
        $region32: #{transformer_forward.23} parent=11 // pred_fallthru
          _
        // Predicated region
        $region33: #{transformer_forward.23} parent=11 // pred_check
          %p319 = pneg %p210
        $region34: #{transformer_forward.23} parent=11 // pred_check_branch
          %321 = sbr.rel (%p319) target = $region36
        $region35: #{transformer_forward.23} parent=11 // pred_region
          %s323 = ssub.s32 16, 16
          %324 = vsyncadd [#allocation13], %s323
          %s326 = sshll.u32 [#allocation14], 4
          %s327 = int_to_ptr.vmem [resolvable:$true] %s326
          %329 = dma.hbm_to_vmem [thread:$0]  %s6, 16, %s327, [#allocation13]
        $region36: #{transformer_forward.23} parent=11 // pred_fallthru
          _
      $region12: #{transformer_forward.23} parent=5 // pred_fallthru
        _
      %p330 = scmp.lt.s32.totalorder %s22, 2
      // Predicated region
      $region37: #{transformer_forward.23} parent=5 // pred_check
        %p331 = pneg %p330
      $region38: #{transformer_forward.23} parent=5 // pred_check_branch
        %333 = sbr.rel (%p331) target = $region40
      $region39: #{transformer_forward.23} parent=5 // pred_region
        // Predicated region
        $region41: #{transformer_forward.23} parent=39 // pred_check
          %p334 = pneg %p63
        $region42: #{transformer_forward.23} parent=39 // pred_check_branch
          %336 = sbr.rel (%p334) target = $region44
        $region43: #{transformer_forward.23} parent=39 // pred_region
          %s337 = sand.u32 %s53, 1
          %s338 = scalar_lea.sflag [#allocation4], %s337
          %s339 = sand.u32 %s53, 1
          %s340 = smul.addr %s339, 16
          %s341 = scalar_lea.vmem [#allocation3], %s340
          %s342 = smul.u32 2, %s30
          %s344 = ssub.s32 256, 256
          %345 = vsyncadd %s338, %s344
          %s346 = smul.addr %s29, 2
          %s347 = sadd.s32 %s342, %s346
          %s348 = smul.addr %s347, 128
          %s349 = scalar_lea.hbm %s0, %s348
          %s350 = sshll.u32 %s341, 4
          %s351 = int_to_ptr.vmem [resolvable:$true] %s350
          %356 = dma.hbm_to_vmem [thread:$0]  %s349, 256, %s351, %s338, 128, 128, 8
        $region44: #{transformer_forward.23} parent=39 // pred_fallthru
          _
      $region40: #{transformer_forward.23} parent=5 // pred_fallthru
        _
      %p357 = scmp.le.s32.totalorder 1, %s22
      %p358 = scmp.lt.s32.totalorder %s22, 3
      %p359 = pnand %p357, %p358
      %p360 = pneg %p359
      // Predicated region
      $region45: #{transformer_forward.23} parent=5 // pred_check
        _
      $region46: #{transformer_forward.23} parent=5 // pred_check_branch
        %362 = sbr.rel (%p359) target = $region48
      $region47: #{transformer_forward.23} parent=5 // pred_region
        %s363 = ssub.s32 %s22, 1
        %s364 = sand.u32 %s56, 1
        %s365 = scalar_lea.sflag [#allocation4], %s364
        %s366 = sand.u32 %s56, 1
        %s367 = smul.addr %s366, 16
        %s368 = scalar_lea.vmem [#allocation3], %s367
        // Predicated region
        $region49: #{transformer_forward.23} parent=47 // pred_check
          %p369 = pneg %p69
        $region50: #{transformer_forward.23} parent=47 // pred_check_branch
          %371 = sbr.rel (%p369) target = $region52
        $region51: #{transformer_forward.23} parent=47 // pred_region
          %372 = dma.done %s365, 256
        $region52: #{transformer_forward.23} parent=47 // pred_fallthru
          _
        // Predicated region
        $region53: #{transformer_forward.23} parent=47 // pred_check
          %p373 = pneg %p95
        $region54: #{transformer_forward.23} parent=47 // pred_check_branch
          %375 = sbr.rel (%p373) target = $region56
        $region55: #{transformer_forward.23} parent=47 // pred_region
          %376 = dma.done [#allocation7], 256
        $region56: #{transformer_forward.23} parent=47 // pred_fallthru
          _
        // Predicated region
        $region57: #{transformer_forward.23} parent=47 // pred_check
          %p377 = pneg %p121
        $region58: #{transformer_forward.23} parent=47 // pred_check_branch
          %379 = sbr.rel (%p377) target = $region60
        $region59: #{transformer_forward.23} parent=47 // pred_region
          %380 = dma.done [#allocation7], 16
        $region60: #{transformer_forward.23} parent=47 // pred_fallthru
          _
        // Predicated region
        $region61: #{transformer_forward.23} parent=47 // pred_check
          %p381 = pneg %p147
        $region62: #{transformer_forward.23} parent=47 // pred_check_branch
          %383 = sbr.rel (%p381) target = $region64
        $region63: #{transformer_forward.23} parent=47 // pred_region
          %384 = dma.done [#allocation10], 512
        $region64: #{transformer_forward.23} parent=47 // pred_fallthru
          _
        // Predicated region
        $region65: #{transformer_forward.23} parent=47 // pred_check
          %p385 = pneg %p168
        $region66: #{transformer_forward.23} parent=47 // pred_check_branch
          %387 = sbr.rel (%p385) target = $region68
        $region67: #{transformer_forward.23} parent=47 // pred_region
          %388 = dma.done [#allocation10], 16
        $region68: #{transformer_forward.23} parent=47 // pred_fallthru
          _
        // Predicated region
        $region69: #{transformer_forward.23} parent=47 // pred_check
          %p389 = pneg %p189
        $region70: #{transformer_forward.23} parent=47 // pred_check_branch
          %391 = sbr.rel (%p389) target = $region72
        $region71: #{transformer_forward.23} parent=47 // pred_region
          %392 = dma.done [#allocation13], 16
        $region72: #{transformer_forward.23} parent=47 // pred_fallthru
          _
        // Predicated region
        $region73: #{transformer_forward.23} parent=47 // pred_check
          %p393 = pneg %p210
        $region74: #{transformer_forward.23} parent=47 // pred_check_branch
          %395 = sbr.rel (%p393) target = $region76
        $region75: #{transformer_forward.23} parent=47 // pred_region
          %396 = dma.done [#allocation13], 16
        $region76: #{transformer_forward.23} parent=47 // pred_fallthru
          _
        %s397 = sand.u32 %s56, 1
        %s398 = scalar_lea.sflag [#allocation4], %s397
        %s399 = sand.u32 %s56, 1
        %s400 = smul.addr %s399, 16
        %s401 = scalar_lea.vmem [#allocation3], %s400
        %p402 = pneg %p69
        %p403 = pneg %p66
        %p404 = pneg %p95
        %p405 = pneg %p92
        %p406 = pneg %p121
        %p407 = pneg %p118
        %p408 = pneg %p147
        %p409 = pneg %p144
        %p410 = pneg %p168
        %p411 = pneg %p165
        %p412 = pneg %p189
        %p413 = pneg %p186
        %p414 = pneg %p210
        %p415 = pneg %p207
        %p416 = pneg %p238
        %p417 = pneg %p235
        %s418 = sand.u32 %s225, 1
        %s419 = scalar_lea.sflag [#allocation5], %s418
        %s420 = sand.u32 %s225, 1
        %s421 = smul.addr %s420, 16
        %s422 = scalar_lea.vmem [#allocation15], %s421
        %s423 = smul.u32 2, %s33
        %s424 = smul.u32 8, %s34
        %s425 = smul.u32 2, %s33
        %p427 = scmp.eq.s32.totalorder %s34, 0
        // Predicated region
        $region77: #{transformer_forward.23} parent=47 // pred_check
          %p428 = pneg %p427
        $region78: #{transformer_forward.23} parent=47 // pred_check_branch
          %430 = sbr.rel (%p428) target = $region80
        $region79: #{transformer_forward.23} parent=47 // pred_region
          %vm431 = vcmask 261120
          %432 = vst.msk [vmem:[#allocation2] sm:$0xff] %vm431, 0.0
          %433 = vst.msk [vmem:[#allocation2 + $0x8] sm:$0xff] %vm431, 0.0
        $region80: #{transformer_forward.23} parent=47 // pred_fallthru
          _
        %v434 = vld [vmem:[%s368] sm:$0xff]
        %v435 = vld [vmem:[%s368 + $0x8] sm:$0xff]
        %v436 = vpack.c.bf16 %v435, %v434
        %v437 = vld [vmem:[#allocation6] sm:$0xf]
        %v438 = vld [vmem:[#allocation6 + $0x4] sm:$0xf]
        %v439 = vld [vmem:[#allocation6 + $0x8] sm:$0xf]
        %v440 = vld [vmem:[#allocation6 + $0xc] sm:$0xf]
        %v441 = vld [vmem:[#allocation8] sm:$0x1]
        %v443 = vlaneseq
        %v444 = vshrl.u32 %v443, 7
        %v445 = vsub.s32 0, %v444
        %v446 = vrot.slane %v441, %v445
        %v452 = vunpack.c.l.b16 %v437
        %v453 = vunpack.c.l.b16 %v438
        %v454 = vunpack.c.l.b16 %v439
        %v455 = vunpack.c.l.b16 %v440
        %v456 = vpack.c.b16 %v453, %v452
        %v457 = vpack.c.b16 %v455, %v454
        %vm460 = vcmask 261120
        %v462 = vsel %vm460, %v436, 0
        %464 = vmatprep.subr.bf16.mxu0 0
        %465 = vmatpush1.bf16.msra.mxu0 %v456
        %466 = vmatprep.subr.bf16.mxu0 0
        %467 = vmatpush1.bf16.msra.mxu0 %v457
        %468 = vmatprep.subr.bf16.mxu0 0
        %469 = vmatpush1.bf16.msra.mxu0 0
        %470 = vmatprep.subr.bf16.mxu0 0
        %471 = vmatpush1.bf16.msra.mxu0 0
        %472 = vmatprep.subr.bf16.mxu0 0
        %473 = vmatpush1.bf16.msra.mxu0 0
        %474 = vmatprep.subr.bf16.mxu0 0
        %475 = vmatpush1.bf16.msra.mxu0 0
        %476 = vmatprep.subr.bf16.mxu0 0
        %477 = vmatpush1.bf16.msra.mxu0 0
        %478 = vmatprep.subr.bf16.mxu0 0
        %479 = vmatpush1.bf16.msra.mxu0 0
        %480 = vmatprep.subr.bf16.mxu0 0
        %481 = vmatpush1.bf16.msra.mxu0 0
        %482 = vmatprep.subr.bf16.mxu0 0
        %483 = vmatpush1.bf16.msra.mxu0 0
        %484 = vmatprep.subr.bf16.mxu0 0
        %485 = vmatpush1.bf16.msra.mxu0 0
        %486 = vmatprep.subr.bf16.mxu0 0
        %487 = vmatpush1.bf16.msra.mxu0 0
        %488 = vmatprep.subr.bf16.mxu0 0
        %489 = vmatpush1.bf16.msra.mxu0 0
        %490 = vmatprep.subr.bf16.mxu0 0
        %491 = vmatpush1.bf16.msra.mxu0 0
        %492 = vmatprep.subr.bf16.mxu0 0
        %493 = vmatpush1.bf16.msra.mxu0 0
        %494 = vmatprep.subr.bf16.mxu0 0
        %495 = vmatpush1.bf16.msra.mxu0 0
        %496 = vmatprep.mubr.bf16.mxu0 0
        %497 = vmatmul.mubr.bf16.gmra.mrb[0].mxu0 %v462
        %v498 = vpop.f32.mrb[0].mxu0
        %v499 = vadd.f32 %v446, %v498
        %v500 = vpop.f32.mrb[0].mxu0
        %v501 = vpop.f32.mrb[0].mxu0
        %v502 = vadd.f32 %v446, %v501
        %v503 = vpop.f32.mrb[0].mxu0
        %504 = vdwg.mxu0
        %v505 = vtanh.pop %v499
        %v506 = vtanh.pop %v502
        %v507 = vld [vmem:[#allocation2] sm:$0xff]
        %v508 = vld [vmem:[#allocation2 + $0x8] sm:$0xff]
        %v509 = vpack.c.bf16 %v506, %v505
        %v510 = vld [vmem:[#allocation9] sm:$0xf]
        %v511 = vld [vmem:[#allocation9 + $0x4] sm:$0xf]
        %v512 = vld [vmem:[#allocation9 + $0x8] sm:$0xf]
        %v513 = vld [vmem:[#allocation9 + $0xc] sm:$0xf]
        %v514 = vld [vmem:[#allocation9 + $0x10] sm:$0xf]
        %v515 = vld [vmem:[#allocation9 + $0x14] sm:$0xf]
        %v516 = vld [vmem:[#allocation9 + $0x18] sm:$0xf]
        %v517 = vld [vmem:[#allocation9 + $0x1c] sm:$0xf]
        %v526 = vunpack.c.l.b16 %v510
        %v527 = vunpack.c.l.b16 %v511
        %v528 = vunpack.c.l.b16 %v512
        %v529 = vunpack.c.l.b16 %v513
        %v530 = vunpack.c.l.b16 %v514
        %v531 = vunpack.c.l.b16 %v515
        %v532 = vunpack.c.l.b16 %v516
        %v533 = vunpack.c.l.b16 %v517
        %v534 = vpack.c.b16 %v527, %v526
        %v535 = vpack.c.b16 %v529, %v528
        %v536 = vpack.c.b16 %v531, %v530
        %v537 = vpack.c.b16 %v533, %v532
        %vm542 = vcmask 523264
        %v544 = vsel %vm542, %v509, 0
        %546 = vmatprep.subr.bf16.mxu0 0
        %547 = vmatpush1.bf16.msra.mxu0 %v534
        %548 = vmatprep.subr.bf16.mxu0 0
        %549 = vmatpush1.bf16.msra.mxu0 %v535
        %550 = vmatprep.subr.bf16.mxu0 0
        %551 = vmatpush1.bf16.msra.mxu0 %v536
        %552 = vmatprep.subr.bf16.mxu0 0
        %553 = vmatpush1.bf16.msra.mxu0 %v537
        %554 = vmatprep.subr.bf16.mxu0 0
        %555 = vmatpush1.bf16.msra.mxu0 0
        %556 = vmatprep.subr.bf16.mxu0 0
        %557 = vmatpush1.bf16.msra.mxu0 0
        %558 = vmatprep.subr.bf16.mxu0 0
        %559 = vmatpush1.bf16.msra.mxu0 0
        %560 = vmatprep.subr.bf16.mxu0 0
        %561 = vmatpush1.bf16.msra.mxu0 0
        %562 = vmatprep.subr.bf16.mxu0 0
        %563 = vmatpush1.bf16.msra.mxu0 0
        %564 = vmatprep.subr.bf16.mxu0 0
        %565 = vmatpush1.bf16.msra.mxu0 0
        %566 = vmatprep.subr.bf16.mxu0 0
        %567 = vmatpush1.bf16.msra.mxu0 0
        %568 = vmatprep.subr.bf16.mxu0 0
        %569 = vmatpush1.bf16.msra.mxu0 0
        %570 = vmatprep.subr.bf16.mxu0 0
        %571 = vmatpush1.bf16.msra.mxu0 0
        %572 = vmatprep.subr.bf16.mxu0 0
        %573 = vmatpush1.bf16.msra.mxu0 0
        %574 = vmatprep.subr.bf16.mxu0 0
        %575 = vmatpush1.bf16.msra.mxu0 0
        %576 = vmatprep.subr.bf16.mxu0 0
        %577 = vmatpush1.bf16.msra.mxu0 0
        %578 = vmatprep.mubr.bf16.mxu0 0
        %579 = vmatmul.mubr.bf16.gmra.mrb[0].mxu0 %v544
        %v580 = vpop.f32.mrb[0].mxu0
        %v581 = vadd.f32 0.0, %v580
        %v582 = vpop.f32.mrb[0].mxu0
        %v583 = vpop.f32.mrb[0].mxu0
        %v584 = vadd.f32 0.0, %v583
        %v585 = vpop.f32.mrb[0].mxu0
        %586 = vdwg.mxu0
        %v587 = vadd.f32 %v507, %v581
        %v588 = vadd.f32 %v508, %v584
        %589 = vst.msk [vmem:[#allocation2] sm:$0xff] %vm460, %v587
        %590 = vst.msk [vmem:[#allocation2 + $0x8] sm:$0xff] %vm460, %v588
        // Predicated region
        $region81: #{transformer_forward.23} parent=47 // pred_check
          %p591 = pneg %p427
        $region82: #{transformer_forward.23} parent=47 // pred_check_branch
          %593 = sbr.rel (%p591) target = $region84
        $region83: #{transformer_forward.23} parent=47 // pred_region
          %v594 = vld [vmem:[%s368] sm:$0xff]
          %v595 = vld [vmem:[%s368 + $0x8] sm:$0xff]
          %v596 = vld [vmem:[#allocation2] sm:$0xff]
          %v597 = vld [vmem:[#allocation2 + $0x8] sm:$0xff]
          %v598 = vadd.f32 %v594, %v596
          %v599 = vadd.f32 %v595, %v597
          %v600 = vld [vmem:[#allocation11] sm:$0x1]
          %v602 = vlaneseq
          %v603 = vshrl.u32 %v602, 7
          %v604 = vsub.s32 0, %v603
          %v605 = vrot.slane %v600, %v604
          %v607 = vadd.f32 %v598, %v605
          %v608 = vadd.f32 %v599, %v605
          %v609 = vsel %vm460, %v607, 0.0
          %610 = vadd.xlane.f32.xlu0 %v609
          %v611 = vpop.xlane.xlu0 %610
          %v612 = vsel %vm460, %v608, 0.0
          %613 = vadd.xlane.f32.xlu0 %v612
          %v614 = vpop.xlane.xlu0 %613
          %v615 = vrcp.pop 32.0
          %v616 = vmul.f32 %v611, %v615
          %v617 = vmul.f32 %v614, %v615
          %v618 = vsub.f32 %v607, %v616
          %v619 = vsub.f32 %v608, %v617
          %v620 = vmul.f32 %v618, %v618
          %v621 = vmul.f32 %v619, %v619
          %v622 = vsel %vm460, %v620, 0.0
          %623 = vadd.xlane.f32.xlu0 %v622
          %v624 = vpop.xlane.xlu0 %623
          %v625 = vsel %vm460, %v621, 0.0
          %626 = vadd.xlane.f32.xlu0 %v625
          %v627 = vpop.xlane.xlu0 %626
          %v628 = vmul.f32 %v624, %v615
          %v629 = vmul.f32 %v627, %v615
          %v630 = vadd.f32 %v628, 1e-05
          %v631 = vadd.f32 %v629, 1e-05
          %v632 = vrsqrt.pop %v630
          %v633 = vrsqrt.pop %v631
          %v634 = vmul.f32 %v618, %v632
          %v635 = vmul.f32 %v619, %v633
          %v636 = vld [vmem:[#allocation12] sm:$0x1]
          %v638 = vlaneseq
          %v639 = vshrl.u32 %v638, 7
          %v640 = vsub.s32 0, %v639
          %v641 = vrot.slane %v636, %v640
          %v643 = vmul.f32 %v634, %v641
          %v644 = vmul.f32 %v635, %v641
          %v645 = vld [vmem:[#allocation14] sm:$0x1]
          %v647 = vlaneseq
          %v648 = vshrl.u32 %v647, 7
          %v649 = vsub.s32 0, %v648
          %v650 = vrot.slane %v645, %v649
          %v652 = vadd.f32 %v643, %v650
          %v653 = vadd.f32 %v644, %v650
          %654 = vst.msk [vmem:[%s422] sm:$0xff] %vm460, %v652
          %655 = vst.msk [vmem:[%s422 + $0x8] sm:$0xff] %vm460, %v653
        $region84: #{transformer_forward.23} parent=47 // pred_fallthru
          _
        %s656 = sand.u32 %s225, 1
        %s657 = scalar_lea.sflag [#allocation5], %s656
        %s658 = sand.u32 %s225, 1
        %s659 = smul.addr %s658, 16
        %s660 = scalar_lea.vmem [#allocation15], %s659
        // Predicated region
        $region85: #{transformer_forward.23} parent=47 // pred_check
          %p661 = pneg %p235
        $region86: #{transformer_forward.23} parent=47 // pred_check_branch
          %663 = sbr.rel (%p661) target = $region88
        $region87: #{transformer_forward.23} parent=47 // pred_region
          %s664 = smul.u32 2, %s33
          %s666 = ssub.s32 256, 256
          %667 = vsyncadd %s657, %s666
          %s668 = smul.addr %s32, 2
          %s669 = sadd.s32 %s664, %s668
          %s670 = smul.addr %s669, 128
          %s671 = scalar_lea.hbm %s7, %s670
          %s672 = sshll.u32 %s660, 4
          %s673 = int_to_ptr.vmem [resolvable:$true] %s672
          %678 = dma.vmem_to_hbm [thread:$0]  %s673, 256, %s671, %s657, 128, 128, 8
        $region88: #{transformer_forward.23} parent=47 // pred_fallthru
          _
      $region48: #{transformer_forward.23} parent=5 // pred_fallthru
        _
      %p679 = scmp.le.s32.totalorder 2, %s22
      // Predicated region
      $region89: #{transformer_forward.23} parent=5 // pred_check
        %p680 = pneg %p679
      $region90: #{transformer_forward.23} parent=5 // pred_check_branch
        %682 = sbr.rel (%p680) target = $region92
      $region91: #{transformer_forward.23} parent=5 // pred_region
        %s683 = ssub.s32 %s22, 2
        // Predicated region
        $region93: #{transformer_forward.23} parent=91 // pred_check
          %p684 = pneg %p241
        $region94: #{transformer_forward.23} parent=91 // pred_check_branch
          %686 = sbr.rel (%p684) target = $region96
        $region95: #{transformer_forward.23} parent=91 // pred_region
          %s687 = sand.u32 %s226, 1
          %s688 = scalar_lea.sflag [#allocation5], %s687
          %s689 = sand.u32 %s226, 1
          %s690 = smul.addr %s689, 16
          %s691 = scalar_lea.vmem [#allocation15], %s690
          %692 = dma.done %s688, 256
        $region96: #{transformer_forward.23} parent=91 // pred_fallthru
          _
      $region92: #{transformer_forward.23} parent=5 // pred_fallthru
        _
    $region6: #{transformer_forward.23} parent=1 // loop_footer
      %s26 = sadd.s32 1, %s22
    $region7: #{transformer_forward.23} parent=1 // loop_footer_branch
      %21 = sbr.rel target = $region3
    $region8: #{transformer_forward.23} parent=1 // loop_exit
      _
    %693 = vsyncpa [#allocation4], 1
    %s694 = scalar_lea.sflag [#allocation4], 1
    %695 = vsyncpa %s694, 1
    %696 = vsyncpa [#allocation7], 1
    %697 = vsyncpa [#allocation10], 1
    %698 = vsyncpa [#allocation13], 1
    %699 = vsyncpa [#allocation5], 1
    %s700 = scalar_lea.sflag [#allocation5], 1
    %701 = vsyncpa %s700, 1

// kernel: transformer_forward.21
$region0: #{transformer_forward.21}
  #allocation0 [shape = 'u32[]', space=smem, size = 0x4, offset = 0x4, fixed_abs, tag = 'smem constant byte address 0x4 - core index']
  #allocation1 [shape = 'u32[144,128]{1,0:T(1,128)}', space=vmem, size = 0x12000, scoped, tag = 'internal scratch']
  %s0 = inlined_call_operand.hbm [shape: f32[2,16,32], index: 0, kind: input, shape index: {}]
  %s1 = inlined_call_operand.hbm [shape: bf16[32,96], index: 1, kind: input, shape index: {}]
  %s2 = inlined_call_operand.hbm [shape: f32[1,96], index: 2, kind: input, shape index: {}]
  %s3 = inlined_call_operand.hbm [shape: f32[2,16,1], index: 3, kind: input, shape index: {}]
  %s4 = inlined_call_operand.hbm [shape: f32[2,1,16], index: 4, kind: input, shape index: {}]
  %s5 = inlined_call_operand.hbm [shape: bf16[2,4,16,8], index: 5, kind: output, shape index: {}]
  %s6 = sld [smem:[#allocation0]]
  $region73: #{transformer_forward.21} parent=0
    _
  %s8 = ssub.s32 1, %s6
  %s9 = scalar_select 0, %s8, %s6
  $region1: #{transformer_forward.21} parent=0
    #allocation2 [shape = 'u8[16384]{0}', space=vmem, size = 0x4000, scoped, tag = 'input window, operand 0']
    #allocation3 [shape = 's32[2]{0}', space=sflag, size = 0x8, scoped, tag = 'scoped memory for transformer_forward.21']
    #allocation4 [shape = 's32[2]{0}', space=sflag, size = 0x8, scoped, tag = 'scoped memory for transformer_forward.21']
    #allocation5 [shape = 'u8[8192]{0}', space=vmem, size = 0x2000, scoped, tag = 'input window, operand 1, single buffered']
    #allocation6 [shape = 's32[1]{0}', space=sflag, size = 0x4, scoped, tag = 'scoped memory for transformer_forward.21']
    #allocation7 [shape = 'u8[512]{0}', space=vmem, size = 0x400, scoped, tag = 'input window, operand 2, single buffered']
    #allocation8 [shape = 'u8[16384]{0}', space=vmem, size = 0x4000, scoped, tag = 'input window, operand 3']
    #allocation9 [shape = 's32[2]{0}', space=sflag, size = 0x8, scoped, tag = 'scoped memory for transformer_forward.21']
    #allocation10 [shape = 'u8[1024]{0}', space=vmem, size = 0x400, scoped, tag = 'input window, operand 4']
    #allocation11 [shape = 'u8[32768]{0}', space=vmem, size = 0x8000, scoped, tag = 'output window, operand 0']
    %10 = vsyncpa [#allocation3], 0
    %s11 = scalar_lea.sflag [#allocation3], 1
    %12 = vsyncpa %s11, 0
    %13 = vsyncpa [#allocation6], 0
    %14 = vsyncpa [#allocation9], 0
    %s15 = scalar_lea.sflag [#allocation9], 1
    %16 = vsyncpa %s15, 0
    %17 = vsyncpa [#allocation4], 0
    %s18 = scalar_lea.sflag [#allocation4], 1
    %19 = vsyncpa %s18, 0
    loop: start=0, step=1, limit=4
    $region2: #{transformer_forward.21} parent=1 // loop_pre_header
      _
    $region3: #{transformer_forward.21} parent=1 // loop_header
      %s21 = sphi 0, %s25
      %p22 = scmp.ge.s32.totalorder %s21, 4
      %s31 = sphi 0, %s33
      %s34 = sphi 0, %s31
      %s35 = sphi 0, %s34
      %s51 = sphi 0, %s35
      %s55 = sphi 0, %s55
      %s57 = sphi 0, %s55
      %s58 = sphi 0, %s57
      %s72 = sphi 0, %s58
      %s76 = sphi 0, %s76
      %s78 = sphi 0, %s76
      %s79 = sphi 0, %s78
      %s93 = sphi 0, %s79
      %s99 = sphi 0, %s101
      %s102 = sphi 0, %s99
      %s103 = sphi 0, %s102
      %s119 = sphi 0, %s103
      %s125 = sphi 0, %s127
      %s128 = sphi 0, %s125
      %s129 = sphi 0, %s128
      %s145 = sphi 0, %s129
      %s151 = sphi 0, %s153
      %s154 = sphi 0, %s151
      %s155 = sphi 0, %s154
      %s171 = sphi 0, %s155
    $region4: #{transformer_forward.21} parent=1 // loop_header_branch
      %24 = sbr.rel (%p22) target = $region8
    $region5: #{transformer_forward.21} parent=1 // loop_body
      %s26 = ssub.s32 %s21, 1
      %s27 = ssub.s32 %s21, 2
      %s28 = sadd.s32 %s21, 1
      %s29 = ssub.s32 %s21, %s28
      %p30 = scmp.eq.s32.totalorder %s29, 0
      %s32 = sadd.s32 %s31, 1
      %s33 = scalar_select %p30, %s31, %s32
      %p36 = pneg %p30
      %p37 = scmp.eq.s32.totalorder %s21, 1
      %p38 = por %p36, %p37
      %p39 = scmp.ne.s32.totalorder %s31, %s34
      %p40 = scmp.eq.s32.totalorder %s21, 0
      %p41 = por %p39, %p40
      %p42 = scmp.ne.s32.totalorder %s31, %s34
      %p43 = scmp.eq.s32.totalorder %s26, 1
      %p44 = por %p42, %p43
      %p45 = scmp.ne.s32.totalorder %s34, %s35
      %p46 = scmp.eq.s32.totalorder %s26, 0
      %p47 = por %p45, %p46
      %p48 = scmp.ne.s32.totalorder %s34, %s35
      %p49 = scmp.eq.s32.totalorder %s27, 1
      %p50 = por %p48, %p49
      %p52 = scmp.ne.s32.totalorder %s35, %s51
      %p53 = scmp.eq.s32.totalorder %s27, 0
      %p54 = por %p52, %p53
      %s56 = sadd.s32 %s55, 1
      %p59 = scmp.eq.s32.totalorder %s21, 1
      %p60 = scmp.ne.s32.totalorder %s55, %s57
      %p61 = scmp.eq.s32.totalorder %s21, 0
      %p62 = por %p60, %p61
      %p63 = scmp.ne.s32.totalorder %s55, %s57
      %p64 = scmp.eq.s32.totalorder %s26, 1
      %p65 = por %p63, %p64
      %p66 = scmp.ne.s32.totalorder %s57, %s58
      %p67 = scmp.eq.s32.totalorder %s26, 0
      %p68 = por %p66, %p67
      %p69 = scmp.ne.s32.totalorder %s57, %s58
      %p70 = scmp.eq.s32.totalorder %s27, 1
      %p71 = por %p69, %p70
      %p73 = scmp.ne.s32.totalorder %s58, %s72
      %p74 = scmp.eq.s32.totalorder %s27, 0
      %p75 = por %p73, %p74
      %s77 = sadd.s32 %s76, 1
      %p80 = scmp.eq.s32.totalorder %s21, 1
      %p81 = scmp.ne.s32.totalorder %s76, %s78
      %p82 = scmp.eq.s32.totalorder %s21, 0
      %p83 = por %p81, %p82
      %p84 = scmp.ne.s32.totalorder %s76, %s78
      %p85 = scmp.eq.s32.totalorder %s26, 1
      %p86 = por %p84, %p85
      %p87 = scmp.ne.s32.totalorder %s78, %s79
      %p88 = scmp.eq.s32.totalorder %s26, 0
      %p89 = por %p87, %p88
      %p90 = scmp.ne.s32.totalorder %s78, %s79
      %p91 = scmp.eq.s32.totalorder %s27, 1
      %p92 = por %p90, %p91
      %p94 = scmp.ne.s32.totalorder %s79, %s93
      %p95 = scmp.eq.s32.totalorder %s27, 0
      %p96 = por %p94, %p95
      %s97 = ssub.s32 %s21, %s28
      %p98 = scmp.eq.s32.totalorder %s97, 0
      %s100 = sadd.s32 %s99, 1
      %s101 = scalar_select %p98, %s99, %s100
      %p104 = pneg %p98
      %p105 = scmp.eq.s32.totalorder %s21, 1
      %p106 = por %p104, %p105
      %p107 = scmp.ne.s32.totalorder %s99, %s102
      %p108 = scmp.eq.s32.totalorder %s21, 0
      %p109 = por %p107, %p108
      %p110 = scmp.ne.s32.totalorder %s99, %s102
      %p111 = scmp.eq.s32.totalorder %s26, 1
      %p112 = por %p110, %p111
      %p113 = scmp.ne.s32.totalorder %s102, %s103
      %p114 = scmp.eq.s32.totalorder %s26, 0
      %p115 = por %p113, %p114
      %p116 = scmp.ne.s32.totalorder %s102, %s103
      %p117 = scmp.eq.s32.totalorder %s27, 1
      %p118 = por %p116, %p117
      %p120 = scmp.ne.s32.totalorder %s103, %s119
      %p121 = scmp.eq.s32.totalorder %s27, 0
      %p122 = por %p120, %p121
      %s123 = ssub.s32 %s21, %s28
      %p124 = scmp.eq.s32.totalorder %s123, 0
      %s126 = sadd.s32 %s125, 1
      %s127 = scalar_select %p124, %s125, %s126
      %p130 = pneg %p124
      %p131 = scmp.eq.s32.totalorder %s21, 1
      %p132 = por %p130, %p131
      %p133 = scmp.ne.s32.totalorder %s125, %s128
      %p134 = scmp.eq.s32.totalorder %s21, 0
      %p135 = por %p133, %p134
      %p136 = scmp.ne.s32.totalorder %s125, %s128
      %p137 = scmp.eq.s32.totalorder %s26, 1
      %p138 = por %p136, %p137
      %p139 = scmp.ne.s32.totalorder %s128, %s129
      %p140 = scmp.eq.s32.totalorder %s26, 0
      %p141 = por %p139, %p140
      %p142 = scmp.ne.s32.totalorder %s128, %s129
      %p143 = scmp.eq.s32.totalorder %s27, 1
      %p144 = por %p142, %p143
      %p146 = scmp.ne.s32.totalorder %s129, %s145
      %p147 = scmp.eq.s32.totalorder %s27, 0
      %p148 = por %p146, %p147
      %s149 = ssub.s32 %s21, %s28
      %p150 = scmp.eq.s32.totalorder %s149, 0
      %s152 = sadd.s32 %s151, 1
      %s153 = scalar_select %p150, %s151, %s152
      %p156 = pneg %p150
      %p157 = scmp.eq.s32.totalorder %s21, 1
      %p158 = por %p156, %p157
      %p159 = scmp.ne.s32.totalorder %s151, %s154
      %p160 = scmp.eq.s32.totalorder %s21, 0
      %p161 = por %p159, %p160
      %p162 = scmp.ne.s32.totalorder %s151, %s154
      %p163 = scmp.eq.s32.totalorder %s26, 1
      %p164 = por %p162, %p163
      %p165 = scmp.ne.s32.totalorder %s154, %s155
      %p166 = scmp.eq.s32.totalorder %s26, 0
      %p167 = por %p165, %p166
      %p168 = scmp.ne.s32.totalorder %s154, %s155
      %p169 = scmp.eq.s32.totalorder %s27, 1
      %p170 = por %p168, %p169
      %p172 = scmp.ne.s32.totalorder %s155, %s171
      %p173 = scmp.eq.s32.totalorder %s27, 0
      %p174 = por %p172, %p173
      %p175 = scmp.le.s32.totalorder 1, %s21
      %p176 = scmp.lt.s32.totalorder %s21, 3
      %p177 = pnand %p175, %p176
      %p178 = pneg %p177
      // Predicated region
      $region9: #{transformer_forward.21} parent=5 // pred_check
        _
      $region10: #{transformer_forward.21} parent=5 // pred_check_branch
        %180 = sbr.rel (%p177) target = $region12
      $region11: #{transformer_forward.21} parent=5 // pred_region
        %s181 = ssub.s32 %s21, 1
        // Predicated region
        $region13: #{transformer_forward.21} parent=11 // pred_check
          %p182 = pneg %p68
        $region14: #{transformer_forward.21} parent=11 // pred_check_branch
          %184 = sbr.rel (%p182) target = $region16
        $region15: #{transformer_forward.21} parent=11 // pred_region
          %s186 = ssub.s32 256, 256
          %187 = vsyncadd [#allocation6], %s186
          %s188 = sshll.u32 [#allocation5], 4
          %s189 = int_to_ptr.vmem [resolvable:$true] %s188
          %194 = dma.hbm_to_vmem [thread:$0]  %s1, 256, %s189, [#allocation6], 64, 64, 4
        $region16: #{transformer_forward.21} parent=11 // pred_fallthru
          _
        // Predicated region
        $region17: #{transformer_forward.21} parent=11 // pred_check
          %p195 = pneg %p89
        $region18: #{transformer_forward.21} parent=11 // pred_check_branch
          %197 = sbr.rel (%p195) target = $region20
        $region19: #{transformer_forward.21} parent=11 // pred_region
          %s199 = ssub.s32 16, 16
          %200 = vsyncadd [#allocation6], %s199
          %s202 = sshll.u32 [#allocation7], 4
          %s203 = int_to_ptr.vmem [resolvable:$true] %s202
          %205 = dma.hbm_to_vmem [thread:$0]  %s2, 16, %s203, [#allocation6]
        $region20: #{transformer_forward.21} parent=11 // pred_fallthru
          _
      $region12: #{transformer_forward.21} parent=5 // pred_fallthru
        _
      %p206 = scmp.lt.s32.totalorder %s21, 2
      // Predicated region
      $region21: #{transformer_forward.21} parent=5 // pred_check
        %p207 = pneg %p206
      $region22: #{transformer_forward.21} parent=5 // pred_check_branch
        %209 = sbr.rel (%p207) target = $region24
      $region23: #{transformer_forward.21} parent=5 // pred_region
        // Predicated region
        $region25: #{transformer_forward.21} parent=23 // pred_check
          %p210 = pneg %p41
        $region26: #{transformer_forward.21} parent=23 // pred_check_branch
          %212 = sbr.rel (%p210) target = $region28
        $region27: #{transformer_forward.21} parent=23 // pred_region
          %s213 = sand.u32 %s31, 1
          %s214 = scalar_lea.sflag [#allocation3], %s213
          %s215 = sand.u32 %s31, 1
          %s216 = smul.addr %s215, 16
          %s217 = scalar_lea.vmem [#allocation2], %s216
          %s219 = ssub.s32 256, 256
          %220 = vsyncadd %s214, %s219
          %s221 = smul.addr %s21, 2
          %s222 = smul.addr %s221, 128
          %s223 = scalar_lea.hbm %s0, %s222
          %s224 = sshll.u32 %s217, 4
          %s225 = int_to_ptr.vmem [resolvable:$true] %s224
          %230 = dma.hbm_to_vmem [thread:$0]  %s223, 256, %s225, %s214, 128, 128, 8
        $region28: #{transformer_forward.21} parent=23 // pred_fallthru
          _
        // Predicated region
        $region29: #{transformer_forward.21} parent=23 // pred_check
          %p231 = pneg %p109
        $region30: #{transformer_forward.21} parent=23 // pred_check_branch
          %233 = sbr.rel (%p231) target = $region32
        $region31: #{transformer_forward.21} parent=23 // pred_region
          %s234 = sand.u32 %s21, 1
          %s235 = scalar_lea.sflag [#allocation9], %s234
          %s236 = sand.u32 %s99, 1
          %s237 = smul.addr %s236, 16
          %s238 = scalar_lea.vmem [#allocation8], %s237
          %s240 = ssub.s32 256, 256
          %241 = vsyncadd %s235, %s240
          %s242 = smul.addr %s21, 2
          %s243 = smul.addr %s242, 128
          %s244 = scalar_lea.hbm %s3, %s243
          %s245 = sshll.u32 %s238, 4
          %s246 = int_to_ptr.vmem [resolvable:$true] %s245
          %251 = dma.hbm_to_vmem [thread:$0]  %s244, 256, %s246, %s235, 128, 128, 8
        $region32: #{transformer_forward.21} parent=23 // pred_fallthru
          _
        // Predicated region
        $region33: #{transformer_forward.21} parent=23 // pred_check
          %p252 = pneg %p135
        $region34: #{transformer_forward.21} parent=23 // pred_check_branch
          %254 = sbr.rel (%p252) target = $region36
        $region35: #{transformer_forward.21} parent=23 // pred_region
          %s255 = sand.u32 %s21, 1
          %s256 = scalar_lea.sflag [#allocation9], %s255
          %s257 = sand.u32 %s125, 1
          %s258 = scalar_lea.vmem [#allocation10], %s257
          %s260 = ssub.s32 16, 16
          %261 = vsyncadd %s256, %s260
          %s262 = smul.addr %s21, 16
          %s263 = scalar_lea.hbm %s4, %s262
          %s265 = sshll.u32 %s258, 4
          %s266 = int_to_ptr.vmem [resolvable:$true] %s265
          %268 = dma.hbm_to_vmem [thread:$0]  %s263, 16, %s266, %s256
        $region36: #{transformer_forward.21} parent=23 // pred_fallthru
          _
      $region24: #{transformer_forward.21} parent=5 // pred_fallthru
        _
      %p269 = scmp.le.s32.totalorder 1, %s21
      %p270 = scmp.lt.s32.totalorder %s21, 3
      %p271 = pnand %p269, %p270
      %p272 = pneg %p271
      // Predicated region
      $region37: #{transformer_forward.21} parent=5 // pred_check
        _
      $region38: #{transformer_forward.21} parent=5 // pred_check_branch
        %274 = sbr.rel (%p271) target = $region40
      $region39: #{transformer_forward.21} parent=5 // pred_region
        %s275 = ssub.s32 %s21, 1
        %s276 = sand.u32 %s34, 1
        %s277 = scalar_lea.sflag [#allocation3], %s276
        %s278 = sand.u32 %s34, 1
        %s279 = smul.addr %s278, 16
        %s280 = scalar_lea.vmem [#allocation2], %s279
        // Predicated region
        $region41: #{transformer_forward.21} parent=39 // pred_check
          %p281 = pneg %p47
        $region42: #{transformer_forward.21} parent=39 // pred_check_branch
          %283 = sbr.rel (%p281) target = $region44
        $region43: #{transformer_forward.21} parent=39 // pred_region
          %284 = dma.done %s277, 256
        $region44: #{transformer_forward.21} parent=39 // pred_fallthru
          _
        // Predicated region
        $region45: #{transformer_forward.21} parent=39 // pred_check
          %p285 = pneg %p68
        $region46: #{transformer_forward.21} parent=39 // pred_check_branch
          %287 = sbr.rel (%p285) target = $region48
        $region47: #{transformer_forward.21} parent=39 // pred_region
          %288 = dma.done [#allocation6], 256
        $region48: #{transformer_forward.21} parent=39 // pred_fallthru
          _
        // Predicated region
        $region49: #{transformer_forward.21} parent=39 // pred_check
          %p289 = pneg %p89
        $region50: #{transformer_forward.21} parent=39 // pred_check_branch
          %291 = sbr.rel (%p289) target = $region52
        $region51: #{transformer_forward.21} parent=39 // pred_region
          %292 = dma.done [#allocation6], 16
        $region52: #{transformer_forward.21} parent=39 // pred_fallthru
          _
        %s293 = sand.u32 %s26, 1
        %s294 = scalar_lea.sflag [#allocation9], %s293
        %s295 = sand.u32 %s102, 1
        %s296 = smul.addr %s295, 16
        %s297 = scalar_lea.vmem [#allocation8], %s296
        // Predicated region
        $region53: #{transformer_forward.21} parent=39 // pred_check
          %p298 = pneg %p115
        $region54: #{transformer_forward.21} parent=39 // pred_check_branch
          %300 = sbr.rel (%p298) target = $region56
        $region55: #{transformer_forward.21} parent=39 // pred_region
          %301 = dma.done %s294, 256
        $region56: #{transformer_forward.21} parent=39 // pred_fallthru
          _
        %s302 = sand.u32 %s26, 1
        %s303 = scalar_lea.sflag [#allocation9], %s302
        %s304 = sand.u32 %s128, 1
        %s305 = scalar_lea.vmem [#allocation10], %s304
        // Predicated region
        $region57: #{transformer_forward.21} parent=39 // pred_check
          %p306 = pneg %p141
        $region58: #{transformer_forward.21} parent=39 // pred_check_branch
          %308 = sbr.rel (%p306) target = $region60
        $region59: #{transformer_forward.21} parent=39 // pred_region
          %309 = dma.done %s303, 16
        $region60: #{transformer_forward.21} parent=39 // pred_fallthru
          _
        %s310 = sand.u32 %s34, 1
        %s311 = scalar_lea.sflag [#allocation3], %s310
        %s312 = sand.u32 %s34, 1
        %s313 = smul.addr %s312, 16
        %s314 = scalar_lea.vmem [#allocation2], %s313
        %p315 = pneg %p47
        %p316 = pneg %p44
        %p317 = pneg %p68
        %p318 = pneg %p65
        %p319 = pneg %p89
        %p320 = pneg %p86
        %s321 = sand.u32 %s26, 1
        %s322 = scalar_lea.sflag [#allocation9], %s321
        %s323 = sand.u32 %s102, 1
        %s324 = smul.addr %s323, 16
        %s325 = scalar_lea.vmem [#allocation8], %s324
        %p326 = pneg %p115
        %p327 = pneg %p112
        %s328 = sand.u32 %s26, 1
        %s329 = scalar_lea.sflag [#allocation9], %s328
        %s330 = sand.u32 %s128, 1
        %s331 = scalar_lea.vmem [#allocation10], %s330
        %p332 = pneg %p141
        %p333 = pneg %p138
        %p334 = pneg %p167
        %p335 = pneg %p164
        %s336 = sand.u32 %s154, 1
        %s337 = scalar_lea.sflag [#allocation4], %s336
        %s338 = sand.u32 %s154, 1
        %s339 = smul.addr %s338, 32
        %s340 = scalar_lea.vmem [#allocation11], %s339
        %v342 = vld [vmem:[%s280] sm:$0xff]
        %v343 = vld [vmem:[%s280 + $0x8] sm:$0xff]
        %v344 = vpack.c.bf16 %v343, %v342
        %v345 = vld [vmem:[#allocation5] sm:$0xf]
        %v346 = vld [vmem:[#allocation5 + $0x4] sm:$0xf]
        %v347 = vld [vmem:[#allocation5 + $0x8] sm:$0xf]
        %v348 = vld [vmem:[#allocation5 + $0xc] sm:$0xf]
        %v349 = vld [vmem:[#allocation7] sm:$0x1]
        %v351 = vlaneseq
        %v352 = vshrl.u32 %v351, 7
        %v353 = vsub.s32 0, %v352
        %v354 = vrot.slane %v349, %v353
        %v360 = vunpack.c.l.b16 %v345
        %v361 = vunpack.c.l.b16 %v346
        %v362 = vunpack.c.l.b16 %v347
        %v363 = vunpack.c.l.b16 %v348
        %v364 = vpack.c.b16 %v361, %v360
        %v365 = vpack.c.b16 %v363, %v362
        %vm368 = vcmask 261120
        %v370 = vsel %vm368, %v344, 0
        %372 = vmatprep.subr.bf16.mxu0 0
        %373 = vmatpush1.bf16.msra.mxu0 %v364
        %374 = vmatprep.subr.bf16.mxu0 0
        %375 = vmatpush1.bf16.msra.mxu0 %v365
        %376 = vmatprep.subr.bf16.mxu0 0
        %377 = vmatpush1.bf16.msra.mxu0 0
        %378 = vmatprep.subr.bf16.mxu0 0
        %379 = vmatpush1.bf16.msra.mxu0 0
        %380 = vmatprep.subr.bf16.mxu0 0
        %381 = vmatpush1.bf16.msra.mxu0 0
        %382 = vmatprep.subr.bf16.mxu0 0
        %383 = vmatpush1.bf16.msra.mxu0 0
        %384 = vmatprep.subr.bf16.mxu0 0
        %385 = vmatpush1.bf16.msra.mxu0 0
        %386 = vmatprep.subr.bf16.mxu0 0
        %387 = vmatpush1.bf16.msra.mxu0 0
        %388 = vmatprep.subr.bf16.mxu0 0
        %389 = vmatpush1.bf16.msra.mxu0 0
        %390 = vmatprep.subr.bf16.mxu0 0
        %391 = vmatpush1.bf16.msra.mxu0 0
        %392 = vmatprep.subr.bf16.mxu0 0
        %393 = vmatpush1.bf16.msra.mxu0 0
        %394 = vmatprep.subr.bf16.mxu0 0
        %395 = vmatpush1.bf16.msra.mxu0 0
        %396 = vmatprep.subr.bf16.mxu0 0
        %397 = vmatpush1.bf16.msra.mxu0 0
        %398 = vmatprep.subr.bf16.mxu0 0
        %399 = vmatpush1.bf16.msra.mxu0 0
        %400 = vmatprep.subr.bf16.mxu0 0
        %401 = vmatpush1.bf16.msra.mxu0 0
        %402 = vmatprep.subr.bf16.mxu0 0
        %403 = vmatpush1.bf16.msra.mxu0 0
        %404 = vmatprep.mubr.bf16.mxu0 0
        %405 = vmatmul.mubr.bf16.gmra.mrb[0].mxu0 %v370
        %v406 = vpop.f32.mrb[0].mxu0
        %v407 = vadd.f32 %v354, %v406
        %v408 = vpop.f32.mrb[0].mxu0
        %v409 = vpop.f32.mrb[0].mxu0
        %v410 = vadd.f32 %v354, %v409
        %v411 = vpop.f32.mrb[0].mxu0
        %412 = vdwg.mxu0
        %v413 = vld [vmem:[%s297] sm:$0xff]
        %v414 = vld [vmem:[%s297 + $0x8] sm:$0xff]
        %v415 = vld [vmem:[%s305] sm:$0x1]
        %417 = vset.pattern.permute.xlu0 0
        %418 = vperm.xlu0 %417, %v413
        %v419 = vpop.permute.xlu0 %418
        %422 = vset.pattern.permute.xlu0 0
        %423 = vperm.xlu0 %422, %v414
        %v424 = vpop.permute.xlu0 %423
        %v427 = vlaneseq
        %v428 = vshrl.u32 %v427, 7
        %v429 = vsub.s32 0, %v428
        %v430 = vrot.slane %v415, %v429
        %v432 = vmul.f32 %v419, %v430
        %v433 = vmul.f32 %v424, %v430
        %vm434 = vcmp.ne.f32.partialorder %v432, 0.0
        %vm435 = vcmp.ne.f32.partialorder %v433, 0.0
        %v436 = vpack.c.bf16 %v410, %v407
        %438 = vrot.lane.b32.xlu0 %v436, 96
        %v439 = vpop.permute.xlu0 %438
        %vm440 = vcmask 64512
        %v442 = vsel %vm440, %v436, 0
        %v445 = vsel %vm440, %v439, 0
        %447 = vmatprep.subr.bf16.mxu0 0
        %448 = vmatpush1.bf16.xpose.msra.mxu0 %v445
        %449 = vmatprep.subr.bf16.mxu0 0
        %450 = vmatpush1.bf16.xpose.msra.mxu0 0
        %451 = vmatprep.subr.bf16.mxu0 0
        %452 = vmatpush1.bf16.xpose.msra.mxu0 0
        %453 = vmatprep.subr.bf16.mxu0 0
        %454 = vmatpush1.bf16.xpose.msra.mxu0 0
        %455 = vmatprep.subr.bf16.mxu0 0
        %456 = vmatpush1.bf16.xpose.msra.mxu0 0
        %457 = vmatprep.subr.bf16.mxu0 0
        %458 = vmatpush1.bf16.xpose.msra.mxu0 0
        %459 = vmatprep.subr.bf16.mxu0 0
        %460 = vmatpush1.bf16.xpose.msra.mxu0 0
        %461 = vmatprep.subr.bf16.mxu0 0
        %462 = vmatpush1.bf16.xpose.msra.mxu0 0
        %463 = vmatprep.subr.bf16.mxu0 0
        %464 = vmatpush1.bf16.xpose.msra.mxu0 0
        %465 = vmatprep.subr.bf16.mxu0 0
        %466 = vmatpush1.bf16.xpose.msra.mxu0 0
        %467 = vmatprep.subr.bf16.mxu0 0
        %468 = vmatpush1.bf16.xpose.msra.mxu0 0
        %469 = vmatprep.subr.bf16.mxu0 0
        %470 = vmatpush1.bf16.xpose.msra.mxu0 0
        %471 = vmatprep.subr.bf16.mxu0 0
        %472 = vmatpush1.bf16.xpose.msra.mxu0 0
        %473 = vmatprep.subr.bf16.mxu0 0
        %474 = vmatpush1.bf16.xpose.msra.mxu0 0
        %475 = vmatprep.subr.bf16.mxu0 0
        %476 = vmatpush1.bf16.xpose.msra.mxu0 0
        %477 = vmatprep.subr.bf16.mxu0 0
        %478 = vmatpush1.bf16.xpose.msra.mxu0 0
        %479 = vmatprep.mubr.bf16.mxu0 0
        %480 = vmatmul.mubr.bf16.gmra.mrb[0].mxu0 %v442
        %v481 = vpop.f32.mrb[0].mxu0
        %v482 = vadd.f32 0.0, %v481
        %v483 = vpop.f32.mrb[0].mxu0
        %v484 = vpop.f32.mrb[0].mxu0
        %v485 = vadd.f32 0.0, %v484
        %v486 = vpop.f32.mrb[0].mxu0
        %487 = vdwg.mxu0
        %v488 = vmul.f32 %v482, 0.35355338
        %v489 = vmul.f32 %v485, 0.35355338
        %v490 = vsel %vm434, %v488, -1e+09
        %v491 = vsel %vm435, %v489, -1e+09
        %vm492 = vcmask 130048
        %v493 = vsel %vm492, %v490, -inf
        %494 = vmax.xlane.f32.xlu0 %v493
        %v495 = vpop.xlane.xlu0 %494
        %v496 = vsel %vm492, %v491, -inf
        %497 = vmax.xlane.f32.xlu0 %v496
        %v498 = vpop.xlane.xlu0 %497
        %v499 = vsub.f32 %v490, %v495
        %v500 = vsub.f32 %v491, %v498
        %v501 = vmul.f32 %v499, 1.442695
        %v502 = vpow.pop %v501
        %v503 = vmul.f32 %v500, 1.442695
        %v504 = vpow.pop %v503
        %v505 = vsel %vm492, %v502, 0.0
        %506 = vadd.xlane.f32.xlu0 %v505
        %v507 = vpop.xlane.xlu0 %506
        %v508 = vsel %vm492, %v504, 0.0
        %509 = vadd.xlane.f32.xlu0 %v508
        %v510 = vpop.xlane.xlu0 %509
        %v511 = vrcp.pop %v507
        %v512 = vrcp.pop %v510
        %v513 = vmul.f32 %v502, %v511
        %v514 = vmul.f32 %v504, %v512
        %v515 = vpack.c.bf16 %v514, %v513
        %516 = vrot.lane.b32.xlu0 %v436, 64
        %v517 = vpop.permute.xlu0 %516
        %v520 = vsel %vm492, %v515, 0
        %522 = vmatprep.subr.bf16.mxu0 0
        %523 = vmatpush1.bf16.msra.mxu0 %v517
        %524 = vmatprep.subr.bf16.mxu0 0
        %525 = vmatpush1.bf16.msra.mxu0 0
        %526 = vmatprep.subr.bf16.mxu0 0
        %527 = vmatpush1.bf16.msra.mxu0 0
        %528 = vmatprep.subr.bf16.mxu0 0
        %529 = vmatpush1.bf16.msra.mxu0 0
        %530 = vmatprep.subr.bf16.mxu0 0
        %531 = vmatpush1.bf16.msra.mxu0 0
        %532 = vmatprep.subr.bf16.mxu0 0
        %533 = vmatpush1.bf16.msra.mxu0 0
        %534 = vmatprep.subr.bf16.mxu0 0
        %535 = vmatpush1.bf16.msra.mxu0 0
        %536 = vmatprep.subr.bf16.mxu0 0
        %537 = vmatpush1.bf16.msra.mxu0 0
        %538 = vmatprep.subr.bf16.mxu0 0
        %539 = vmatpush1.bf16.msra.mxu0 0
        %540 = vmatprep.subr.bf16.mxu0 0
        %541 = vmatpush1.bf16.msra.mxu0 0
        %542 = vmatprep.subr.bf16.mxu0 0
        %543 = vmatpush1.bf16.msra.mxu0 0
        %544 = vmatprep.subr.bf16.mxu0 0
        %545 = vmatpush1.bf16.msra.mxu0 0
        %546 = vmatprep.subr.bf16.mxu0 0
        %547 = vmatpush1.bf16.msra.mxu0 0
        %548 = vmatprep.subr.bf16.mxu0 0
        %549 = vmatpush1.bf16.msra.mxu0 0
        %550 = vmatprep.subr.bf16.mxu0 0
        %551 = vmatpush1.bf16.msra.mxu0 0
        %552 = vmatprep.subr.bf16.mxu0 0
        %553 = vmatpush1.bf16.msra.mxu0 0
        %554 = vmatprep.mubr.bf16.mxu0 0
        %555 = vmatmul.mubr.bf16.gmra.mrb[0].mxu0 %v520
        %v556 = vpop.f32.mrb[0].mxu0
        %v557 = vadd.f32 0.0, %v556
        %v558 = vpop.f32.mrb[0].mxu0
        %v559 = vpop.f32.mrb[0].mxu0
        %v560 = vadd.f32 0.0, %v559
        %v561 = vpop.f32.mrb[0].mxu0
        %562 = vdwg.mxu0
        %v563 = vpack.c.bf16 %v560, %v557
        %v565 = vunpack.c.l.b16 %v563
        %v566 = vunpack.c.h.b16 %v563
        %v567 = vpack.c.b16 %v565, %v565
        %v568 = vpack.c.b16 %v566, %v566
        %vm571 = vcmask 60416
        %572 = vst.msk [vmem:[%s340] sm:$0xf] %vm571, %v567
        %573 = vst.msk [vmem:[%s340 + $0x4] sm:$0xf] %vm571, %v568
        %574 = vrot.lane.b32.xlu0 %v436, 120
        %v575 = vpop.permute.xlu0 %574
        %576 = vrot.lane.b32.xlu0 %v436, 88
        %v577 = vpop.permute.xlu0 %576
        %v579 = vsel %vm440, %v575, 0
        %v582 = vsel %vm440, %v577, 0
        %584 = vmatprep.subr.bf16.mxu0 0
        %585 = vmatpush1.bf16.xpose.msra.mxu0 %v582
        %586 = vmatprep.subr.bf16.mxu0 0
        %587 = vmatpush1.bf16.xpose.msra.mxu0 0
        %588 = vmatprep.subr.bf16.mxu0 0
        %589 = vmatpush1.bf16.xpose.msra.mxu0 0
        %590 = vmatprep.subr.bf16.mxu0 0
        %591 = vmatpush1.bf16.xpose.msra.mxu0 0
        %592 = vmatprep.subr.bf16.mxu0 0
        %593 = vmatpush1.bf16.xpose.msra.mxu0 0
        %594 = vmatprep.subr.bf16.mxu0 0
        %595 = vmatpush1.bf16.xpose.msra.mxu0 0
        %596 = vmatprep.subr.bf16.mxu0 0
        %597 = vmatpush1.bf16.xpose.msra.mxu0 0
        %598 = vmatprep.subr.bf16.mxu0 0
        %599 = vmatpush1.bf16.xpose.msra.mxu0 0
        %600 = vmatprep.subr.bf16.mxu0 0
        %601 = vmatpush1.bf16.xpose.msra.mxu0 0
        %602 = vmatprep.subr.bf16.mxu0 0
        %603 = vmatpush1.bf16.xpose.msra.mxu0 0
        %604 = vmatprep.subr.bf16.mxu0 0
        %605 = vmatpush1.bf16.xpose.msra.mxu0 0
        %606 = vmatprep.subr.bf16.mxu0 0
        %607 = vmatpush1.bf16.xpose.msra.mxu0 0
        %608 = vmatprep.subr.bf16.mxu0 0
        %609 = vmatpush1.bf16.xpose.msra.mxu0 0
        %610 = vmatprep.subr.bf16.mxu0 0
        %611 = vmatpush1.bf16.xpose.msra.mxu0 0
        %612 = vmatprep.subr.bf16.mxu0 0
        %613 = vmatpush1.bf16.xpose.msra.mxu0 0
        %614 = vmatprep.subr.bf16.mxu0 0
        %615 = vmatpush1.bf16.xpose.msra.mxu0 0
        %616 = vmatprep.mubr.bf16.mxu0 0
        %617 = vmatmul.mubr.bf16.gmra.mrb[0].mxu0 %v579
        %v618 = vpop.f32.mrb[0].mxu0
        %v619 = vadd.f32 0.0, %v618
        %v620 = vpop.f32.mrb[0].mxu0
        %v621 = vpop.f32.mrb[0].mxu0
        %v622 = vadd.f32 0.0, %v621
        %v623 = vpop.f32.mrb[0].mxu0
        %624 = vdwg.mxu0
        %v625 = vmul.f32 %v619, 0.35355338
        %v626 = vmul.f32 %v622, 0.35355338
        %v627 = vsel %vm434, %v625, -1e+09
        %v628 = vsel %vm435, %v626, -1e+09
        %v629 = vsel %vm492, %v627, -inf
        %630 = vmax.xlane.f32.xlu0 %v629
        %v631 = vpop.xlane.xlu0 %630
        %v632 = vsel %vm492, %v628, -inf
        %633 = vmax.xlane.f32.xlu0 %v632
        %v634 = vpop.xlane.xlu0 %633
        %v635 = vsub.f32 %v627, %v631
        %v636 = vsub.f32 %v628, %v634
        %v637 = vmul.f32 %v635, 1.442695
        %v638 = vpow.pop %v637
        %v639 = vmul.f32 %v636, 1.442695
        %v640 = vpow.pop %v639
        %v641 = vsel %vm492, %v638, 0.0
        %642 = vadd.xlane.f32.xlu0 %v641
        %v643 = vpop.xlane.xlu0 %642
        %v644 = vsel %vm492, %v640, 0.0
        %645 = vadd.xlane.f32.xlu0 %v644
        %v646 = vpop.xlane.xlu0 %645
        %v647 = vrcp.pop %v643
        %v648 = vrcp.pop %v646
        %v649 = vmul.f32 %v638, %v647
        %v650 = vmul.f32 %v640, %v648
        %v651 = vpack.c.bf16 %v650, %v649
        %652 = vrot.lane.b32.xlu0 %v436, 56
        %v653 = vpop.permute.xlu0 %652
        %v656 = vsel %vm492, %v651, 0
        %658 = vmatprep.subr.bf16.mxu0 0
        %659 = vmatpush1.bf16.msra.mxu0 %v653
        %660 = vmatprep.subr.bf16.mxu0 0
        %661 = vmatpush1.bf16.msra.mxu0 0
        %662 = vmatprep.subr.bf16.mxu0 0
        %663 = vmatpush1.bf16.msra.mxu0 0
        %664 = vmatprep.subr.bf16.mxu0 0
        %665 = vmatpush1.bf16.msra.mxu0 0
        %666 = vmatprep.subr.bf16.mxu0 0
        %667 = vmatpush1.bf16.msra.mxu0 0
        %668 = vmatprep.subr.bf16.mxu0 0
        %669 = vmatpush1.bf16.msra.mxu0 0
        %670 = vmatprep.subr.bf16.mxu0 0
        %671 = vmatpush1.bf16.msra.mxu0 0
        %672 = vmatprep.subr.bf16.mxu0 0
        %673 = vmatpush1.bf16.msra.mxu0 0
        %674 = vmatprep.subr.bf16.mxu0 0
        %675 = vmatpush1.bf16.msra.mxu0 0
        %676 = vmatprep.subr.bf16.mxu0 0
        %677 = vmatpush1.bf16.msra.mxu0 0
        %678 = vmatprep.subr.bf16.mxu0 0
        %679 = vmatpush1.bf16.msra.mxu0 0
        %680 = vmatprep.subr.bf16.mxu0 0
        %681 = vmatpush1.bf16.msra.mxu0 0
        %682 = vmatprep.subr.bf16.mxu0 0
        %683 = vmatpush1.bf16.msra.mxu0 0
        %684 = vmatprep.subr.bf16.mxu0 0
        %685 = vmatpush1.bf16.msra.mxu0 0
        %686 = vmatprep.subr.bf16.mxu0 0
        %687 = vmatpush1.bf16.msra.mxu0 0
        %688 = vmatprep.subr.bf16.mxu0 0
        %689 = vmatpush1.bf16.msra.mxu0 0
        %690 = vmatprep.mubr.bf16.mxu0 0
        %691 = vmatmul.mubr.bf16.gmra.mrb[0].mxu0 %v656
        %v692 = vpop.f32.mrb[0].mxu0
        %v693 = vadd.f32 0.0, %v692
        %v694 = vpop.f32.mrb[0].mxu0
        %v695 = vpop.f32.mrb[0].mxu0
        %v696 = vadd.f32 0.0, %v695
        %v697 = vpop.f32.mrb[0].mxu0
        %698 = vdwg.mxu0
        %v699 = vpack.c.bf16 %v696, %v693
        %v701 = vunpack.c.l.b16 %v699
        %v702 = vunpack.c.h.b16 %v699
        %v703 = vpack.c.b16 %v701, %v701
        %v704 = vpack.c.b16 %v702, %v702
        %s707 = scalar_lea.vmem %s340, 8 [#allocation11]
        %708 = vst.msk [vmem:[%s707] sm:$0xf] %vm571, %v703
        %709 = vst.msk [vmem:[%s707 + $0x4] sm:$0xf] %vm571, %v704
        %710 = vrot.lane.b32.xlu0 %v436, 112
        %v711 = vpop.permute.xlu0 %710
        %712 = vrot.lane.b32.xlu0 %v436, 80
        %v713 = vpop.permute.xlu0 %712
        %v715 = vsel %vm440, %v711, 0
        %v718 = vsel %vm440, %v713, 0
        %720 = vmatprep.subr.bf16.mxu0 0
        %721 = vmatpush1.bf16.xpose.msra.mxu0 %v718
        %722 = vmatprep.subr.bf16.mxu0 0
        %723 = vmatpush1.bf16.xpose.msra.mxu0 0
        %724 = vmatprep.subr.bf16.mxu0 0
        %725 = vmatpush1.bf16.xpose.msra.mxu0 0
        %726 = vmatprep.subr.bf16.mxu0 0
        %727 = vmatpush1.bf16.xpose.msra.mxu0 0
        %728 = vmatprep.subr.bf16.mxu0 0
        %729 = vmatpush1.bf16.xpose.msra.mxu0 0
        %730 = vmatprep.subr.bf16.mxu0 0
        %731 = vmatpush1.bf16.xpose.msra.mxu0 0
        %732 = vmatprep.subr.bf16.mxu0 0
        %733 = vmatpush1.bf16.xpose.msra.mxu0 0
        %734 = vmatprep.subr.bf16.mxu0 0
        %735 = vmatpush1.bf16.xpose.msra.mxu0 0
        %736 = vmatprep.subr.bf16.mxu0 0
        %737 = vmatpush1.bf16.xpose.msra.mxu0 0
        %738 = vmatprep.subr.bf16.mxu0 0
        %739 = vmatpush1.bf16.xpose.msra.mxu0 0
        %740 = vmatprep.subr.bf16.mxu0 0
        %741 = vmatpush1.bf16.xpose.msra.mxu0 0
        %742 = vmatprep.subr.bf16.mxu0 0
        %743 = vmatpush1.bf16.xpose.msra.mxu0 0
        %744 = vmatprep.subr.bf16.mxu0 0
        %745 = vmatpush1.bf16.xpose.msra.mxu0 0
        %746 = vmatprep.subr.bf16.mxu0 0
        %747 = vmatpush1.bf16.xpose.msra.mxu0 0
        %748 = vmatprep.subr.bf16.mxu0 0
        %749 = vmatpush1.bf16.xpose.msra.mxu0 0
        %750 = vmatprep.subr.bf16.mxu0 0
        %751 = vmatpush1.bf16.xpose.msra.mxu0 0
        %752 = vmatprep.mubr.bf16.mxu0 0
        %753 = vmatmul.mubr.bf16.gmra.mrb[0].mxu0 %v715
        %v754 = vpop.f32.mrb[0].mxu0
        %v755 = vadd.f32 0.0, %v754
        %v756 = vpop.f32.mrb[0].mxu0
        %v757 = vpop.f32.mrb[0].mxu0
        %v758 = vadd.f32 0.0, %v757
        %v759 = vpop.f32.mrb[0].mxu0
        %760 = vdwg.mxu0
        %v761 = vmul.f32 %v755, 0.35355338
        %v762 = vmul.f32 %v758, 0.35355338
        %v763 = vsel %vm434, %v761, -1e+09
        %v764 = vsel %vm435, %v762, -1e+09
        %v765 = vsel %vm492, %v763, -inf
        %766 = vmax.xlane.f32.xlu0 %v765
        %v767 = vpop.xlane.xlu0 %766
        %v768 = vsel %vm492, %v764, -inf
        %769 = vmax.xlane.f32.xlu0 %v768
        %v770 = vpop.xlane.xlu0 %769
        %v771 = vsub.f32 %v763, %v767
        %v772 = vsub.f32 %v764, %v770
        %v773 = vmul.f32 %v771, 1.442695
        %v774 = vpow.pop %v773
        %v775 = vmul.f32 %v772, 1.442695
        %v776 = vpow.pop %v775
        %v777 = vsel %vm492, %v774, 0.0
        %778 = vadd.xlane.f32.xlu0 %v777
        %v779 = vpop.xlane.xlu0 %778
        %v780 = vsel %vm492, %v776, 0.0
        %781 = vadd.xlane.f32.xlu0 %v780
        %v782 = vpop.xlane.xlu0 %781
        %v783 = vrcp.pop %v779
        %v784 = vrcp.pop %v782
        %v785 = vmul.f32 %v774, %v783
        %v786 = vmul.f32 %v776, %v784
        %v787 = vpack.c.bf16 %v786, %v785
        %788 = vrot.lane.b32.xlu0 %v436, 48
        %v789 = vpop.permute.xlu0 %788
        %v792 = vsel %vm492, %v787, 0
        %794 = vmatprep.subr.bf16.mxu0 0
        %795 = vmatpush1.bf16.msra.mxu0 %v789
        %796 = vmatprep.subr.bf16.mxu0 0
        %797 = vmatpush1.bf16.msra.mxu0 0
        %798 = vmatprep.subr.bf16.mxu0 0
        %799 = vmatpush1.bf16.msra.mxu0 0
        %800 = vmatprep.subr.bf16.mxu0 0
        %801 = vmatpush1.bf16.msra.mxu0 0
        %802 = vmatprep.subr.bf16.mxu0 0
        %803 = vmatpush1.bf16.msra.mxu0 0
        %804 = vmatprep.subr.bf16.mxu0 0
        %805 = vmatpush1.bf16.msra.mxu0 0
        %806 = vmatprep.subr.bf16.mxu0 0
        %807 = vmatpush1.bf16.msra.mxu0 0
        %808 = vmatprep.subr.bf16.mxu0 0
        %809 = vmatpush1.bf16.msra.mxu0 0
        %810 = vmatprep.subr.bf16.mxu0 0
        %811 = vmatpush1.bf16.msra.mxu0 0
        %812 = vmatprep.subr.bf16.mxu0 0
        %813 = vmatpush1.bf16.msra.mxu0 0
        %814 = vmatprep.subr.bf16.mxu0 0
        %815 = vmatpush1.bf16.msra.mxu0 0
        %816 = vmatprep.subr.bf16.mxu0 0
        %817 = vmatpush1.bf16.msra.mxu0 0
        %818 = vmatprep.subr.bf16.mxu0 0
        %819 = vmatpush1.bf16.msra.mxu0 0
        %820 = vmatprep.subr.bf16.mxu0 0
        %821 = vmatpush1.bf16.msra.mxu0 0
        %822 = vmatprep.subr.bf16.mxu0 0
        %823 = vmatpush1.bf16.msra.mxu0 0
        %824 = vmatprep.subr.bf16.mxu0 0
        %825 = vmatpush1.bf16.msra.mxu0 0
        %826 = vmatprep.mubr.bf16.mxu0 0
        %827 = vmatmul.mubr.bf16.gmra.mrb[0].mxu0 %v792
        %v828 = vpop.f32.mrb[0].mxu0
        %v829 = vadd.f32 0.0, %v828
        %v830 = vpop.f32.mrb[0].mxu0
        %v831 = vpop.f32.mrb[0].mxu0
        %v832 = vadd.f32 0.0, %v831
        %v833 = vpop.f32.mrb[0].mxu0
        %834 = vdwg.mxu0
        %v835 = vpack.c.bf16 %v832, %v829
        %v837 = vunpack.c.l.b16 %v835
        %v838 = vunpack.c.h.b16 %v835
        %v839 = vpack.c.b16 %v837, %v837
        %v840 = vpack.c.b16 %v838, %v838
        %s843 = scalar_lea.vmem %s340, 16 [#allocation11]
        %844 = vst.msk [vmem:[%s843] sm:$0xf] %vm571, %v839
        %845 = vst.msk [vmem:[%s843 + $0x4] sm:$0xf] %vm571, %v840
        %846 = vrot.lane.b32.xlu0 %v436, 104
        %v847 = vpop.permute.xlu0 %846
        %848 = vrot.lane.b32.xlu0 %v436, 72
        %v849 = vpop.permute.xlu0 %848
        %v851 = vsel %vm440, %v847, 0
        %v854 = vsel %vm440, %v849, 0
        %856 = vmatprep.subr.bf16.mxu0 0
        %857 = vmatpush1.bf16.xpose.msra.mxu0 %v854
        %858 = vmatprep.subr.bf16.mxu0 0
        %859 = vmatpush1.bf16.xpose.msra.mxu0 0
        %860 = vmatprep.subr.bf16.mxu0 0
        %861 = vmatpush1.bf16.xpose.msra.mxu0 0
        %862 = vmatprep.subr.bf16.mxu0 0
        %863 = vmatpush1.bf16.xpose.msra.mxu0 0
        %864 = vmatprep.subr.bf16.mxu0 0
        %865 = vmatpush1.bf16.xpose.msra.mxu0 0
        %866 = vmatprep.subr.bf16.mxu0 0
        %867 = vmatpush1.bf16.xpose.msra.mxu0 0
        %868 = vmatprep.subr.bf16.mxu0 0
        %869 = vmatpush1.bf16.xpose.msra.mxu0 0
        %870 = vmatprep.subr.bf16.mxu0 0
        %871 = vmatpush1.bf16.xpose.msra.mxu0 0
        %872 = vmatprep.subr.bf16.mxu0 0
        %873 = vmatpush1.bf16.xpose.msra.mxu0 0
        %874 = vmatprep.subr.bf16.mxu0 0
        %875 = vmatpush1.bf16.xpose.msra.mxu0 0
        %876 = vmatprep.subr.bf16.mxu0 0
        %877 = vmatpush1.bf16.xpose.msra.mxu0 0
        %878 = vmatprep.subr.bf16.mxu0 0
        %879 = vmatpush1.bf16.xpose.msra.mxu0 0
        %880 = vmatprep.subr.bf16.mxu0 0
        %881 = vmatpush1.bf16.xpose.msra.mxu0 0
        %882 = vmatprep.subr.bf16.mxu0 0
        %883 = vmatpush1.bf16.xpose.msra.mxu0 0
        %884 = vmatprep.subr.bf16.mxu0 0
        %885 = vmatpush1.bf16.xpose.msra.mxu0 0
        %886 = vmatprep.subr.bf16.mxu0 0
        %887 = vmatpush1.bf16.xpose.msra.mxu0 0
        %888 = vmatprep.mubr.bf16.mxu0 0
        %889 = vmatmul.mubr.bf16.gmra.mrb[0].mxu0 %v851
        %v890 = vpop.f32.mrb[0].mxu0
        %v891 = vadd.f32 0.0, %v890
        %v892 = vpop.f32.mrb[0].mxu0
        %v893 = vpop.f32.mrb[0].mxu0
        %v894 = vadd.f32 0.0, %v893
        %v895 = vpop.f32.mrb[0].mxu0
        %896 = vdwg.mxu0
        %v897 = vmul.f32 %v891, 0.35355338
        %v898 = vmul.f32 %v894, 0.35355338
        %v899 = vsel %vm434, %v897, -1e+09
        %v900 = vsel %vm435, %v898, -1e+09
        %v901 = vsel %vm492, %v899, -inf
        %902 = vmax.xlane.f32.xlu0 %v901
        %v903 = vpop.xlane.xlu0 %902
        %v904 = vsel %vm492, %v900, -inf
        %905 = vmax.xlane.f32.xlu0 %v904
        %v906 = vpop.xlane.xlu0 %905
        %v907 = vsub.f32 %v899, %v903
        %v908 = vsub.f32 %v900, %v906
        %v909 = vmul.f32 %v907, 1.442695
        %v910 = vpow.pop %v909
        %v911 = vmul.f32 %v908, 1.442695
        %v912 = vpow.pop %v911
        %v913 = vsel %vm492, %v910, 0.0
        %914 = vadd.xlane.f32.xlu0 %v913
        %v915 = vpop.xlane.xlu0 %914
        %v916 = vsel %vm492, %v912, 0.0
        %917 = vadd.xlane.f32.xlu0 %v916
        %v918 = vpop.xlane.xlu0 %917
        %v919 = vrcp.pop %v915
        %v920 = vrcp.pop %v918
        %v921 = vmul.f32 %v910, %v919
        %v922 = vmul.f32 %v912, %v920
        %v923 = vpack.c.bf16 %v922, %v921
        %924 = vrot.lane.b32.xlu0 %v436, 40
        %v925 = vpop.permute.xlu0 %924
        %v928 = vsel %vm492, %v923, 0
        %930 = vmatprep.subr.bf16.mxu0 0
        %931 = vmatpush1.bf16.msra.mxu0 %v925
        %932 = vmatprep.subr.bf16.mxu0 0
        %933 = vmatpush1.bf16.msra.mxu0 0
        %934 = vmatprep.subr.bf16.mxu0 0
        %935 = vmatpush1.bf16.msra.mxu0 0
        %936 = vmatprep.subr.bf16.mxu0 0
        %937 = vmatpush1.bf16.msra.mxu0 0
        %938 = vmatprep.subr.bf16.mxu0 0
        %939 = vmatpush1.bf16.msra.mxu0 0
        %940 = vmatprep.subr.bf16.mxu0 0
        %941 = vmatpush1.bf16.msra.mxu0 0
        %942 = vmatprep.subr.bf16.mxu0 0
        %943 = vmatpush1.bf16.msra.mxu0 0
        %944 = vmatprep.subr.bf16.mxu0 0
        %945 = vmatpush1.bf16.msra.mxu0 0
        %946 = vmatprep.subr.bf16.mxu0 0
        %947 = vmatpush1.bf16.msra.mxu0 0
        %948 = vmatprep.subr.bf16.mxu0 0
        %949 = vmatpush1.bf16.msra.mxu0 0
        %950 = vmatprep.subr.bf16.mxu0 0
        %951 = vmatpush1.bf16.msra.mxu0 0
        %952 = vmatprep.subr.bf16.mxu0 0
        %953 = vmatpush1.bf16.msra.mxu0 0
        %954 = vmatprep.subr.bf16.mxu0 0
        %955 = vmatpush1.bf16.msra.mxu0 0
        %956 = vmatprep.subr.bf16.mxu0 0
        %957 = vmatpush1.bf16.msra.mxu0 0
        %958 = vmatprep.subr.bf16.mxu0 0
        %959 = vmatpush1.bf16.msra.mxu0 0
        %960 = vmatprep.subr.bf16.mxu0 0
        %961 = vmatpush1.bf16.msra.mxu0 0
        %962 = vmatprep.mubr.bf16.mxu0 0
        %963 = vmatmul.mubr.bf16.gmra.mrb[0].mxu0 %v928
        %v964 = vpop.f32.mrb[0].mxu0
        %v965 = vadd.f32 0.0, %v964
        %v966 = vpop.f32.mrb[0].mxu0
        %v967 = vpop.f32.mrb[0].mxu0
        %v968 = vadd.f32 0.0, %v967
        %v969 = vpop.f32.mrb[0].mxu0
        %970 = vdwg.mxu0
        %v971 = vpack.c.bf16 %v968, %v965
        %v973 = vunpack.c.l.b16 %v971
        %v974 = vunpack.c.h.b16 %v971
        %v975 = vpack.c.b16 %v973, %v973
        %v976 = vpack.c.b16 %v974, %v974
        %s979 = scalar_lea.vmem %s340, 24 [#allocation11]
        %980 = vst.msk [vmem:[%s979] sm:$0xf] %vm571, %v975
        %981 = vst.msk [vmem:[%s979 + $0x4] sm:$0xf] %vm571, %v976
        %s982 = sand.u32 %s154, 1
        %s983 = scalar_lea.sflag [#allocation4], %s982
        %s984 = sand.u32 %s154, 1
        %s985 = smul.addr %s984, 32
        %s986 = scalar_lea.vmem [#allocation11], %s985
        // Predicated region
        $region61: #{transformer_forward.21} parent=39 // pred_check
          %p987 = pneg %p164
        $region62: #{transformer_forward.21} parent=39 // pred_check_branch
          %989 = sbr.rel (%p987) target = $region64
        $region63: #{transformer_forward.21} parent=39 // pred_region
          %s991 = ssub.s32 512, 512
          %992 = vsyncadd %s983, %s991
          %s993 = smul.addr %s26, 8
          %s994 = smul.addr %s993, 64
          %s995 = scalar_lea.hbm %s5, %s994
          %s996 = sshll.u32 %s986, 4
          %s997 = int_to_ptr.vmem [resolvable:$true] %s996
          %1002 = dma.vmem_to_hbm [thread:$0]  %s997, 512, %s995, %s983, 64, 64, 4
        $region64: #{transformer_forward.21} parent=39 // pred_fallthru
          _
      $region40: #{transformer_forward.21} parent=5 // pred_fallthru
        _
      %p1003 = scmp.le.s32.totalorder 2, %s21
      // Predicated region
      $region65: #{transformer_forward.21} parent=5 // pred_check
        %p1004 = pneg %p1003
      $region66: #{transformer_forward.21} parent=5 // pred_check_branch
        %1006 = sbr.rel (%p1004) target = $region68
      $region67: #{transformer_forward.21} parent=5 // pred_region
        %s1007 = ssub.s32 %s21, 2
        // Predicated region
        $region69: #{transformer_forward.21} parent=67 // pred_check
          %p1008 = pneg %p170
        $region70: #{transformer_forward.21} parent=67 // pred_check_branch
          %1010 = sbr.rel (%p1008) target = $region72
        $region71: #{transformer_forward.21} parent=67 // pred_region
          %s1011 = sand.u32 %s155, 1
          %s1012 = scalar_lea.sflag [#allocation4], %s1011
          %s1013 = sand.u32 %s155, 1
          %s1014 = smul.addr %s1013, 32
          %s1015 = scalar_lea.vmem [#allocation11], %s1014
          %1016 = dma.done %s1012, 512
        $region72: #{transformer_forward.21} parent=67 // pred_fallthru
          _
      $region68: #{transformer_forward.21} parent=5 // pred_fallthru
        _
    $region6: #{transformer_forward.21} parent=1 // loop_footer
      %s25 = sadd.s32 1, %s21
    $region7: #{transformer_forward.21} parent=1 // loop_footer_branch
      %20 = sbr.rel target = $region3
    $region8: #{transformer_forward.21} parent=1 // loop_exit
      _
    %1017 = vsyncpa [#allocation3], 1
    %s1018 = scalar_lea.sflag [#allocation3], 1
    %1019 = vsyncpa %s1018, 1
    %1020 = vsyncpa [#allocation6], 1
    %1021 = vsyncpa [#allocation9], 1
    %s1022 = scalar_lea.sflag [#allocation9], 1
    %1023 = vsyncpa %s1022, 1
    %1024 = vsyncpa [#allocation4], 1
    %s1025 = scalar_lea.sflag [#allocation4], 1
    %1026 = vsyncpa %s1025, 1

// kernel: transformer_forward.37
$region0: #{transformer_forward.37}
  #allocation0 [shape = 'u32[]', space=smem, size = 0x4, offset = 0x4, fixed_abs, tag = 'smem constant byte address 0x4 - core index']
  #allocation1 [shape = 'u32[144,128]{1,0:T(1,128)}', space=vmem, size = 0x12000, scoped, tag = 'internal scratch']
  %s0 = inlined_call_operand.hbm [shape: f32[2,16,32], index: 0, kind: input, shape index: {}]
  %s1 = inlined_call_operand.hbm [shape: bf16[32,8], index: 1, kind: input, shape index: {}]
  %s2 = inlined_call_operand.hbm [shape: f32[1,8], index: 2, kind: input, shape index: {}]
  %s3 = inlined_call_operand.hbm [shape: f32[2,16,8], index: 3, kind: output, shape index: {}]
  %s4 = sld [smem:[#allocation0]]
  $region57: #{transformer_forward.37} parent=0
    _
  %s6 = ssub.s32 1, %s4
  %s7 = scalar_select 0, %s6, %s4
  $region1: #{transformer_forward.37} parent=0
    #allocation2 [shape = 'u8[16384]{0}', space=vmem, size = 0x4000, scoped, tag = 'input window, operand 0']
    #allocation3 [shape = 's32[2]{0}', space=sflag, size = 0x8, scoped, tag = 'scoped memory for transformer_forward.37']
    #allocation4 [shape = 's32[2]{0}', space=sflag, size = 0x8, scoped, tag = 'scoped memory for transformer_forward.37']
    #allocation5 [shape = 'u8[8192]{0}', space=vmem, size = 0x2000, scoped, tag = 'input window, operand 1, single buffered']
    #allocation6 [shape = 's32[1]{0}', space=sflag, size = 0x4, scoped, tag = 'scoped memory for transformer_forward.37']
    #allocation7 [shape = 'u8[512]{0}', space=vmem, size = 0x400, scoped, tag = 'input window, operand 2, single buffered']
    #allocation8 [shape = 'u8[16384]{0}', space=vmem, size = 0x4000, scoped, tag = 'output window, operand 0']
    %8 = vsyncpa [#allocation3], 0
    %s9 = scalar_lea.sflag [#allocation3], 1
    %10 = vsyncpa %s9, 0
    %11 = vsyncpa [#allocation6], 0
    %12 = vsyncpa [#allocation4], 0
    %s13 = scalar_lea.sflag [#allocation4], 1
    %14 = vsyncpa %s13, 0
    loop: start=0, step=1, limit=4
    $region2: #{transformer_forward.37} parent=1 // loop_pre_header
      _
    $region3: #{transformer_forward.37} parent=1 // loop_header
      %s16 = sphi 0, %s20
      %p17 = scmp.ge.s32.totalorder %s16, 4
      %s23 = sphi 0, %s35
      %s24 = sphi 0, %s31
      %s25 = sphi 0, %s23
      %s26 = sphi 0, %s24
      %s27 = sphi 0, %s25
      %s28 = sphi 0, %s26
      %s40 = sphi 0, %s42
      %s43 = sphi 0, %s40
      %s44 = sphi 0, %s43
      %s60 = sphi 0, %s44
      %s64 = sphi 0, %s64
      %s66 = sphi 0, %s64
      %s67 = sphi 0, %s66
      %s81 = sphi 0, %s67
      %s85 = sphi 0, %s85
      %s87 = sphi 0, %s85
      %s88 = sphi 0, %s87
      %s102 = sphi 0, %s88
      %s110 = sphi 0, %s112
      %s113 = sphi 0, %s110
      %s114 = sphi 0, %s113
      %s130 = sphi 0, %s114
    $region4: #{transformer_forward.37} parent=1 // loop_header_branch
      %19 = sbr.rel (%p17) target = $region8
    $region5: #{transformer_forward.37} parent=1 // loop_body
      %s21 = ssub.s32 %s16, 1
      %s22 = ssub.s32 %s16, 2
      %s29 = sadd.s32 1, %s24
      %p30 = scmp.ge.s32.totalorder %s29, 1
      %s31 = scalar_select %p30, 0, %s29
      %s32 = sadd.s32 1, %s23
      %s33 = scalar_select %p30, %s32, %s23
      %p34 = scmp.ge.s32.totalorder %s33, 2
      %s35 = scalar_select %p34, 0, %s33
      %s36 = ssub.s32 %s23, %s35
      %s37 = ssub.s32 %s24, %s31
      %s38 = sor.u32 %s36, %s37
      %p39 = scmp.eq.s32.totalorder %s38, 0
      %s41 = sadd.s32 %s40, 1
      %s42 = scalar_select %p39, %s40, %s41
      %p45 = pneg %p39
      %p46 = scmp.eq.s32.totalorder %s16, 1
      %p47 = por %p45, %p46
      %p48 = scmp.ne.s32.totalorder %s40, %s43
      %p49 = scmp.eq.s32.totalorder %s16, 0
      %p50 = por %p48, %p49
      %p51 = scmp.ne.s32.totalorder %s40, %s43
      %p52 = scmp.eq.s32.totalorder %s21, 1
      %p53 = por %p51, %p52
      %p54 = scmp.ne.s32.totalorder %s43, %s44
      %p55 = scmp.eq.s32.totalorder %s21, 0
      %p56 = por %p54, %p55
      %p57 = scmp.ne.s32.totalorder %s43, %s44
      %p58 = scmp.eq.s32.totalorder %s22, 1
      %p59 = por %p57, %p58
      %p61 = scmp.ne.s32.totalorder %s44, %s60
      %p62 = scmp.eq.s32.totalorder %s22, 0
      %p63 = por %p61, %p62
      %s65 = sadd.s32 %s64, 1
      %p68 = scmp.eq.s32.totalorder %s16, 1
      %p69 = scmp.ne.s32.totalorder %s64, %s66
      %p70 = scmp.eq.s32.totalorder %s16, 0
      %p71 = por %p69, %p70
      %p72 = scmp.ne.s32.totalorder %s64, %s66
      %p73 = scmp.eq.s32.totalorder %s21, 1
      %p74 = por %p72, %p73
      %p75 = scmp.ne.s32.totalorder %s66, %s67
      %p76 = scmp.eq.s32.totalorder %s21, 0
      %p77 = por %p75, %p76
      %p78 = scmp.ne.s32.totalorder %s66, %s67
      %p79 = scmp.eq.s32.totalorder %s22, 1
      %p80 = por %p78, %p79
      %p82 = scmp.ne.s32.totalorder %s67, %s81
      %p83 = scmp.eq.s32.totalorder %s22, 0
      %p84 = por %p82, %p83
      %s86 = sadd.s32 %s85, 1
      %p89 = scmp.eq.s32.totalorder %s16, 1
      %p90 = scmp.ne.s32.totalorder %s85, %s87
      %p91 = scmp.eq.s32.totalorder %s16, 0
      %p92 = por %p90, %p91
      %p93 = scmp.ne.s32.totalorder %s85, %s87
      %p94 = scmp.eq.s32.totalorder %s21, 1
      %p95 = por %p93, %p94
      %p96 = scmp.ne.s32.totalorder %s87, %s88
      %p97 = scmp.eq.s32.totalorder %s21, 0
      %p98 = por %p96, %p97
      %p99 = scmp.ne.s32.totalorder %s87, %s88
      %p100 = scmp.eq.s32.totalorder %s22, 1
      %p101 = por %p99, %p100
      %p103 = scmp.ne.s32.totalorder %s88, %s102
      %p104 = scmp.eq.s32.totalorder %s22, 0
      %p105 = por %p103, %p104
      %s106 = ssub.s32 %s23, %s35
      %s107 = ssub.s32 %s24, %s31
      %s108 = sor.u32 %s106, %s107
      %p109 = scmp.eq.s32.totalorder %s108, 0
      %s111 = sadd.s32 %s110, 1
      %s112 = scalar_select %p109, %s110, %s111
      %p115 = pneg %p109
      %p116 = scmp.eq.s32.totalorder %s16, 1
      %p117 = por %p115, %p116
      %p118 = scmp.ne.s32.totalorder %s110, %s113
      %p119 = scmp.eq.s32.totalorder %s16, 0
      %p120 = por %p118, %p119
      %p121 = scmp.ne.s32.totalorder %s110, %s113
      %p122 = scmp.eq.s32.totalorder %s21, 1
      %p123 = por %p121, %p122
      %p124 = scmp.ne.s32.totalorder %s113, %s114
      %p125 = scmp.eq.s32.totalorder %s21, 0
      %p126 = por %p124, %p125
      %p127 = scmp.ne.s32.totalorder %s113, %s114
      %p128 = scmp.eq.s32.totalorder %s22, 1
      %p129 = por %p127, %p128
      %p131 = scmp.ne.s32.totalorder %s114, %s130
      %p132 = scmp.eq.s32.totalorder %s22, 0
      %p133 = por %p131, %p132
      %p134 = scmp.le.s32.totalorder 1, %s16
      %p135 = scmp.lt.s32.totalorder %s16, 3
      %p136 = pnand %p134, %p135
      %p137 = pneg %p136
      // Predicated region
      $region9: #{transformer_forward.37} parent=5 // pred_check
        _
      $region10: #{transformer_forward.37} parent=5 // pred_check_branch
        %139 = sbr.rel (%p136) target = $region12
      $region11: #{transformer_forward.37} parent=5 // pred_region
        %s140 = ssub.s32 %s16, 1
        // Predicated region
        $region13: #{transformer_forward.37} parent=11 // pred_check
          %p141 = pneg %p77
        $region14: #{transformer_forward.37} parent=11 // pred_check_branch
          %143 = sbr.rel (%p141) target = $region16
        $region15: #{transformer_forward.37} parent=11 // pred_region
          %s145 = ssub.s32 256, 256
          %146 = vsyncadd [#allocation6], %s145
          %s147 = sshll.u32 [#allocation5], 4
          %s148 = int_to_ptr.vmem [resolvable:$true] %s147
          %153 = dma.hbm_to_vmem [thread:$0]  %s1, 256, %s148, [#allocation6], 64, 64, 4
        $region16: #{transformer_forward.37} parent=11 // pred_fallthru
          _
        // Predicated region
        $region17: #{transformer_forward.37} parent=11 // pred_check
          %p154 = pneg %p98
        $region18: #{transformer_forward.37} parent=11 // pred_check_branch
          %156 = sbr.rel (%p154) target = $region20
        $region19: #{transformer_forward.37} parent=11 // pred_region
          %s158 = ssub.s32 16, 16
          %159 = vsyncadd [#allocation6], %s158
          %s161 = sshll.u32 [#allocation7], 4
          %s162 = int_to_ptr.vmem [resolvable:$true] %s161
          %164 = dma.hbm_to_vmem [thread:$0]  %s2, 16, %s162, [#allocation6]
        $region20: #{transformer_forward.37} parent=11 // pred_fallthru
          _
      $region12: #{transformer_forward.37} parent=5 // pred_fallthru
        _
      %p165 = scmp.lt.s32.totalorder %s16, 2
      // Predicated region
      $region21: #{transformer_forward.37} parent=5 // pred_check
        %p166 = pneg %p165
      $region22: #{transformer_forward.37} parent=5 // pred_check_branch
        %168 = sbr.rel (%p166) target = $region24
      $region23: #{transformer_forward.37} parent=5 // pred_region
        // Predicated region
        $region25: #{transformer_forward.37} parent=23 // pred_check
          %p169 = pneg %p50
        $region26: #{transformer_forward.37} parent=23 // pred_check_branch
          %171 = sbr.rel (%p169) target = $region28
        $region27: #{transformer_forward.37} parent=23 // pred_region
          %s172 = sand.u32 %s40, 1
          %s173 = scalar_lea.sflag [#allocation3], %s172
          %s174 = sand.u32 %s40, 1
          %s175 = smul.addr %s174, 16
          %s176 = scalar_lea.vmem [#allocation2], %s175
          %s177 = smul.u32 2, %s24
          %s179 = ssub.s32 256, 256
          %180 = vsyncadd %s173, %s179
          %s181 = smul.addr %s23, 2
          %s182 = sadd.s32 %s177, %s181
          %s183 = smul.addr %s182, 128
          %s184 = scalar_lea.hbm %s0, %s183
          %s185 = sshll.u32 %s176, 4
          %s186 = int_to_ptr.vmem [resolvable:$true] %s185
          %191 = dma.hbm_to_vmem [thread:$0]  %s184, 256, %s186, %s173, 128, 128, 8
        $region28: #{transformer_forward.37} parent=23 // pred_fallthru
          _
      $region24: #{transformer_forward.37} parent=5 // pred_fallthru
        _
      %p192 = scmp.le.s32.totalorder 1, %s16
      %p193 = scmp.lt.s32.totalorder %s16, 3
      %p194 = pnand %p192, %p193
      %p195 = pneg %p194
      // Predicated region
      $region29: #{transformer_forward.37} parent=5 // pred_check
        _
      $region30: #{transformer_forward.37} parent=5 // pred_check_branch
        %197 = sbr.rel (%p194) target = $region32
      $region31: #{transformer_forward.37} parent=5 // pred_region
        %s198 = ssub.s32 %s16, 1
        %s199 = sand.u32 %s43, 1
        %s200 = scalar_lea.sflag [#allocation3], %s199
        %s201 = sand.u32 %s43, 1
        %s202 = smul.addr %s201, 16
        %s203 = scalar_lea.vmem [#allocation2], %s202
        // Predicated region
        $region33: #{transformer_forward.37} parent=31 // pred_check
          %p204 = pneg %p56
        $region34: #{transformer_forward.37} parent=31 // pred_check_branch
          %206 = sbr.rel (%p204) target = $region36
        $region35: #{transformer_forward.37} parent=31 // pred_region
          %207 = dma.done %s200, 256
        $region36: #{transformer_forward.37} parent=31 // pred_fallthru
          _
        // Predicated region
        $region37: #{transformer_forward.37} parent=31 // pred_check
          %p208 = pneg %p77
        $region38: #{transformer_forward.37} parent=31 // pred_check_branch
          %210 = sbr.rel (%p208) target = $region40
        $region39: #{transformer_forward.37} parent=31 // pred_region
          %211 = dma.done [#allocation6], 256
        $region40: #{transformer_forward.37} parent=31 // pred_fallthru
          _
        // Predicated region
        $region41: #{transformer_forward.37} parent=31 // pred_check
          %p212 = pneg %p98
        $region42: #{transformer_forward.37} parent=31 // pred_check_branch
          %214 = sbr.rel (%p212) target = $region44
        $region43: #{transformer_forward.37} parent=31 // pred_region
          %215 = dma.done [#allocation6], 16
        $region44: #{transformer_forward.37} parent=31 // pred_fallthru
          _
        %s216 = sand.u32 %s43, 1
        %s217 = scalar_lea.sflag [#allocation3], %s216
        %s218 = sand.u32 %s43, 1
        %s219 = smul.addr %s218, 16
        %s220 = scalar_lea.vmem [#allocation2], %s219
        %p221 = pneg %p56
        %p222 = pneg %p53
        %p223 = pneg %p77
        %p224 = pneg %p74
        %p225 = pneg %p98
        %p226 = pneg %p95
        %p227 = pneg %p126
        %p228 = pneg %p123
        %s229 = sand.u32 %s113, 1
        %s230 = scalar_lea.sflag [#allocation4], %s229
        %s231 = sand.u32 %s113, 1
        %s232 = smul.addr %s231, 16
        %s233 = scalar_lea.vmem [#allocation8], %s232
        %s234 = smul.u32 2, %s26
        %s235 = smul.u32 2, %s26
        %v237 = vld [vmem:[%s203] sm:$0xff]
        %v238 = vld [vmem:[%s203 + $0x8] sm:$0xff]
        %v239 = vpack.c.bf16 %v238, %v237
        %v240 = vld [vmem:[#allocation5] sm:$0xf]
        %v241 = vld [vmem:[#allocation5 + $0x4] sm:$0xf]
        %v242 = vld [vmem:[#allocation5 + $0x8] sm:$0xf]
        %v243 = vld [vmem:[#allocation5 + $0xc] sm:$0xf]
        %v244 = vld [vmem:[#allocation7] sm:$0x1]
        %v246 = vlaneseq
        %v247 = vshrl.u32 %v246, 7
        %v248 = vsub.s32 0, %v247
        %v249 = vrot.slane %v244, %v248
        %v255 = vunpack.c.l.b16 %v240
        %v256 = vunpack.c.l.b16 %v241
        %v257 = vunpack.c.l.b16 %v242
        %v258 = vunpack.c.l.b16 %v243
        %v259 = vpack.c.b16 %v256, %v255
        %v260 = vpack.c.b16 %v258, %v257
        %vm263 = vcmask 261120
        %v265 = vsel %vm263, %v239, 0
        %267 = vmatprep.subr.bf16.mxu0 0
        %268 = vmatpush1.bf16.msra.mxu0 %v259
        %269 = vmatprep.subr.bf16.mxu0 0
        %270 = vmatpush1.bf16.msra.mxu0 %v260
        %271 = vmatprep.subr.bf16.mxu0 0
        %272 = vmatpush1.bf16.msra.mxu0 0
        %273 = vmatprep.subr.bf16.mxu0 0
        %274 = vmatpush1.bf16.msra.mxu0 0
        %275 = vmatprep.subr.bf16.mxu0 0
        %276 = vmatpush1.bf16.msra.mxu0 0
        %277 = vmatprep.subr.bf16.mxu0 0
        %278 = vmatpush1.bf16.msra.mxu0 0
        %279 = vmatprep.subr.bf16.mxu0 0
        %280 = vmatpush1.bf16.msra.mxu0 0
        %281 = vmatprep.subr.bf16.mxu0 0
        %282 = vmatpush1.bf16.msra.mxu0 0
        %283 = vmatprep.subr.bf16.mxu0 0
        %284 = vmatpush1.bf16.msra.mxu0 0
        %285 = vmatprep.subr.bf16.mxu0 0
        %286 = vmatpush1.bf16.msra.mxu0 0
        %287 = vmatprep.subr.bf16.mxu0 0
        %288 = vmatpush1.bf16.msra.mxu0 0
        %289 = vmatprep.subr.bf16.mxu0 0
        %290 = vmatpush1.bf16.msra.mxu0 0
        %291 = vmatprep.subr.bf16.mxu0 0
        %292 = vmatpush1.bf16.msra.mxu0 0
        %293 = vmatprep.subr.bf16.mxu0 0
        %294 = vmatpush1.bf16.msra.mxu0 0
        %295 = vmatprep.subr.bf16.mxu0 0
        %296 = vmatpush1.bf16.msra.mxu0 0
        %297 = vmatprep.subr.bf16.mxu0 0
        %298 = vmatpush1.bf16.msra.mxu0 0
        %299 = vmatprep.mubr.bf16.mxu0 0
        %300 = vmatmul.mubr.bf16.gmra.mrb[0].mxu0 %v265
        %v301 = vpop.f32.mrb[0].mxu0
        %v302 = vadd.f32 %v249, %v301
        %v303 = vpop.f32.mrb[0].mxu0
        %v304 = vpop.f32.mrb[0].mxu0
        %v305 = vadd.f32 %v249, %v304
        %v306 = vpop.f32.mrb[0].mxu0
        %307 = vdwg.mxu0
        %vm308 = vcmask 64512
        %309 = vst.msk [vmem:[%s233] sm:$0xff] %vm308, %v302
        %310 = vst.msk [vmem:[%s233 + $0x8] sm:$0xff] %vm308, %v305
        %s311 = sand.u32 %s113, 1
        %s312 = scalar_lea.sflag [#allocation4], %s311
        %s313 = sand.u32 %s113, 1
        %s314 = smul.addr %s313, 16
        %s315 = scalar_lea.vmem [#allocation8], %s314
        // Predicated region
        $region45: #{transformer_forward.37} parent=31 // pred_check
          %p316 = pneg %p123
        $region46: #{transformer_forward.37} parent=31 // pred_check_branch
          %318 = sbr.rel (%p316) target = $region48
        $region47: #{transformer_forward.37} parent=31 // pred_region
          %s319 = smul.u32 2, %s26
          %s321 = ssub.s32 256, 256
          %322 = vsyncadd %s312, %s321
          %s323 = smul.addr %s25, 2
          %s324 = sadd.s32 %s319, %s323
          %s325 = smul.addr %s324, 128
          %s326 = scalar_lea.hbm %s3, %s325
          %s327 = sshll.u32 %s315, 4
          %s328 = int_to_ptr.vmem [resolvable:$true] %s327
          %333 = dma.vmem_to_hbm [thread:$0]  %s328, 256, %s326, %s312, 128, 128, 8
        $region48: #{transformer_forward.37} parent=31 // pred_fallthru
          _
      $region32: #{transformer_forward.37} parent=5 // pred_fallthru
        _
      %p334 = scmp.le.s32.totalorder 2, %s16
      // Predicated region
      $region49: #{transformer_forward.37} parent=5 // pred_check
        %p335 = pneg %p334
      $region50: #{transformer_forward.37} parent=5 // pred_check_branch
        %337 = sbr.rel (%p335) target = $region52
      $region51: #{transformer_forward.37} parent=5 // pred_region
        %s338 = ssub.s32 %s16, 2
        // Predicated region
        $region53: #{transformer_forward.37} parent=51 // pred_check
          %p339 = pneg %p129
        $region54: #{transformer_forward.37} parent=51 // pred_check_branch
          %341 = sbr.rel (%p339) target = $region56
        $region55: #{transformer_forward.37} parent=51 // pred_region
          %s342 = sand.u32 %s114, 1
          %s343 = scalar_lea.sflag [#allocation4], %s342
          %s344 = sand.u32 %s114, 1
          %s345 = smul.addr %s344, 16
          %s346 = scalar_lea.vmem [#allocation8], %s345
          %347 = dma.done %s343, 256
        $region56: #{transformer_forward.37} parent=51 // pred_fallthru
          _
      $region52: #{transformer_forward.37} parent=5 // pred_fallthru
        _
    $region6: #{transformer_forward.37} parent=1 // loop_footer
      %s20 = sadd.s32 1, %s16
    $region7: #{transformer_forward.37} parent=1 // loop_footer_branch
      %15 = sbr.rel target = $region3
    $region8: #{transformer_forward.37} parent=1 // loop_exit
      _
    %348 = vsyncpa [#allocation3], 1
    %s349 = scalar_lea.sflag [#allocation3], 1
    %350 = vsyncpa %s349, 1
    %351 = vsyncpa [#allocation6], 1
    %352 = vsyncpa [#allocation4], 1
    %s353 = scalar_lea.sflag [#allocation4], 1
    %354 = vsyncpa %s353, 1

// kernel: transformer_forward.27
$region0: #{transformer_forward.27}
  #allocation0 [shape = 'u32[]', space=smem, size = 0x4, offset = 0x4, fixed_abs, tag = 'smem constant byte address 0x4 - core index']
  #allocation1 [shape = 'u32[144,128]{1,0:T(1,128)}', space=vmem, size = 0x12000, scoped, tag = 'internal scratch']
  %s0 = inlined_call_operand.hbm [shape: f32[2,16,32], index: 0, kind: input, shape index: {}]
  %s1 = inlined_call_operand.hbm [shape: bf16[32,96], index: 1, kind: input, shape index: {}]
  %s2 = inlined_call_operand.hbm [shape: f32[1,96], index: 2, kind: input, shape index: {}]
  %s3 = inlined_call_operand.hbm [shape: f32[2,16,1], index: 3, kind: input, shape index: {}]
  %s4 = inlined_call_operand.hbm [shape: f32[2,1,16], index: 4, kind: input, shape index: {}]
  %s5 = inlined_call_operand.hbm [shape: bf16[2,4,16,8], index: 5, kind: output, shape index: {}]
  %s6 = sld [smem:[#allocation0]]
  $region73: #{transformer_forward.27} parent=0
    _
  %s8 = ssub.s32 1, %s6
  %s9 = scalar_select 0, %s8, %s6
  $region1: #{transformer_forward.27} parent=0
    #allocation2 [shape = 'u8[16384]{0}', space=vmem, size = 0x4000, scoped, tag = 'input window, operand 0']
    #allocation3 [shape = 's32[2]{0}', space=sflag, size = 0x8, scoped, tag = 'scoped memory for transformer_forward.27']
    #allocation4 [shape = 's32[2]{0}', space=sflag, size = 0x8, scoped, tag = 'scoped memory for transformer_forward.27']
    #allocation5 [shape = 'u8[8192]{0}', space=vmem, size = 0x2000, scoped, tag = 'input window, operand 1, single buffered']
    #allocation6 [shape = 's32[1]{0}', space=sflag, size = 0x4, scoped, tag = 'scoped memory for transformer_forward.27']
    #allocation7 [shape = 'u8[512]{0}', space=vmem, size = 0x400, scoped, tag = 'input window, operand 2, single buffered']
    #allocation8 [shape = 'u8[16384]{0}', space=vmem, size = 0x4000, scoped, tag = 'input window, operand 3']
    #allocation9 [shape = 's32[2]{0}', space=sflag, size = 0x8, scoped, tag = 'scoped memory for transformer_forward.27']
    #allocation10 [shape = 'u8[1024]{0}', space=vmem, size = 0x400, scoped, tag = 'input window, operand 4']
    #allocation11 [shape = 'u8[32768]{0}', space=vmem, size = 0x8000, scoped, tag = 'output window, operand 0']
    %10 = vsyncpa [#allocation3], 0
    %s11 = scalar_lea.sflag [#allocation3], 1
    %12 = vsyncpa %s11, 0
    %13 = vsyncpa [#allocation6], 0
    %14 = vsyncpa [#allocation9], 0
    %s15 = scalar_lea.sflag [#allocation9], 1
    %16 = vsyncpa %s15, 0
    %17 = vsyncpa [#allocation4], 0
    %s18 = scalar_lea.sflag [#allocation4], 1
    %19 = vsyncpa %s18, 0
    loop: start=0, step=1, limit=4
    $region2: #{transformer_forward.27} parent=1 // loop_pre_header
      _
    $region3: #{transformer_forward.27} parent=1 // loop_header
      %s21 = sphi 0, %s25
      %p22 = scmp.ge.s32.totalorder %s21, 4
      %s31 = sphi 0, %s33
      %s34 = sphi 0, %s31
      %s35 = sphi 0, %s34
      %s51 = sphi 0, %s35
      %s55 = sphi 0, %s55
      %s57 = sphi 0, %s55
      %s58 = sphi 0, %s57
      %s72 = sphi 0, %s58
      %s76 = sphi 0, %s76
      %s78 = sphi 0, %s76
      %s79 = sphi 0, %s78
      %s93 = sphi 0, %s79
      %s99 = sphi 0, %s101
      %s102 = sphi 0, %s99
      %s103 = sphi 0, %s102
      %s119 = sphi 0, %s103
      %s125 = sphi 0, %s127
      %s128 = sphi 0, %s125
      %s129 = sphi 0, %s128
      %s145 = sphi 0, %s129
      %s151 = sphi 0, %s153
      %s154 = sphi 0, %s151
      %s155 = sphi 0, %s154
      %s171 = sphi 0, %s155
    $region4: #{transformer_forward.27} parent=1 // loop_header_branch
      %24 = sbr.rel (%p22) target = $region8
    $region5: #{transformer_forward.27} parent=1 // loop_body
      %s26 = ssub.s32 %s21, 1
      %s27 = ssub.s32 %s21, 2
      %s28 = sadd.s32 %s21, 1
      %s29 = ssub.s32 %s21, %s28
      %p30 = scmp.eq.s32.totalorder %s29, 0
      %s32 = sadd.s32 %s31, 1
      %s33 = scalar_select %p30, %s31, %s32
      %p36 = pneg %p30
      %p37 = scmp.eq.s32.totalorder %s21, 1
      %p38 = por %p36, %p37
      %p39 = scmp.ne.s32.totalorder %s31, %s34
      %p40 = scmp.eq.s32.totalorder %s21, 0
      %p41 = por %p39, %p40
      %p42 = scmp.ne.s32.totalorder %s31, %s34
      %p43 = scmp.eq.s32.totalorder %s26, 1
      %p44 = por %p42, %p43
      %p45 = scmp.ne.s32.totalorder %s34, %s35
      %p46 = scmp.eq.s32.totalorder %s26, 0
      %p47 = por %p45, %p46
      %p48 = scmp.ne.s32.totalorder %s34, %s35
      %p49 = scmp.eq.s32.totalorder %s27, 1
      %p50 = por %p48, %p49
      %p52 = scmp.ne.s32.totalorder %s35, %s51
      %p53 = scmp.eq.s32.totalorder %s27, 0
      %p54 = por %p52, %p53
      %s56 = sadd.s32 %s55, 1
      %p59 = scmp.eq.s32.totalorder %s21, 1
      %p60 = scmp.ne.s32.totalorder %s55, %s57
      %p61 = scmp.eq.s32.totalorder %s21, 0
      %p62 = por %p60, %p61
      %p63 = scmp.ne.s32.totalorder %s55, %s57
      %p64 = scmp.eq.s32.totalorder %s26, 1
      %p65 = por %p63, %p64
      %p66 = scmp.ne.s32.totalorder %s57, %s58
      %p67 = scmp.eq.s32.totalorder %s26, 0
      %p68 = por %p66, %p67
      %p69 = scmp.ne.s32.totalorder %s57, %s58
      %p70 = scmp.eq.s32.totalorder %s27, 1
      %p71 = por %p69, %p70
      %p73 = scmp.ne.s32.totalorder %s58, %s72
      %p74 = scmp.eq.s32.totalorder %s27, 0
      %p75 = por %p73, %p74
      %s77 = sadd.s32 %s76, 1
      %p80 = scmp.eq.s32.totalorder %s21, 1
      %p81 = scmp.ne.s32.totalorder %s76, %s78
      %p82 = scmp.eq.s32.totalorder %s21, 0
      %p83 = por %p81, %p82
      %p84 = scmp.ne.s32.totalorder %s76, %s78
      %p85 = scmp.eq.s32.totalorder %s26, 1
      %p86 = por %p84, %p85
      %p87 = scmp.ne.s32.totalorder %s78, %s79
      %p88 = scmp.eq.s32.totalorder %s26, 0
      %p89 = por %p87, %p88
      %p90 = scmp.ne.s32.totalorder %s78, %s79
      %p91 = scmp.eq.s32.totalorder %s27, 1
      %p92 = por %p90, %p91
      %p94 = scmp.ne.s32.totalorder %s79, %s93
      %p95 = scmp.eq.s32.totalorder %s27, 0
      %p96 = por %p94, %p95
      %s97 = ssub.s32 %s21, %s28
      %p98 = scmp.eq.s32.totalorder %s97, 0
      %s100 = sadd.s32 %s99, 1
      %s101 = scalar_select %p98, %s99, %s100
      %p104 = pneg %p98
      %p105 = scmp.eq.s32.totalorder %s21, 1
      %p106 = por %p104, %p105
      %p107 = scmp.ne.s32.totalorder %s99, %s102
      %p108 = scmp.eq.s32.totalorder %s21, 0
      %p109 = por %p107, %p108
      %p110 = scmp.ne.s32.totalorder %s99, %s102
      %p111 = scmp.eq.s32.totalorder %s26, 1
      %p112 = por %p110, %p111
      %p113 = scmp.ne.s32.totalorder %s102, %s103
      %p114 = scmp.eq.s32.totalorder %s26, 0
      %p115 = por %p113, %p114
      %p116 = scmp.ne.s32.totalorder %s102, %s103
      %p117 = scmp.eq.s32.totalorder %s27, 1
      %p118 = por %p116, %p117
      %p120 = scmp.ne.s32.totalorder %s103, %s119
      %p121 = scmp.eq.s32.totalorder %s27, 0
      %p122 = por %p120, %p121
      %s123 = ssub.s32 %s21, %s28
      %p124 = scmp.eq.s32.totalorder %s123, 0
      %s126 = sadd.s32 %s125, 1
      %s127 = scalar_select %p124, %s125, %s126
      %p130 = pneg %p124
      %p131 = scmp.eq.s32.totalorder %s21, 1
      %p132 = por %p130, %p131
      %p133 = scmp.ne.s32.totalorder %s125, %s128
      %p134 = scmp.eq.s32.totalorder %s21, 0
      %p135 = por %p133, %p134
      %p136 = scmp.ne.s32.totalorder %s125, %s128
      %p137 = scmp.eq.s32.totalorder %s26, 1
      %p138 = por %p136, %p137
      %p139 = scmp.ne.s32.totalorder %s128, %s129
      %p140 = scmp.eq.s32.totalorder %s26, 0
      %p141 = por %p139, %p140
      %p142 = scmp.ne.s32.totalorder %s128, %s129
      %p143 = scmp.eq.s32.totalorder %s27, 1
      %p144 = por %p142, %p143
      %p146 = scmp.ne.s32.totalorder %s129, %s145
      %p147 = scmp.eq.s32.totalorder %s27, 0
      %p148 = por %p146, %p147
      %s149 = ssub.s32 %s21, %s28
      %p150 = scmp.eq.s32.totalorder %s149, 0
      %s152 = sadd.s32 %s151, 1
      %s153 = scalar_select %p150, %s151, %s152
      %p156 = pneg %p150
      %p157 = scmp.eq.s32.totalorder %s21, 1
      %p158 = por %p156, %p157
      %p159 = scmp.ne.s32.totalorder %s151, %s154
      %p160 = scmp.eq.s32.totalorder %s21, 0
      %p161 = por %p159, %p160
      %p162 = scmp.ne.s32.totalorder %s151, %s154
      %p163 = scmp.eq.s32.totalorder %s26, 1
      %p164 = por %p162, %p163
      %p165 = scmp.ne.s32.totalorder %s154, %s155
      %p166 = scmp.eq.s32.totalorder %s26, 0
      %p167 = por %p165, %p166
      %p168 = scmp.ne.s32.totalorder %s154, %s155
      %p169 = scmp.eq.s32.totalorder %s27, 1
      %p170 = por %p168, %p169
      %p172 = scmp.ne.s32.totalorder %s155, %s171
      %p173 = scmp.eq.s32.totalorder %s27, 0
      %p174 = por %p172, %p173
      %p175 = scmp.le.s32.totalorder 1, %s21
      %p176 = scmp.lt.s32.totalorder %s21, 3
      %p177 = pnand %p175, %p176
      %p178 = pneg %p177
      // Predicated region
      $region9: #{transformer_forward.27} parent=5 // pred_check
        _
      $region10: #{transformer_forward.27} parent=5 // pred_check_branch
        %180 = sbr.rel (%p177) target = $region12
      $region11: #{transformer_forward.27} parent=5 // pred_region
        %s181 = ssub.s32 %s21, 1
        // Predicated region
        $region13: #{transformer_forward.27} parent=11 // pred_check
          %p182 = pneg %p68
        $region14: #{transformer_forward.27} parent=11 // pred_check_branch
          %184 = sbr.rel (%p182) target = $region16
        $region15: #{transformer_forward.27} parent=11 // pred_region
          %s186 = ssub.s32 256, 256
          %187 = vsyncadd [#allocation6], %s186
          %s188 = sshll.u32 [#allocation5], 4
          %s189 = int_to_ptr.vmem [resolvable:$true] %s188
          %194 = dma.hbm_to_vmem [thread:$0]  %s1, 256, %s189, [#allocation6], 64, 64, 4
        $region16: #{transformer_forward.27} parent=11 // pred_fallthru
          _
        // Predicated region
        $region17: #{transformer_forward.27} parent=11 // pred_check
          %p195 = pneg %p89
        $region18: #{transformer_forward.27} parent=11 // pred_check_branch
          %197 = sbr.rel (%p195) target = $region20
        $region19: #{transformer_forward.27} parent=11 // pred_region
          %s199 = ssub.s32 16, 16
          %200 = vsyncadd [#allocation6], %s199
          %s202 = sshll.u32 [#allocation7], 4
          %s203 = int_to_ptr.vmem [resolvable:$true] %s202
          %205 = dma.hbm_to_vmem [thread:$0]  %s2, 16, %s203, [#allocation6]
        $region20: #{transformer_forward.27} parent=11 // pred_fallthru
          _
      $region12: #{transformer_forward.27} parent=5 // pred_fallthru
        _
      %p206 = scmp.lt.s32.totalorder %s21, 2
      // Predicated region
      $region21: #{transformer_forward.27} parent=5 // pred_check
        %p207 = pneg %p206
      $region22: #{transformer_forward.27} parent=5 // pred_check_branch
        %209 = sbr.rel (%p207) target = $region24
      $region23: #{transformer_forward.27} parent=5 // pred_region
        // Predicated region
        $region25: #{transformer_forward.27} parent=23 // pred_check
          %p210 = pneg %p41
        $region26: #{transformer_forward.27} parent=23 // pred_check_branch
          %212 = sbr.rel (%p210) target = $region28
        $region27: #{transformer_forward.27} parent=23 // pred_region
          %s213 = sand.u32 %s31, 1
          %s214 = scalar_lea.sflag [#allocation3], %s213
          %s215 = sand.u32 %s31, 1
          %s216 = smul.addr %s215, 16
          %s217 = scalar_lea.vmem [#allocation2], %s216
          %s219 = ssub.s32 256, 256
          %220 = vsyncadd %s214, %s219
          %s221 = smul.addr %s21, 2
          %s222 = smul.addr %s221, 128
          %s223 = scalar_lea.hbm %s0, %s222
          %s224 = sshll.u32 %s217, 4
          %s225 = int_to_ptr.vmem [resolvable:$true] %s224
          %230 = dma.hbm_to_vmem [thread:$0]  %s223, 256, %s225, %s214, 128, 128, 8
        $region28: #{transformer_forward.27} parent=23 // pred_fallthru
          _
        // Predicated region
        $region29: #{transformer_forward.27} parent=23 // pred_check
          %p231 = pneg %p109
        $region30: #{transformer_forward.27} parent=23 // pred_check_branch
          %233 = sbr.rel (%p231) target = $region32
        $region31: #{transformer_forward.27} parent=23 // pred_region
          %s234 = sand.u32 %s21, 1
          %s235 = scalar_lea.sflag [#allocation9], %s234
          %s236 = sand.u32 %s99, 1
          %s237 = smul.addr %s236, 16
          %s238 = scalar_lea.vmem [#allocation8], %s237
          %s240 = ssub.s32 256, 256
          %241 = vsyncadd %s235, %s240
          %s242 = smul.addr %s21, 2
          %s243 = smul.addr %s242, 128
          %s244 = scalar_lea.hbm %s3, %s243
          %s245 = sshll.u32 %s238, 4
          %s246 = int_to_ptr.vmem [resolvable:$true] %s245
          %251 = dma.hbm_to_vmem [thread:$0]  %s244, 256, %s246, %s235, 128, 128, 8
        $region32: #{transformer_forward.27} parent=23 // pred_fallthru
          _
        // Predicated region
        $region33: #{transformer_forward.27} parent=23 // pred_check
          %p252 = pneg %p135
        $region34: #{transformer_forward.27} parent=23 // pred_check_branch
          %254 = sbr.rel (%p252) target = $region36
        $region35: #{transformer_forward.27} parent=23 // pred_region
          %s255 = sand.u32 %s21, 1
          %s256 = scalar_lea.sflag [#allocation9], %s255
          %s257 = sand.u32 %s125, 1
          %s258 = scalar_lea.vmem [#allocation10], %s257
          %s260 = ssub.s32 16, 16
          %261 = vsyncadd %s256, %s260
          %s262 = smul.addr %s21, 16
          %s263 = scalar_lea.hbm %s4, %s262
          %s265 = sshll.u32 %s258, 4
          %s266 = int_to_ptr.vmem [resolvable:$true] %s265
          %268 = dma.hbm_to_vmem [thread:$0]  %s263, 16, %s266, %s256
        $region36: #{transformer_forward.27} parent=23 // pred_fallthru
          _
      $region24: #{transformer_forward.27} parent=5 // pred_fallthru
        _
      %p269 = scmp.le.s32.totalorder 1, %s21
      %p270 = scmp.lt.s32.totalorder %s21, 3
      %p271 = pnand %p269, %p270
      %p272 = pneg %p271
      // Predicated region
      $region37: #{transformer_forward.27} parent=5 // pred_check
        _
      $region38: #{transformer_forward.27} parent=5 // pred_check_branch
        %274 = sbr.rel (%p271) target = $region40
      $region39: #{transformer_forward.27} parent=5 // pred_region
        %s275 = ssub.s32 %s21, 1
        %s276 = sand.u32 %s34, 1
        %s277 = scalar_lea.sflag [#allocation3], %s276
        %s278 = sand.u32 %s34, 1
        %s279 = smul.addr %s278, 16
        %s280 = scalar_lea.vmem [#allocation2], %s279
        // Predicated region
        $region41: #{transformer_forward.27} parent=39 // pred_check
          %p281 = pneg %p47
        $region42: #{transformer_forward.27} parent=39 // pred_check_branch
          %283 = sbr.rel (%p281) target = $region44
        $region43: #{transformer_forward.27} parent=39 // pred_region
          %284 = dma.done %s277, 256
        $region44: #{transformer_forward.27} parent=39 // pred_fallthru
          _
        // Predicated region
        $region45: #{transformer_forward.27} parent=39 // pred_check
          %p285 = pneg %p68
        $region46: #{transformer_forward.27} parent=39 // pred_check_branch
          %287 = sbr.rel (%p285) target = $region48
        $region47: #{transformer_forward.27} parent=39 // pred_region
          %288 = dma.done [#allocation6], 256
        $region48: #{transformer_forward.27} parent=39 // pred_fallthru
          _
        // Predicated region
        $region49: #{transformer_forward.27} parent=39 // pred_check
          %p289 = pneg %p89
        $region50: #{transformer_forward.27} parent=39 // pred_check_branch
          %291 = sbr.rel (%p289) target = $region52
        $region51: #{transformer_forward.27} parent=39 // pred_region
          %292 = dma.done [#allocation6], 16
        $region52: #{transformer_forward.27} parent=39 // pred_fallthru
          _
        %s293 = sand.u32 %s26, 1
        %s294 = scalar_lea.sflag [#allocation9], %s293
        %s295 = sand.u32 %s102, 1
        %s296 = smul.addr %s295, 16
        %s297 = scalar_lea.vmem [#allocation8], %s296
        // Predicated region
        $region53: #{transformer_forward.27} parent=39 // pred_check
          %p298 = pneg %p115
        $region54: #{transformer_forward.27} parent=39 // pred_check_branch
          %300 = sbr.rel (%p298) target = $region56
        $region55: #{transformer_forward.27} parent=39 // pred_region
          %301 = dma.done %s294, 256
        $region56: #{transformer_forward.27} parent=39 // pred_fallthru
          _
        %s302 = sand.u32 %s26, 1
        %s303 = scalar_lea.sflag [#allocation9], %s302
        %s304 = sand.u32 %s128, 1
        %s305 = scalar_lea.vmem [#allocation10], %s304
        // Predicated region
        $region57: #{transformer_forward.27} parent=39 // pred_check
          %p306 = pneg %p141
        $region58: #{transformer_forward.27} parent=39 // pred_check_branch
          %308 = sbr.rel (%p306) target = $region60
        $region59: #{transformer_forward.27} parent=39 // pred_region
          %309 = dma.done %s303, 16
        $region60: #{transformer_forward.27} parent=39 // pred_fallthru
          _
        %s310 = sand.u32 %s34, 1
        %s311 = scalar_lea.sflag [#allocation3], %s310
        %s312 = sand.u32 %s34, 1
        %s313 = smul.addr %s312, 16
        %s314 = scalar_lea.vmem [#allocation2], %s313
        %p315 = pneg %p47
        %p316 = pneg %p44
        %p317 = pneg %p68
        %p318 = pneg %p65
        %p319 = pneg %p89
        %p320 = pneg %p86
        %s321 = sand.u32 %s26, 1
        %s322 = scalar_lea.sflag [#allocation9], %s321
        %s323 = sand.u32 %s102, 1
        %s324 = smul.addr %s323, 16
        %s325 = scalar_lea.vmem [#allocation8], %s324
        %p326 = pneg %p115
        %p327 = pneg %p112
        %s328 = sand.u32 %s26, 1
        %s329 = scalar_lea.sflag [#allocation9], %s328
        %s330 = sand.u32 %s128, 1
        %s331 = scalar_lea.vmem [#allocation10], %s330
        %p332 = pneg %p141
        %p333 = pneg %p138
        %p334 = pneg %p167
        %p335 = pneg %p164
        %s336 = sand.u32 %s154, 1
        %s337 = scalar_lea.sflag [#allocation4], %s336
        %s338 = sand.u32 %s154, 1
        %s339 = smul.addr %s338, 32
        %s340 = scalar_lea.vmem [#allocation11], %s339
        %v342 = vld [vmem:[%s280] sm:$0xff]
        %v343 = vld [vmem:[%s280 + $0x8] sm:$0xff]
        %v344 = vpack.c.bf16 %v343, %v342
        %v345 = vld [vmem:[#allocation5] sm:$0xf]
        %v346 = vld [vmem:[#allocation5 + $0x4] sm:$0xf]
        %v347 = vld [vmem:[#allocation5 + $0x8] sm:$0xf]
        %v348 = vld [vmem:[#allocation5 + $0xc] sm:$0xf]
        %v349 = vld [vmem:[#allocation7] sm:$0x1]
        %v351 = vlaneseq
        %v352 = vshrl.u32 %v351, 7
        %v353 = vsub.s32 0, %v352
        %v354 = vrot.slane %v349, %v353
        %v360 = vunpack.c.l.b16 %v345
        %v361 = vunpack.c.l.b16 %v346
        %v362 = vunpack.c.l.b16 %v347
        %v363 = vunpack.c.l.b16 %v348
        %v364 = vpack.c.b16 %v361, %v360
        %v365 = vpack.c.b16 %v363, %v362
        %vm368 = vcmask 261120
        %v370 = vsel %vm368, %v344, 0
        %372 = vmatprep.subr.bf16.mxu0 0
        %373 = vmatpush1.bf16.msra.mxu0 %v364
        %374 = vmatprep.subr.bf16.mxu0 0
        %375 = vmatpush1.bf16.msra.mxu0 %v365
        %376 = vmatprep.subr.bf16.mxu0 0
        %377 = vmatpush1.bf16.msra.mxu0 0
        %378 = vmatprep.subr.bf16.mxu0 0
        %379 = vmatpush1.bf16.msra.mxu0 0
        %380 = vmatprep.subr.bf16.mxu0 0
        %381 = vmatpush1.bf16.msra.mxu0 0
        %382 = vmatprep.subr.bf16.mxu0 0
        %383 = vmatpush1.bf16.msra.mxu0 0
        %384 = vmatprep.subr.bf16.mxu0 0
        %385 = vmatpush1.bf16.msra.mxu0 0
        %386 = vmatprep.subr.bf16.mxu0 0
        %387 = vmatpush1.bf16.msra.mxu0 0
        %388 = vmatprep.subr.bf16.mxu0 0
        %389 = vmatpush1.bf16.msra.mxu0 0
        %390 = vmatprep.subr.bf16.mxu0 0
        %391 = vmatpush1.bf16.msra.mxu0 0
        %392 = vmatprep.subr.bf16.mxu0 0
        %393 = vmatpush1.bf16.msra.mxu0 0
        %394 = vmatprep.subr.bf16.mxu0 0
        %395 = vmatpush1.bf16.msra.mxu0 0
        %396 = vmatprep.subr.bf16.mxu0 0
        %397 = vmatpush1.bf16.msra.mxu0 0
        %398 = vmatprep.subr.bf16.mxu0 0
        %399 = vmatpush1.bf16.msra.mxu0 0
        %400 = vmatprep.subr.bf16.mxu0 0
        %401 = vmatpush1.bf16.msra.mxu0 0
        %402 = vmatprep.subr.bf16.mxu0 0
        %403 = vmatpush1.bf16.msra.mxu0 0
        %404 = vmatprep.mubr.bf16.mxu0 0
        %405 = vmatmul.mubr.bf16.gmra.mrb[0].mxu0 %v370
        %v406 = vpop.f32.mrb[0].mxu0
        %v407 = vadd.f32 %v354, %v406
        %v408 = vpop.f32.mrb[0].mxu0
        %v409 = vpop.f32.mrb[0].mxu0
        %v410 = vadd.f32 %v354, %v409
        %v411 = vpop.f32.mrb[0].mxu0
        %412 = vdwg.mxu0
        %v413 = vld [vmem:[%s297] sm:$0xff]
        %v414 = vld [vmem:[%s297 + $0x8] sm:$0xff]
        %v415 = vld [vmem:[%s305] sm:$0x1]
        %417 = vset.pattern.permute.xlu0 0
        %418 = vperm.xlu0 %417, %v413
        %v419 = vpop.permute.xlu0 %418
        %422 = vset.pattern.permute.xlu0 0
        %423 = vperm.xlu0 %422, %v414
        %v424 = vpop.permute.xlu0 %423
        %v427 = vlaneseq
        %v428 = vshrl.u32 %v427, 7
        %v429 = vsub.s32 0, %v428
        %v430 = vrot.slane %v415, %v429
        %v432 = vmul.f32 %v419, %v430
        %v433 = vmul.f32 %v424, %v430
        %vm434 = vcmp.ne.f32.partialorder %v432, 0.0
        %vm435 = vcmp.ne.f32.partialorder %v433, 0.0
        %v436 = vlaneseq
        %v437 = vshrl.u32 %v436, 7
        %v438 = vadd.s32 %v437, 8
        %v439 = vlaneseq
        %v440 = vand.u32 %v439, 127
        %vm441 = vcmp.le.s32.totalorder %v440, %v437
        %vm442 = vcmp.le.s32.totalorder %v440, %v438
        %vm443 = vmand %vm434, %vm441
        %vm444 = vmand %vm435, %vm442
        %v445 = vpack.c.bf16 %v410, %v407
        %447 = vrot.lane.b32.xlu0 %v445, 96
        %v448 = vpop.permute.xlu0 %447
        %vm449 = vcmask 64512
        %v451 = vsel %vm449, %v445, 0
        %v454 = vsel %vm449, %v448, 0
        %456 = vmatprep.subr.bf16.mxu0 0
        %457 = vmatpush1.bf16.xpose.msra.mxu0 %v454
        %458 = vmatprep.subr.bf16.mxu0 0
        %459 = vmatpush1.bf16.xpose.msra.mxu0 0
        %460 = vmatprep.subr.bf16.mxu0 0
        %461 = vmatpush1.bf16.xpose.msra.mxu0 0
        %462 = vmatprep.subr.bf16.mxu0 0
        %463 = vmatpush1.bf16.xpose.msra.mxu0 0
        %464 = vmatprep.subr.bf16.mxu0 0
        %465 = vmatpush1.bf16.xpose.msra.mxu0 0
        %466 = vmatprep.subr.bf16.mxu0 0
        %467 = vmatpush1.bf16.xpose.msra.mxu0 0
        %468 = vmatprep.subr.bf16.mxu0 0
        %469 = vmatpush1.bf16.xpose.msra.mxu0 0
        %470 = vmatprep.subr.bf16.mxu0 0
        %471 = vmatpush1.bf16.xpose.msra.mxu0 0
        %472 = vmatprep.subr.bf16.mxu0 0
        %473 = vmatpush1.bf16.xpose.msra.mxu0 0
        %474 = vmatprep.subr.bf16.mxu0 0
        %475 = vmatpush1.bf16.xpose.msra.mxu0 0
        %476 = vmatprep.subr.bf16.mxu0 0
        %477 = vmatpush1.bf16.xpose.msra.mxu0 0
        %478 = vmatprep.subr.bf16.mxu0 0
        %479 = vmatpush1.bf16.xpose.msra.mxu0 0
        %480 = vmatprep.subr.bf16.mxu0 0
        %481 = vmatpush1.bf16.xpose.msra.mxu0 0
        %482 = vmatprep.subr.bf16.mxu0 0
        %483 = vmatpush1.bf16.xpose.msra.mxu0 0
        %484 = vmatprep.subr.bf16.mxu0 0
        %485 = vmatpush1.bf16.xpose.msra.mxu0 0
        %486 = vmatprep.subr.bf16.mxu0 0
        %487 = vmatpush1.bf16.xpose.msra.mxu0 0
        %488 = vmatprep.mubr.bf16.mxu0 0
        %489 = vmatmul.mubr.bf16.gmra.mrb[0].mxu0 %v451
        %v490 = vpop.f32.mrb[0].mxu0
        %v491 = vadd.f32 0.0, %v490
        %v492 = vpop.f32.mrb[0].mxu0
        %v493 = vpop.f32.mrb[0].mxu0
        %v494 = vadd.f32 0.0, %v493
        %v495 = vpop.f32.mrb[0].mxu0
        %496 = vdwg.mxu0
        %v497 = vmul.f32 %v491, 0.35355338
        %v498 = vmul.f32 %v494, 0.35355338
        %v499 = vsel %vm443, %v497, -1e+09
        %v500 = vsel %vm444, %v498, -1e+09
        %vm501 = vcmask 130048
        %v502 = vsel %vm501, %v499, -inf
        %503 = vmax.xlane.f32.xlu0 %v502
        %v504 = vpop.xlane.xlu0 %503
        %v505 = vsel %vm501, %v500, -inf
        %506 = vmax.xlane.f32.xlu0 %v505
        %v507 = vpop.xlane.xlu0 %506
        %v508 = vsub.f32 %v499, %v504
        %v509 = vsub.f32 %v500, %v507
        %v510 = vmul.f32 %v508, 1.442695
        %v511 = vpow.pop %v510
        %v512 = vmul.f32 %v509, 1.442695
        %v513 = vpow.pop %v512
        %v514 = vsel %vm501, %v511, 0.0
        %515 = vadd.xlane.f32.xlu0 %v514
        %v516 = vpop.xlane.xlu0 %515
        %v517 = vsel %vm501, %v513, 0.0
        %518 = vadd.xlane.f32.xlu0 %v517
        %v519 = vpop.xlane.xlu0 %518
        %v520 = vrcp.pop %v516
        %v521 = vrcp.pop %v519
        %v522 = vmul.f32 %v511, %v520
        %v523 = vmul.f32 %v513, %v521
        %v524 = vpack.c.bf16 %v523, %v522
        %525 = vrot.lane.b32.xlu0 %v445, 64
        %v526 = vpop.permute.xlu0 %525
        %v529 = vsel %vm501, %v524, 0
        %531 = vmatprep.subr.bf16.mxu0 0
        %532 = vmatpush1.bf16.msra.mxu0 %v526
        %533 = vmatprep.subr.bf16.mxu0 0
        %534 = vmatpush1.bf16.msra.mxu0 0
        %535 = vmatprep.subr.bf16.mxu0 0
        %536 = vmatpush1.bf16.msra.mxu0 0
        %537 = vmatprep.subr.bf16.mxu0 0
        %538 = vmatpush1.bf16.msra.mxu0 0
        %539 = vmatprep.subr.bf16.mxu0 0
        %540 = vmatpush1.bf16.msra.mxu0 0
        %541 = vmatprep.subr.bf16.mxu0 0
        %542 = vmatpush1.bf16.msra.mxu0 0
        %543 = vmatprep.subr.bf16.mxu0 0
        %544 = vmatpush1.bf16.msra.mxu0 0
        %545 = vmatprep.subr.bf16.mxu0 0
        %546 = vmatpush1.bf16.msra.mxu0 0
        %547 = vmatprep.subr.bf16.mxu0 0
        %548 = vmatpush1.bf16.msra.mxu0 0
        %549 = vmatprep.subr.bf16.mxu0 0
        %550 = vmatpush1.bf16.msra.mxu0 0
        %551 = vmatprep.subr.bf16.mxu0 0
        %552 = vmatpush1.bf16.msra.mxu0 0
        %553 = vmatprep.subr.bf16.mxu0 0
        %554 = vmatpush1.bf16.msra.mxu0 0
        %555 = vmatprep.subr.bf16.mxu0 0
        %556 = vmatpush1.bf16.msra.mxu0 0
        %557 = vmatprep.subr.bf16.mxu0 0
        %558 = vmatpush1.bf16.msra.mxu0 0
        %559 = vmatprep.subr.bf16.mxu0 0
        %560 = vmatpush1.bf16.msra.mxu0 0
        %561 = vmatprep.subr.bf16.mxu0 0
        %562 = vmatpush1.bf16.msra.mxu0 0
        %563 = vmatprep.mubr.bf16.mxu0 0
        %564 = vmatmul.mubr.bf16.gmra.mrb[0].mxu0 %v529
        %v565 = vpop.f32.mrb[0].mxu0
        %v566 = vadd.f32 0.0, %v565
        %v567 = vpop.f32.mrb[0].mxu0
        %v568 = vpop.f32.mrb[0].mxu0
        %v569 = vadd.f32 0.0, %v568
        %v570 = vpop.f32.mrb[0].mxu0
        %571 = vdwg.mxu0
        %v572 = vpack.c.bf16 %v569, %v566
        %v574 = vunpack.c.l.b16 %v572
        %v575 = vunpack.c.h.b16 %v572
        %v576 = vpack.c.b16 %v574, %v574
        %v577 = vpack.c.b16 %v575, %v575
        %vm580 = vcmask 60416
        %581 = vst.msk [vmem:[%s340] sm:$0xf] %vm580, %v576
        %582 = vst.msk [vmem:[%s340 + $0x4] sm:$0xf] %vm580, %v577
        %583 = vrot.lane.b32.xlu0 %v445, 120
        %v584 = vpop.permute.xlu0 %583
        %585 = vrot.lane.b32.xlu0 %v445, 88
        %v586 = vpop.permute.xlu0 %585
        %v588 = vsel %vm449, %v584, 0
        %v591 = vsel %vm449, %v586, 0
        %593 = vmatprep.subr.bf16.mxu0 0
        %594 = vmatpush1.bf16.xpose.msra.mxu0 %v591
        %595 = vmatprep.subr.bf16.mxu0 0
        %596 = vmatpush1.bf16.xpose.msra.mxu0 0
        %597 = vmatprep.subr.bf16.mxu0 0
        %598 = vmatpush1.bf16.xpose.msra.mxu0 0
        %599 = vmatprep.subr.bf16.mxu0 0
        %600 = vmatpush1.bf16.xpose.msra.mxu0 0
        %601 = vmatprep.subr.bf16.mxu0 0
        %602 = vmatpush1.bf16.xpose.msra.mxu0 0
        %603 = vmatprep.subr.bf16.mxu0 0
        %604 = vmatpush1.bf16.xpose.msra.mxu0 0
        %605 = vmatprep.subr.bf16.mxu0 0
        %606 = vmatpush1.bf16.xpose.msra.mxu0 0
        %607 = vmatprep.subr.bf16.mxu0 0
        %608 = vmatpush1.bf16.xpose.msra.mxu0 0
        %609 = vmatprep.subr.bf16.mxu0 0
        %610 = vmatpush1.bf16.xpose.msra.mxu0 0
        %611 = vmatprep.subr.bf16.mxu0 0
        %612 = vmatpush1.bf16.xpose.msra.mxu0 0
        %613 = vmatprep.subr.bf16.mxu0 0
        %614 = vmatpush1.bf16.xpose.msra.mxu0 0
        %615 = vmatprep.subr.bf16.mxu0 0
        %616 = vmatpush1.bf16.xpose.msra.mxu0 0
        %617 = vmatprep.subr.bf16.mxu0 0
        %618 = vmatpush1.bf16.xpose.msra.mxu0 0
        %619 = vmatprep.subr.bf16.mxu0 0
        %620 = vmatpush1.bf16.xpose.msra.mxu0 0
        %621 = vmatprep.subr.bf16.mxu0 0
        %622 = vmatpush1.bf16.xpose.msra.mxu0 0
        %623 = vmatprep.subr.bf16.mxu0 0
        %624 = vmatpush1.bf16.xpose.msra.mxu0 0
        %625 = vmatprep.mubr.bf16.mxu0 0
        %626 = vmatmul.mubr.bf16.gmra.mrb[0].mxu0 %v588
        %v627 = vpop.f32.mrb[0].mxu0
        %v628 = vadd.f32 0.0, %v627
        %v629 = vpop.f32.mrb[0].mxu0
        %v630 = vpop.f32.mrb[0].mxu0
        %v631 = vadd.f32 0.0, %v630
        %v632 = vpop.f32.mrb[0].mxu0
        %633 = vdwg.mxu0
        %v634 = vmul.f32 %v628, 0.35355338
        %v635 = vmul.f32 %v631, 0.35355338
        %v636 = vsel %vm443, %v634, -1e+09
        %v637 = vsel %vm444, %v635, -1e+09
        %v638 = vsel %vm501, %v636, -inf
        %639 = vmax.xlane.f32.xlu0 %v638
        %v640 = vpop.xlane.xlu0 %639
        %v641 = vsel %vm501, %v637, -inf
        %642 = vmax.xlane.f32.xlu0 %v641
        %v643 = vpop.xlane.xlu0 %642
        %v644 = vsub.f32 %v636, %v640
        %v645 = vsub.f32 %v637, %v643
        %v646 = vmul.f32 %v644, 1.442695
        %v647 = vpow.pop %v646
        %v648 = vmul.f32 %v645, 1.442695
        %v649 = vpow.pop %v648
        %v650 = vsel %vm501, %v647, 0.0
        %651 = vadd.xlane.f32.xlu0 %v650
        %v652 = vpop.xlane.xlu0 %651
        %v653 = vsel %vm501, %v649, 0.0
        %654 = vadd.xlane.f32.xlu0 %v653
        %v655 = vpop.xlane.xlu0 %654
        %v656 = vrcp.pop %v652
        %v657 = vrcp.pop %v655
        %v658 = vmul.f32 %v647, %v656
        %v659 = vmul.f32 %v649, %v657
        %v660 = vpack.c.bf16 %v659, %v658
        %661 = vrot.lane.b32.xlu0 %v445, 56
        %v662 = vpop.permute.xlu0 %661
        %v665 = vsel %vm501, %v660, 0
        %667 = vmatprep.subr.bf16.mxu0 0
        %668 = vmatpush1.bf16.msra.mxu0 %v662
        %669 = vmatprep.subr.bf16.mxu0 0
        %670 = vmatpush1.bf16.msra.mxu0 0
        %671 = vmatprep.subr.bf16.mxu0 0
        %672 = vmatpush1.bf16.msra.mxu0 0
        %673 = vmatprep.subr.bf16.mxu0 0
        %674 = vmatpush1.bf16.msra.mxu0 0
        %675 = vmatprep.subr.bf16.mxu0 0
        %676 = vmatpush1.bf16.msra.mxu0 0
        %677 = vmatprep.subr.bf16.mxu0 0
        %678 = vmatpush1.bf16.msra.mxu0 0
        %679 = vmatprep.subr.bf16.mxu0 0
        %680 = vmatpush1.bf16.msra.mxu0 0
        %681 = vmatprep.subr.bf16.mxu0 0
        %682 = vmatpush1.bf16.msra.mxu0 0
        %683 = vmatprep.subr.bf16.mxu0 0
        %684 = vmatpush1.bf16.msra.mxu0 0
        %685 = vmatprep.subr.bf16.mxu0 0
        %686 = vmatpush1.bf16.msra.mxu0 0
        %687 = vmatprep.subr.bf16.mxu0 0
        %688 = vmatpush1.bf16.msra.mxu0 0
        %689 = vmatprep.subr.bf16.mxu0 0
        %690 = vmatpush1.bf16.msra.mxu0 0
        %691 = vmatprep.subr.bf16.mxu0 0
        %692 = vmatpush1.bf16.msra.mxu0 0
        %693 = vmatprep.subr.bf16.mxu0 0
        %694 = vmatpush1.bf16.msra.mxu0 0
        %695 = vmatprep.subr.bf16.mxu0 0
        %696 = vmatpush1.bf16.msra.mxu0 0
        %697 = vmatprep.subr.bf16.mxu0 0
        %698 = vmatpush1.bf16.msra.mxu0 0
        %699 = vmatprep.mubr.bf16.mxu0 0
        %700 = vmatmul.mubr.bf16.gmra.mrb[0].mxu0 %v665
        %v701 = vpop.f32.mrb[0].mxu0
        %v702 = vadd.f32 0.0, %v701
        %v703 = vpop.f32.mrb[0].mxu0
        %v704 = vpop.f32.mrb[0].mxu0
        %v705 = vadd.f32 0.0, %v704
        %v706 = vpop.f32.mrb[0].mxu0
        %707 = vdwg.mxu0
        %v708 = vpack.c.bf16 %v705, %v702
        %v710 = vunpack.c.l.b16 %v708
        %v711 = vunpack.c.h.b16 %v708
        %v712 = vpack.c.b16 %v710, %v710
        %v713 = vpack.c.b16 %v711, %v711
        %s716 = scalar_lea.vmem %s340, 8 [#allocation11]
        %717 = vst.msk [vmem:[%s716] sm:$0xf] %vm580, %v712
        %718 = vst.msk [vmem:[%s716 + $0x4] sm:$0xf] %vm580, %v713
        %719 = vrot.lane.b32.xlu0 %v445, 112
        %v720 = vpop.permute.xlu0 %719
        %721 = vrot.lane.b32.xlu0 %v445, 80
        %v722 = vpop.permute.xlu0 %721
        %v724 = vsel %vm449, %v720, 0
        %v727 = vsel %vm449, %v722, 0
        %729 = vmatprep.subr.bf16.mxu0 0
        %730 = vmatpush1.bf16.xpose.msra.mxu0 %v727
        %731 = vmatprep.subr.bf16.mxu0 0
        %732 = vmatpush1.bf16.xpose.msra.mxu0 0
        %733 = vmatprep.subr.bf16.mxu0 0
        %734 = vmatpush1.bf16.xpose.msra.mxu0 0
        %735 = vmatprep.subr.bf16.mxu0 0
        %736 = vmatpush1.bf16.xpose.msra.mxu0 0
        %737 = vmatprep.subr.bf16.mxu0 0
        %738 = vmatpush1.bf16.xpose.msra.mxu0 0
        %739 = vmatprep.subr.bf16.mxu0 0
        %740 = vmatpush1.bf16.xpose.msra.mxu0 0
        %741 = vmatprep.subr.bf16.mxu0 0
        %742 = vmatpush1.bf16.xpose.msra.mxu0 0
        %743 = vmatprep.subr.bf16.mxu0 0
        %744 = vmatpush1.bf16.xpose.msra.mxu0 0
        %745 = vmatprep.subr.bf16.mxu0 0
        %746 = vmatpush1.bf16.xpose.msra.mxu0 0
        %747 = vmatprep.subr.bf16.mxu0 0
        %748 = vmatpush1.bf16.xpose.msra.mxu0 0
        %749 = vmatprep.subr.bf16.mxu0 0
        %750 = vmatpush1.bf16.xpose.msra.mxu0 0
        %751 = vmatprep.subr.bf16.mxu0 0
        %752 = vmatpush1.bf16.xpose.msra.mxu0 0
        %753 = vmatprep.subr.bf16.mxu0 0
        %754 = vmatpush1.bf16.xpose.msra.mxu0 0
        %755 = vmatprep.subr.bf16.mxu0 0
        %756 = vmatpush1.bf16.xpose.msra.mxu0 0
        %757 = vmatprep.subr.bf16.mxu0 0
        %758 = vmatpush1.bf16.xpose.msra.mxu0 0
        %759 = vmatprep.subr.bf16.mxu0 0
        %760 = vmatpush1.bf16.xpose.msra.mxu0 0
        %761 = vmatprep.mubr.bf16.mxu0 0
        %762 = vmatmul.mubr.bf16.gmra.mrb[0].mxu0 %v724
        %v763 = vpop.f32.mrb[0].mxu0
        %v764 = vadd.f32 0.0, %v763
        %v765 = vpop.f32.mrb[0].mxu0
        %v766 = vpop.f32.mrb[0].mxu0
        %v767 = vadd.f32 0.0, %v766
        %v768 = vpop.f32.mrb[0].mxu0
        %769 = vdwg.mxu0
        %v770 = vmul.f32 %v764, 0.35355338
        %v771 = vmul.f32 %v767, 0.35355338
        %v772 = vsel %vm443, %v770, -1e+09
        %v773 = vsel %vm444, %v771, -1e+09
        %v774 = vsel %vm501, %v772, -inf
        %775 = vmax.xlane.f32.xlu0 %v774
        %v776 = vpop.xlane.xlu0 %775
        %v777 = vsel %vm501, %v773, -inf
        %778 = vmax.xlane.f32.xlu0 %v777
        %v779 = vpop.xlane.xlu0 %778
        %v780 = vsub.f32 %v772, %v776
        %v781 = vsub.f32 %v773, %v779
        %v782 = vmul.f32 %v780, 1.442695
        %v783 = vpow.pop %v782
        %v784 = vmul.f32 %v781, 1.442695
        %v785 = vpow.pop %v784
        %v786 = vsel %vm501, %v783, 0.0
        %787 = vadd.xlane.f32.xlu0 %v786
        %v788 = vpop.xlane.xlu0 %787
        %v789 = vsel %vm501, %v785, 0.0
        %790 = vadd.xlane.f32.xlu0 %v789
        %v791 = vpop.xlane.xlu0 %790
        %v792 = vrcp.pop %v788
        %v793 = vrcp.pop %v791
        %v794 = vmul.f32 %v783, %v792
        %v795 = vmul.f32 %v785, %v793
        %v796 = vpack.c.bf16 %v795, %v794
        %797 = vrot.lane.b32.xlu0 %v445, 48
        %v798 = vpop.permute.xlu0 %797
        %v801 = vsel %vm501, %v796, 0
        %803 = vmatprep.subr.bf16.mxu0 0
        %804 = vmatpush1.bf16.msra.mxu0 %v798
        %805 = vmatprep.subr.bf16.mxu0 0
        %806 = vmatpush1.bf16.msra.mxu0 0
        %807 = vmatprep.subr.bf16.mxu0 0
        %808 = vmatpush1.bf16.msra.mxu0 0
        %809 = vmatprep.subr.bf16.mxu0 0
        %810 = vmatpush1.bf16.msra.mxu0 0
        %811 = vmatprep.subr.bf16.mxu0 0
        %812 = vmatpush1.bf16.msra.mxu0 0
        %813 = vmatprep.subr.bf16.mxu0 0
        %814 = vmatpush1.bf16.msra.mxu0 0
        %815 = vmatprep.subr.bf16.mxu0 0
        %816 = vmatpush1.bf16.msra.mxu0 0
        %817 = vmatprep.subr.bf16.mxu0 0
        %818 = vmatpush1.bf16.msra.mxu0 0
        %819 = vmatprep.subr.bf16.mxu0 0
        %820 = vmatpush1.bf16.msra.mxu0 0
        %821 = vmatprep.subr.bf16.mxu0 0
        %822 = vmatpush1.bf16.msra.mxu0 0
        %823 = vmatprep.subr.bf16.mxu0 0
        %824 = vmatpush1.bf16.msra.mxu0 0
        %825 = vmatprep.subr.bf16.mxu0 0
        %826 = vmatpush1.bf16.msra.mxu0 0
        %827 = vmatprep.subr.bf16.mxu0 0
        %828 = vmatpush1.bf16.msra.mxu0 0
        %829 = vmatprep.subr.bf16.mxu0 0
        %830 = vmatpush1.bf16.msra.mxu0 0
        %831 = vmatprep.subr.bf16.mxu0 0
        %832 = vmatpush1.bf16.msra.mxu0 0
        %833 = vmatprep.subr.bf16.mxu0 0
        %834 = vmatpush1.bf16.msra.mxu0 0
        %835 = vmatprep.mubr.bf16.mxu0 0
        %836 = vmatmul.mubr.bf16.gmra.mrb[0].mxu0 %v801
        %v837 = vpop.f32.mrb[0].mxu0
        %v838 = vadd.f32 0.0, %v837
        %v839 = vpop.f32.mrb[0].mxu0
        %v840 = vpop.f32.mrb[0].mxu0
        %v841 = vadd.f32 0.0, %v840
        %v842 = vpop.f32.mrb[0].mxu0
        %843 = vdwg.mxu0
        %v844 = vpack.c.bf16 %v841, %v838
        %v846 = vunpack.c.l.b16 %v844
        %v847 = vunpack.c.h.b16 %v844
        %v848 = vpack.c.b16 %v846, %v846
        %v849 = vpack.c.b16 %v847, %v847
        %s852 = scalar_lea.vmem %s340, 16 [#allocation11]
        %853 = vst.msk [vmem:[%s852] sm:$0xf] %vm580, %v848
        %854 = vst.msk [vmem:[%s852 + $0x4] sm:$0xf] %vm580, %v849
        %855 = vrot.lane.b32.xlu0 %v445, 104
        %v856 = vpop.permute.xlu0 %855
        %857 = vrot.lane.b32.xlu0 %v445, 72
        %v858 = vpop.permute.xlu0 %857
        %v860 = vsel %vm449, %v856, 0
        %v863 = vsel %vm449, %v858, 0
        %865 = vmatprep.subr.bf16.mxu0 0
        %866 = vmatpush1.bf16.xpose.msra.mxu0 %v863
        %867 = vmatprep.subr.bf16.mxu0 0
        %868 = vmatpush1.bf16.xpose.msra.mxu0 0
        %869 = vmatprep.subr.bf16.mxu0 0
        %870 = vmatpush1.bf16.xpose.msra.mxu0 0
        %871 = vmatprep.subr.bf16.mxu0 0
        %872 = vmatpush1.bf16.xpose.msra.mxu0 0
        %873 = vmatprep.subr.bf16.mxu0 0
        %874 = vmatpush1.bf16.xpose.msra.mxu0 0
        %875 = vmatprep.subr.bf16.mxu0 0
        %876 = vmatpush1.bf16.xpose.msra.mxu0 0
        %877 = vmatprep.subr.bf16.mxu0 0
        %878 = vmatpush1.bf16.xpose.msra.mxu0 0
        %879 = vmatprep.subr.bf16.mxu0 0
        %880 = vmatpush1.bf16.xpose.msra.mxu0 0
        %881 = vmatprep.subr.bf16.mxu0 0
        %882 = vmatpush1.bf16.xpose.msra.mxu0 0
        %883 = vmatprep.subr.bf16.mxu0 0
        %884 = vmatpush1.bf16.xpose.msra.mxu0 0
        %885 = vmatprep.subr.bf16.mxu0 0
        %886 = vmatpush1.bf16.xpose.msra.mxu0 0
        %887 = vmatprep.subr.bf16.mxu0 0
        %888 = vmatpush1.bf16.xpose.msra.mxu0 0
        %889 = vmatprep.subr.bf16.mxu0 0
        %890 = vmatpush1.bf16.xpose.msra.mxu0 0
        %891 = vmatprep.subr.bf16.mxu0 0
        %892 = vmatpush1.bf16.xpose.msra.mxu0 0
        %893 = vmatprep.subr.bf16.mxu0 0
        %894 = vmatpush1.bf16.xpose.msra.mxu0 0
        %895 = vmatprep.subr.bf16.mxu0 0
        %896 = vmatpush1.bf16.xpose.msra.mxu0 0
        %897 = vmatprep.mubr.bf16.mxu0 0
        %898 = vmatmul.mubr.bf16.gmra.mrb[0].mxu0 %v860
        %v899 = vpop.f32.mrb[0].mxu0
        %v900 = vadd.f32 0.0, %v899
        %v901 = vpop.f32.mrb[0].mxu0
        %v902 = vpop.f32.mrb[0].mxu0
        %v903 = vadd.f32 0.0, %v902
        %v904 = vpop.f32.mrb[0].mxu0
        %905 = vdwg.mxu0
        %v906 = vmul.f32 %v900, 0.35355338
        %v907 = vmul.f32 %v903, 0.35355338
        %v908 = vsel %vm443, %v906, -1e+09
        %v909 = vsel %vm444, %v907, -1e+09
        %v910 = vsel %vm501, %v908, -inf
        %911 = vmax.xlane.f32.xlu0 %v910
        %v912 = vpop.xlane.xlu0 %911
        %v913 = vsel %vm501, %v909, -inf
        %914 = vmax.xlane.f32.xlu0 %v913
        %v915 = vpop.xlane.xlu0 %914
        %v916 = vsub.f32 %v908, %v912
        %v917 = vsub.f32 %v909, %v915
        %v918 = vmul.f32 %v916, 1.442695
        %v919 = vpow.pop %v918
        %v920 = vmul.f32 %v917, 1.442695
        %v921 = vpow.pop %v920
        %v922 = vsel %vm501, %v919, 0.0
        %923 = vadd.xlane.f32.xlu0 %v922
        %v924 = vpop.xlane.xlu0 %923
        %v925 = vsel %vm501, %v921, 0.0
        %926 = vadd.xlane.f32.xlu0 %v925
        %v927 = vpop.xlane.xlu0 %926
        %v928 = vrcp.pop %v924
        %v929 = vrcp.pop %v927
        %v930 = vmul.f32 %v919, %v928
        %v931 = vmul.f32 %v921, %v929
        %v932 = vpack.c.bf16 %v931, %v930
        %933 = vrot.lane.b32.xlu0 %v445, 40
        %v934 = vpop.permute.xlu0 %933
        %v937 = vsel %vm501, %v932, 0
        %939 = vmatprep.subr.bf16.mxu0 0
        %940 = vmatpush1.bf16.msra.mxu0 %v934
        %941 = vmatprep.subr.bf16.mxu0 0
        %942 = vmatpush1.bf16.msra.mxu0 0
        %943 = vmatprep.subr.bf16.mxu0 0
        %944 = vmatpush1.bf16.msra.mxu0 0
        %945 = vmatprep.subr.bf16.mxu0 0
        %946 = vmatpush1.bf16.msra.mxu0 0
        %947 = vmatprep.subr.bf16.mxu0 0
        %948 = vmatpush1.bf16.msra.mxu0 0
        %949 = vmatprep.subr.bf16.mxu0 0
        %950 = vmatpush1.bf16.msra.mxu0 0
        %951 = vmatprep.subr.bf16.mxu0 0
        %952 = vmatpush1.bf16.msra.mxu0 0
        %953 = vmatprep.subr.bf16.mxu0 0
        %954 = vmatpush1.bf16.msra.mxu0 0
        %955 = vmatprep.subr.bf16.mxu0 0
        %956 = vmatpush1.bf16.msra.mxu0 0
        %957 = vmatprep.subr.bf16.mxu0 0
        %958 = vmatpush1.bf16.msra.mxu0 0
        %959 = vmatprep.subr.bf16.mxu0 0
        %960 = vmatpush1.bf16.msra.mxu0 0
        %961 = vmatprep.subr.bf16.mxu0 0
        %962 = vmatpush1.bf16.msra.mxu0 0
        %963 = vmatprep.subr.bf16.mxu0 0
        %964 = vmatpush1.bf16.msra.mxu0 0
        %965 = vmatprep.subr.bf16.mxu0 0
        %966 = vmatpush1.bf16.msra.mxu0 0
        %967 = vmatprep.subr.bf16.mxu0 0
        %968 = vmatpush1.bf16.msra.mxu0 0
        %969 = vmatprep.subr.bf16.mxu0 0
        %970 = vmatpush1.bf16.msra.mxu0 0
        %971 = vmatprep.mubr.bf16.mxu0 0
        %972 = vmatmul.mubr.bf16.gmra.mrb[0].mxu0 %v937
        %v973 = vpop.f32.mrb[0].mxu0
        %v974 = vadd.f32 0.0, %v973
        %v975 = vpop.f32.mrb[0].mxu0
        %v976 = vpop.f32.mrb[0].mxu0
        %v977 = vadd.f32 0.0, %v976
        %v978 = vpop.f32.mrb[0].mxu0
        %979 = vdwg.mxu0
        %v980 = vpack.c.bf16 %v977, %v974
        %v982 = vunpack.c.l.b16 %v980
        %v983 = vunpack.c.h.b16 %v980
        %v984 = vpack.c.b16 %v982, %v982
        %v985 = vpack.c.b16 %v983, %v983
        %s988 = scalar_lea.vmem %s340, 24 [#allocation11]
        %989 = vst.msk [vmem:[%s988] sm:$0xf] %vm580, %v984
        %990 = vst.msk [vmem:[%s988 + $0x4] sm:$0xf] %vm580, %v985
        %s991 = sand.u32 %s154, 1
        %s992 = scalar_lea.sflag [#allocation4], %s991
        %s993 = sand.u32 %s154, 1
        %s994 = smul.addr %s993, 32
        %s995 = scalar_lea.vmem [#allocation11], %s994
        // Predicated region
        $region61: #{transformer_forward.27} parent=39 // pred_check
          %p996 = pneg %p164
        $region62: #{transformer_forward.27} parent=39 // pred_check_branch
          %998 = sbr.rel (%p996) target = $region64
        $region63: #{transformer_forward.27} parent=39 // pred_region
          %s1000 = ssub.s32 512, 512
          %1001 = vsyncadd %s992, %s1000
          %s1002 = smul.addr %s26, 8
          %s1003 = smul.addr %s1002, 64
          %s1004 = scalar_lea.hbm %s5, %s1003
          %s1005 = sshll.u32 %s995, 4
          %s1006 = int_to_ptr.vmem [resolvable:$true] %s1005
          %1011 = dma.vmem_to_hbm [thread:$0]  %s1006, 512, %s1004, %s992, 64, 64, 4
        $region64: #{transformer_forward.27} parent=39 // pred_fallthru
          _
      $region40: #{transformer_forward.27} parent=5 // pred_fallthru
        _
      %p1012 = scmp.le.s32.totalorder 2, %s21
      // Predicated region
      $region65: #{transformer_forward.27} parent=5 // pred_check
        %p1013 = pneg %p1012
      $region66: #{transformer_forward.27} parent=5 // pred_check_branch
        %1015 = sbr.rel (%p1013) target = $region68
      $region67: #{transformer_forward.27} parent=5 // pred_region
        %s1016 = ssub.s32 %s21, 2
        // Predicated region
        $region69: #{transformer_forward.27} parent=67 // pred_check
          %p1017 = pneg %p170
        $region70: #{transformer_forward.27} parent=67 // pred_check_branch
          %1019 = sbr.rel (%p1017) target = $region72
        $region71: #{transformer_forward.27} parent=67 // pred_region
          %s1020 = sand.u32 %s155, 1
          %s1021 = scalar_lea.sflag [#allocation4], %s1020
          %s1022 = sand.u32 %s155, 1
          %s1023 = smul.addr %s1022, 32
          %s1024 = scalar_lea.vmem [#allocation11], %s1023
          %1025 = dma.done %s1021, 512
        $region72: #{transformer_forward.27} parent=67 // pred_fallthru
          _
      $region68: #{transformer_forward.27} parent=5 // pred_fallthru
        _
    $region6: #{transformer_forward.27} parent=1 // loop_footer
      %s25 = sadd.s32 1, %s21
    $region7: #{transformer_forward.27} parent=1 // loop_footer_branch
      %20 = sbr.rel target = $region3
    $region8: #{transformer_forward.27} parent=1 // loop_exit
      _
    %1026 = vsyncpa [#allocation3], 1
    %s1027 = scalar_lea.sflag [#allocation3], 1
    %1028 = vsyncpa %s1027, 1
    %1029 = vsyncpa [#allocation6], 1
    %1030 = vsyncpa [#allocation9], 1
    %s1031 = scalar_lea.sflag [#allocation9], 1
    %1032 = vsyncpa %s1031, 1
    %1033 = vsyncpa [#allocation4], 1
    %s1034 = scalar_lea.sflag [#allocation4], 1
    %1035 = vsyncpa %s1034, 1

// kernel: transformer_forward.29
$region0: #{transformer_forward.29}
  #allocation0 [shape = 'u32[]', space=smem, size = 0x4, offset = 0x4, fixed_abs, tag = 'smem constant byte address 0x4 - core index']
  #allocation1 [shape = 'u32[144,128]{1,0:T(1,128)}', space=vmem, size = 0x12000, scoped, tag = 'internal scratch']
  %s0 = inlined_call_operand.hbm [shape: f32[2,16,32], index: 0, kind: input, shape index: {}]
  %s1 = inlined_call_operand.hbm [shape: f32[2,16,32], index: 1, kind: input, shape index: {}]
  %s2 = inlined_call_operand.hbm [shape: bf16[32,32], index: 2, kind: input, shape index: {}]
  %s3 = inlined_call_operand.hbm [shape: f32[1,32], index: 3, kind: input, shape index: {}]
  %s4 = inlined_call_operand.hbm [shape: bf16[32,64], index: 4, kind: input, shape index: {}]
  %s5 = inlined_call_operand.hbm [shape: f32[1,64], index: 5, kind: input, shape index: {}]
  %s6 = inlined_call_operand.hbm [shape: f32[2,1,16], index: 6, kind: input, shape index: {}]
  %s7 = inlined_call_operand.hbm [shape: bf16[2,4,16,8], index: 7, kind: output, shape index: {}]
  %s8 = sld [smem:[#allocation0]]
  $region89: #{transformer_forward.29} parent=0
    _
  %s10 = ssub.s32 1, %s8
  %s11 = scalar_select 0, %s10, %s8
  $region1: #{transformer_forward.29} parent=0
    #allocation2 [shape = 'u8[16384]{0}', space=vmem, size = 0x4000, scoped, tag = 'input window, operand 0']
    #allocation3 [shape = 's32[2]{0}', space=sflag, size = 0x8, scoped, tag = 'scoped memory for transformer_forward.29']
    #allocation4 [shape = 's32[2]{0}', space=sflag, size = 0x8, scoped, tag = 'scoped memory for transformer_forward.29']
    #allocation5 [shape = 'u8[16384]{0}', space=vmem, size = 0x4000, scoped, tag = 'input window, operand 1']
    #allocation6 [shape = 's32[2]{0}', space=sflag, size = 0x8, scoped, tag = 'scoped memory for transformer_forward.29']
    #allocation7 [shape = 'u8[8192]{0}', space=vmem, size = 0x2000, scoped, tag = 'input window, operand 2, single buffered']
    #allocation8 [shape = 'u8[512]{0}', space=vmem, size = 0x400, scoped, tag = 'input window, operand 3, single buffered']
    #allocation9 [shape = 's32[1]{0}', space=sflag, size = 0x4, scoped, tag = 'scoped memory for transformer_forward.29']
    #allocation10 [shape = 'u8[8192]{0}', space=vmem, size = 0x2000, scoped, tag = 'input window, operand 4, single buffered']
    #allocation11 [shape = 'u8[512]{0}', space=vmem, size = 0x400, scoped, tag = 'input window, operand 5, single buffered']
    #allocation12 [shape = 's32[1]{0}', space=sflag, size = 0x4, scoped, tag = 'scoped memory for transformer_forward.29']
    #allocation13 [shape = 'u8[1024]{0}', space=vmem, size = 0x400, scoped, tag = 'input window, operand 6']
    #allocation14 [shape = 'u8[32768]{0}', space=vmem, size = 0x8000, scoped, tag = 'output window, operand 0']
    %12 = vsyncpa [#allocation3], 0
    %s13 = scalar_lea.sflag [#allocation3], 1
    %14 = vsyncpa %s13, 0
    %15 = vsyncpa [#allocation6], 0
    %s16 = scalar_lea.sflag [#allocation6], 1
    %17 = vsyncpa %s16, 0
    %18 = vsyncpa [#allocation9], 0
    %19 = vsyncpa [#allocation12], 0
    %20 = vsyncpa [#allocation4], 0
    %s21 = scalar_lea.sflag [#allocation4], 1
    %22 = vsyncpa %s21, 0
    loop: start=0, step=1, limit=4
    $region2: #{transformer_forward.29} parent=1 // loop_pre_header
      _
    $region3: #{transformer_forward.29} parent=1 // loop_header
      %s24 = sphi 0, %s28
      %p25 = scmp.ge.s32.totalorder %s24, 4
      %s34 = sphi 0, %s36
      %s37 = sphi 0, %s34
      %s38 = sphi 0, %s37
      %s54 = sphi 0, %s38
      %s60 = sphi 0, %s62
      %s63 = sphi 0, %s60
      %s64 = sphi 0, %s63
      %s80 = sphi 0, %s64
      %s84 = sphi 0, %s84
      %s86 = sphi 0, %s84
      %s87 = sphi 0, %s86
      %s101 = sphi 0, %s87
      %s105 = sphi 0, %s105
      %s107 = sphi 0, %s105
      %s108 = sphi 0, %s107
      %s122 = sphi 0, %s108
      %s126 = sphi 0, %s126
      %s128 = sphi 0, %s126
      %s129 = sphi 0, %s128
      %s143 = sphi 0, %s129
      %s147 = sphi 0, %s147
      %s149 = sphi 0, %s147
      %s150 = sphi 0, %s149
      %s164 = sphi 0, %s150
      %s170 = sphi 0, %s172
      %s173 = sphi 0, %s170
      %s174 = sphi 0, %s173
      %s190 = sphi 0, %s174
      %s196 = sphi 0, %s198
      %s199 = sphi 0, %s196
      %s200 = sphi 0, %s199
      %s216 = sphi 0, %s200
    $region4: #{transformer_forward.29} parent=1 // loop_header_branch
      %27 = sbr.rel (%p25) target = $region8
    $region5: #{transformer_forward.29} parent=1 // loop_body
      %s29 = ssub.s32 %s24, 1
      %s30 = ssub.s32 %s24, 2
      %s31 = sadd.s32 %s24, 1
      %s32 = ssub.s32 %s24, %s31
      %p33 = scmp.eq.s32.totalorder %s32, 0
      %s35 = sadd.s32 %s34, 1
      %s36 = scalar_select %p33, %s34, %s35
      %p39 = pneg %p33
      %p40 = scmp.eq.s32.totalorder %s24, 1
      %p41 = por %p39, %p40
      %p42 = scmp.ne.s32.totalorder %s34, %s37
      %p43 = scmp.eq.s32.totalorder %s24, 0
      %p44 = por %p42, %p43
      %p45 = scmp.ne.s32.totalorder %s34, %s37
      %p46 = scmp.eq.s32.totalorder %s29, 1
      %p47 = por %p45, %p46
      %p48 = scmp.ne.s32.totalorder %s37, %s38
      %p49 = scmp.eq.s32.totalorder %s29, 0
      %p50 = por %p48, %p49
      %p51 = scmp.ne.s32.totalorder %s37, %s38
      %p52 = scmp.eq.s32.totalorder %s30, 1
      %p53 = por %p51, %p52
      %p55 = scmp.ne.s32.totalorder %s38, %s54
      %p56 = scmp.eq.s32.totalorder %s30, 0
      %p57 = por %p55, %p56
      %s58 = ssub.s32 %s24, %s31
      %p59 = scmp.eq.s32.totalorder %s58, 0
      %s61 = sadd.s32 %s60, 1
      %s62 = scalar_select %p59, %s60, %s61
      %p65 = pneg %p59
      %p66 = scmp.eq.s32.totalorder %s24, 1
      %p67 = por %p65, %p66
      %p68 = scmp.ne.s32.totalorder %s60, %s63
      %p69 = scmp.eq.s32.totalorder %s24, 0
      %p70 = por %p68, %p69
      %p71 = scmp.ne.s32.totalorder %s60, %s63
      %p72 = scmp.eq.s32.totalorder %s29, 1
      %p73 = por %p71, %p72
      %p74 = scmp.ne.s32.totalorder %s63, %s64
      %p75 = scmp.eq.s32.totalorder %s29, 0
      %p76 = por %p74, %p75
      %p77 = scmp.ne.s32.totalorder %s63, %s64
      %p78 = scmp.eq.s32.totalorder %s30, 1
      %p79 = por %p77, %p78
      %p81 = scmp.ne.s32.totalorder %s64, %s80
      %p82 = scmp.eq.s32.totalorder %s30, 0
      %p83 = por %p81, %p82
      %s85 = sadd.s32 %s84, 1
      %p88 = scmp.eq.s32.totalorder %s24, 1
      %p89 = scmp.ne.s32.totalorder %s84, %s86
      %p90 = scmp.eq.s32.totalorder %s24, 0
      %p91 = por %p89, %p90
      %p92 = scmp.ne.s32.totalorder %s84, %s86
      %p93 = scmp.eq.s32.totalorder %s29, 1
      %p94 = por %p92, %p93
      %p95 = scmp.ne.s32.totalorder %s86, %s87
      %p96 = scmp.eq.s32.totalorder %s29, 0
      %p97 = por %p95, %p96
      %p98 = scmp.ne.s32.totalorder %s86, %s87
      %p99 = scmp.eq.s32.totalorder %s30, 1
      %p100 = por %p98, %p99
      %p102 = scmp.ne.s32.totalorder %s87, %s101
      %p103 = scmp.eq.s32.totalorder %s30, 0
      %p104 = por %p102, %p103
      %s106 = sadd.s32 %s105, 1
      %p109 = scmp.eq.s32.totalorder %s24, 1
      %p110 = scmp.ne.s32.totalorder %s105, %s107
      %p111 = scmp.eq.s32.totalorder %s24, 0
      %p112 = por %p110, %p111
      %p113 = scmp.ne.s32.totalorder %s105, %s107
      %p114 = scmp.eq.s32.totalorder %s29, 1
      %p115 = por %p113, %p114
      %p116 = scmp.ne.s32.totalorder %s107, %s108
      %p117 = scmp.eq.s32.totalorder %s29, 0
      %p118 = por %p116, %p117
      %p119 = scmp.ne.s32.totalorder %s107, %s108
      %p120 = scmp.eq.s32.totalorder %s30, 1
      %p121 = por %p119, %p120
      %p123 = scmp.ne.s32.totalorder %s108, %s122
      %p124 = scmp.eq.s32.totalorder %s30, 0
      %p125 = por %p123, %p124
      %s127 = sadd.s32 %s126, 1
      %p130 = scmp.eq.s32.totalorder %s24, 1
      %p131 = scmp.ne.s32.totalorder %s126, %s128
      %p132 = scmp.eq.s32.totalorder %s24, 0
      %p133 = por %p131, %p132
      %p134 = scmp.ne.s32.totalorder %s126, %s128
      %p135 = scmp.eq.s32.totalorder %s29, 1
      %p136 = por %p134, %p135
      %p137 = scmp.ne.s32.totalorder %s128, %s129
      %p138 = scmp.eq.s32.totalorder %s29, 0
      %p139 = por %p137, %p138
      %p140 = scmp.ne.s32.totalorder %s128, %s129
      %p141 = scmp.eq.s32.totalorder %s30, 1
      %p142 = por %p140, %p141
      %p144 = scmp.ne.s32.totalorder %s129, %s143
      %p145 = scmp.eq.s32.totalorder %s30, 0
      %p146 = por %p144, %p145
      %s148 = sadd.s32 %s147, 1
      %p151 = scmp.eq.s32.totalorder %s24, 1
      %p152 = scmp.ne.s32.totalorder %s147, %s149
      %p153 = scmp.eq.s32.totalorder %s24, 0
      %p154 = por %p152, %p153
      %p155 = scmp.ne.s32.totalorder %s147, %s149
      %p156 = scmp.eq.s32.totalorder %s29, 1
      %p157 = por %p155, %p156
      %p158 = scmp.ne.s32.totalorder %s149, %s150
      %p159 = scmp.eq.s32.totalorder %s29, 0
      %p160 = por %p158, %p159
      %p161 = scmp.ne.s32.totalorder %s149, %s150
      %p162 = scmp.eq.s32.totalorder %s30, 1
      %p163 = por %p161, %p162
      %p165 = scmp.ne.s32.totalorder %s150, %s164
      %p166 = scmp.eq.s32.totalorder %s30, 0
      %p167 = por %p165, %p166
      %s168 = ssub.s32 %s24, %s31
      %p169 = scmp.eq.s32.totalorder %s168, 0
      %s171 = sadd.s32 %s170, 1
      %s172 = scalar_select %p169, %s170, %s171
      %p175 = pneg %p169
      %p176 = scmp.eq.s32.totalorder %s24, 1
      %p177 = por %p175, %p176
      %p178 = scmp.ne.s32.totalorder %s170, %s173
      %p179 = scmp.eq.s32.totalorder %s24, 0
      %p180 = por %p178, %p179
      %p181 = scmp.ne.s32.totalorder %s170, %s173
      %p182 = scmp.eq.s32.totalorder %s29, 1
      %p183 = por %p181, %p182
      %p184 = scmp.ne.s32.totalorder %s173, %s174
      %p185 = scmp.eq.s32.totalorder %s29, 0
      %p186 = por %p184, %p185
      %p187 = scmp.ne.s32.totalorder %s173, %s174
      %p188 = scmp.eq.s32.totalorder %s30, 1
      %p189 = por %p187, %p188
      %p191 = scmp.ne.s32.totalorder %s174, %s190
      %p192 = scmp.eq.s32.totalorder %s30, 0
      %p193 = por %p191, %p192
      %s194 = ssub.s32 %s24, %s31
      %p195 = scmp.eq.s32.totalorder %s194, 0
      %s197 = sadd.s32 %s196, 1
      %s198 = scalar_select %p195, %s196, %s197
      %p201 = pneg %p195
      %p202 = scmp.eq.s32.totalorder %s24, 1
      %p203 = por %p201, %p202
      %p204 = scmp.ne.s32.totalorder %s196, %s199
      %p205 = scmp.eq.s32.totalorder %s24, 0
      %p206 = por %p204, %p205
      %p207 = scmp.ne.s32.totalorder %s196, %s199
      %p208 = scmp.eq.s32.totalorder %s29, 1
      %p209 = por %p207, %p208
      %p210 = scmp.ne.s32.totalorder %s199, %s200
      %p211 = scmp.eq.s32.totalorder %s29, 0
      %p212 = por %p210, %p211
      %p213 = scmp.ne.s32.totalorder %s199, %s200
      %p214 = scmp.eq.s32.totalorder %s30, 1
      %p215 = por %p213, %p214
      %p217 = scmp.ne.s32.totalorder %s200, %s216
      %p218 = scmp.eq.s32.totalorder %s30, 0
      %p219 = por %p217, %p218
      %p220 = scmp.le.s32.totalorder 1, %s24
      %p221 = scmp.lt.s32.totalorder %s24, 3
      %p222 = pnand %p220, %p221
      %p223 = pneg %p222
      // Predicated region
      $region9: #{transformer_forward.29} parent=5 // pred_check
        _
      $region10: #{transformer_forward.29} parent=5 // pred_check_branch
        %225 = sbr.rel (%p222) target = $region12
      $region11: #{transformer_forward.29} parent=5 // pred_region
        %s226 = ssub.s32 %s24, 1
        // Predicated region
        $region13: #{transformer_forward.29} parent=11 // pred_check
          %p227 = pneg %p97
        $region14: #{transformer_forward.29} parent=11 // pred_check_branch
          %229 = sbr.rel (%p227) target = $region16
        $region15: #{transformer_forward.29} parent=11 // pred_region
          %s231 = ssub.s32 256, 256
          %232 = vsyncadd [#allocation6], %s231
          %s233 = sshll.u32 [#allocation7], 4
          %s234 = int_to_ptr.vmem [resolvable:$true] %s233
          %239 = dma.hbm_to_vmem [thread:$0]  %s2, 256, %s234, [#allocation6], 64, 64, 4
        $region16: #{transformer_forward.29} parent=11 // pred_fallthru
          _
        // Predicated region
        $region17: #{transformer_forward.29} parent=11 // pred_check
          %p240 = pneg %p118
        $region18: #{transformer_forward.29} parent=11 // pred_check_branch
          %242 = sbr.rel (%p240) target = $region20
        $region19: #{transformer_forward.29} parent=11 // pred_region
          %s244 = ssub.s32 16, 16
          %245 = vsyncadd [#allocation9], %s244
          %s247 = sshll.u32 [#allocation8], 4
          %s248 = int_to_ptr.vmem [resolvable:$true] %s247
          %250 = dma.hbm_to_vmem [thread:$0]  %s3, 16, %s248, [#allocation9]
        $region20: #{transformer_forward.29} parent=11 // pred_fallthru
          _
        // Predicated region
        $region21: #{transformer_forward.29} parent=11 // pred_check
          %p251 = pneg %p139
        $region22: #{transformer_forward.29} parent=11 // pred_check_branch
          %253 = sbr.rel (%p251) target = $region24
        $region23: #{transformer_forward.29} parent=11 // pred_region
          %s255 = ssub.s32 256, 256
          %256 = vsyncadd [#allocation9], %s255
          %s257 = sshll.u32 [#allocation10], 4
          %s258 = int_to_ptr.vmem [resolvable:$true] %s257
          %263 = dma.hbm_to_vmem [thread:$0]  %s4, 256, %s258, [#allocation9], 64, 64, 4
        $region24: #{transformer_forward.29} parent=11 // pred_fallthru
          _
        // Predicated region
        $region25: #{transformer_forward.29} parent=11 // pred_check
          %p264 = pneg %p160
        $region26: #{transformer_forward.29} parent=11 // pred_check_branch
          %266 = sbr.rel (%p264) target = $region28
        $region27: #{transformer_forward.29} parent=11 // pred_region
          %s268 = ssub.s32 16, 16
          %269 = vsyncadd [#allocation12], %s268
          %s271 = sshll.u32 [#allocation11], 4
          %s272 = int_to_ptr.vmem [resolvable:$true] %s271
          %274 = dma.hbm_to_vmem [thread:$0]  %s5, 16, %s272, [#allocation12]
        $region28: #{transformer_forward.29} parent=11 // pred_fallthru
          _
      $region12: #{transformer_forward.29} parent=5 // pred_fallthru
        _
      %p275 = scmp.lt.s32.totalorder %s24, 2
      // Predicated region
      $region29: #{transformer_forward.29} parent=5 // pred_check
        %p276 = pneg %p275
      $region30: #{transformer_forward.29} parent=5 // pred_check_branch
        %278 = sbr.rel (%p276) target = $region32
      $region31: #{transformer_forward.29} parent=5 // pred_region
        // Predicated region
        $region33: #{transformer_forward.29} parent=31 // pred_check
          %p279 = pneg %p44
        $region34: #{transformer_forward.29} parent=31 // pred_check_branch
          %281 = sbr.rel (%p279) target = $region36
        $region35: #{transformer_forward.29} parent=31 // pred_region
          %s282 = sand.u32 %s24, 1
          %s283 = scalar_lea.sflag [#allocation3], %s282
          %s284 = sand.u32 %s34, 1
          %s285 = smul.addr %s284, 16
          %s286 = scalar_lea.vmem [#allocation2], %s285
          %s288 = ssub.s32 256, 256
          %289 = vsyncadd %s283, %s288
          %s290 = smul.addr %s24, 2
          %s291 = smul.addr %s290, 128
          %s292 = scalar_lea.hbm %s0, %s291
          %s293 = sshll.u32 %s286, 4
          %s294 = int_to_ptr.vmem [resolvable:$true] %s293
          %299 = dma.hbm_to_vmem [thread:$0]  %s292, 256, %s294, %s283, 128, 128, 8
        $region36: #{transformer_forward.29} parent=31 // pred_fallthru
          _
        // Predicated region
        $region37: #{transformer_forward.29} parent=31 // pred_check
          %p300 = pneg %p70
        $region38: #{transformer_forward.29} parent=31 // pred_check_branch
          %302 = sbr.rel (%p300) target = $region40
        $region39: #{transformer_forward.29} parent=31 // pred_region
          %s303 = sand.u32 %s24, 1
          %s304 = scalar_lea.sflag [#allocation6], %s303
          %s305 = sand.u32 %s60, 1
          %s306 = smul.addr %s305, 16
          %s307 = scalar_lea.vmem [#allocation5], %s306
          %s309 = ssub.s32 256, 256
          %310 = vsyncadd %s304, %s309
          %s311 = smul.addr %s24, 2
          %s312 = smul.addr %s311, 128
          %s313 = scalar_lea.hbm %s1, %s312
          %s314 = sshll.u32 %s307, 4
          %s315 = int_to_ptr.vmem [resolvable:$true] %s314
          %320 = dma.hbm_to_vmem [thread:$0]  %s313, 256, %s315, %s304, 128, 128, 8
        $region40: #{transformer_forward.29} parent=31 // pred_fallthru
          _
        // Predicated region
        $region41: #{transformer_forward.29} parent=31 // pred_check
          %p321 = pneg %p180
        $region42: #{transformer_forward.29} parent=31 // pred_check_branch
          %323 = sbr.rel (%p321) target = $region44
        $region43: #{transformer_forward.29} parent=31 // pred_region
          %s324 = sand.u32 %s24, 1
          %s325 = scalar_lea.sflag [#allocation3], %s324
          %s326 = sand.u32 %s170, 1
          %s327 = scalar_lea.vmem [#allocation13], %s326
          %s329 = ssub.s32 16, 16
          %330 = vsyncadd %s325, %s329
          %s331 = smul.addr %s24, 16
          %s332 = scalar_lea.hbm %s6, %s331
          %s334 = sshll.u32 %s327, 4
          %s335 = int_to_ptr.vmem [resolvable:$true] %s334
          %337 = dma.hbm_to_vmem [thread:$0]  %s332, 16, %s335, %s325
        $region44: #{transformer_forward.29} parent=31 // pred_fallthru
          _
      $region32: #{transformer_forward.29} parent=5 // pred_fallthru
        _
      %p338 = scmp.le.s32.totalorder 1, %s24
      %p339 = scmp.lt.s32.totalorder %s24, 3
      %p340 = pnand %p338, %p339
      %p341 = pneg %p340
      // Predicated region
      $region45: #{transformer_forward.29} parent=5 // pred_check
        _
      $region46: #{transformer_forward.29} parent=5 // pred_check_branch
        %343 = sbr.rel (%p340) target = $region48
      $region47: #{transformer_forward.29} parent=5 // pred_region
        %s344 = ssub.s32 %s24, 1
        %s345 = sand.u32 %s29, 1
        %s346 = scalar_lea.sflag [#allocation3], %s345
        %s347 = sand.u32 %s37, 1
        %s348 = smul.addr %s347, 16
        %s349 = scalar_lea.vmem [#allocation2], %s348
        // Predicated region
        $region49: #{transformer_forward.29} parent=47 // pred_check
          %p350 = pneg %p50
        $region50: #{transformer_forward.29} parent=47 // pred_check_branch
          %352 = sbr.rel (%p350) target = $region52
        $region51: #{transformer_forward.29} parent=47 // pred_region
          %353 = dma.done %s346, 256
        $region52: #{transformer_forward.29} parent=47 // pred_fallthru
          _
        %s354 = sand.u32 %s29, 1
        %s355 = scalar_lea.sflag [#allocation6], %s354
        %s356 = sand.u32 %s63, 1
        %s357 = smul.addr %s356, 16
        %s358 = scalar_lea.vmem [#allocation5], %s357
        // Predicated region
        $region53: #{transformer_forward.29} parent=47 // pred_check
          %p359 = pneg %p76
        $region54: #{transformer_forward.29} parent=47 // pred_check_branch
          %361 = sbr.rel (%p359) target = $region56
        $region55: #{transformer_forward.29} parent=47 // pred_region
          %362 = dma.done %s355, 256
        $region56: #{transformer_forward.29} parent=47 // pred_fallthru
          _
        // Predicated region
        $region57: #{transformer_forward.29} parent=47 // pred_check
          %p363 = pneg %p97
        $region58: #{transformer_forward.29} parent=47 // pred_check_branch
          %365 = sbr.rel (%p363) target = $region60
        $region59: #{transformer_forward.29} parent=47 // pred_region
          %366 = dma.done [#allocation6], 256
        $region60: #{transformer_forward.29} parent=47 // pred_fallthru
          _
        // Predicated region
        $region61: #{transformer_forward.29} parent=47 // pred_check
          %p367 = pneg %p118
        $region62: #{transformer_forward.29} parent=47 // pred_check_branch
          %369 = sbr.rel (%p367) target = $region64
        $region63: #{transformer_forward.29} parent=47 // pred_region
          %370 = dma.done [#allocation9], 16
        $region64: #{transformer_forward.29} parent=47 // pred_fallthru
          _
        // Predicated region
        $region65: #{transformer_forward.29} parent=47 // pred_check
          %p371 = pneg %p139
        $region66: #{transformer_forward.29} parent=47 // pred_check_branch
          %373 = sbr.rel (%p371) target = $region68
        $region67: #{transformer_forward.29} parent=47 // pred_region
          %374 = dma.done [#allocation9], 256
        $region68: #{transformer_forward.29} parent=47 // pred_fallthru
          _
        // Predicated region
        $region69: #{transformer_forward.29} parent=47 // pred_check
          %p375 = pneg %p160
        $region70: #{transformer_forward.29} parent=47 // pred_check_branch
          %377 = sbr.rel (%p375) target = $region72
        $region71: #{transformer_forward.29} parent=47 // pred_region
          %378 = dma.done [#allocation12], 16
        $region72: #{transformer_forward.29} parent=47 // pred_fallthru
          _
        %s379 = sand.u32 %s29, 1
        %s380 = scalar_lea.sflag [#allocation3], %s379
        %s381 = sand.u32 %s173, 1
        %s382 = scalar_lea.vmem [#allocation13], %s381
        // Predicated region
        $region73: #{transformer_forward.29} parent=47 // pred_check
          %p383 = pneg %p186
        $region74: #{transformer_forward.29} parent=47 // pred_check_branch
          %385 = sbr.rel (%p383) target = $region76
        $region75: #{transformer_forward.29} parent=47 // pred_region
          %386 = dma.done %s380, 16
        $region76: #{transformer_forward.29} parent=47 // pred_fallthru
          _
        %s387 = sand.u32 %s29, 1
        %s388 = scalar_lea.sflag [#allocation3], %s387
        %s389 = sand.u32 %s37, 1
        %s390 = smul.addr %s389, 16
        %s391 = scalar_lea.vmem [#allocation2], %s390
        %p392 = pneg %p50
        %p393 = pneg %p47
        %s394 = sand.u32 %s29, 1
        %s395 = scalar_lea.sflag [#allocation6], %s394
        %s396 = sand.u32 %s63, 1
        %s397 = smul.addr %s396, 16
        %s398 = scalar_lea.vmem [#allocation5], %s397
        %p399 = pneg %p76
        %p400 = pneg %p73
        %p401 = pneg %p97
        %p402 = pneg %p94
        %p403 = pneg %p118
        %p404 = pneg %p115
        %p405 = pneg %p139
        %p406 = pneg %p136
        %p407 = pneg %p160
        %p408 = pneg %p157
        %s409 = sand.u32 %s29, 1
        %s410 = scalar_lea.sflag [#allocation3], %s409
        %s411 = sand.u32 %s173, 1
        %s412 = scalar_lea.vmem [#allocation13], %s411
        %p413 = pneg %p186
        %p414 = pneg %p183
        %p415 = pneg %p212
        %p416 = pneg %p209
        %s417 = sand.u32 %s199, 1
        %s418 = scalar_lea.sflag [#allocation4], %s417
        %s419 = sand.u32 %s199, 1
        %s420 = smul.addr %s419, 32
        %s421 = scalar_lea.vmem [#allocation14], %s420
        %v423 = vld [vmem:[%s349] sm:$0xff]
        %v424 = vld [vmem:[%s349 + $0x8] sm:$0xff]
        %v425 = vpack.c.bf16 %v424, %v423
        %v426 = vld [vmem:[#allocation7] sm:$0xf]
        %v427 = vld [vmem:[#allocation7 + $0x4] sm:$0xf]
        %v428 = vld [vmem:[#allocation7 + $0x8] sm:$0xf]
        %v429 = vld [vmem:[#allocation7 + $0xc] sm:$0xf]
        %v430 = vld [vmem:[#allocation8] sm:$0x1]
        %v432 = vlaneseq
        %v433 = vshrl.u32 %v432, 7
        %v434 = vsub.s32 0, %v433
        %v435 = vrot.slane %v430, %v434
        %v441 = vunpack.c.l.b16 %v426
        %v442 = vunpack.c.l.b16 %v427
        %v443 = vunpack.c.l.b16 %v428
        %v444 = vunpack.c.l.b16 %v429
        %v445 = vpack.c.b16 %v442, %v441
        %v446 = vpack.c.b16 %v444, %v443
        %vm449 = vcmask 261120
        %v451 = vsel %vm449, %v425, 0
        %453 = vmatprep.subr.bf16.mxu0 0
        %454 = vmatpush1.bf16.msra.mxu0 %v445
        %455 = vmatprep.subr.bf16.mxu0 0
        %456 = vmatpush1.bf16.msra.mxu0 %v446
        %457 = vmatprep.subr.bf16.mxu0 0
        %458 = vmatpush1.bf16.msra.mxu0 0
        %459 = vmatprep.subr.bf16.mxu0 0
        %460 = vmatpush1.bf16.msra.mxu0 0
        %461 = vmatprep.subr.bf16.mxu0 0
        %462 = vmatpush1.bf16.msra.mxu0 0
        %463 = vmatprep.subr.bf16.mxu0 0
        %464 = vmatpush1.bf16.msra.mxu0 0
        %465 = vmatprep.subr.bf16.mxu0 0
        %466 = vmatpush1.bf16.msra.mxu0 0
        %467 = vmatprep.subr.bf16.mxu0 0
        %468 = vmatpush1.bf16.msra.mxu0 0
        %469 = vmatprep.subr.bf16.mxu0 0
        %470 = vmatpush1.bf16.msra.mxu0 0
        %471 = vmatprep.subr.bf16.mxu0 0
        %472 = vmatpush1.bf16.msra.mxu0 0
        %473 = vmatprep.subr.bf16.mxu0 0
        %474 = vmatpush1.bf16.msra.mxu0 0
        %475 = vmatprep.subr.bf16.mxu0 0
        %476 = vmatpush1.bf16.msra.mxu0 0
        %477 = vmatprep.subr.bf16.mxu0 0
        %478 = vmatpush1.bf16.msra.mxu0 0
        %479 = vmatprep.subr.bf16.mxu0 0
        %480 = vmatpush1.bf16.msra.mxu0 0
        %481 = vmatprep.subr.bf16.mxu0 0
        %482 = vmatpush1.bf16.msra.mxu0 0
        %483 = vmatprep.subr.bf16.mxu0 0
        %484 = vmatpush1.bf16.msra.mxu0 0
        %485 = vmatprep.mubr.bf16.mxu0 0
        %486 = vmatmul.mubr.bf16.gmra.mrb[0].mxu0 %v451
        %v487 = vpop.f32.mrb[0].mxu0
        %v488 = vadd.f32 %v435, %v487
        %v489 = vpop.f32.mrb[0].mxu0
        %v490 = vpop.f32.mrb[0].mxu0
        %v491 = vadd.f32 %v435, %v490
        %v492 = vpop.f32.mrb[0].mxu0
        %493 = vdwg.mxu0
        %v494 = vld [vmem:[%s358] sm:$0xff]
        %v495 = vld [vmem:[%s358 + $0x8] sm:$0xff]
        %v496 = vpack.c.bf16 %v495, %v494
        %v497 = vld [vmem:[#allocation10] sm:$0xf]
        %v498 = vld [vmem:[#allocation10 + $0x4] sm:$0xf]
        %v499 = vld [vmem:[#allocation10 + $0x8] sm:$0xf]
        %v500 = vld [vmem:[#allocation10 + $0xc] sm:$0xf]
        %v501 = vld [vmem:[#allocation11] sm:$0x1]
        %v503 = vlaneseq
        %v504 = vshrl.u32 %v503, 7
        %v505 = vsub.s32 0, %v504
        %v506 = vrot.slane %v501, %v505
        %v512 = vunpack.c.l.b16 %v497
        %v513 = vunpack.c.l.b16 %v498
        %v514 = vunpack.c.l.b16 %v499
        %v515 = vunpack.c.l.b16 %v500
        %v516 = vpack.c.b16 %v513, %v512
        %v517 = vpack.c.b16 %v515, %v514
        %v521 = vsel %vm449, %v496, 0
        %523 = vmatprep.subr.bf16.mxu0 0
        %524 = vmatpush1.bf16.msra.mxu0 %v516
        %525 = vmatprep.subr.bf16.mxu0 0
        %526 = vmatpush1.bf16.msra.mxu0 %v517
        %527 = vmatprep.subr.bf16.mxu0 0
        %528 = vmatpush1.bf16.msra.mxu0 0
        %529 = vmatprep.subr.bf16.mxu0 0
        %530 = vmatpush1.bf16.msra.mxu0 0
        %531 = vmatprep.subr.bf16.mxu0 0
        %532 = vmatpush1.bf16.msra.mxu0 0
        %533 = vmatprep.subr.bf16.mxu0 0
        %534 = vmatpush1.bf16.msra.mxu0 0
        %535 = vmatprep.subr.bf16.mxu0 0
        %536 = vmatpush1.bf16.msra.mxu0 0
        %537 = vmatprep.subr.bf16.mxu0 0
        %538 = vmatpush1.bf16.msra.mxu0 0
        %539 = vmatprep.subr.bf16.mxu0 0
        %540 = vmatpush1.bf16.msra.mxu0 0
        %541 = vmatprep.subr.bf16.mxu0 0
        %542 = vmatpush1.bf16.msra.mxu0 0
        %543 = vmatprep.subr.bf16.mxu0 0
        %544 = vmatpush1.bf16.msra.mxu0 0
        %545 = vmatprep.subr.bf16.mxu0 0
        %546 = vmatpush1.bf16.msra.mxu0 0
        %547 = vmatprep.subr.bf16.mxu0 0
        %548 = vmatpush1.bf16.msra.mxu0 0
        %549 = vmatprep.subr.bf16.mxu0 0
        %550 = vmatpush1.bf16.msra.mxu0 0
        %551 = vmatprep.subr.bf16.mxu0 0
        %552 = vmatpush1.bf16.msra.mxu0 0
        %553 = vmatprep.subr.bf16.mxu0 0
        %554 = vmatpush1.bf16.msra.mxu0 0
        %555 = vmatprep.mubr.bf16.mxu0 0
        %556 = vmatmul.mubr.bf16.gmra.mrb[0].mxu0 %v521
        %v557 = vpop.f32.mrb[0].mxu0
        %v558 = vadd.f32 %v506, %v557
        %v559 = vpop.f32.mrb[0].mxu0
        %v560 = vpop.f32.mrb[0].mxu0
        %v561 = vadd.f32 %v506, %v560
        %v562 = vpop.f32.mrb[0].mxu0
        %563 = vdwg.mxu0
        %v564 = vld [vmem:[%s382] sm:$0x1]
        %vm565 = vcmp.ne.f32.partialorder %v564, 0.0
        %v566 = vpack.c.bf16 %v491, %v488
        %v567 = vpack.c.bf16 %v561, %v558
        %vm568 = vcmask 64512
        %v570 = vsel %vm568, %v566, 0
        %v573 = vsel %vm568, %v567, 0
        %575 = vmatprep.subr.bf16.mxu0 0
        %576 = vmatpush1.bf16.xpose.msra.mxu0 %v573
        %577 = vmatprep.subr.bf16.mxu0 0
        %578 = vmatpush1.bf16.xpose.msra.mxu0 0
        %579 = vmatprep.subr.bf16.mxu0 0
        %580 = vmatpush1.bf16.xpose.msra.mxu0 0
        %581 = vmatprep.subr.bf16.mxu0 0
        %582 = vmatpush1.bf16.xpose.msra.mxu0 0
        %583 = vmatprep.subr.bf16.mxu0 0
        %584 = vmatpush1.bf16.xpose.msra.mxu0 0
        %585 = vmatprep.subr.bf16.mxu0 0
        %586 = vmatpush1.bf16.xpose.msra.mxu0 0
        %587 = vmatprep.subr.bf16.mxu0 0
        %588 = vmatpush1.bf16.xpose.msra.mxu0 0
        %589 = vmatprep.subr.bf16.mxu0 0
        %590 = vmatpush1.bf16.xpose.msra.mxu0 0
        %591 = vmatprep.subr.bf16.mxu0 0
        %592 = vmatpush1.bf16.xpose.msra.mxu0 0
        %593 = vmatprep.subr.bf16.mxu0 0
        %594 = vmatpush1.bf16.xpose.msra.mxu0 0
        %595 = vmatprep.subr.bf16.mxu0 0
        %596 = vmatpush1.bf16.xpose.msra.mxu0 0
        %597 = vmatprep.subr.bf16.mxu0 0
        %598 = vmatpush1.bf16.xpose.msra.mxu0 0
        %599 = vmatprep.subr.bf16.mxu0 0
        %600 = vmatpush1.bf16.xpose.msra.mxu0 0
        %601 = vmatprep.subr.bf16.mxu0 0
        %602 = vmatpush1.bf16.xpose.msra.mxu0 0
        %603 = vmatprep.subr.bf16.mxu0 0
        %604 = vmatpush1.bf16.xpose.msra.mxu0 0
        %605 = vmatprep.subr.bf16.mxu0 0
        %606 = vmatpush1.bf16.xpose.msra.mxu0 0
        %607 = vmatprep.mubr.bf16.mxu0 0
        %608 = vmatmul.mubr.bf16.gmra.mrb[0].mxu0 %v570
        %v609 = vpop.f32.mrb[0].mxu0
        %v610 = vadd.f32 0.0, %v609
        %v611 = vpop.f32.mrb[0].mxu0
        %v612 = vpop.f32.mrb[0].mxu0
        %v613 = vadd.f32 0.0, %v612
        %v614 = vpop.f32.mrb[0].mxu0
        %615 = vdwg.mxu0
        %v616 = vmul.f32 %v610, 0.35355338
        %v617 = vmul.f32 %v613, 0.35355338
        %v618 = vsel %vm565, 1, 0
        %v619 = vlaneseq
        %v620 = vshrl.u32 %v619, 7
        %v621 = vsub.s32 0, %v620
        %v622 = vrot.slane %v618, %v621
        %vm623 = vcmp.eq.s32.totalorder %v622, 1
        %v624 = vsel %vm623, %v616, -1e+09
        %v625 = vsel %vm623, %v617, -1e+09
        %vm626 = vcmask 130048
        %v627 = vsel %vm626, %v624, -inf
        %628 = vmax.xlane.f32.xlu0 %v627
        %v629 = vpop.xlane.xlu0 %628
        %v630 = vsel %vm626, %v625, -inf
        %631 = vmax.xlane.f32.xlu0 %v630
        %v632 = vpop.xlane.xlu0 %631
        %v633 = vsub.f32 %v624, %v629
        %v634 = vsub.f32 %v625, %v632
        %v635 = vmul.f32 %v633, 1.442695
        %v636 = vpow.pop %v635
        %v637 = vmul.f32 %v634, 1.442695
        %v638 = vpow.pop %v637
        %v639 = vsel %vm626, %v636, 0.0
        %640 = vadd.xlane.f32.xlu0 %v639
        %v641 = vpop.xlane.xlu0 %640
        %v642 = vsel %vm626, %v638, 0.0
        %643 = vadd.xlane.f32.xlu0 %v642
        %v644 = vpop.xlane.xlu0 %643
        %v645 = vrcp.pop %v641
        %v646 = vrcp.pop %v644
        %v647 = vmul.f32 %v636, %v645
        %v648 = vmul.f32 %v638, %v646
        %v649 = vpack.c.bf16 %v648, %v647
        %651 = vrot.lane.b32.xlu0 %v567, 96
        %v652 = vpop.permute.xlu0 %651
        %v655 = vsel %vm626, %v649, 0
        %657 = vmatprep.subr.bf16.mxu0 0
        %658 = vmatpush1.bf16.msra.mxu0 %v652
        %659 = vmatprep.subr.bf16.mxu0 0
        %660 = vmatpush1.bf16.msra.mxu0 0
        %661 = vmatprep.subr.bf16.mxu0 0
        %662 = vmatpush1.bf16.msra.mxu0 0
        %663 = vmatprep.subr.bf16.mxu0 0
        %664 = vmatpush1.bf16.msra.mxu0 0
        %665 = vmatprep.subr.bf16.mxu0 0
        %666 = vmatpush1.bf16.msra.mxu0 0
        %667 = vmatprep.subr.bf16.mxu0 0
        %668 = vmatpush1.bf16.msra.mxu0 0
        %669 = vmatprep.subr.bf16.mxu0 0
        %670 = vmatpush1.bf16.msra.mxu0 0
        %671 = vmatprep.subr.bf16.mxu0 0
        %672 = vmatpush1.bf16.msra.mxu0 0
        %673 = vmatprep.subr.bf16.mxu0 0
        %674 = vmatpush1.bf16.msra.mxu0 0
        %675 = vmatprep.subr.bf16.mxu0 0
        %676 = vmatpush1.bf16.msra.mxu0 0
        %677 = vmatprep.subr.bf16.mxu0 0
        %678 = vmatpush1.bf16.msra.mxu0 0
        %679 = vmatprep.subr.bf16.mxu0 0
        %680 = vmatpush1.bf16.msra.mxu0 0
        %681 = vmatprep.subr.bf16.mxu0 0
        %682 = vmatpush1.bf16.msra.mxu0 0
        %683 = vmatprep.subr.bf16.mxu0 0
        %684 = vmatpush1.bf16.msra.mxu0 0
        %685 = vmatprep.subr.bf16.mxu0 0
        %686 = vmatpush1.bf16.msra.mxu0 0
        %687 = vmatprep.subr.bf16.mxu0 0
        %688 = vmatpush1.bf16.msra.mxu0 0
        %689 = vmatprep.mubr.bf16.mxu0 0
        %690 = vmatmul.mubr.bf16.gmra.mrb[0].mxu0 %v655
        %v691 = vpop.f32.mrb[0].mxu0
        %v692 = vadd.f32 0.0, %v691
        %v693 = vpop.f32.mrb[0].mxu0
        %v694 = vpop.f32.mrb[0].mxu0
        %v695 = vadd.f32 0.0, %v694
        %v696 = vpop.f32.mrb[0].mxu0
        %697 = vdwg.mxu0
        %v698 = vpack.c.bf16 %v695, %v692
        %v700 = vunpack.c.l.b16 %v698
        %v701 = vunpack.c.h.b16 %v698
        %v702 = vpack.c.b16 %v700, %v700
        %v703 = vpack.c.b16 %v701, %v701
        %vm706 = vcmask 60416
        %707 = vst.msk [vmem:[%s421] sm:$0xf] %vm706, %v702
        %708 = vst.msk [vmem:[%s421 + $0x4] sm:$0xf] %vm706, %v703
        %710 = vrot.lane.b32.xlu0 %v566, 120
        %v711 = vpop.permute.xlu0 %710
        %712 = vrot.lane.b32.xlu0 %v567, 120
        %v713 = vpop.permute.xlu0 %712
        %v715 = vsel %vm568, %v711, 0
        %v718 = vsel %vm568, %v713, 0
        %720 = vmatprep.subr.bf16.mxu0 0
        %721 = vmatpush1.bf16.xpose.msra.mxu0 %v718
        %722 = vmatprep.subr.bf16.mxu0 0
        %723 = vmatpush1.bf16.xpose.msra.mxu0 0
        %724 = vmatprep.subr.bf16.mxu0 0
        %725 = vmatpush1.bf16.xpose.msra.mxu0 0
        %726 = vmatprep.subr.bf16.mxu0 0
        %727 = vmatpush1.bf16.xpose.msra.mxu0 0
        %728 = vmatprep.subr.bf16.mxu0 0
        %729 = vmatpush1.bf16.xpose.msra.mxu0 0
        %730 = vmatprep.subr.bf16.mxu0 0
        %731 = vmatpush1.bf16.xpose.msra.mxu0 0
        %732 = vmatprep.subr.bf16.mxu0 0
        %733 = vmatpush1.bf16.xpose.msra.mxu0 0
        %734 = vmatprep.subr.bf16.mxu0 0
        %735 = vmatpush1.bf16.xpose.msra.mxu0 0
        %736 = vmatprep.subr.bf16.mxu0 0
        %737 = vmatpush1.bf16.xpose.msra.mxu0 0
        %738 = vmatprep.subr.bf16.mxu0 0
        %739 = vmatpush1.bf16.xpose.msra.mxu0 0
        %740 = vmatprep.subr.bf16.mxu0 0
        %741 = vmatpush1.bf16.xpose.msra.mxu0 0
        %742 = vmatprep.subr.bf16.mxu0 0
        %743 = vmatpush1.bf16.xpose.msra.mxu0 0
        %744 = vmatprep.subr.bf16.mxu0 0
        %745 = vmatpush1.bf16.xpose.msra.mxu0 0
        %746 = vmatprep.subr.bf16.mxu0 0
        %747 = vmatpush1.bf16.xpose.msra.mxu0 0
        %748 = vmatprep.subr.bf16.mxu0 0
        %749 = vmatpush1.bf16.xpose.msra.mxu0 0
        %750 = vmatprep.subr.bf16.mxu0 0
        %751 = vmatpush1.bf16.xpose.msra.mxu0 0
        %752 = vmatprep.mubr.bf16.mxu0 0
        %753 = vmatmul.mubr.bf16.gmra.mrb[0].mxu0 %v715
        %v754 = vpop.f32.mrb[0].mxu0
        %v755 = vadd.f32 0.0, %v754
        %v756 = vpop.f32.mrb[0].mxu0
        %v757 = vpop.f32.mrb[0].mxu0
        %v758 = vadd.f32 0.0, %v757
        %v759 = vpop.f32.mrb[0].mxu0
        %760 = vdwg.mxu0
        %v761 = vmul.f32 %v755, 0.35355338
        %v762 = vmul.f32 %v758, 0.35355338
        %v763 = vsel %vm623, %v761, -1e+09
        %v764 = vsel %vm623, %v762, -1e+09
        %v765 = vsel %vm626, %v763, -inf
        %766 = vmax.xlane.f32.xlu0 %v765
        %v767 = vpop.xlane.xlu0 %766
        %v768 = vsel %vm626, %v764, -inf
        %769 = vmax.xlane.f32.xlu0 %v768
        %v770 = vpop.xlane.xlu0 %769
        %v771 = vsub.f32 %v763, %v767
        %v772 = vsub.f32 %v764, %v770
        %v773 = vmul.f32 %v771, 1.442695
        %v774 = vpow.pop %v773
        %v775 = vmul.f32 %v772, 1.442695
        %v776 = vpow.pop %v775
        %v777 = vsel %vm626, %v774, 0.0
        %778 = vadd.xlane.f32.xlu0 %v777
        %v779 = vpop.xlane.xlu0 %778
        %v780 = vsel %vm626, %v776, 0.0
        %781 = vadd.xlane.f32.xlu0 %v780
        %v782 = vpop.xlane.xlu0 %781
        %v783 = vrcp.pop %v779
        %v784 = vrcp.pop %v782
        %v785 = vmul.f32 %v774, %v783
        %v786 = vmul.f32 %v776, %v784
        %v787 = vpack.c.bf16 %v786, %v785
        %788 = vrot.lane.b32.xlu0 %v567, 88
        %v789 = vpop.permute.xlu0 %788
        %v792 = vsel %vm626, %v787, 0
        %794 = vmatprep.subr.bf16.mxu0 0
        %795 = vmatpush1.bf16.msra.mxu0 %v789
        %796 = vmatprep.subr.bf16.mxu0 0
        %797 = vmatpush1.bf16.msra.mxu0 0
        %798 = vmatprep.subr.bf16.mxu0 0
        %799 = vmatpush1.bf16.msra.mxu0 0
        %800 = vmatprep.subr.bf16.mxu0 0
        %801 = vmatpush1.bf16.msra.mxu0 0
        %802 = vmatprep.subr.bf16.mxu0 0
        %803 = vmatpush1.bf16.msra.mxu0 0
        %804 = vmatprep.subr.bf16.mxu0 0
        %805 = vmatpush1.bf16.msra.mxu0 0
        %806 = vmatprep.subr.bf16.mxu0 0
        %807 = vmatpush1.bf16.msra.mxu0 0
        %808 = vmatprep.subr.bf16.mxu0 0
        %809 = vmatpush1.bf16.msra.mxu0 0
        %810 = vmatprep.subr.bf16.mxu0 0
        %811 = vmatpush1.bf16.msra.mxu0 0
        %812 = vmatprep.subr.bf16.mxu0 0
        %813 = vmatpush1.bf16.msra.mxu0 0
        %814 = vmatprep.subr.bf16.mxu0 0
        %815 = vmatpush1.bf16.msra.mxu0 0
        %816 = vmatprep.subr.bf16.mxu0 0
        %817 = vmatpush1.bf16.msra.mxu0 0
        %818 = vmatprep.subr.bf16.mxu0 0
        %819 = vmatpush1.bf16.msra.mxu0 0
        %820 = vmatprep.subr.bf16.mxu0 0
        %821 = vmatpush1.bf16.msra.mxu0 0
        %822 = vmatprep.subr.bf16.mxu0 0
        %823 = vmatpush1.bf16.msra.mxu0 0
        %824 = vmatprep.subr.bf16.mxu0 0
        %825 = vmatpush1.bf16.msra.mxu0 0
        %826 = vmatprep.mubr.bf16.mxu0 0
        %827 = vmatmul.mubr.bf16.gmra.mrb[0].mxu0 %v792
        %v828 = vpop.f32.mrb[0].mxu0
        %v829 = vadd.f32 0.0, %v828
        %v830 = vpop.f32.mrb[0].mxu0
        %v831 = vpop.f32.mrb[0].mxu0
        %v832 = vadd.f32 0.0, %v831
        %v833 = vpop.f32.mrb[0].mxu0
        %834 = vdwg.mxu0
        %v835 = vpack.c.bf16 %v832, %v829
        %v837 = vunpack.c.l.b16 %v835
        %v838 = vunpack.c.h.b16 %v835
        %v839 = vpack.c.b16 %v837, %v837
        %v840 = vpack.c.b16 %v838, %v838
        %s843 = scalar_lea.vmem %s421, 8 [#allocation14]
        %844 = vst.msk [vmem:[%s843] sm:$0xf] %vm706, %v839
        %845 = vst.msk [vmem:[%s843 + $0x4] sm:$0xf] %vm706, %v840
        %846 = vrot.lane.b32.xlu0 %v566, 112
        %v847 = vpop.permute.xlu0 %846
        %848 = vrot.lane.b32.xlu0 %v567, 112
        %v849 = vpop.permute.xlu0 %848
        %v851 = vsel %vm568, %v847, 0
        %v854 = vsel %vm568, %v849, 0
        %856 = vmatprep.subr.bf16.mxu0 0
        %857 = vmatpush1.bf16.xpose.msra.mxu0 %v854
        %858 = vmatprep.subr.bf16.mxu0 0
        %859 = vmatpush1.bf16.xpose.msra.mxu0 0
        %860 = vmatprep.subr.bf16.mxu0 0
        %861 = vmatpush1.bf16.xpose.msra.mxu0 0
        %862 = vmatprep.subr.bf16.mxu0 0
        %863 = vmatpush1.bf16.xpose.msra.mxu0 0
        %864 = vmatprep.subr.bf16.mxu0 0
        %865 = vmatpush1.bf16.xpose.msra.mxu0 0
        %866 = vmatprep.subr.bf16.mxu0 0
        %867 = vmatpush1.bf16.xpose.msra.mxu0 0
        %868 = vmatprep.subr.bf16.mxu0 0
        %869 = vmatpush1.bf16.xpose.msra.mxu0 0
        %870 = vmatprep.subr.bf16.mxu0 0
        %871 = vmatpush1.bf16.xpose.msra.mxu0 0
        %872 = vmatprep.subr.bf16.mxu0 0
        %873 = vmatpush1.bf16.xpose.msra.mxu0 0
        %874 = vmatprep.subr.bf16.mxu0 0
        %875 = vmatpush1.bf16.xpose.msra.mxu0 0
        %876 = vmatprep.subr.bf16.mxu0 0
        %877 = vmatpush1.bf16.xpose.msra.mxu0 0
        %878 = vmatprep.subr.bf16.mxu0 0
        %879 = vmatpush1.bf16.xpose.msra.mxu0 0
        %880 = vmatprep.subr.bf16.mxu0 0
        %881 = vmatpush1.bf16.xpose.msra.mxu0 0
        %882 = vmatprep.subr.bf16.mxu0 0
        %883 = vmatpush1.bf16.xpose.msra.mxu0 0
        %884 = vmatprep.subr.bf16.mxu0 0
        %885 = vmatpush1.bf16.xpose.msra.mxu0 0
        %886 = vmatprep.subr.bf16.mxu0 0
        %887 = vmatpush1.bf16.xpose.msra.mxu0 0
        %888 = vmatprep.mubr.bf16.mxu0 0
        %889 = vmatmul.mubr.bf16.gmra.mrb[0].mxu0 %v851
        %v890 = vpop.f32.mrb[0].mxu0
        %v891 = vadd.f32 0.0, %v890
        %v892 = vpop.f32.mrb[0].mxu0
        %v893 = vpop.f32.mrb[0].mxu0
        %v894 = vadd.f32 0.0, %v893
        %v895 = vpop.f32.mrb[0].mxu0
        %896 = vdwg.mxu0
        %v897 = vmul.f32 %v891, 0.35355338
        %v898 = vmul.f32 %v894, 0.35355338
        %v899 = vsel %vm623, %v897, -1e+09
        %v900 = vsel %vm623, %v898, -1e+09
        %v901 = vsel %vm626, %v899, -inf
        %902 = vmax.xlane.f32.xlu0 %v901
        %v903 = vpop.xlane.xlu0 %902
        %v904 = vsel %vm626, %v900, -inf
        %905 = vmax.xlane.f32.xlu0 %v904
        %v906 = vpop.xlane.xlu0 %905
        %v907 = vsub.f32 %v899, %v903
        %v908 = vsub.f32 %v900, %v906
        %v909 = vmul.f32 %v907, 1.442695
        %v910 = vpow.pop %v909
        %v911 = vmul.f32 %v908, 1.442695
        %v912 = vpow.pop %v911
        %v913 = vsel %vm626, %v910, 0.0
        %914 = vadd.xlane.f32.xlu0 %v913
        %v915 = vpop.xlane.xlu0 %914
        %v916 = vsel %vm626, %v912, 0.0
        %917 = vadd.xlane.f32.xlu0 %v916
        %v918 = vpop.xlane.xlu0 %917
        %v919 = vrcp.pop %v915
        %v920 = vrcp.pop %v918
        %v921 = vmul.f32 %v910, %v919
        %v922 = vmul.f32 %v912, %v920
        %v923 = vpack.c.bf16 %v922, %v921
        %924 = vrot.lane.b32.xlu0 %v567, 80
        %v925 = vpop.permute.xlu0 %924
        %v928 = vsel %vm626, %v923, 0
        %930 = vmatprep.subr.bf16.mxu0 0
        %931 = vmatpush1.bf16.msra.mxu0 %v925
        %932 = vmatprep.subr.bf16.mxu0 0
        %933 = vmatpush1.bf16.msra.mxu0 0
        %934 = vmatprep.subr.bf16.mxu0 0
        %935 = vmatpush1.bf16.msra.mxu0 0
        %936 = vmatprep.subr.bf16.mxu0 0
        %937 = vmatpush1.bf16.msra.mxu0 0
        %938 = vmatprep.subr.bf16.mxu0 0
        %939 = vmatpush1.bf16.msra.mxu0 0
        %940 = vmatprep.subr.bf16.mxu0 0
        %941 = vmatpush1.bf16.msra.mxu0 0
        %942 = vmatprep.subr.bf16.mxu0 0
        %943 = vmatpush1.bf16.msra.mxu0 0
        %944 = vmatprep.subr.bf16.mxu0 0
        %945 = vmatpush1.bf16.msra.mxu0 0
        %946 = vmatprep.subr.bf16.mxu0 0
        %947 = vmatpush1.bf16.msra.mxu0 0
        %948 = vmatprep.subr.bf16.mxu0 0
        %949 = vmatpush1.bf16.msra.mxu0 0
        %950 = vmatprep.subr.bf16.mxu0 0
        %951 = vmatpush1.bf16.msra.mxu0 0
        %952 = vmatprep.subr.bf16.mxu0 0
        %953 = vmatpush1.bf16.msra.mxu0 0
        %954 = vmatprep.subr.bf16.mxu0 0
        %955 = vmatpush1.bf16.msra.mxu0 0
        %956 = vmatprep.subr.bf16.mxu0 0
        %957 = vmatpush1.bf16.msra.mxu0 0
        %958 = vmatprep.subr.bf16.mxu0 0
        %959 = vmatpush1.bf16.msra.mxu0 0
        %960 = vmatprep.subr.bf16.mxu0 0
        %961 = vmatpush1.bf16.msra.mxu0 0
        %962 = vmatprep.mubr.bf16.mxu0 0
        %963 = vmatmul.mubr.bf16.gmra.mrb[0].mxu0 %v928
        %v964 = vpop.f32.mrb[0].mxu0
        %v965 = vadd.f32 0.0, %v964
        %v966 = vpop.f32.mrb[0].mxu0
        %v967 = vpop.f32.mrb[0].mxu0
        %v968 = vadd.f32 0.0, %v967
        %v969 = vpop.f32.mrb[0].mxu0
        %970 = vdwg.mxu0
        %v971 = vpack.c.bf16 %v968, %v965
        %v973 = vunpack.c.l.b16 %v971
        %v974 = vunpack.c.h.b16 %v971
        %v975 = vpack.c.b16 %v973, %v973
        %v976 = vpack.c.b16 %v974, %v974
        %s979 = scalar_lea.vmem %s421, 16 [#allocation14]
        %980 = vst.msk [vmem:[%s979] sm:$0xf] %vm706, %v975
        %981 = vst.msk [vmem:[%s979 + $0x4] sm:$0xf] %vm706, %v976
        %982 = vrot.lane.b32.xlu0 %v566, 104
        %v983 = vpop.permute.xlu0 %982
        %984 = vrot.lane.b32.xlu0 %v567, 104
        %v985 = vpop.permute.xlu0 %984
        %v987 = vsel %vm568, %v983, 0
        %v990 = vsel %vm568, %v985, 0
        %992 = vmatprep.subr.bf16.mxu0 0
        %993 = vmatpush1.bf16.xpose.msra.mxu0 %v990
        %994 = vmatprep.subr.bf16.mxu0 0
        %995 = vmatpush1.bf16.xpose.msra.mxu0 0
        %996 = vmatprep.subr.bf16.mxu0 0
        %997 = vmatpush1.bf16.xpose.msra.mxu0 0
        %998 = vmatprep.subr.bf16.mxu0 0
        %999 = vmatpush1.bf16.xpose.msra.mxu0 0
        %1000 = vmatprep.subr.bf16.mxu0 0
        %1001 = vmatpush1.bf16.xpose.msra.mxu0 0
        %1002 = vmatprep.subr.bf16.mxu0 0
        %1003 = vmatpush1.bf16.xpose.msra.mxu0 0
        %1004 = vmatprep.subr.bf16.mxu0 0
        %1005 = vmatpush1.bf16.xpose.msra.mxu0 0
        %1006 = vmatprep.subr.bf16.mxu0 0
        %1007 = vmatpush1.bf16.xpose.msra.mxu0 0
        %1008 = vmatprep.subr.bf16.mxu0 0
        %1009 = vmatpush1.bf16.xpose.msra.mxu0 0
        %1010 = vmatprep.subr.bf16.mxu0 0
        %1011 = vmatpush1.bf16.xpose.msra.mxu0 0
        %1012 = vmatprep.subr.bf16.mxu0 0
        %1013 = vmatpush1.bf16.xpose.msra.mxu0 0
        %1014 = vmatprep.subr.bf16.mxu0 0
        %1015 = vmatpush1.bf16.xpose.msra.mxu0 0
        %1016 = vmatprep.subr.bf16.mxu0 0
        %1017 = vmatpush1.bf16.xpose.msra.mxu0 0
        %1018 = vmatprep.subr.bf16.mxu0 0
        %1019 = vmatpush1.bf16.xpose.msra.mxu0 0
        %1020 = vmatprep.subr.bf16.mxu0 0
        %1021 = vmatpush1.bf16.xpose.msra.mxu0 0
        %1022 = vmatprep.subr.bf16.mxu0 0
        %1023 = vmatpush1.bf16.xpose.msra.mxu0 0
        %1024 = vmatprep.mubr.bf16.mxu0 0
        %1025 = vmatmul.mubr.bf16.gmra.mrb[0].mxu0 %v987
        %v1026 = vpop.f32.mrb[0].mxu0
        %v1027 = vadd.f32 0.0, %v1026
        %v1028 = vpop.f32.mrb[0].mxu0
        %v1029 = vpop.f32.mrb[0].mxu0
        %v1030 = vadd.f32 0.0, %v1029
        %v1031 = vpop.f32.mrb[0].mxu0
        %1032 = vdwg.mxu0
        %v1033 = vmul.f32 %v1027, 0.35355338
        %v1034 = vmul.f32 %v1030, 0.35355338
        %v1035 = vsel %vm623, %v1033, -1e+09
        %v1036 = vsel %vm623, %v1034, -1e+09
        %v1037 = vsel %vm626, %v1035, -inf
        %1038 = vmax.xlane.f32.xlu0 %v1037
        %v1039 = vpop.xlane.xlu0 %1038
        %v1040 = vsel %vm626, %v1036, -inf
        %1041 = vmax.xlane.f32.xlu0 %v1040
        %v1042 = vpop.xlane.xlu0 %1041
        %v1043 = vsub.f32 %v1035, %v1039
        %v1044 = vsub.f32 %v1036, %v1042
        %v1045 = vmul.f32 %v1043, 1.442695
        %v1046 = vpow.pop %v1045
        %v1047 = vmul.f32 %v1044, 1.442695
        %v1048 = vpow.pop %v1047
        %v1049 = vsel %vm626, %v1046, 0.0
        %1050 = vadd.xlane.f32.xlu0 %v1049
        %v1051 = vpop.xlane.xlu0 %1050
        %v1052 = vsel %vm626, %v1048, 0.0
        %1053 = vadd.xlane.f32.xlu0 %v1052
        %v1054 = vpop.xlane.xlu0 %1053
        %v1055 = vrcp.pop %v1051
        %v1056 = vrcp.pop %v1054
        %v1057 = vmul.f32 %v1046, %v1055
        %v1058 = vmul.f32 %v1048, %v1056
        %v1059 = vpack.c.bf16 %v1058, %v1057
        %1060 = vrot.lane.b32.xlu0 %v567, 72
        %v1061 = vpop.permute.xlu0 %1060
        %v1064 = vsel %vm626, %v1059, 0
        %1066 = vmatprep.subr.bf16.mxu0 0
        %1067 = vmatpush1.bf16.msra.mxu0 %v1061
        %1068 = vmatprep.subr.bf16.mxu0 0
        %1069 = vmatpush1.bf16.msra.mxu0 0
        %1070 = vmatprep.subr.bf16.mxu0 0
        %1071 = vmatpush1.bf16.msra.mxu0 0
        %1072 = vmatprep.subr.bf16.mxu0 0
        %1073 = vmatpush1.bf16.msra.mxu0 0
        %1074 = vmatprep.subr.bf16.mxu0 0
        %1075 = vmatpush1.bf16.msra.mxu0 0
        %1076 = vmatprep.subr.bf16.mxu0 0
        %1077 = vmatpush1.bf16.msra.mxu0 0
        %1078 = vmatprep.subr.bf16.mxu0 0
        %1079 = vmatpush1.bf16.msra.mxu0 0
        %1080 = vmatprep.subr.bf16.mxu0 0
        %1081 = vmatpush1.bf16.msra.mxu0 0
        %1082 = vmatprep.subr.bf16.mxu0 0
        %1083 = vmatpush1.bf16.msra.mxu0 0
        %1084 = vmatprep.subr.bf16.mxu0 0
        %1085 = vmatpush1.bf16.msra.mxu0 0
        %1086 = vmatprep.subr.bf16.mxu0 0
        %1087 = vmatpush1.bf16.msra.mxu0 0
        %1088 = vmatprep.subr.bf16.mxu0 0
        %1089 = vmatpush1.bf16.msra.mxu0 0
        %1090 = vmatprep.subr.bf16.mxu0 0
        %1091 = vmatpush1.bf16.msra.mxu0 0
        %1092 = vmatprep.subr.bf16.mxu0 0
        %1093 = vmatpush1.bf16.msra.mxu0 0
        %1094 = vmatprep.subr.bf16.mxu0 0
        %1095 = vmatpush1.bf16.msra.mxu0 0
        %1096 = vmatprep.subr.bf16.mxu0 0
        %1097 = vmatpush1.bf16.msra.mxu0 0
        %1098 = vmatprep.mubr.bf16.mxu0 0
        %1099 = vmatmul.mubr.bf16.gmra.mrb[0].mxu0 %v1064
        %v1100 = vpop.f32.mrb[0].mxu0
        %v1101 = vadd.f32 0.0, %v1100
        %v1102 = vpop.f32.mrb[0].mxu0
        %v1103 = vpop.f32.mrb[0].mxu0
        %v1104 = vadd.f32 0.0, %v1103
        %v1105 = vpop.f32.mrb[0].mxu0
        %1106 = vdwg.mxu0
        %v1107 = vpack.c.bf16 %v1104, %v1101
        %v1109 = vunpack.c.l.b16 %v1107
        %v1110 = vunpack.c.h.b16 %v1107
        %v1111 = vpack.c.b16 %v1109, %v1109
        %v1112 = vpack.c.b16 %v1110, %v1110
        %s1115 = scalar_lea.vmem %s421, 24 [#allocation14]
        %1116 = vst.msk [vmem:[%s1115] sm:$0xf] %vm706, %v1111
        %1117 = vst.msk [vmem:[%s1115 + $0x4] sm:$0xf] %vm706, %v1112
        %s1118 = sand.u32 %s199, 1
        %s1119 = scalar_lea.sflag [#allocation4], %s1118
        %s1120 = sand.u32 %s199, 1
        %s1121 = smul.addr %s1120, 32
        %s1122 = scalar_lea.vmem [#allocation14], %s1121
        // Predicated region
        $region77: #{transformer_forward.29} parent=47 // pred_check
          %p1123 = pneg %p209
        $region78: #{transformer_forward.29} parent=47 // pred_check_branch
          %1125 = sbr.rel (%p1123) target = $region80
        $region79: #{transformer_forward.29} parent=47 // pred_region
          %s1127 = ssub.s32 512, 512
          %1128 = vsyncadd %s1119, %s1127
          %s1129 = smul.addr %s29, 8
          %s1130 = smul.addr %s1129, 64
          %s1131 = scalar_lea.hbm %s7, %s1130
          %s1132 = sshll.u32 %s1122, 4
          %s1133 = int_to_ptr.vmem [resolvable:$true] %s1132
          %1138 = dma.vmem_to_hbm [thread:$0]  %s1133, 512, %s1131, %s1119, 64, 64, 4
        $region80: #{transformer_forward.29} parent=47 // pred_fallthru
          _
      $region48: #{transformer_forward.29} parent=5 // pred_fallthru
        _
      %p1139 = scmp.le.s32.totalorder 2, %s24
      // Predicated region
      $region81: #{transformer_forward.29} parent=5 // pred_check
        %p1140 = pneg %p1139
      $region82: #{transformer_forward.29} parent=5 // pred_check_branch
        %1142 = sbr.rel (%p1140) target = $region84
      $region83: #{transformer_forward.29} parent=5 // pred_region
        %s1143 = ssub.s32 %s24, 2
        // Predicated region
        $region85: #{transformer_forward.29} parent=83 // pred_check
          %p1144 = pneg %p215
        $region86: #{transformer_forward.29} parent=83 // pred_check_branch
          %1146 = sbr.rel (%p1144) target = $region88
        $region87: #{transformer_forward.29} parent=83 // pred_region
          %s1147 = sand.u32 %s200, 1
          %s1148 = scalar_lea.sflag [#allocation4], %s1147
          %s1149 = sand.u32 %s200, 1
          %s1150 = smul.addr %s1149, 32
          %s1151 = scalar_lea.vmem [#allocation14], %s1150
          %1152 = dma.done %s1148, 512
        $region88: #{transformer_forward.29} parent=83 // pred_fallthru
          _
      $region84: #{transformer_forward.29} parent=5 // pred_fallthru
        _
    $region6: #{transformer_forward.29} parent=1 // loop_footer
      %s28 = sadd.s32 1, %s24
    $region7: #{transformer_forward.29} parent=1 // loop_footer_branch
      %23 = sbr.rel target = $region3
    $region8: #{transformer_forward.29} parent=1 // loop_exit
      _
    %1153 = vsyncpa [#allocation3], 1
    %s1154 = scalar_lea.sflag [#allocation3], 1
    %1155 = vsyncpa %s1154, 1
    %1156 = vsyncpa [#allocation6], 1
    %s1157 = scalar_lea.sflag [#allocation6], 1
    %1158 = vsyncpa %s1157, 1
    %1159 = vsyncpa [#allocation9], 1
    %1160 = vsyncpa [#allocation12], 1
    %1161 = vsyncpa [#allocation4], 1
    %s1162 = scalar_lea.sflag [#allocation4], 1
    %1163 = vsyncpa %s1162, 1

</llo_original>
